<compile_context>
chip_gen: v7x
topology: tpu7x:2x2x1
jax: 0.10.0
libtpu: 0.0.40
codegen_flags: <defaults>
</compile_context>

<pallas_src>
import functools

import jax
import jax.numpy as jnp
from jax import lax
from jax.experimental import pallas as pl
from jax.experimental.pallas import tpu as pltpu

F32 = jnp.float32
HIGHEST = jax.lax.Precision.HIGHEST

_PAR_1D = pltpu.CompilerParams(
    dimension_semantics=("parallel",),
    vmem_limit_bytes=32 * 1024 * 1024,
)
_ARB_1D = pltpu.CompilerParams(
    dimension_semantics=("arbitrary",),
    vmem_limit_bytes=32 * 1024 * 1024,
)


def _act(y, act):
    if act == "relu":
        return jnp.maximum(y, 0.0)
    if act == "sigmoid":
        return 1.0 / (1.0 + jnp.exp(-y))
    return y


# ------------------------------ Pallas kernel bodies ------------------------------

def _conv_s2_kernel(x_ref, w_ref, b_ref, o_ref, *, oh, ows, act):
    """4x4 / stride-2 / pad-1 conv for one batch element as 4 quadrant GEMMs.

    x_ref: (1, oh+1, W_in, 4*Cin)  space-to-depth'd zero-padded input block
    w_ref: (4, 4*Cin, Cout)        per-quadrant GEMM weights
    b_ref: (1, Cout)
    o_ref: (oh*ows, Cout)          row = oy*ows + ox   (ox >= real OW are junk cols)
    """
    cout = o_ref.shape[-1]
    acc = jnp.zeros((oh * ows, cout), F32)
    for q in range(4):
        qy, qx = q // 2, q % 2
        sl = x_ref[0, qy:qy + oh, qx:qx + ows, :]          # (oh, ows, 4*Cin)
        sl = sl.reshape(oh * ows, -1)                      # layout-preserving (ows % 8 == 0)
        acc = acc + jnp.dot(sl, w_ref[q], preferred_element_type=F32)
    o_ref[...] = _act(acc + b_ref[...], act)


def _convT_s2_kernel(x_ref, w_ref, b_ref, o_ref, *, oh, ows, act):
    """4x4 / stride-2 / pad-1 conv-transpose for one batch element (sub-pixel form).

    x_ref: (1, oh+2, W_in, Cin)    zero-padded input block
    w_ref: (4, 4, Cin, Cout)       [parity class, tap, ci, co]
    b_ref: (1, Cout)
    o_ref: (4, oh*ows, Cout)       per parity class (py, px); full-res output is the
                                   interleave out[2*by+py, 2*bx+px] = class[by, bx]
    """
    cout = o_ref.shape[-1]
    for cls in range(4):
        py, px = cls // 2, cls % 2
        acc = jnp.zeros((oh * ows, cout), F32)
        for t in range(4):
            dy, dx = t // 2, t % 2
            sl = x_ref[0, py + dy:py + dy + oh, px + dx:px + dx + ows, :]
            sl = sl.reshape(oh * ows, -1)
            acc = acc + jnp.dot(sl, w_ref[cls, t], preferred_element_type=F32)
        o_ref[cls] = _act(acc + b_ref[...], act)


def _linear_acc_kernel(x_ref, w_ref, b_ref, o_ref):
    """K-tiled GEMM with a VMEM-resident output accumulator (grid axis = 'arbitrary')."""
    @pl.when(pl.program_id(0) == 0)
    def _():
        o_ref[...] = jnp.broadcast_to(b_ref[...], o_ref.shape)
    o_ref[...] += jnp.dot(x_ref[...], w_ref[...], preferred_element_type=F32)


def _linear_act_kernel(x_ref, w_ref, b_ref, o_ref, *, act):
    """N-tiled GEMM + bias + activation (grid axis = 'parallel')."""
    y = jnp.dot(x_ref[...], w_ref[...], preferred_element_type=F32) + b_ref[...]
    o_ref[...] = _act(y, act)


# ------------------------------ wrappers (layout plumbing + pallas_call) ------------------------------

def _space_to_depth2(x):
    """(B, H, W, C) -> (B, H//2, W//2, 4*C); 2x2 blocks flattened in (ry, rx, c) order."""
    b, h, w, c = x.shape
    x = x.reshape(b, h // 2, 2, w // 2, 2, c).transpose(0, 1, 3, 2, 4, 5)
    return x.reshape(b, h // 2, w // 2, 4 * c)


def conv2d_s2p1(x_nhwc, w_oihw, b, act):
    """nn.Conv2d(Cin, Cout, kernel_size=4, stride=2, padding=1) + activation, NHWC in/out."""
    B, H, W, Cin = x_nhwc.shape
    Cout = w_oihw.shape[0]
    OH, OW = H // 2, W // 2
    OWS = ((OW + 7) // 8) * 8                               # sublane-aligned row tile
    xp = jnp.pad(x_nhwc, ((0, 0), (1, 1), (1, 1), (0, 0)))
    xs = _space_to_depth2(xp)                               # (B, OH+1, OW+1, 4*Cin)
    wpad = 1 + OWS - xs.shape[2]
    if wpad > 0:
        xs = jnp.pad(xs, ((0, 0), (0, 0), (0, wpad), (0, 0)))
    Win = xs.shape[2]
    # torch weight (Cout, Cin, 4, 4) -> quadrant GEMM weights (4, 4*Cin, Cout)
    wq = w_oihw.reshape(Cout, Cin, 2, 2, 2, 2).transpose(2, 4, 3, 5, 1, 0)
    wq = wq.reshape(4, 4 * Cin, Cout).astype(F32)

    out = pl.pallas_call(
        functools.partial(_conv_s2_kernel, oh=OH, ows=OWS, act=act),
        grid=(B,),
        in_specs=[
            pl.BlockSpec((1, OH + 1, Win, 4 * Cin), lambda i: (i, 0, 0, 0)),
            pl.BlockSpec((4, 4 * Cin, Cout), lambda i: (0, 0, 0)),
            pl.BlockSpec((1, Cout), lambda i: (0, 0)),
        ],
        out_specs=pl.BlockSpec((OH * OWS, Cout), lambda i: (i, 0)),
        out_shape=jax.ShapeDtypeStruct((B * OH * OWS, Cout), F32),
        compiler_params=_PAR_1D,
    )(xs, wq, b.reshape(1, Cout).astype(F32))
    return out.reshape(B, OH, OWS, Cout)[:, :, :OW, :]      # drop junk columns -> NHWC


def conv_transpose2d_s2p1(x_nhwc, w_iohw, b, act):
    """nn.ConvTranspose2d(Cin, Cout, kernel_size=4, stride=2, padding=1) + activation, NHWC."""
    B, IH, IW, Cin = x_nhwc.shape
    Cout = w_iohw.shape[1]
    OWS = ((IW + 7) // 8) * 8
    xp = jnp.pad(x_nhwc, ((0, 0), (1, 1), (1, 1), (0, 0)))   # (B, IH+2, IW+2, Cin)
    wpad = 2 + OWS - xp.shape[2]
    if wpad > 0:
        xp = jnp.pad(xp, ((0, 0), (0, 0), (0, wpad), (0, 0)))
    Win = xp.shape[2]
    # torch weight (Cin, Cout, 4, 4) -> (4 parity classes, 4 taps, Cin, Cout)
    classes = []
    for py in range(2):
        for px in range(2):
            taps = [w_iohw[:, :, 3 - py - 2 * dy, 3 - px - 2 * dx]
                    for dy in range(2) for dx in range(2)]
            classes.append(jnp.stack(taps, axis=0))
    wt = jnp.stack(classes, axis=0).astype(F32)              # (4, 4, Cin, Cout)

    out = pl.pallas_call(
        functools.partial(_convT_s2_kernel, oh=IH, ows=OWS, act=act),
        grid=(B,),
        in_specs=[
            pl.BlockSpec((1, IH + 2, Win, Cin), lambda i: (i, 0, 0, 0)),
            pl.BlockSpec((4, 4, Cin, Cout), lambda i: (0, 0, 0, 0)),
            pl.BlockSpec((1, Cout), lambda i: (0, 0)),
        ],
        out_specs=pl.BlockSpec((4, IH * OWS, Cout), lambda i: (0, i, 0)),
        out_shape=jax.ShapeDtypeStruct((4, B * IH * OWS, Cout), F32),
        compiler_params=_PAR_1D,
    )(xp, wt, b.reshape(1, Cout).astype(F32))
    # interleave the 4 parity classes back to full resolution (wrapper layout plumbing)
    out = out.reshape(2, 2, B, IH, OWS, Cout)[:, :, :, :, :IW, :]
    out = out.transpose(2, 3, 0, 4, 1, 5)                    # (B, by, py, bx, px, C)
    return out.reshape(B, 2 * IH, 2 * IW, Cout)


def linear_k_tiled(x, w, b, *, block_k=256):
    """out = x @ w + b with the contraction (K) axis grid-tiled, accumulated in VMEM."""
    M, K = x.shape
    N = w.shape[1]
    bk = min(block_k, K)
    assert K % bk == 0
    return pl.pallas_call(
        _linear_acc_kernel,
        grid=(K // bk,),
        in_specs=[
            pl.BlockSpec((M, bk), lambda k: (0, k)),
            pl.BlockSpec((bk, N), lambda k: (k, 0)),
            pl.BlockSpec((1, N), lambda k: (0, 0)),
        ],
        out_specs=pl.BlockSpec((M, N), lambda k: (0, 0)),
        out_shape=jax.ShapeDtypeStruct((M, N), F32),
        compiler_params=_ARB_1D,
    )(x, w, b.reshape(1, N))


def linear_n_tiled(x, w, b, *, act, block_n=512):
    """out = act(x @ w + b) with the output (N) axis grid-tiled ('parallel')."""
    M, K = x.shape
    N = w.shape[1]
    bn = min(block_n, N)
    assert N % bn == 0
    return pl.pallas_call(
        functools.partial(_linear_act_kernel, act=act),
        grid=(N // bn,),
        in_specs=[
            pl.BlockSpec((M, K), lambda j: (0, 0)),
            pl.BlockSpec((K, bn), lambda j: (0, j)),
            pl.BlockSpec((1, bn), lambda j: (0, j)),
        ],
        out_specs=pl.BlockSpec((M, bn), lambda j: (0, j)),
        out_shape=jax.ShapeDtypeStruct((M, N), F32),
        compiler_params=_PAR_1D,
    )(x, w, b.reshape(1, N))


# ------------------------------ model forward ------------------------------

def autoencoder_forward(x_nchw, p):
    """Forward pass of the PyTorch Autoencoder (eval mode): NCHW in, NCHW out."""
    B = x_nchw.shape[0]
    x = x_nchw.transpose(0, 2, 3, 1)                               # -> NHWC

    # --------- encoder ---------
    h = conv2d_s2p1(x, p["enc_w1"], p["enc_b1"], act="relu")        # (B, H/2, W/2, 32)
    h = conv2d_s2p1(h, p["enc_w2"], p["enc_b2"], act="relu")        # (B, H/4, W/4, 64)
    _, OH, OW, C2 = h.shape
    flat = h.reshape(B, OH * OW * C2)                               # (oy, ox, c) order (free view)
    latent_dim = p["enc_wl"].shape[0]
    # permute torch Linear weight (torch Flatten order = (c, oy, ox)) to match (oy, ox, c)
    wl = p["enc_wl"].reshape(latent_dim, C2, OH, OW).transpose(2, 3, 1, 0)
    wl = wl.reshape(OH * OW * C2, latent_dim)
    latent = linear_k_tiled(flat, wl, p["enc_bl"])                  # (B, latent_dim)

    # --------- decoder ---------
    wd = p["dec_wl"].reshape(C2, OH, OW, latent_dim).transpose(1, 2, 0, 3)
    wd = wd.reshape(OH * OW * C2, latent_dim).T                     # (latent, OH*OW*C2) in (oy,ox,c)
    bd = p["dec_bl"].reshape(C2, OH, OW).transpose(1, 2, 0).reshape(-1)
    h = linear_n_tiled(latent, wd, bd, act="relu")                  # (B, OH*OW*C2)
    h = h.reshape(B, OH, OW, C2)                                    # NHWC (free view) == Unflatten
    h = conv_transpose2d_s2p1(h, p["dec_w1"], p["dec_b1"], act="relu")      # (B, H/2, W/2, 32)
    h = conv_transpose2d_s2p1(h, p["dec_w2"], p["dec_b2"], act="sigmoid")   # (B, H, W, 3)
    return h.transpose(0, 3, 1, 2)                                  # -> NCHW


# ------------------------------ pure-JAX reference (for a correctness check) ------------------------------

def reference_forward(x_nchw, p):
    dn = ("NCHW", "OIHW", "NCHW")
    y = lax.conv_general_dilated(x_nchw, p["enc_w1"], (2, 2), ((1, 1), (1, 1)),
                                 dimension_numbers=dn, precision=HIGHEST)
    y = jnp.maximum(y + p["enc_b1"][None, :, None, None], 0.0)
    y = lax.conv_general_dilated(y, p["enc_w2"], (2, 2), ((1, 1), (1, 1)),
                                 dimension_numbers=dn, precision=HIGHEST)
    y = jnp.maximum(y + p["enc_b2"][None, :, None, None], 0.0)
    B, C2, OH, OW = y.shape
    latent = jnp.dot(y.reshape(B, -1), p["enc_wl"].T, precision=HIGHEST) + p["enc_bl"]
    h = jnp.maximum(jnp.dot(latent, p["dec_wl"].T, precision=HIGHEST) + p["dec_bl"], 0.0)
    h = h.reshape(B, C2, OH, OW)

    def conv_t(z, w_iohw, b):
        wf = jnp.flip(jnp.transpose(w_iohw, (1, 0, 2, 3)), axis=(2, 3))
        o = lax.conv_general_dilated(z, wf, (1, 1), ((2, 2), (2, 2)),
                                     lhs_dilation=(2, 2), dimension_numbers=dn,
                                     precision=HIGHEST)
        return o + b[None, :, None, None]

    h = jnp.maximum(conv_t(h, p["dec_w1"], p["dec_b1"]), 0.0)
    return jax.nn.sigmoid(conv_t(h, p["dec_w2"], p["dec_b2"]))


# ------------------------------ main ------------------------------

if __name__ == "__main__":
    # The PyTorch module hard-wires a 256x256 input (Linear(64*64*64, latent)); we keep the exact
    # architecture but size the bottleneck Linear to 64*(H/4)*(W/4) for a small 16x16 test input.
    B, H, W = 2, 16, 16
    LATENT = 128
    FLAT = 64 * (H // 4) * (W // 4)

    key = jax.random.PRNGKey(0)
    ks = jax.random.split(key, 13)

    def nrm(k, shape, scale=0.1):
        return scale * jax.random.normal(k, shape, dtype=F32)

    params = {
        # encoder: Conv2d(3,32,4,2,1), Conv2d(32,64,4,2,1), Linear(FLAT, LATENT)
        "enc_w1": nrm(ks[0], (32, 3, 4, 4)),   "enc_b1": nrm(ks[1], (32,)),
        "enc_w2": nrm(ks[2], (64, 32, 4, 4)),  "enc_b2": nrm(ks[3], (64,)),
        "enc_wl": nrm(ks[4], (LATENT, FLAT)),  "enc_bl": nrm(ks[5], (LATENT,)),
        # decoder: Linear(LATENT, FLAT), ConvTranspose2d(64,32,4,2,1), ConvTranspose2d(32,3,4,2,1)
        "dec_wl": nrm(ks[6], (FLAT, LATENT)),  "dec_bl": nrm(ks[7], (FLAT,)),
        "dec_w1": nrm(ks[8], (64, 32, 4, 4)),  "dec_b1": nrm(ks[9], (32,)),
        "dec_w2": nrm(ks[10], (32, 3, 4, 4)),  "dec_b2": nrm(ks[11], (3,)),
    }
    x = jax.random.normal(ks[12], (B, 3, H, W), dtype=F32)

    out = jax.jit(autoencoder_forward)(x, params)
    out = jax.block_until_ready(out)
    assert out.shape == (B, 3, H, W), out.shape
    assert bool(jnp.all(jnp.isfinite(out)))

    ref = reference_forward(x, params)
    err = float(jnp.max(jnp.abs(out - ref)))
    assert err < 1.5e-2, f"mismatch vs reference: max abs err = {err}"

    print("KERNEL_OK")
</pallas_src>

<mosaic_0001>
module attributes {stable_mosaic.version = 11 : i64} {
  func.func @_conv_s2_kernel(%arg0: i32, %arg1: memref<1x9x9x12xf32, #tpu.memory_space<vmem>>, %arg2: memref<4x12x32xf32, #tpu.memory_space<vmem>>, %arg3: memref<1x32xf32, #tpu.memory_space<vmem>>, %arg4: memref<64x32xf32, #tpu.memory_space<vmem>>) attributes {dimension_semantics = [#tpu.dimension_semantics<parallel>], iteration_bounds = array<i64: 2>, scalar_prefetch = 0 : i64, scratch_operands = 0 : i64, tpu.core_type = #tpu.core_type<tc>, window_params = [{transform_indices = @transform_0, window_bounds = array<i64: 1, 9, 9, 12>}, {pipeline_mode = #tpu.pipeline_mode<synchronous>, transform_indices = @transform_1, window_bounds = array<i64: 4, 12, 32>}, {pipeline_mode = #tpu.pipeline_mode<synchronous>, transform_indices = @transform_2, window_bounds = array<i64: 1, 32>}, {transform_indices = @transform_3, window_bounds = array<i64: 64, 32>}]} {
    %cst = arith.constant 0.000000e+00 : f32
    %0 = vector.broadcast %cst : f32 to vector<64x32xf32>
    %c0 = arith.constant 0 : index
    %c0_0 = arith.constant 0 : index
    %c0_1 = arith.constant 0 : index
    %c0_2 = arith.constant 0 : index
    %1 = vector.load %arg1[%c0, %c0_0, %c0_1, %c0_2] : memref<1x9x9x12xf32, #tpu.memory_space<vmem>>, vector<1x8x8x12xf32>
    %2 = vector.shape_cast %1 : vector<1x8x8x12xf32> to vector<8x8x12xf32>
    %3 = vector.shape_cast %2 : vector<8x8x12xf32> to vector<64x12xf32>
    %c0_3 = arith.constant 0 : index
    %c0_4 = arith.constant 0 : index
    %c0_5 = arith.constant 0 : index
    %4 = vector.load %arg2[%c0_3, %c0_4, %c0_5] : memref<4x12x32xf32, #tpu.memory_space<vmem>>, vector<1x12x32xf32>
    %5 = vector.shape_cast %4 : vector<1x12x32xf32> to vector<12x32xf32>
    %cst_6 = arith.constant dense<0.000000e+00> : vector<64x32xf32>
    %6 = tpu.matmul %3, %5, %cst_6 {dimension_numbers = #tpu.dot_dimension_numbers<[1], [0], [0], [1], [0, 0, 1, 1], [], []>} : vector<64x12xf32>, vector<12x32xf32>, vector<64x32xf32> -> vector<64x32xf32>
    %7 = arith.addf %0, %6 : vector<64x32xf32>
    %c0_7 = arith.constant 0 : index
    %c0_8 = arith.constant 0 : index
    %c1 = arith.constant 1 : index
    %c0_9 = arith.constant 0 : index
    %8 = vector.load %arg1[%c0_7, %c0_8, %c1, %c0_9] : memref<1x9x9x12xf32, #tpu.memory_space<vmem>>, vector<1x8x8x12xf32>
    %9 = vector.shape_cast %8 : vector<1x8x8x12xf32> to vector<8x8x12xf32>
    %10 = vector.shape_cast %9 : vector<8x8x12xf32> to vector<64x12xf32>
    %c1_10 = arith.constant 1 : index
    %c0_11 = arith.constant 0 : index
    %c0_12 = arith.constant 0 : index
    %11 = vector.load %arg2[%c1_10, %c0_11, %c0_12] : memref<4x12x32xf32, #tpu.memory_space<vmem>>, vector<1x12x32xf32>
    %12 = vector.shape_cast %11 : vector<1x12x32xf32> to vector<12x32xf32>
    %cst_13 = arith.constant dense<0.000000e+00> : vector<64x32xf32>
    %13 = tpu.matmul %10, %12, %cst_13 {dimension_numbers = #tpu.dot_dimension_numbers<[1], [0], [0], [1], [0, 0, 1, 1], [], []>} : vector<64x12xf32>, vector<12x32xf32>, vector<64x32xf32> -> vector<64x32xf32>
    %14 = arith.addf %7, %13 : vector<64x32xf32>
    %c0_14 = arith.constant 0 : index
    %c1_15 = arith.constant 1 : index
    %c0_16 = arith.constant 0 : index
    %c0_17 = arith.constant 0 : index
    %15 = vector.load %arg1[%c0_14, %c1_15, %c0_16, %c0_17] : memref<1x9x9x12xf32, #tpu.memory_space<vmem>>, vector<1x8x8x12xf32>
    %16 = vector.shape_cast %15 : vector<1x8x8x12xf32> to vector<8x8x12xf32>
    %17 = vector.shape_cast %16 : vector<8x8x12xf32> to vector<64x12xf32>
    %c2 = arith.constant 2 : index
    %c0_18 = arith.constant 0 : index
    %c0_19 = arith.constant 0 : index
    %18 = vector.load %arg2[%c2, %c0_18, %c0_19] : memref<4x12x32xf32, #tpu.memory_space<vmem>>, vector<1x12x32xf32>
    %19 = vector.shape_cast %18 : vector<1x12x32xf32> to vector<12x32xf32>
    %cst_20 = arith.constant dense<0.000000e+00> : vector<64x32xf32>
    %20 = tpu.matmul %17, %19, %cst_20 {dimension_numbers = #tpu.dot_dimension_numbers<[1], [0], [0], [1], [0, 0, 1, 1], [], []>} : vector<64x12xf32>, vector<12x32xf32>, vector<64x32xf32> -> vector<64x32xf32>
    %21 = arith.addf %14, %20 : vector<64x32xf32>
    %c0_21 = arith.constant 0 : index
    %c1_22 = arith.constant 1 : index
    %c1_23 = arith.constant 1 : index
    %c0_24 = arith.constant 0 : index
    %22 = vector.load %arg1[%c0_21, %c1_22, %c1_23, %c0_24] : memref<1x9x9x12xf32, #tpu.memory_space<vmem>>, vector<1x8x8x12xf32>
    %23 = vector.shape_cast %22 : vector<1x8x8x12xf32> to vector<8x8x12xf32>
    %24 = vector.shape_cast %23 : vector<8x8x12xf32> to vector<64x12xf32>
    %c3 = arith.constant 3 : index
    %c0_25 = arith.constant 0 : index
    %c0_26 = arith.constant 0 : index
    %25 = vector.load %arg2[%c3, %c0_25, %c0_26] : memref<4x12x32xf32, #tpu.memory_space<vmem>>, vector<1x12x32xf32>
    %26 = vector.shape_cast %25 : vector<1x12x32xf32> to vector<12x32xf32>
    %cst_27 = arith.constant dense<0.000000e+00> : vector<64x32xf32>
    %27 = tpu.matmul %24, %26, %cst_27 {dimension_numbers = #tpu.dot_dimension_numbers<[1], [0], [0], [1], [0, 0, 1, 1], [], []>} : vector<64x12xf32>, vector<12x32xf32>, vector<64x32xf32> -> vector<64x32xf32>
    %28 = arith.addf %21, %27 : vector<64x32xf32>
    %c0_28 = arith.constant 0 : index
    %c0_29 = arith.constant 0 : index
    %29 = vector.load %arg3[%c0_28, %c0_29] : memref<1x32xf32, #tpu.memory_space<vmem>>, vector<1x32xf32>
    %30 = vector.broadcast %29 : vector<1x32xf32> to vector<64x32xf32>
    %31 = arith.addf %28, %30 : vector<64x32xf32>
    %cst_30 = arith.constant 0.000000e+00 : f32
    %32 = vector.broadcast %cst_30 : f32 to vector<64x32xf32>
    %33 = arith.maximumf %31, %32 : vector<64x32xf32>
    %c0_31 = arith.constant 0 : index
    %c0_32 = arith.constant 0 : index
    %34 = vector.load %arg4[%c0_31, %c0_32] : memref<64x32xf32, #tpu.memory_space<vmem>>, vector<64x32xf32>
    tpu.vector_store %arg4[%c0_31, %c0_32], %33 {strides = array<i32>} : memref<64x32xf32, #tpu.memory_space<vmem>>, vector<64x32xf32>,
    return
  }
  func.func @transform_0(%arg0: i32) -> (i32, i32, i32, i32) {
    %c0_i32 = arith.constant 0 : i32
    %c0_i32_0 = arith.constant 0 : i32
    %c0_i32_1 = arith.constant 0 : i32
    %c0_i32_2 = arith.constant 0 : i32
    return %arg0, %c0_i32, %c0_i32_0, %c0_i32_1 : i32, i32, i32, i32
  }
  func.func @transform_1(%arg0: i32) -> (i32, i32, i32) {
    %c0_i32 = arith.constant 0 : i32
    %c0_i32_0 = arith.constant 0 : i32
    %c0_i32_1 = arith.constant 0 : i32
    %c0_i32_2 = arith.constant 0 : i32
    return %c0_i32, %c0_i32_0, %c0_i32_1 : i32, i32, i32
  }
  func.func @transform_2(%arg0: i32) -> (i32, i32) {
    %c0_i32 = arith.constant 0 : i32
    %c0_i32_0 = arith.constant 0 : i32
    %c0_i32_1 = arith.constant 0 : i32
    return %c0_i32, %c0_i32_0 : i32, i32
  }
  func.func @transform_3(%arg0: i32) -> (i32, i32) {
    %c0_i32 = arith.constant 0 : i32
    %c0_i32_0 = arith.constant 0 : i32
    return %arg0, %c0_i32 : i32, i32
  }
}

module attributes {stable_mosaic.version = 11 : i64} {
  func.func @_conv_s2_kernel(%arg0: i32, %arg1: memref<1x5x9x128xf32, #tpu.memory_space<vmem>>, %arg2: memref<4x128x64xf32, #tpu.memory_space<vmem>>, %arg3: memref<1x64xf32, #tpu.memory_space<vmem>>, %arg4: memref<32x64xf32, #tpu.memory_space<vmem>>) attributes {dimension_semantics = [#tpu.dimension_semantics<parallel>], iteration_bounds = array<i64: 2>, scalar_prefetch = 0 : i64, scratch_operands = 0 : i64, tpu.core_type = #tpu.core_type<tc>, window_params = [{transform_indices = @transform_0, window_bounds = array<i64: 1, 5, 9, 128>}, {pipeline_mode = #tpu.pipeline_mode<synchronous>, transform_indices = @transform_1, window_bounds = array<i64: 4, 128, 64>}, {pipeline_mode = #tpu.pipeline_mode<synchronous>, transform_indices = @transform_2, window_bounds = array<i64: 1, 64>}, {transform_indices = @transform_3, window_bounds = array<i64: 32, 64>}]} {
    %cst = arith.constant 0.000000e+00 : f32
    %0 = vector.broadcast %cst : f32 to vector<32x64xf32>
    %c0 = arith.constant 0 : index
    %c0_0 = arith.constant 0 : index
    %c0_1 = arith.constant 0 : index
    %c0_2 = arith.constant 0 : index
    %1 = vector.load %arg1[%c0, %c0_0, %c0_1, %c0_2] : memref<1x5x9x128xf32, #tpu.memory_space<vmem>>, vector<1x4x8x128xf32>
    %2 = vector.shape_cast %1 : vector<1x4x8x128xf32> to vector<4x8x128xf32>
    %3 = vector.shape_cast %2 : vector<4x8x128xf32> to vector<32x128xf32>
    %c0_3 = arith.constant 0 : index
    %c0_4 = arith.constant 0 : index
    %c0_5 = arith.constant 0 : index
    %4 = vector.load %arg2[%c0_3, %c0_4, %c0_5] : memref<4x128x64xf32, #tpu.memory_space<vmem>>, vector<1x128x64xf32>
    %5 = vector.shape_cast %4 : vector<1x128x64xf32> to vector<128x64xf32>
    %cst_6 = arith.constant dense<0.000000e+00> : vector<32x64xf32>
    %6 = tpu.matmul %3, %5, %cst_6 {dimension_numbers = #tpu.dot_dimension_numbers<[1], [0], [0], [1], [0, 0, 1, 1], [], []>} : vector<32x128xf32>, vector<128x64xf32>, vector<32x64xf32> -> vector<32x64xf32>
    %7 = arith.addf %0, %6 : vector<32x64xf32>
    %c0_7 = arith.constant 0 : index
    %c0_8 = arith.constant 0 : index
    %c1 = arith.constant 1 : index
    %c0_9 = arith.constant 0 : index
    %8 = vector.load %arg1[%c0_7, %c0_8, %c1, %c0_9] : memref<1x5x9x128xf32, #tpu.memory_space<vmem>>, vector<1x4x8x128xf32>
    %9 = vector.shape_cast %8 : vector<1x4x8x128xf32> to vector<4x8x128xf32>
    %10 = vector.shape_cast %9 : vector<4x8x128xf32> to vector<32x128xf32>
    %c1_10 = arith.constant 1 : index
    %c0_11 = arith.constant 0 : index
    %c0_12 = arith.constant 0 : index
    %11 = vector.load %arg2[%c1_10, %c0_11, %c0_12] : memref<4x128x64xf32, #tpu.memory_space<vmem>>, vector<1x128x64xf32>
    %12 = vector.shape_cast %11 : vector<1x128x64xf32> to vector<128x64xf32>
    %cst_13 = arith.constant dense<0.000000e+00> : vector<32x64xf32>
    %13 = tpu.matmul %10, %12, %cst_13 {dimension_numbers = #tpu.dot_dimension_numbers<[1], [0], [0], [1], [0, 0, 1, 1], [], []>} : vector<32x128xf32>, vector<128x64xf32>, vector<32x64xf32> -> vector<32x64xf32>
    %14 = arith.addf %7, %13 : vector<32x64xf32>
    %c0_14 = arith.constant 0 : index
    %c1_15 = arith.constant 1 : index
    %c0_16 = arith.constant 0 : index
    %c0_17 = arith.constant 0 : index
    %15 = vector.load %arg1[%c0_14, %c1_15, %c0_16, %c0_17] : memref<1x5x9x128xf32, #tpu.memory_space<vmem>>, vector<1x4x8x128xf32>
    %16 = vector.shape_cast %15 : vector<1x4x8x128xf32> to vector<4x8x128xf32>
    %17 = vector.shape_cast %16 : vector<4x8x128xf32> to vector<32x128xf32>
    %c2 = arith.constant 2 : index
    %c0_18 = arith.constant 0 : index
    %c0_19 = arith.constant 0 : index
    %18 = vector.load %arg2[%c2, %c0_18, %c0_19] : memref<4x128x64xf32, #tpu.memory_space<vmem>>, vector<1x128x64xf32>
    %19 = vector.shape_cast %18 : vector<1x128x64xf32> to vector<128x64xf32>
    %cst_20 = arith.constant dense<0.000000e+00> : vector<32x64xf32>
    %20 = tpu.matmul %17, %19, %cst_20 {dimension_numbers = #tpu.dot_dimension_numbers<[1], [0], [0], [1], [0, 0, 1, 1], [], []>} : vector<32x128xf32>, vector<128x64xf32>, vector<32x64xf32> -> vector<32x64xf32>
    %21 = arith.addf %14, %20 : vector<32x64xf32>
    %c0_21 = arith.constant 0 : index
    %c1_22 = arith.constant 1 : index
    %c1_23 = arith.constant 1 : index
    %c0_24 = arith.constant 0 : index
    %22 = vector.load %arg1[%c0_21, %c1_22, %c1_23, %c0_24] : memref<1x5x9x128xf32, #tpu.memory_space<vmem>>, vector<1x4x8x128xf32>
    %23 = vector.shape_cast %22 : vector<1x4x8x128xf32> to vector<4x8x128xf32>
    %24 = vector.shape_cast %23 : vector<4x8x128xf32> to vector<32x128xf32>
    %c3 = arith.constant 3 : index
    %c0_25 = arith.constant 0 : index
    %c0_26 = arith.constant 0 : index
    %25 = vector.load %arg2[%c3, %c0_25, %c0_26] : memref<4x128x64xf32, #tpu.memory_space<vmem>>, vector<1x128x64xf32>
    %26 = vector.shape_cast %25 : vector<1x128x64xf32> to vector<128x64xf32>
    %cst_27 = arith.constant dense<0.000000e+00> : vector<32x64xf32>
    %27 = tpu.matmul %24, %26, %cst_27 {dimension_numbers = #tpu.dot_dimension_numbers<[1], [0], [0], [1], [0, 0, 1, 1], [], []>} : vector<32x128xf32>, vector<128x64xf32>, vector<32x64xf32> -> vector<32x64xf32>
    %28 = arith.addf %21, %27 : vector<32x64xf32>
    %c0_28 = arith.constant 0 : index
    %c0_29 = arith.constant 0 : index
    %29 = vector.load %arg3[%c0_28, %c0_29] : memref<1x64xf32, #tpu.memory_space<vmem>>, vector<1x64xf32>
    %30 = vector.broadcast %29 : vector<1x64xf32> to vector<32x64xf32>
    %31 = arith.addf %28, %30 : vector<32x64xf32>
    %cst_30 = arith.constant 0.000000e+00 : f32
    %32 = vector.broadcast %cst_30 : f32 to vector<32x64xf32>
    %33 = arith.maximumf %31, %32 : vector<32x64xf32>
    %c0_31 = arith.constant 0 : index
    %c0_32 = arith.constant 0 : index
    %34 = vector.load %arg4[%c0_31, %c0_32] : memref<32x64xf32, #tpu.memory_space<vmem>>, vector<32x64xf32>
    tpu.vector_store %arg4[%c0_31, %c0_32], %33 {strides = array<i32>} : memref<32x64xf32, #tpu.memory_space<vmem>>, vector<32x64xf32>,
    return
  }
  func.func @transform_0(%arg0: i32) -> (i32, i32, i32, i32) {
    %c0_i32 = arith.constant 0 : i32
    %c0_i32_0 = arith.constant 0 : i32
    %c0_i32_1 = arith.constant 0 : i32
    %c0_i32_2 = arith.constant 0 : i32
    return %arg0, %c0_i32, %c0_i32_0, %c0_i32_1 : i32, i32, i32, i32
  }
  func.func @transform_1(%arg0: i32) -> (i32, i32, i32) {
    %c0_i32 = arith.constant 0 : i32
    %c0_i32_0 = arith.constant 0 : i32
    %c0_i32_1 = arith.constant 0 : i32
    %c0_i32_2 = arith.constant 0 : i32
    return %c0_i32, %c0_i32_0, %c0_i32_1 : i32, i32, i32
  }
  func.func @transform_2(%arg0: i32) -> (i32, i32) {
    %c0_i32 = arith.constant 0 : i32
    %c0_i32_0 = arith.constant 0 : i32
    %c0_i32_1 = arith.constant 0 : i32
    return %c0_i32, %c0_i32_0 : i32, i32
  }
  func.func @transform_3(%arg0: i32) -> (i32, i32) {
    %c0_i32 = arith.constant 0 : i32
    %c0_i32_0 = arith.constant 0 : i32
    return %arg0, %c0_i32 : i32, i32
  }
}

module attributes {stable_mosaic.version = 11 : i64} {
  func.func @_linear_acc_kernel(%arg0: i32, %arg1: memref<2x256xf32, #tpu.memory_space<vmem>>, %arg2: memref<256x128xf32, #tpu.memory_space<vmem>>, %arg3: memref<1x128xf32, #tpu.memory_space<vmem>>, %arg4: memref<2x128xf32, #tpu.memory_space<vmem>>) attributes {dimension_semantics = [#tpu.dimension_semantics<arbitrary>], iteration_bounds = array<i64: 4>, scalar_prefetch = 0 : i64, scratch_operands = 0 : i64, tpu.core_type = #tpu.core_type<tc>, window_params = [{transform_indices = @transform_0, window_bounds = array<i64: 2, 256>}, {transform_indices = @transform_1, window_bounds = array<i64: 256, 128>}, {pipeline_mode = #tpu.pipeline_mode<synchronous>, transform_indices = @transform_2, window_bounds = array<i64: 1, 128>}, {pipeline_mode = #tpu.pipeline_mode<synchronous>, transform_indices = @transform_3, window_bounds = array<i64: 2, 128>}]} {
    %c0_i32 = arith.constant 0 : i32
    %0 = arith.cmpi eq, %arg0, %c0_i32 : i32
    %1 = arith.extui %0 : i1 to i32
    %c0_i32_0 = arith.constant 0 : i32
    %2 = arith.cmpi ne, %1, %c0_i32_0 : i32
    scf.if %2 {
      %c0_8 = arith.constant 0 : index
      %c0_9 = arith.constant 0 : index
      %9 = vector.load %arg3[%c0_8, %c0_9] : memref<1x128xf32, #tpu.memory_space<vmem>>, vector<1x128xf32>
      %10 = vector.shape_cast %9 : vector<1x128xf32> to vector<1x128xf32>
      %11 = vector.broadcast %10 : vector<1x128xf32> to vector<2x128xf32>
      %c0_10 = arith.constant 0 : index
      %c0_11 = arith.constant 0 : index
      %12 = vector.load %arg4[%c0_10, %c0_11] : memref<2x128xf32, #tpu.memory_space<vmem>>, vector<2x128xf32>
      tpu.vector_store %arg4[%c0_10, %c0_11], %11 {strides = array<i32>} : memref<2x128xf32, #tpu.memory_space<vmem>>, vector<2x128xf32>,
    } else {
    }
    %c0 = arith.constant 0 : index
    %c0_1 = arith.constant 0 : index
    %3 = vector.load %arg4[%c0, %c0_1] : memref<2x128xf32, #tpu.memory_space<vmem>>, vector<2x128xf32>
    %c0_2 = arith.constant 0 : index
    %c0_3 = arith.constant 0 : index
    %4 = vector.load %arg1[%c0_2, %c0_3] : memref<2x256xf32, #tpu.memory_space<vmem>>, vector<2x256xf32>
    %c0_4 = arith.constant 0 : index
    %c0_5 = arith.constant 0 : index
    %5 = vector.load %arg2[%c0_4, %c0_5] : memref<256x128xf32, #tpu.memory_space<vmem>>, vector<256x128xf32>
    %cst = arith.constant dense<0.000000e+00> : vector<2x128xf32>
    %6 = tpu.matmul %4, %5, %cst {dimension_numbers = #tpu.dot_dimension_numbers<[1], [0], [0], [1], [0, 0, 1, 1], [], []>} : vector<2x256xf32>, vector<256x128xf32>, vector<2x128xf32> -> vector<2x128xf32>
    %7 = arith.addf %3, %6 : vector<2x128xf32>
    %c0_6 = arith.constant 0 : index
    %c0_7 = arith.constant 0 : index
    %8 = vector.load %arg4[%c0_6, %c0_7] : memref<2x128xf32, #tpu.memory_space<vmem>>, vector<2x128xf32>
    tpu.vector_store %arg4[%c0_6, %c0_7], %7 {strides = array<i32>} : memref<2x128xf32, #tpu.memory_space<vmem>>, vector<2x128xf32>,
    return
  }
  func.func @transform_0(%arg0: i32) -> (i32, i32) {
    %c0_i32 = arith.constant 0 : i32
    %c0_i32_0 = arith.constant 0 : i32
    return %c0_i32, %arg0 : i32, i32
  }
  func.func @transform_1(%arg0: i32) -> (i32, i32) {
    %c0_i32 = arith.constant 0 : i32
    %c0_i32_0 = arith.constant 0 : i32
    return %arg0, %c0_i32 : i32, i32
  }
  func.func @transform_2(%arg0: i32) -> (i32, i32) {
    %c0_i32 = arith.constant 0 : i32
    %c0_i32_0 = arith.constant 0 : i32
    %c0_i32_1 = arith.constant 0 : i32
    return %c0_i32, %c0_i32_0 : i32, i32
  }
  func.func @transform_3(%arg0: i32) -> (i32, i32) {
    %c0_i32 = arith.constant 0 : i32
    %c0_i32_0 = arith.constant 0 : i32
    %c0_i32_1 = arith.constant 0 : i32
    return %c0_i32, %c0_i32_0 : i32, i32
  }
}

module attributes {stable_mosaic.version = 11 : i64} {
  func.func @_linear_act_kernel(%arg0: i32, %arg1: memref<2x128xf32, #tpu.memory_space<vmem>>, %arg2: memref<128x512xf32, #tpu.memory_space<vmem>>, %arg3: memref<1x512xf32, #tpu.memory_space<vmem>>, %arg4: memref<2x512xf32, #tpu.memory_space<vmem>>) attributes {dimension_semantics = [#tpu.dimension_semantics<parallel>], iteration_bounds = array<i64: 2>, scalar_prefetch = 0 : i64, scratch_operands = 0 : i64, tpu.core_type = #tpu.core_type<tc>, window_params = [{pipeline_mode = #tpu.pipeline_mode<synchronous>, transform_indices = @transform_0, window_bounds = array<i64: 2, 128>}, {transform_indices = @transform_1, window_bounds = array<i64: 128, 512>}, {transform_indices = @transform_2, window_bounds = array<i64: 1, 512>}, {transform_indices = @transform_3, window_bounds = array<i64: 2, 512>}]} {
    %c0 = arith.constant 0 : index
    %c0_0 = arith.constant 0 : index
    %0 = vector.load %arg1[%c0, %c0_0] : memref<2x128xf32, #tpu.memory_space<vmem>>, vector<2x128xf32>
    %c0_1 = arith.constant 0 : index
    %c0_2 = arith.constant 0 : index
    %1 = vector.load %arg2[%c0_1, %c0_2] : memref<128x512xf32, #tpu.memory_space<vmem>>, vector<128x512xf32>
    %cst = arith.constant dense<0.000000e+00> : vector<2x512xf32>
    %2 = tpu.matmul %0, %1, %cst {dimension_numbers = #tpu.dot_dimension_numbers<[1], [0], [0], [1], [0, 0, 1, 1], [], []>} : vector<2x128xf32>, vector<128x512xf32>, vector<2x512xf32> -> vector<2x512xf32>
    %c0_3 = arith.constant 0 : index
    %c0_4 = arith.constant 0 : index
    %3 = vector.load %arg3[%c0_3, %c0_4] : memref<1x512xf32, #tpu.memory_space<vmem>>, vector<1x512xf32>
    %4 = vector.broadcast %3 : vector<1x512xf32> to vector<2x512xf32>
    %5 = arith.addf %2, %4 : vector<2x512xf32>
    %cst_5 = arith.constant 0.000000e+00 : f32
    %6 = vector.broadcast %cst_5 : f32 to vector<2x512xf32>
    %7 = arith.maximumf %5, %6 : vector<2x512xf32>
    %c0_6 = arith.constant 0 : index
    %c0_7 = arith.constant 0 : index
    %8 = vector.load %arg4[%c0_6, %c0_7] : memref<2x512xf32, #tpu.memory_space<vmem>>, vector<2x512xf32>
    tpu.vector_store %arg4[%c0_6, %c0_7], %7 {strides = array<i32>} : memref<2x512xf32, #tpu.memory_space<vmem>>, vector<2x512xf32>,
    return
  }
  func.func @transform_0(%arg0: i32) -> (i32, i32) {
    %c0_i32 = arith.constant 0 : i32
    %c0_i32_0 = arith.constant 0 : i32
    %c0_i32_1 = arith.constant 0 : i32
    return %c0_i32, %c0_i32_0 : i32, i32
  }
  func.func @transform_1(%arg0: i32) -> (i32, i32) {
    %c0_i32 = arith.constant 0 : i32
    %c0_i32_0 = arith.constant 0 : i32
    return %c0_i32, %arg0 : i32, i32
  }
  func.func @transform_2(%arg0: i32) -> (i32, i32) {
    %c0_i32 = arith.constant 0 : i32
    %c0_i32_0 = arith.constant 0 : i32
    return %c0_i32, %arg0 : i32, i32
  }
  func.func @transform_3(%arg0: i32) -> (i32, i32) {
    %c0_i32 = arith.constant 0 : i32
    %c0_i32_0 = arith.constant 0 : i32
    return %c0_i32, %arg0 : i32, i32
  }
}

module attributes {stable_mosaic.version = 11 : i64} {
  func.func @_convT_s2_kernel(%arg0: i32, %arg1: memref<1x6x10x64xf32, #tpu.memory_space<vmem>>, %arg2: memref<4x4x64x32xf32, #tpu.memory_space<vmem>>, %arg3: memref<1x32xf32, #tpu.memory_space<vmem>>, %arg4: memref<4x32x32xf32, #tpu.memory_space<vmem>>) attributes {dimension_semantics = [#tpu.dimension_semantics<parallel>], iteration_bounds = array<i64: 2>, scalar_prefetch = 0 : i64, scratch_operands = 0 : i64, tpu.core_type = #tpu.core_type<tc>, window_params = [{transform_indices = @transform_0, window_bounds = array<i64: 1, 6, 10, 64>}, {pipeline_mode = #tpu.pipeline_mode<synchronous>, transform_indices = @transform_1, window_bounds = array<i64: 4, 4, 64, 32>}, {pipeline_mode = #tpu.pipeline_mode<synchronous>, transform_indices = @transform_2, window_bounds = array<i64: 1, 32>}, {transform_indices = @transform_3, window_bounds = array<i64: 4, 32, 32>}]} {
    %cst = arith.constant 0.000000e+00 : f32
    %0 = vector.broadcast %cst : f32 to vector<32x32xf32>
    %c0 = arith.constant 0 : index
    %c0_0 = arith.constant 0 : index
    %c0_1 = arith.constant 0 : index
    %c0_2 = arith.constant 0 : index
    %1 = vector.load %arg1[%c0, %c0_0, %c0_1, %c0_2] : memref<1x6x10x64xf32, #tpu.memory_space<vmem>>, vector<1x4x8x64xf32>
    %2 = vector.shape_cast %1 : vector<1x4x8x64xf32> to vector<4x8x64xf32>
    %3 = vector.shape_cast %2 : vector<4x8x64xf32> to vector<32x64xf32>
    %c0_3 = arith.constant 0 : index
    %c0_4 = arith.constant 0 : index
    %c0_5 = arith.constant 0 : index
    %c0_6 = arith.constant 0 : index
    %4 = vector.load %arg2[%c0_3, %c0_4, %c0_5, %c0_6] : memref<4x4x64x32xf32, #tpu.memory_space<vmem>>, vector<1x1x64x32xf32>
    %5 = vector.shape_cast %4 : vector<1x1x64x32xf32> to vector<64x32xf32>
    %cst_7 = arith.constant dense<0.000000e+00> : vector<32x32xf32>
    %6 = tpu.matmul %3, %5, %cst_7 {dimension_numbers = #tpu.dot_dimension_numbers<[1], [0], [0], [1], [0, 0, 1, 1], [], []>} : vector<32x64xf32>, vector<64x32xf32>, vector<32x32xf32> -> vector<32x32xf32>
    %7 = arith.addf %0, %6 : vector<32x32xf32>
    %c0_8 = arith.constant 0 : index
    %c0_9 = arith.constant 0 : index
    %c1 = arith.constant 1 : index
    %c0_10 = arith.constant 0 : index
    %8 = vector.load %arg1[%c0_8, %c0_9, %c1, %c0_10] : memref<1x6x10x64xf32, #tpu.memory_space<vmem>>, vector<1x4x8x64xf32>
    %9 = vector.shape_cast %8 : vector<1x4x8x64xf32> to vector<4x8x64xf32>
    %10 = vector.shape_cast %9 : vector<4x8x64xf32> to vector<32x64xf32>
    %c0_11 = arith.constant 0 : index
    %c1_12 = arith.constant 1 : index
    %c0_13 = arith.constant 0 : index
    %c0_14 = arith.constant 0 : index
    %11 = vector.load %arg2[%c0_11, %c1_12, %c0_13, %c0_14] : memref<4x4x64x32xf32, #tpu.memory_space<vmem>>, vector<1x1x64x32xf32>
    %12 = vector.shape_cast %11 : vector<1x1x64x32xf32> to vector<64x32xf32>
    %cst_15 = arith.constant dense<0.000000e+00> : vector<32x32xf32>
    %13 = tpu.matmul %10, %12, %cst_15 {dimension_numbers = #tpu.dot_dimension_numbers<[1], [0], [0], [1], [0, 0, 1, 1], [], []>} : vector<32x64xf32>, vector<64x32xf32>, vector<32x32xf32> -> vector<32x32xf32>
    %14 = arith.addf %7, %13 : vector<32x32xf32>
    %c0_16 = arith.constant 0 : index
    %c1_17 = arith.constant 1 : index
    %c0_18 = arith.constant 0 : index
    %c0_19 = arith.constant 0 : index
    %15 = vector.load %arg1[%c0_16, %c1_17, %c0_18, %c0_19] : memref<1x6x10x64xf32, #tpu.memory_space<vmem>>, vector<1x4x8x64xf32>
    %16 = vector.shape_cast %15 : vector<1x4x8x64xf32> to vector<4x8x64xf32>
    %17 = vector.shape_cast %16 : vector<4x8x64xf32> to vector<32x64xf32>
    %c0_20 = arith.constant 0 : index
    %c2 = arith.constant 2 : index
    %c0_21 = arith.constant 0 : index
    %c0_22 = arith.constant 0 : index
    %18 = vector.load %arg2[%c0_20, %c2, %c0_21, %c0_22] : memref<4x4x64x32xf32, #tpu.memory_space<vmem>>, vector<1x1x64x32xf32>
    %19 = vector.shape_cast %18 : vector<1x1x64x32xf32> to vector<64x32xf32>
    %cst_23 = arith.constant dense<0.000000e+00> : vector<32x32xf32>
    %20 = tpu.matmul %17, %19, %cst_23 {dimension_numbers = #tpu.dot_dimension_numbers<[1], [0], [0], [1], [0, 0, 1, 1], [], []>} : vector<32x64xf32>, vector<64x32xf32>, vector<32x32xf32> -> vector<32x32xf32>
    %21 = arith.addf %14, %20 : vector<32x32xf32>
    %c0_24 = arith.constant 0 : index
    %c1_25 = arith.constant 1 : index
    %c1_26 = arith.constant 1 : index
    %c0_27 = arith.constant 0 : index
    %22 = vector.load %arg1[%c0_24, %c1_25, %c1_26, %c0_27] : memref<1x6x10x64xf32, #tpu.memory_space<vmem>>, vector<1x4x8x64xf32>
    %23 = vector.shape_cast %22 : vector<1x4x8x64xf32> to vector<4x8x64xf32>
    %24 = vector.shape_cast %23 : vector<4x8x64xf32> to vector<32x64xf32>
    %c0_28 = arith.constant 0 : index
    %c3 = arith.constant 3 : index
    %c0_29 = arith.constant 0 : index
    %c0_30 = arith.constant 0 : index
    %25 = vector.load %arg2[%c0_28, %c3, %c0_29, %c0_30] : memref<4x4x64x32xf32, #tpu.memory_space<vmem>>, vector<1x1x64x32xf32>
    %26 = vector.shape_cast %25 : vector<1x1x64x32xf32> to vector<64x32xf32>
    %cst_31 = arith.constant dense<0.000000e+00> : vector<32x32xf32>
    %27 = tpu.matmul %24, %26, %cst_31 {dimension_numbers = #tpu.dot_dimension_numbers<[1], [0], [0], [1], [0, 0, 1, 1], [], []>} : vector<32x64xf32>, vector<64x32xf32>, vector<32x32xf32> -> vector<32x32xf32>
    %28 = arith.addf %21, %27 : vector<32x32xf32>
    %c0_32 = arith.constant 0 : index
    %c0_33 = arith.constant 0 : index
    %29 = vector.load %arg3[%c0_32, %c0_33] : memref<1x32xf32, #tpu.memory_space<vmem>>, vector<1x32xf32>
    %30 = vector.broadcast %29 : vector<1x32xf32> to vector<32x32xf32>
    %31 = arith.addf %28, %30 : vector<32x32xf32>
    %cst_34 = arith.constant 0.000000e+00 : f32
    %32 = vector.broadcast %cst_34 : f32 to vector<32x32xf32>
    %33 = arith.maximumf %31, %32 : vector<32x32xf32>
    %c0_35 = arith.constant 0 : index
    %c0_36 = arith.constant 0 : index
    %c0_37 = arith.constant 0 : index
    %34 = vector.load %arg4[%c0_35, %c0_36, %c0_37] : memref<4x32x32xf32, #tpu.memory_space<vmem>>, vector<1x32x32xf32>
    %35 = vector.shape_cast %34 : vector<1x32x32xf32> to vector<32x32xf32>
    %36 = vector.shape_cast %33 : vector<32x32xf32> to vector<1x32x32xf32>
    tpu.vector_store %arg4[%c0_35, %c0_36, %c0_37], %36 {strides = array<i32>} : memref<4x32x32xf32, #tpu.memory_space<vmem>>, vector<1x32x32xf32>,
    %cst_38 = arith.constant 0.000000e+00 : f32
    %37 = vector.broadcast %cst_38 : f32 to vector<32x32xf32>
    %c0_39 = arith.constant 0 : index
    %c0_40 = arith.constant 0 : index
    %c1_41 = arith.constant 1 : index
    %c0_42 = arith.constant 0 : index
    %38 = vector.load %arg1[%c0_39, %c0_40, %c1_41, %c0_42] : memref<1x6x10x64xf32, #tpu.memory_space<vmem>>, vector<1x4x8x64xf32>
    %39 = vector.shape_cast %38 : vector<1x4x8x64xf32> to vector<4x8x64xf32>
    %40 = vector.shape_cast %39 : vector<4x8x64xf32> to vector<32x64xf32>
    %c1_43 = arith.constant 1 : index
    %c0_44 = arith.constant 0 : index
    %c0_45 = arith.constant 0 : index
    %c0_46 = arith.constant 0 : index
    %41 = vector.load %arg2[%c1_43, %c0_44, %c0_45, %c0_46] : memref<4x4x64x32xf32, #tpu.memory_space<vmem>>, vector<1x1x64x32xf32>
    %42 = vector.shape_cast %41 : vector<1x1x64x32xf32> to vector<64x32xf32>
    %cst_47 = arith.constant dense<0.000000e+00> : vector<32x32xf32>
    %43 = tpu.matmul %40, %42, %cst_47 {dimension_numbers = #tpu.dot_dimension_numbers<[1], [0], [0], [1], [0, 0, 1, 1], [], []>} : vector<32x64xf32>, vector<64x32xf32>, vector<32x32xf32> -> vector<32x32xf32>
    %44 = arith.addf %37, %43 : vector<32x32xf32>
    %c0_48 = arith.constant 0 : index
    %c0_49 = arith.constant 0 : index
    %c2_50 = arith.constant 2 : index
    %c0_51 = arith.constant 0 : index
    %45 = vector.load %arg1[%c0_48, %c0_49, %c2_50, %c0_51] : memref<1x6x10x64xf32, #tpu.memory_space<vmem>>, vector<1x4x8x64xf32>
    %46 = vector.shape_cast %45 : vector<1x4x8x64xf32> to vector<4x8x64xf32>
    %47 = vector.shape_cast %46 : vector<4x8x64xf32> to vector<32x64xf32>
    %c1_52 = arith.constant 1 : index
    %c1_53 = arith.constant 1 : index
    %c0_54 = arith.constant 0 : index
    %c0_55 = arith.constant 0 : index
    %48 = vector.load %arg2[%c1_52, %c1_53, %c0_54, %c0_55] : memref<4x4x64x32xf32, #tpu.memory_space<vmem>>, vector<1x1x64x32xf32>
    %49 = vector.shape_cast %48 : vector<1x1x64x32xf32> to vector<64x32xf32>
    %cst_56 = arith.constant dense<0.000000e+00> : vector<32x32xf32>
    %50 = tpu.matmul %47, %49, %cst_56 {dimension_numbers = #tpu.dot_dimension_numbers<[1], [0], [0], [1], [0, 0, 1, 1], [], []>} : vector<32x64xf32>, vector<64x32xf32>, vector<32x32xf32> -> vector<32x32xf32>
    %51 = arith.addf %44, %50 : vector<32x32xf32>
    %c0_57 = arith.constant 0 : index
    %c1_58 = arith.constant 1 : index
    %c1_59 = arith.constant 1 : index
    %c0_60 = arith.constant 0 : index
    %52 = vector.load %arg1[%c0_57, %c1_58, %c1_59, %c0_60] : memref<1x6x10x64xf32, #tpu.memory_space<vmem>>, vector<1x4x8x64xf32>
    %53 = vector.shape_cast %52 : vector<1x4x8x64xf32> to vector<4x8x64xf32>
    %54 = vector.shape_cast %53 : vector<4x8x64xf32> to vector<32x64xf32>
    %c1_61 = arith.constant 1 : index
    %c2_62 = arith.constant 2 : index
    %c0_63 = arith.constant 0 : index
    %c0_64 = arith.constant 0 : index
    %55 = vector.load %arg2[%c1_61, %c2_62, %c0_63, %c0_64] : memref<4x4x64x32xf32, #tpu.memory_space<vmem>>, vector<1x1x64x32xf32>
    %56 = vector.shape_cast %55 : vector<1x1x64x32xf32> to vector<64x32xf32>
    %cst_65 = arith.constant dense<0.000000e+00> : vector<32x32xf32>
    %57 = tpu.matmul %54, %56, %cst_65 {dimension_numbers = #tpu.dot_dimension_numbers<[1], [0], [0], [1], [0, 0, 1, 1], [], []>} : vector<32x64xf32>, vector<64x32xf32>, vector<32x32xf32> -> vector<32x32xf32>
    %58 = arith.addf %51, %57 : vector<32x32xf32>
    %c0_66 = arith.constant 0 : index
    %c1_67 = arith.constant 1 : index
    %c2_68 = arith.constant 2 : index
    %c0_69 = arith.constant 0 : index
    %59 = vector.load %arg1[%c0_66, %c1_67, %c2_68, %c0_69] : memref<1x6x10x64xf32, #tpu.memory_space<vmem>>, vector<1x4x8x64xf32>
    %60 = vector.shape_cast %59 : vector<1x4x8x64xf32> to vector<4x8x64xf32>
    %61 = vector.shape_cast %60 : vector<4x8x64xf32> to vector<32x64xf32>
    %c1_70 = arith.constant 1 : index
    %c3_71 = arith.constant 3 : index
    %c0_72 = arith.constant 0 : index
    %c0_73 = arith.constant 0 : index
    %62 = vector.load %arg2[%c1_70, %c3_71, %c0_72, %c0_73] : memref<4x4x64x32xf32, #tpu.memory_space<vmem>>, vector<1x1x64x32xf32>
    %63 = vector.shape_cast %62 : vector<1x1x64x32xf32> to vector<64x32xf32>
    %cst_74 = arith.constant dense<0.000000e+00> : vector<32x32xf32>
    %64 = tpu.matmul %61, %63, %cst_74 {dimension_numbers = #tpu.dot_dimension_numbers<[1], [0], [0], [1], [0, 0, 1, 1], [], []>} : vector<32x64xf32>, vector<64x32xf32>, vector<32x32xf32> -> vector<32x32xf32>
    %65 = arith.addf %58, %64 : vector<32x32xf32>
    %c0_75 = arith.constant 0 : index
    %c0_76 = arith.constant 0 : index
    %66 = vector.load %arg3[%c0_75, %c0_76] : memref<1x32xf32, #tpu.memory_space<vmem>>, vector<1x32xf32>
    %67 = vector.broadcast %66 : vector<1x32xf32> to vector<32x32xf32>
    %68 = arith.addf %65, %67 : vector<32x32xf32>
    %cst_77 = arith.constant 0.000000e+00 : f32
    %69 = vector.broadcast %cst_77 : f32 to vector<32x32xf32>
    %70 = arith.maximumf %68, %69 : vector<32x32xf32>
    %c1_78 = arith.constant 1 : index
    %c0_79 = arith.constant 0 : index
    %c0_80 = arith.constant 0 : index
    %71 = vector.load %arg4[%c1_78, %c0_79, %c0_80] : memref<4x32x32xf32, #tpu.memory_space<vmem>>, vector<1x32x32xf32>
    %72 = vector.shape_cast %71 : vector<1x32x32xf32> to vector<32x32xf32>
    %73 = vector.shape_cast %70 : vector<32x32xf32> to vector<1x32x32xf32>
    tpu.vector_store %arg4[%c1_78, %c0_79, %c0_80], %73 {strides = array<i32>} : memref<4x32x32xf32, #tpu.memory_space<vmem>>, vector<1x32x32xf32>,
    %cst_81 = arith.constant 0.000000e+00 : f32
    %74 = vector.broadcast %cst_81 : f32 to vector<32x32xf32>
    %c0_82 = arith.constant 0 : index
    %c1_83 = arith.constant 1 : index
    %c0_84 = arith.constant 0 : index
    %c0_85 = arith.constant 0 : index
    %75 = vector.load %arg1[%c0_82, %c1_83, %c0_84, %c0_85] : memref<1x6x10x64xf32, #tpu.memory_space<vmem>>, vector<1x4x8x64xf32>
    %76 = vector.shape_cast %75 : vector<1x4x8x64xf32> to vector<4x8x64xf32>
    %77 = vector.shape_cast %76 : vector<4x8x64xf32> to vector<32x64xf32>
    %c2_86 = arith.constant 2 : index
    %c0_87 = arith.constant 0 : index
    %c0_88 = arith.constant 0 : index
    %c0_89 = arith.constant 0 : index
    %78 = vector.load %arg2[%c2_86, %c0_87, %c0_88, %c0_89] : memref<4x4x64x32xf32, #tpu.memory_space<vmem>>, vector<1x1x64x32xf32>
    %79 = vector.shape_cast %78 : vector<1x1x64x32xf32> to vector<64x32xf32>
    %cst_90 = arith.constant dense<0.000000e+00> : vector<32x32xf32>
    %80 = tpu.matmul %77, %79, %cst_90 {dimension_numbers = #tpu.dot_dimension_numbers<[1], [0], [0], [1], [0, 0, 1, 1], [], []>} : vector<32x64xf32>, vector<64x32xf32>, vector<32x32xf32> -> vector<32x32xf32>
    %81 = arith.addf %74, %80 : vector<32x32xf32>
    %c0_91 = arith.constant 0 : index
    %c1_92 = arith.constant 1 : index
    %c1_93 = arith.constant 1 : index
    %c0_94 = arith.constant 0 : index
    %82 = vector.load %arg1[%c0_91, %c1_92, %c1_93, %c0_94] : memref<1x6x10x64xf32, #tpu.memory_space<vmem>>, vector<1x4x8x64xf32>
    %83 = vector.shape_cast %82 : vector<1x4x8x64xf32> to vector<4x8x64xf32>
    %84 = vector.shape_cast %83 : vector<4x8x64xf32> to vector<32x64xf32>
    %c2_95 = arith.constant 2 : index
    %c1_96 = arith.constant 1 : index
    %c0_97 = arith.constant 0 : index
    %c0_98 = arith.constant 0 : index
    %85 = vector.load %arg2[%c2_95, %c1_96, %c0_97, %c0_98] : memref<4x4x64x32xf32, #tpu.memory_space<vmem>>, vector<1x1x64x32xf32>
    %86 = vector.shape_cast %85 : vector<1x1x64x32xf32> to vector<64x32xf32>
    %cst_99 = arith.constant dense<0.000000e+00> : vector<32x32xf32>
    %87 = tpu.matmul %84, %86, %cst_99 {dimension_numbers = #tpu.dot_dimension_numbers<[1], [0], [0], [1], [0, 0, 1, 1], [], []>} : vector<32x64xf32>, vector<64x32xf32>, vector<32x32xf32> -> vector<32x32xf32>
    %88 = arith.addf %81, %87 : vector<32x32xf32>
    %c0_100 = arith.constant 0 : index
    %c2_101 = arith.constant 2 : index
    %c0_102 = arith.constant 0 : index
    %c0_103 = arith.constant 0 : index
    %89 = vector.load %arg1[%c0_100, %c2_101, %c0_102, %c0_103] : memref<1x6x10x64xf32, #tpu.memory_space<vmem>>, vector<1x4x8x64xf32>
    %90 = vector.shape_cast %89 : vector<1x4x8x64xf32> to vector<4x8x64xf32>
    %91 = vector.shape_cast %90 : vector<4x8x64xf32> to vector<32x64xf32>
    %c2_104 = arith.constant 2 : index
    %c2_105 = arith.constant 2 : index
    %c0_106 = arith.constant 0 : index
    %c0_107 = arith.constant 0 : index
    %92 = vector.load %arg2[%c2_104, %c2_105, %c0_106, %c0_107] : memref<4x4x64x32xf32, #tpu.memory_space<vmem>>, vector<1x1x64x32xf32>
    %93 = vector.shape_cast %92 : vector<1x1x64x32xf32> to vector<64x32xf32>
    %cst_108 = arith.constant dense<0.000000e+00> : vector<32x32xf32>
    %94 = tpu.matmul %91, %93, %cst_108 {dimension_numbers = #tpu.dot_dimension_numbers<[1], [0], [0], [1], [0, 0, 1, 1], [], []>} : vector<32x64xf32>, vector<64x32xf32>, vector<32x32xf32> -> vector<32x32xf32>
    %95 = arith.addf %88, %94 : vector<32x32xf32>
    %c0_109 = arith.constant 0 : index
    %c2_110 = arith.constant 2 : index
    %c1_111 = arith.constant 1 : index
    %c0_112 = arith.constant 0 : index
    %96 = vector.load %arg1[%c0_109, %c2_110, %c1_111, %c0_112] : memref<1x6x10x64xf32, #tpu.memory_space<vmem>>, vector<1x4x8x64xf32>
    %97 = vector.shape_cast %96 : vector<1x4x8x64xf32> to vector<4x8x64xf32>
    %98 = vector.shape_cast %97 : vector<4x8x64xf32> to vector<32x64xf32>
    %c2_113 = arith.constant 2 : index
    %c3_114 = arith.constant 3 : index
    %c0_115 = arith.constant 0 : index
    %c0_116 = arith.constant 0 : index
    %99 = vector.load %arg2[%c2_113, %c3_114, %c0_115, %c0_116] : memref<4x4x64x32xf32, #tpu.memory_space<vmem>>, vector<1x1x64x32xf32>
    %100 = vector.shape_cast %99 : vector<1x1x64x32xf32> to vector<64x32xf32>
    %cst_117 = arith.constant dense<0.000000e+00> : vector<32x32xf32>
    %101 = tpu.matmul %98, %100, %cst_117 {dimension_numbers = #tpu.dot_dimension_numbers<[1], [0], [0], [1], [0, 0, 1, 1], [], []>} : vector<32x64xf32>, vector<64x32xf32>, vector<32x32xf32> -> vector<32x32xf32>
    %102 = arith.addf %95, %101 : vector<32x32xf32>
    %c0_118 = arith.constant 0 : index
    %c0_119 = arith.constant 0 : index
    %103 = vector.load %arg3[%c0_118, %c0_119] : memref<1x32xf32, #tpu.memory_space<vmem>>, vector<1x32xf32>
    %104 = vector.broadcast %103 : vector<1x32xf32> to vector<32x32xf32>
    %105 = arith.addf %102, %104 : vector<32x32xf32>
    %cst_120 = arith.constant 0.000000e+00 : f32
    %106 = vector.broadcast %cst_120 : f32 to vector<32x32xf32>
    %107 = arith.maximumf %105, %106 : vector<32x32xf32>
    %c2_121 = arith.constant 2 : index
    %c0_122 = arith.constant 0 : index
    %c0_123 = arith.constant 0 : index
    %108 = vector.load %arg4[%c2_121, %c0_122, %c0_123] : memref<4x32x32xf32, #tpu.memory_space<vmem>>, vector<1x32x32xf32>
    %109 = vector.shape_cast %108 : vector<1x32x32xf32> to vector<32x32xf32>
    %110 = vector.shape_cast %107 : vector<32x32xf32> to vector<1x32x32xf32>
    tpu.vector_store %arg4[%c2_121, %c0_122, %c0_123], %110 {strides = array<i32>} : memref<4x32x32xf32, #tpu.memory_space<vmem>>, vector<1x32x32xf32>,
    %cst_124 = arith.constant 0.000000e+00 : f32
    %111 = vector.broadcast %cst_124 : f32 to vector<32x32xf32>
    %c0_125 = arith.constant 0 : index
    %c1_126 = arith.constant 1 : index
    %c1_127 = arith.constant 1 : index
    %c0_128 = arith.constant 0 : index
    %112 = vector.load %arg1[%c0_125, %c1_126, %c1_127, %c0_128] : memref<1x6x10x64xf32, #tpu.memory_space<vmem>>, vector<1x4x8x64xf32>
    %113 = vector.shape_cast %112 : vector<1x4x8x64xf32> to vector<4x8x64xf32>
    %114 = vector.shape_cast %113 : vector<4x8x64xf32> to vector<32x64xf32>
    %c3_129 = arith.constant 3 : index
    %c0_130 = arith.constant 0 : index
    %c0_131 = arith.constant 0 : index
    %c0_132 = arith.constant 0 : index
    %115 = vector.load %arg2[%c3_129, %c0_130, %c0_131, %c0_132] : memref<4x4x64x32xf32, #tpu.memory_space<vmem>>, vector<1x1x64x32xf32>
    %116 = vector.shape_cast %115 : vector<1x1x64x32xf32> to vector<64x32xf32>
    %cst_133 = arith.constant dense<0.000000e+00> : vector<32x32xf32>
    %117 = tpu.matmul %114, %116, %cst_133 {dimension_numbers = #tpu.dot_dimension_numbers<[1], [0], [0], [1], [0, 0, 1, 1], [], []>} : vector<32x64xf32>, vector<64x32xf32>, vector<32x32xf32> -> vector<32x32xf32>
    %118 = arith.addf %111, %117 : vector<32x32xf32>
    %c0_134 = arith.constant 0 : index
    %c1_135 = arith.constant 1 : index
    %c2_136 = arith.constant 2 : index
    %c0_137 = arith.constant 0 : index
    %119 = vector.load %arg1[%c0_134, %c1_135, %c2_136, %c0_137] : memref<1x6x10x64xf32, #tpu.memory_space<vmem>>, vector<1x4x8x64xf32>
    %120 = vector.shape_cast %119 : vector<1x4x8x64xf32> to vector<4x8x64xf32>
    %121 = vector.shape_cast %120 : vector<4x8x64xf32> to vector<32x64xf32>
    %c3_138 = arith.constant 3 : index
    %c1_139 = arith.constant 1 : index
    %c0_140 = arith.constant 0 : index
    %c0_141 = arith.constant 0 : index
    %122 = vector.load %arg2[%c3_138, %c1_139, %c0_140, %c0_141] : memref<4x4x64x32xf32, #tpu.memory_space<vmem>>, vector<1x1x64x32xf32>
    %123 = vector.shape_cast %122 : vector<1x1x64x32xf32> to vector<64x32xf32>
    %cst_142 = arith.constant dense<0.000000e+00> : vector<32x32xf32>
    %124 = tpu.matmul %121, %123, %cst_142 {dimension_numbers = #tpu.dot_dimension_numbers<[1], [0], [0], [1], [0, 0, 1, 1], [], []>} : vector<32x64xf32>, vector<64x32xf32>, vector<32x32xf32> -> vector<32x32xf32>
    %125 = arith.addf %118, %124 : vector<32x32xf32>
    %c0_143 = arith.constant 0 : index
    %c2_144 = arith.constant 2 : index
    %c1_145 = arith.constant 1 : index
    %c0_146 = arith.constant 0 : index
    %126 = vector.load %arg1[%c0_143, %c2_144, %c1_145, %c0_146] : memref<1x6x10x64xf32, #tpu.memory_space<vmem>>, vector<1x4x8x64xf32>
    %127 = vector.shape_cast %126 : vector<1x4x8x64xf32> to vector<4x8x64xf32>
    %128 = vector.shape_cast %127 : vector<4x8x64xf32> to vector<32x64xf32>
    %c3_147 = arith.constant 3 : index
    %c2_148 = arith.constant 2 : index
    %c0_149 = arith.constant 0 : index
    %c0_150 = arith.constant 0 : index
    %129 = vector.load %arg2[%c3_147, %c2_148, %c0_149, %c0_150] : memref<4x4x64x32xf32, #tpu.memory_space<vmem>>, vector<1x1x64x32xf32>
    %130 = vector.shape_cast %129 : vector<1x1x64x32xf32> to vector<64x32xf32>
    %cst_151 = arith.constant dense<0.000000e+00> : vector<32x32xf32>
    %131 = tpu.matmul %128, %130, %cst_151 {dimension_numbers = #tpu.dot_dimension_numbers<[1], [0], [0], [1], [0, 0, 1, 1], [], []>} : vector<32x64xf32>, vector<64x32xf32>, vector<32x32xf32> -> vector<32x32xf32>
    %132 = arith.addf %125, %131 : vector<32x32xf32>
    %c0_152 = arith.constant 0 : index
    %c2_153 = arith.constant 2 : index
    %c2_154 = arith.constant 2 : index
    %c0_155 = arith.constant 0 : index
    %133 = vector.load %arg1[%c0_152, %c2_153, %c2_154, %c0_155] : memref<1x6x10x64xf32, #tpu.memory_space<vmem>>, vector<1x4x8x64xf32>
    %134 = vector.shape_cast %133 : vector<1x4x8x64xf32> to vector<4x8x64xf32>
    %135 = vector.shape_cast %134 : vector<4x8x64xf32> to vector<32x64xf32>
    %c3_156 = arith.constant 3 : index
    %c3_157 = arith.constant 3 : index
    %c0_158 = arith.constant 0 : index
    %c0_159 = arith.constant 0 : index
    %136 = vector.load %arg2[%c3_156, %c3_157, %c0_158, %c0_159] : memref<4x4x64x32xf32, #tpu.memory_space<vmem>>, vector<1x1x64x32xf32>
    %137 = vector.shape_cast %136 : vector<1x1x64x32xf32> to vector<64x32xf32>
    %cst_160 = arith.constant dense<0.000000e+00> : vector<32x32xf32>
    %138 = tpu.matmul %135, %137, %cst_160 {dimension_numbers = #tpu.dot_dimension_numbers<[1], [0], [0], [1], [0, 0, 1, 1], [], []>} : vector<32x64xf32>, vector<64x32xf32>, vector<32x32xf32> -> vector<32x32xf32>
    %139 = arith.addf %132, %138 : vector<32x32xf32>
    %c0_161 = arith.constant 0 : index
    %c0_162 = arith.constant 0 : index
    %140 = vector.load %arg3[%c0_161, %c0_162] : memref<1x32xf32, #tpu.memory_space<vmem>>, vector<1x32xf32>
    %141 = vector.broadcast %140 : vector<1x32xf32> to vector<32x32xf32>
    %142 = arith.addf %139, %141 : vector<32x32xf32>
    %cst_163 = arith.constant 0.000000e+00 : f32
    %143 = vector.broadcast %cst_163 : f32 to vector<32x32xf32>
    %144 = arith.maximumf %142, %143 : vector<32x32xf32>
    %c3_164 = arith.constant 3 : index
    %c0_165 = arith.constant 0 : index
    %c0_166 = arith.constant 0 : index
    %145 = vector.load %arg4[%c3_164, %c0_165, %c0_166] : memref<4x32x32xf32, #tpu.memory_space<vmem>>, vector<1x32x32xf32>
    %146 = vector.shape_cast %145 : vector<1x32x32xf32> to vector<32x32xf32>
    %147 = vector.shape_cast %144 : vector<32x32xf32> to vector<1x32x32xf32>
    tpu.vector_store %arg4[%c3_164, %c0_165, %c0_166], %147 {strides = array<i32>} : memref<4x32x32xf32, #tpu.memory_space<vmem>>, vector<1x32x32xf32>,
    return
  }
  func.func @transform_0(%arg0: i32) -> (i32, i32, i32, i32) {
    %c0_i32 = arith.constant 0 : i32
    %c0_i32_0 = arith.constant 0 : i32
    %c0_i32_1 = arith.constant 0 : i32
    %c0_i32_2 = arith.constant 0 : i32
    return %arg0, %c0_i32, %c0_i32_0, %c0_i32_1 : i32, i32, i32, i32
  }
  func.func @transform_1(%arg0: i32) -> (i32, i32, i32, i32) {
    %c0_i32 = arith.constant 0 : i32
    %c0_i32_0 = arith.constant 0 : i32
    %c0_i32_1 = arith.constant 0 : i32
    %c0_i32_2 = arith.constant 0 : i32
    %c0_i32_3 = arith.constant 0 : i32
    return %c0_i32, %c0_i32_0, %c0_i32_1, %c0_i32_2 : i32, i32, i32, i32
  }
  func.func @transform_2(%arg0: i32) -> (i32, i32) {
    %c0_i32 = arith.constant 0 : i32
    %c0_i32_0 = arith.constant 0 : i32
    %c0_i32_1 = arith.constant 0 : i32
    return %c0_i32, %c0_i32_0 : i32, i32
  }
  func.func @transform_3(%arg0: i32) -> (i32, i32, i32) {
    %c0_i32 = arith.constant 0 : i32
    %c0_i32_0 = arith.constant 0 : i32
    %c0_i32_1 = arith.constant 0 : i32
    return %c0_i32, %arg0, %c0_i32_0 : i32, i32, i32
  }
}

module attributes {stable_mosaic.version = 11 : i64} {
  func.func @_convT_s2_kernel(%arg0: i32, %arg1: memref<1x10x10x32xf32, #tpu.memory_space<vmem>>, %arg2: memref<4x4x32x3xf32, #tpu.memory_space<vmem>>, %arg3: memref<1x3xf32, #tpu.memory_space<vmem>>, %arg4: memref<4x64x3xf32, #tpu.memory_space<vmem>>) attributes {dimension_semantics = [#tpu.dimension_semantics<parallel>], iteration_bounds = array<i64: 2>, scalar_prefetch = 0 : i64, scratch_operands = 0 : i64, tpu.core_type = #tpu.core_type<tc>, window_params = [{transform_indices = @transform_0, window_bounds = array<i64: 1, 10, 10, 32>}, {pipeline_mode = #tpu.pipeline_mode<synchronous>, transform_indices = @transform_1, window_bounds = array<i64: 4, 4, 32, 3>}, {pipeline_mode = #tpu.pipeline_mode<synchronous>, transform_indices = @transform_2, window_bounds = array<i64: 1, 3>}, {transform_indices = @transform_3, window_bounds = array<i64: 4, 64, 3>}]} {
    %cst = arith.constant 0.000000e+00 : f32
    %0 = vector.broadcast %cst : f32 to vector<64x3xf32>
    %c0 = arith.constant 0 : index
    %c0_0 = arith.constant 0 : index
    %c0_1 = arith.constant 0 : index
    %c0_2 = arith.constant 0 : index
    %1 = vector.load %arg1[%c0, %c0_0, %c0_1, %c0_2] : memref<1x10x10x32xf32, #tpu.memory_space<vmem>>, vector<1x8x8x32xf32>
    %2 = vector.shape_cast %1 : vector<1x8x8x32xf32> to vector<8x8x32xf32>
    %3 = vector.shape_cast %2 : vector<8x8x32xf32> to vector<64x32xf32>
    %c0_3 = arith.constant 0 : index
    %c0_4 = arith.constant 0 : index
    %c0_5 = arith.constant 0 : index
    %c0_6 = arith.constant 0 : index
    %4 = vector.load %arg2[%c0_3, %c0_4, %c0_5, %c0_6] : memref<4x4x32x3xf32, #tpu.memory_space<vmem>>, vector<1x1x32x3xf32>
    %5 = vector.shape_cast %4 : vector<1x1x32x3xf32> to vector<32x3xf32>
    %cst_7 = arith.constant dense<0.000000e+00> : vector<64x3xf32>
    %6 = tpu.matmul %3, %5, %cst_7 {dimension_numbers = #tpu.dot_dimension_numbers<[1], [0], [0], [1], [0, 0, 1, 1], [], []>} : vector<64x32xf32>, vector<32x3xf32>, vector<64x3xf32> -> vector<64x3xf32>
    %7 = arith.addf %0, %6 : vector<64x3xf32>
    %c0_8 = arith.constant 0 : index
    %c0_9 = arith.constant 0 : index
    %c1 = arith.constant 1 : index
    %c0_10 = arith.constant 0 : index
    %8 = vector.load %arg1[%c0_8, %c0_9, %c1, %c0_10] : memref<1x10x10x32xf32, #tpu.memory_space<vmem>>, vector<1x8x8x32xf32>
    %9 = vector.shape_cast %8 : vector<1x8x8x32xf32> to vector<8x8x32xf32>
    %10 = vector.shape_cast %9 : vector<8x8x32xf32> to vector<64x32xf32>
    %c0_11 = arith.constant 0 : index
    %c1_12 = arith.constant 1 : index
    %c0_13 = arith.constant 0 : index
    %c0_14 = arith.constant 0 : index
    %11 = vector.load %arg2[%c0_11, %c1_12, %c0_13, %c0_14] : memref<4x4x32x3xf32, #tpu.memory_space<vmem>>, vector<1x1x32x3xf32>
    %12 = vector.shape_cast %11 : vector<1x1x32x3xf32> to vector<32x3xf32>
    %cst_15 = arith.constant dense<0.000000e+00> : vector<64x3xf32>
    %13 = tpu.matmul %10, %12, %cst_15 {dimension_numbers = #tpu.dot_dimension_numbers<[1], [0], [0], [1], [0, 0, 1, 1], [], []>} : vector<64x32xf32>, vector<32x3xf32>, vector<64x3xf32> -> vector<64x3xf32>
    %14 = arith.addf %7, %13 : vector<64x3xf32>
    %c0_16 = arith.constant 0 : index
    %c1_17 = arith.constant 1 : index
    %c0_18 = arith.constant 0 : index
    %c0_19 = arith.constant 0 : index
    %15 = vector.load %arg1[%c0_16, %c1_17, %c0_18, %c0_19] : memref<1x10x10x32xf32, #tpu.memory_space<vmem>>, vector<1x8x8x32xf32>
    %16 = vector.shape_cast %15 : vector<1x8x8x32xf32> to vector<8x8x32xf32>
    %17 = vector.shape_cast %16 : vector<8x8x32xf32> to vector<64x32xf32>
    %c0_20 = arith.constant 0 : index
    %c2 = arith.constant 2 : index
    %c0_21 = arith.constant 0 : index
    %c0_22 = arith.constant 0 : index
    %18 = vector.load %arg2[%c0_20, %c2, %c0_21, %c0_22] : memref<4x4x32x3xf32, #tpu.memory_space<vmem>>, vector<1x1x32x3xf32>
    %19 = vector.shape_cast %18 : vector<1x1x32x3xf32> to vector<32x3xf32>
    %cst_23 = arith.constant dense<0.000000e+00> : vector<64x3xf32>
    %20 = tpu.matmul %17, %19, %cst_23 {dimension_numbers = #tpu.dot_dimension_numbers<[1], [0], [0], [1], [0, 0, 1, 1], [], []>} : vector<64x32xf32>, vector<32x3xf32>, vector<64x3xf32> -> vector<64x3xf32>
    %21 = arith.addf %14, %20 : vector<64x3xf32>
    %c0_24 = arith.constant 0 : index
    %c1_25 = arith.constant 1 : index
    %c1_26 = arith.constant 1 : index
    %c0_27 = arith.constant 0 : index
    %22 = vector.load %arg1[%c0_24, %c1_25, %c1_26, %c0_27] : memref<1x10x10x32xf32, #tpu.memory_space<vmem>>, vector<1x8x8x32xf32>
    %23 = vector.shape_cast %22 : vector<1x8x8x32xf32> to vector<8x8x32xf32>
    %24 = vector.shape_cast %23 : vector<8x8x32xf32> to vector<64x32xf32>
    %c0_28 = arith.constant 0 : index
    %c3 = arith.constant 3 : index
    %c0_29 = arith.constant 0 : index
    %c0_30 = arith.constant 0 : index
    %25 = vector.load %arg2[%c0_28, %c3, %c0_29, %c0_30] : memref<4x4x32x3xf32, #tpu.memory_space<vmem>>, vector<1x1x32x3xf32>
    %26 = vector.shape_cast %25 : vector<1x1x32x3xf32> to vector<32x3xf32>
    %cst_31 = arith.constant dense<0.000000e+00> : vector<64x3xf32>
    %27 = tpu.matmul %24, %26, %cst_31 {dimension_numbers = #tpu.dot_dimension_numbers<[1], [0], [0], [1], [0, 0, 1, 1], [], []>} : vector<64x32xf32>, vector<32x3xf32>, vector<64x3xf32> -> vector<64x3xf32>
    %28 = arith.addf %21, %27 : vector<64x3xf32>
    %c0_32 = arith.constant 0 : index
    %c0_33 = arith.constant 0 : index
    %29 = vector.load %arg3[%c0_32, %c0_33] : memref<1x3xf32, #tpu.memory_space<vmem>>, vector<1x3xf32>
    %30 = vector.broadcast %29 : vector<1x3xf32> to vector<64x3xf32>
    %31 = arith.addf %28, %30 : vector<64x3xf32>
    %cst_34 = arith.constant 0.000000e+00 : f32
    %32 = vector.broadcast %cst_34 : f32 to vector<64x3xf32>
    %33 = arith.subf %32, %31 : vector<64x3xf32>
    %34 = math.exp %33 : vector<64x3xf32>
    %cst_35 = arith.constant 1.000000e+00 : f32
    %35 = vector.broadcast %cst_35 : f32 to vector<64x3xf32>
    %36 = arith.addf %35, %34 : vector<64x3xf32>
    %cst_36 = arith.constant 1.000000e+00 : f32
    %37 = vector.broadcast %cst_36 : f32 to vector<64x3xf32>
    %38 = arith.divf %37, %36 : vector<64x3xf32>
    %c0_37 = arith.constant 0 : index
    %c0_38 = arith.constant 0 : index
    %c0_39 = arith.constant 0 : index
    %39 = vector.load %arg4[%c0_37, %c0_38, %c0_39] : memref<4x64x3xf32, #tpu.memory_space<vmem>>, vector<1x64x3xf32>
    %40 = vector.shape_cast %39 : vector<1x64x3xf32> to vector<64x3xf32>
    %41 = vector.shape_cast %38 : vector<64x3xf32> to vector<1x64x3xf32>
    tpu.vector_store %arg4[%c0_37, %c0_38, %c0_39], %41 {strides = array<i32>} : memref<4x64x3xf32, #tpu.memory_space<vmem>>, vector<1x64x3xf32>,
    %cst_40 = arith.constant 0.000000e+00 : f32
    %42 = vector.broadcast %cst_40 : f32 to vector<64x3xf32>
    %c0_41 = arith.constant 0 : index
    %c0_42 = arith.constant 0 : index
    %c1_43 = arith.constant 1 : index
    %c0_44 = arith.constant 0 : index
    %43 = vector.load %arg1[%c0_41, %c0_42, %c1_43, %c0_44] : memref<1x10x10x32xf32, #tpu.memory_space<vmem>>, vector<1x8x8x32xf32>
    %44 = vector.shape_cast %43 : vector<1x8x8x32xf32> to vector<8x8x32xf32>
    %45 = vector.shape_cast %44 : vector<8x8x32xf32> to vector<64x32xf32>
    %c1_45 = arith.constant 1 : index
    %c0_46 = arith.constant 0 : index
    %c0_47 = arith.constant 0 : index
    %c0_48 = arith.constant 0 : index
    %46 = vector.load %arg2[%c1_45, %c0_46, %c0_47, %c0_48] : memref<4x4x32x3xf32, #tpu.memory_space<vmem>>, vector<1x1x32x3xf32>
    %47 = vector.shape_cast %46 : vector<1x1x32x3xf32> to vector<32x3xf32>
    %cst_49 = arith.constant dense<0.000000e+00> : vector<64x3xf32>
    %48 = tpu.matmul %45, %47, %cst_49 {dimension_numbers = #tpu.dot_dimension_numbers<[1], [0], [0], [1], [0, 0, 1, 1], [], []>} : vector<64x32xf32>, vector<32x3xf32>, vector<64x3xf32> -> vector<64x3xf32>
    %49 = arith.addf %42, %48 : vector<64x3xf32>
    %c0_50 = arith.constant 0 : index
    %c0_51 = arith.constant 0 : index
    %c2_52 = arith.constant 2 : index
    %c0_53 = arith.constant 0 : index
    %50 = vector.load %arg1[%c0_50, %c0_51, %c2_52, %c0_53] : memref<1x10x10x32xf32, #tpu.memory_space<vmem>>, vector<1x8x8x32xf32>
    %51 = vector.shape_cast %50 : vector<1x8x8x32xf32> to vector<8x8x32xf32>
    %52 = vector.shape_cast %51 : vector<8x8x32xf32> to vector<64x32xf32>
    %c1_54 = arith.constant 1 : index
    %c1_55 = arith.constant 1 : index
    %c0_56 = arith.constant 0 : index
    %c0_57 = arith.constant 0 : index
    %53 = vector.load %arg2[%c1_54, %c1_55, %c0_56, %c0_57] : memref<4x4x32x3xf32, #tpu.memory_space<vmem>>, vector<1x1x32x3xf32>
    %54 = vector.shape_cast %53 : vector<1x1x32x3xf32> to vector<32x3xf32>
    %cst_58 = arith.constant dense<0.000000e+00> : vector<64x3xf32>
    %55 = tpu.matmul %52, %54, %cst_58 {dimension_numbers = #tpu.dot_dimension_numbers<[1], [0], [0], [1], [0, 0, 1, 1], [], []>} : vector<64x32xf32>, vector<32x3xf32>, vector<64x3xf32> -> vector<64x3xf32>
    %56 = arith.addf %49, %55 : vector<64x3xf32>
    %c0_59 = arith.constant 0 : index
    %c1_60 = arith.constant 1 : index
    %c1_61 = arith.constant 1 : index
    %c0_62 = arith.constant 0 : index
    %57 = vector.load %arg1[%c0_59, %c1_60, %c1_61, %c0_62] : memref<1x10x10x32xf32, #tpu.memory_space<vmem>>, vector<1x8x8x32xf32>
    %58 = vector.shape_cast %57 : vector<1x8x8x32xf32> to vector<8x8x32xf32>
    %59 = vector.shape_cast %58 : vector<8x8x32xf32> to vector<64x32xf32>
    %c1_63 = arith.constant 1 : index
    %c2_64 = arith.constant 2 : index
    %c0_65 = arith.constant 0 : index
    %c0_66 = arith.constant 0 : index
    %60 = vector.load %arg2[%c1_63, %c2_64, %c0_65, %c0_66] : memref<4x4x32x3xf32, #tpu.memory_space<vmem>>, vector<1x1x32x3xf32>
    %61 = vector.shape_cast %60 : vector<1x1x32x3xf32> to vector<32x3xf32>
    %cst_67 = arith.constant dense<0.000000e+00> : vector<64x3xf32>
    %62 = tpu.matmul %59, %61, %cst_67 {dimension_numbers = #tpu.dot_dimension_numbers<[1], [0], [0], [1], [0, 0, 1, 1], [], []>} : vector<64x32xf32>, vector<32x3xf32>, vector<64x3xf32> -> vector<64x3xf32>
    %63 = arith.addf %56, %62 : vector<64x3xf32>
    %c0_68 = arith.constant 0 : index
    %c1_69 = arith.constant 1 : index
    %c2_70 = arith.constant 2 : index
    %c0_71 = arith.constant 0 : index
    %64 = vector.load %arg1[%c0_68, %c1_69, %c2_70, %c0_71] : memref<1x10x10x32xf32, #tpu.memory_space<vmem>>, vector<1x8x8x32xf32>
    %65 = vector.shape_cast %64 : vector<1x8x8x32xf32> to vector<8x8x32xf32>
    %66 = vector.shape_cast %65 : vector<8x8x32xf32> to vector<64x32xf32>
    %c1_72 = arith.constant 1 : index
    %c3_73 = arith.constant 3 : index
    %c0_74 = arith.constant 0 : index
    %c0_75 = arith.constant 0 : index
    %67 = vector.load %arg2[%c1_72, %c3_73, %c0_74, %c0_75] : memref<4x4x32x3xf32, #tpu.memory_space<vmem>>, vector<1x1x32x3xf32>
    %68 = vector.shape_cast %67 : vector<1x1x32x3xf32> to vector<32x3xf32>
    %cst_76 = arith.constant dense<0.000000e+00> : vector<64x3xf32>
    %69 = tpu.matmul %66, %68, %cst_76 {dimension_numbers = #tpu.dot_dimension_numbers<[1], [0], [0], [1], [0, 0, 1, 1], [], []>} : vector<64x32xf32>, vector<32x3xf32>, vector<64x3xf32> -> vector<64x3xf32>
    %70 = arith.addf %63, %69 : vector<64x3xf32>
    %c0_77 = arith.constant 0 : index
    %c0_78 = arith.constant 0 : index
    %71 = vector.load %arg3[%c0_77, %c0_78] : memref<1x3xf32, #tpu.memory_space<vmem>>, vector<1x3xf32>
    %72 = vector.broadcast %71 : vector<1x3xf32> to vector<64x3xf32>
    %73 = arith.addf %70, %72 : vector<64x3xf32>
    %cst_79 = arith.constant 0.000000e+00 : f32
    %74 = vector.broadcast %cst_79 : f32 to vector<64x3xf32>
    %75 = arith.subf %74, %73 : vector<64x3xf32>
    %76 = math.exp %75 : vector<64x3xf32>
    %cst_80 = arith.constant 1.000000e+00 : f32
    %77 = vector.broadcast %cst_80 : f32 to vector<64x3xf32>
    %78 = arith.addf %77, %76 : vector<64x3xf32>
    %cst_81 = arith.constant 1.000000e+00 : f32
    %79 = vector.broadcast %cst_81 : f32 to vector<64x3xf32>
    %80 = arith.divf %79, %78 : vector<64x3xf32>
    %c1_82 = arith.constant 1 : index
    %c0_83 = arith.constant 0 : index
    %c0_84 = arith.constant 0 : index
    %81 = vector.load %arg4[%c1_82, %c0_83, %c0_84] : memref<4x64x3xf32, #tpu.memory_space<vmem>>, vector<1x64x3xf32>
    %82 = vector.shape_cast %81 : vector<1x64x3xf32> to vector<64x3xf32>
    %83 = vector.shape_cast %80 : vector<64x3xf32> to vector<1x64x3xf32>
    tpu.vector_store %arg4[%c1_82, %c0_83, %c0_84], %83 {strides = array<i32>} : memref<4x64x3xf32, #tpu.memory_space<vmem>>, vector<1x64x3xf32>,
    %cst_85 = arith.constant 0.000000e+00 : f32
    %84 = vector.broadcast %cst_85 : f32 to vector<64x3xf32>
    %c0_86 = arith.constant 0 : index
    %c1_87 = arith.constant 1 : index
    %c0_88 = arith.constant 0 : index
    %c0_89 = arith.constant 0 : index
    %85 = vector.load %arg1[%c0_86, %c1_87, %c0_88, %c0_89] : memref<1x10x10x32xf32, #tpu.memory_space<vmem>>, vector<1x8x8x32xf32>
    %86 = vector.shape_cast %85 : vector<1x8x8x32xf32> to vector<8x8x32xf32>
    %87 = vector.shape_cast %86 : vector<8x8x32xf32> to vector<64x32xf32>
    %c2_90 = arith.constant 2 : index
    %c0_91 = arith.constant 0 : index
    %c0_92 = arith.constant 0 : index
    %c0_93 = arith.constant 0 : index
    %88 = vector.load %arg2[%c2_90, %c0_91, %c0_92, %c0_93] : memref<4x4x32x3xf32, #tpu.memory_space<vmem>>, vector<1x1x32x3xf32>
    %89 = vector.shape_cast %88 : vector<1x1x32x3xf32> to vector<32x3xf32>
    %cst_94 = arith.constant dense<0.000000e+00> : vector<64x3xf32>
    %90 = tpu.matmul %87, %89, %cst_94 {dimension_numbers = #tpu.dot_dimension_numbers<[1], [0], [0], [1], [0, 0, 1, 1], [], []>} : vector<64x32xf32>, vector<32x3xf32>, vector<64x3xf32> -> vector<64x3xf32>
    %91 = arith.addf %84, %90 : vector<64x3xf32>
    %c0_95 = arith.constant 0 : index
    %c1_96 = arith.constant 1 : index
    %c1_97 = arith.constant 1 : index
    %c0_98 = arith.constant 0 : index
    %92 = vector.load %arg1[%c0_95, %c1_96, %c1_97, %c0_98] : memref<1x10x10x32xf32, #tpu.memory_space<vmem>>, vector<1x8x8x32xf32>
    %93 = vector.shape_cast %92 : vector<1x8x8x32xf32> to vector<8x8x32xf32>
    %94 = vector.shape_cast %93 : vector<8x8x32xf32> to vector<64x32xf32>
    %c2_99 = arith.constant 2 : index
    %c1_100 = arith.constant 1 : index
    %c0_101 = arith.constant 0 : index
    %c0_102 = arith.constant 0 : index
    %95 = vector.load %arg2[%c2_99, %c1_100, %c0_101, %c0_102] : memref<4x4x32x3xf32, #tpu.memory_space<vmem>>, vector<1x1x32x3xf32>
    %96 = vector.shape_cast %95 : vector<1x1x32x3xf32> to vector<32x3xf32>
    %cst_103 = arith.constant dense<0.000000e+00> : vector<64x3xf32>
    %97 = tpu.matmul %94, %96, %cst_103 {dimension_numbers = #tpu.dot_dimension_numbers<[1], [0], [0], [1], [0, 0, 1, 1], [], []>} : vector<64x32xf32>, vector<32x3xf32>, vector<64x3xf32> -> vector<64x3xf32>
    %98 = arith.addf %91, %97 : vector<64x3xf32>
    %c0_104 = arith.constant 0 : index
    %c2_105 = arith.constant 2 : index
    %c0_106 = arith.constant 0 : index
    %c0_107 = arith.constant 0 : index
    %99 = vector.load %arg1[%c0_104, %c2_105, %c0_106, %c0_107] : memref<1x10x10x32xf32, #tpu.memory_space<vmem>>, vector<1x8x8x32xf32>
    %100 = vector.shape_cast %99 : vector<1x8x8x32xf32> to vector<8x8x32xf32>
    %101 = vector.shape_cast %100 : vector<8x8x32xf32> to vector<64x32xf32>
    %c2_108 = arith.constant 2 : index
    %c2_109 = arith.constant 2 : index
    %c0_110 = arith.constant 0 : index
    %c0_111 = arith.constant 0 : index
    %102 = vector.load %arg2[%c2_108, %c2_109, %c0_110, %c0_111] : memref<4x4x32x3xf32, #tpu.memory_space<vmem>>, vector<1x1x32x3xf32>
    %103 = vector.shape_cast %102 : vector<1x1x32x3xf32> to vector<32x3xf32>
    %cst_112 = arith.constant dense<0.000000e+00> : vector<64x3xf32>
    %104 = tpu.matmul %101, %103, %cst_112 {dimension_numbers = #tpu.dot_dimension_numbers<[1], [0], [0], [1], [0, 0, 1, 1], [], []>} : vector<64x32xf32>, vector<32x3xf32>, vector<64x3xf32> -> vector<64x3xf32>
    %105 = arith.addf %98, %104 : vector<64x3xf32>
    %c0_113 = arith.constant 0 : index
    %c2_114 = arith.constant 2 : index
    %c1_115 = arith.constant 1 : index
    %c0_116 = arith.constant 0 : index
    %106 = vector.load %arg1[%c0_113, %c2_114, %c1_115, %c0_116] : memref<1x10x10x32xf32, #tpu.memory_space<vmem>>, vector<1x8x8x32xf32>
    %107 = vector.shape_cast %106 : vector<1x8x8x32xf32> to vector<8x8x32xf32>
    %108 = vector.shape_cast %107 : vector<8x8x32xf32> to vector<64x32xf32>
    %c2_117 = arith.constant 2 : index
    %c3_118 = arith.constant 3 : index
    %c0_119 = arith.constant 0 : index
    %c0_120 = arith.constant 0 : index
    %109 = vector.load %arg2[%c2_117, %c3_118, %c0_119, %c0_120] : memref<4x4x32x3xf32, #tpu.memory_space<vmem>>, vector<1x1x32x3xf32>
    %110 = vector.shape_cast %109 : vector<1x1x32x3xf32> to vector<32x3xf32>
    %cst_121 = arith.constant dense<0.000000e+00> : vector<64x3xf32>
    %111 = tpu.matmul %108, %110, %cst_121 {dimension_numbers = #tpu.dot_dimension_numbers<[1], [0], [0], [1], [0, 0, 1, 1], [], []>} : vector<64x32xf32>, vector<32x3xf32>, vector<64x3xf32> -> vector<64x3xf32>
    %112 = arith.addf %105, %111 : vector<64x3xf32>
    %c0_122 = arith.constant 0 : index
    %c0_123 = arith.constant 0 : index
    %113 = vector.load %arg3[%c0_122, %c0_123] : memref<1x3xf32, #tpu.memory_space<vmem>>, vector<1x3xf32>
    %114 = vector.broadcast %113 : vector<1x3xf32> to vector<64x3xf32>
    %115 = arith.addf %112, %114 : vector<64x3xf32>
    %cst_124 = arith.constant 0.000000e+00 : f32
    %116 = vector.broadcast %cst_124 : f32 to vector<64x3xf32>
    %117 = arith.subf %116, %115 : vector<64x3xf32>
    %118 = math.exp %117 : vector<64x3xf32>
    %cst_125 = arith.constant 1.000000e+00 : f32
    %119 = vector.broadcast %cst_125 : f32 to vector<64x3xf32>
    %120 = arith.addf %119, %118 : vector<64x3xf32>
    %cst_126 = arith.constant 1.000000e+00 : f32
    %121 = vector.broadcast %cst_126 : f32 to vector<64x3xf32>
    %122 = arith.divf %121, %120 : vector<64x3xf32>
    %c2_127 = arith.constant 2 : index
    %c0_128 = arith.constant 0 : index
    %c0_129 = arith.constant 0 : index
    %123 = vector.load %arg4[%c2_127, %c0_128, %c0_129] : memref<4x64x3xf32, #tpu.memory_space<vmem>>, vector<1x64x3xf32>
    %124 = vector.shape_cast %123 : vector<1x64x3xf32> to vector<64x3xf32>
    %125 = vector.shape_cast %122 : vector<64x3xf32> to vector<1x64x3xf32>
    tpu.vector_store %arg4[%c2_127, %c0_128, %c0_129], %125 {strides = array<i32>} : memref<4x64x3xf32, #tpu.memory_space<vmem>>, vector<1x64x3xf32>,
    %cst_130 = arith.constant 0.000000e+00 : f32
    %126 = vector.broadcast %cst_130 : f32 to vector<64x3xf32>
    %c0_131 = arith.constant 0 : index
    %c1_132 = arith.constant 1 : index
    %c1_133 = arith.constant 1 : index
    %c0_134 = arith.constant 0 : index
    %127 = vector.load %arg1[%c0_131, %c1_132, %c1_133, %c0_134] : memref<1x10x10x32xf32, #tpu.memory_space<vmem>>, vector<1x8x8x32xf32>
    %128 = vector.shape_cast %127 : vector<1x8x8x32xf32> to vector<8x8x32xf32>
    %129 = vector.shape_cast %128 : vector<8x8x32xf32> to vector<64x32xf32>
    %c3_135 = arith.constant 3 : index
    %c0_136 = arith.constant 0 : index
    %c0_137 = arith.constant 0 : index
    %c0_138 = arith.constant 0 : index
    %130 = vector.load %arg2[%c3_135, %c0_136, %c0_137, %c0_138] : memref<4x4x32x3xf32, #tpu.memory_space<vmem>>, vector<1x1x32x3xf32>
    %131 = vector.shape_cast %130 : vector<1x1x32x3xf32> to vector<32x3xf32>
    %cst_139 = arith.constant dense<0.000000e+00> : vector<64x3xf32>
    %132 = tpu.matmul %129, %131, %cst_139 {dimension_numbers = #tpu.dot_dimension_numbers<[1], [0], [0], [1], [0, 0, 1, 1], [], []>} : vector<64x32xf32>, vector<32x3xf32>, vector<64x3xf32> -> vector<64x3xf32>
    %133 = arith.addf %126, %132 : vector<64x3xf32>
    %c0_140 = arith.constant 0 : index
    %c1_141 = arith.constant 1 : index
    %c2_142 = arith.constant 2 : index
    %c0_143 = arith.constant 0 : index
    %134 = vector.load %arg1[%c0_140, %c1_141, %c2_142, %c0_143] : memref<1x10x10x32xf32, #tpu.memory_space<vmem>>, vector<1x8x8x32xf32>
    %135 = vector.shape_cast %134 : vector<1x8x8x32xf32> to vector<8x8x32xf32>
    %136 = vector.shape_cast %135 : vector<8x8x32xf32> to vector<64x32xf32>
    %c3_144 = arith.constant 3 : index
    %c1_145 = arith.constant 1 : index
    %c0_146 = arith.constant 0 : index
    %c0_147 = arith.constant 0 : index
    %137 = vector.load %arg2[%c3_144, %c1_145, %c0_146, %c0_147] : memref<4x4x32x3xf32, #tpu.memory_space<vmem>>, vector<1x1x32x3xf32>
    %138 = vector.shape_cast %137 : vector<1x1x32x3xf32> to vector<32x3xf32>
    %cst_148 = arith.constant dense<0.000000e+00> : vector<64x3xf32>
    %139 = tpu.matmul %136, %138, %cst_148 {dimension_numbers = #tpu.dot_dimension_numbers<[1], [0], [0], [1], [0, 0, 1, 1], [], []>} : vector<64x32xf32>, vector<32x3xf32>, vector<64x3xf32> -> vector<64x3xf32>
    %140 = arith.addf %133, %139 : vector<64x3xf32>
    %c0_149 = arith.constant 0 : index
    %c2_150 = arith.constant 2 : index
    %c1_151 = arith.constant 1 : index
    %c0_152 = arith.constant 0 : index
    %141 = vector.load %arg1[%c0_149, %c2_150, %c1_151, %c0_152] : memref<1x10x10x32xf32, #tpu.memory_space<vmem>>, vector<1x8x8x32xf32>
    %142 = vector.shape_cast %141 : vector<1x8x8x32xf32> to vector<8x8x32xf32>
    %143 = vector.shape_cast %142 : vector<8x8x32xf32> to vector<64x32xf32>
    %c3_153 = arith.constant 3 : index
    %c2_154 = arith.constant 2 : index
    %c0_155 = arith.constant 0 : index
    %c0_156 = arith.constant 0 : index
    %144 = vector.load %arg2[%c3_153, %c2_154, %c0_155, %c0_156] : memref<4x4x32x3xf32, #tpu.memory_space<vmem>>, vector<1x1x32x3xf32>
    %145 = vector.shape_cast %144 : vector<1x1x32x3xf32> to vector<32x3xf32>
    %cst_157 = arith.constant dense<0.000000e+00> : vector<64x3xf32>
    %146 = tpu.matmul %143, %145, %cst_157 {dimension_numbers = #tpu.dot_dimension_numbers<[1], [0], [0], [1], [0, 0, 1, 1], [], []>} : vector<64x32xf32>, vector<32x3xf32>, vector<64x3xf32> -> vector<64x3xf32>
    %147 = arith.addf %140, %146 : vector<64x3xf32>
    %c0_158 = arith.constant 0 : index
    %c2_159 = arith.constant 2 : index
    %c2_160 = arith.constant 2 : index
    %c0_161 = arith.constant 0 : index
    %148 = vector.load %arg1[%c0_158, %c2_159, %c2_160, %c0_161] : memref<1x10x10x32xf32, #tpu.memory_space<vmem>>, vector<1x8x8x32xf32>
    %149 = vector.shape_cast %148 : vector<1x8x8x32xf32> to vector<8x8x32xf32>
    %150 = vector.shape_cast %149 : vector<8x8x32xf32> to vector<64x32xf32>
    %c3_162 = arith.constant 3 : index
    %c3_163 = arith.constant 3 : index
    %c0_164 = arith.constant 0 : index
    %c0_165 = arith.constant 0 : index
    %151 = vector.load %arg2[%c3_162, %c3_163, %c0_164, %c0_165] : memref<4x4x32x3xf32, #tpu.memory_space<vmem>>, vector<1x1x32x3xf32>
    %152 = vector.shape_cast %151 : vector<1x1x32x3xf32> to vector<32x3xf32>
    %cst_166 = arith.constant dense<0.000000e+00> : vector<64x3xf32>
    %153 = tpu.matmul %150, %152, %cst_166 {dimension_numbers = #tpu.dot_dimension_numbers<[1], [0], [0], [1], [0, 0, 1, 1], [], []>} : vector<64x32xf32>, vector<32x3xf32>, vector<64x3xf32> -> vector<64x3xf32>
    %154 = arith.addf %147, %153 : vector<64x3xf32>
    %c0_167 = arith.constant 0 : index
    %c0_168 = arith.constant 0 : index
    %155 = vector.load %arg3[%c0_167, %c0_168] : memref<1x3xf32, #tpu.memory_space<vmem>>, vector<1x3xf32>
    %156 = vector.broadcast %155 : vector<1x3xf32> to vector<64x3xf32>
    %157 = arith.addf %154, %156 : vector<64x3xf32>
    %cst_169 = arith.constant 0.000000e+00 : f32
    %158 = vector.broadcast %cst_169 : f32 to vector<64x3xf32>
    %159 = arith.subf %158, %157 : vector<64x3xf32>
    %160 = math.exp %159 : vector<64x3xf32>
    %cst_170 = arith.constant 1.000000e+00 : f32
    %161 = vector.broadcast %cst_170 : f32 to vector<64x3xf32>
    %162 = arith.addf %161, %160 : vector<64x3xf32>
    %cst_171 = arith.constant 1.000000e+00 : f32
    %163 = vector.broadcast %cst_171 : f32 to vector<64x3xf32>
    %164 = arith.divf %163, %162 : vector<64x3xf32>
    %c3_172 = arith.constant 3 : index
    %c0_173 = arith.constant 0 : index
    %c0_174 = arith.constant 0 : index
    %165 = vector.load %arg4[%c3_172, %c0_173, %c0_174] : memref<4x64x3xf32, #tpu.memory_space<vmem>>, vector<1x64x3xf32>
    %166 = vector.shape_cast %165 : vector<1x64x3xf32> to vector<64x3xf32>
    %167 = vector.shape_cast %164 : vector<64x3xf32> to vector<1x64x3xf32>
    tpu.vector_store %arg4[%c3_172, %c0_173, %c0_174], %167 {strides = array<i32>} : memref<4x64x3xf32, #tpu.memory_space<vmem>>, vector<1x64x3xf32>,
    return
  }
  func.func @transform_0(%arg0: i32) -> (i32, i32, i32, i32) {
    %c0_i32 = arith.constant 0 : i32
    %c0_i32_0 = arith.constant 0 : i32
    %c0_i32_1 = arith.constant 0 : i32
    %c0_i32_2 = arith.constant 0 : i32
    return %arg0, %c0_i32, %c0_i32_0, %c0_i32_1 : i32, i32, i32, i32
  }
  func.func @transform_1(%arg0: i32) -> (i32, i32, i32, i32) {
    %c0_i32 = arith.constant 0 : i32
    %c0_i32_0 = arith.constant 0 : i32
    %c0_i32_1 = arith.constant 0 : i32
    %c0_i32_2 = arith.constant 0 : i32
    %c0_i32_3 = arith.constant 0 : i32
    return %c0_i32, %c0_i32_0, %c0_i32_1, %c0_i32_2 : i32, i32, i32, i32
  }
  func.func @transform_2(%arg0: i32) -> (i32, i32) {
    %c0_i32 = arith.constant 0 : i32
    %c0_i32_0 = arith.constant 0 : i32
    %c0_i32_1 = arith.constant 0 : i32
    return %c0_i32, %c0_i32_0 : i32, i32
  }
  func.func @transform_3(%arg0: i32) -> (i32, i32, i32) {
    %c0_i32 = arith.constant 0 : i32
    %c0_i32_0 = arith.constant 0 : i32
    %c0_i32_1 = arith.constant 0 : i32
    return %c0_i32, %arg0, %c0_i32_0 : i32, i32, i32
  }
}

</mosaic_0001>

<llo_original>
// kernel: autoencoder_forward.6
$region0: #{autoencoder_forward.6}
  #allocation0 [shape = 'u32[]', space=smem, size = 0x4, offset = 0x4, fixed_abs, tag = 'smem constant byte address 0x4 - core index']
  #allocation1 [shape = 'u32[144,128]{1,0:T(1,128)}', space=vmem, size = 0x12000, scoped, tag = 'internal scratch']
  %s0 = inlined_call_operand.vmem [shape: f32[2,9,9,12], index: 0, kind: input, shape index: {}]
  %s1 = inlined_call_operand.vmem [shape: f32[4,12,32], index: 1, kind: input, shape index: {}]
  %s2 = inlined_call_operand.vmem [shape: f32[1,32], index: 2, kind: input, shape index: {}]
  %s3 = inlined_call_operand.vmem [shape: f32[128,32], index: 3, kind: output, shape index: {}]
  %s4 = sld [smem:[#allocation0]]
  $region45: #{autoencoder_forward.6} parent=0
    _
  %s6 = ssub.s32 1, %s4
  %s7 = scalar_select 0, %s6, %s4
  loop: start=0, step=1, limit=4
  $region2: #{autoencoder_forward.6} parent=0 // loop_pre_header
    _
  $region3: #{autoencoder_forward.6} parent=0 // loop_header
    %s9 = sphi 0, %s13
    %p10 = scmp.ge.s32.totalorder %s9, 4
    %s19 = sphi 0, %s21
    %s22 = sphi 0, %s19
    %s23 = sphi 0, %s22
    %s39 = sphi 0, %s23
    %s43 = sphi 0, %s43
    %s45 = sphi 0, %s43
    %s46 = sphi 0, %s45
    %s60 = sphi 0, %s46
    %s64 = sphi 0, %s64
    %s66 = sphi 0, %s64
    %s67 = sphi 0, %s66
    %s81 = sphi 0, %s67
    %s87 = sphi 0, %s89
    %s90 = sphi 0, %s87
    %s91 = sphi 0, %s90
    %s107 = sphi 0, %s91
  $region4: #{autoencoder_forward.6} parent=0 // loop_header_branch
    %12 = sbr.rel (%p10) target = $region8
  $region5: #{autoencoder_forward.6} parent=0 // loop_body
    %s14 = ssub.s32 %s9, 1
    %s15 = ssub.s32 %s9, 2
    %s16 = sadd.s32 %s9, 1
    %s17 = ssub.s32 %s9, %s16
    %p18 = scmp.eq.s32.totalorder %s17, 0
    %s20 = sadd.s32 %s19, 1
    %s21 = scalar_select %p18, %s19, %s20
    %p24 = pneg %p18
    %p25 = scmp.eq.s32.totalorder %s9, 1
    %p26 = por %p24, %p25
    %p27 = scmp.ne.s32.totalorder %s19, %s22
    %p28 = scmp.eq.s32.totalorder %s9, 0
    %p29 = por %p27, %p28
    %p30 = scmp.ne.s32.totalorder %s19, %s22
    %p31 = scmp.eq.s32.totalorder %s14, 1
    %p32 = por %p30, %p31
    %p33 = scmp.ne.s32.totalorder %s22, %s23
    %p34 = scmp.eq.s32.totalorder %s14, 0
    %p35 = por %p33, %p34
    %p36 = scmp.ne.s32.totalorder %s22, %s23
    %p37 = scmp.eq.s32.totalorder %s15, 1
    %p38 = por %p36, %p37
    %p40 = scmp.ne.s32.totalorder %s23, %s39
    %p41 = scmp.eq.s32.totalorder %s15, 0
    %p42 = por %p40, %p41
    %s44 = sadd.s32 %s43, 1
    %p47 = scmp.eq.s32.totalorder %s9, 1
    %p48 = scmp.ne.s32.totalorder %s43, %s45
    %p49 = scmp.eq.s32.totalorder %s9, 0
    %p50 = por %p48, %p49
    %p51 = scmp.ne.s32.totalorder %s43, %s45
    %p52 = scmp.eq.s32.totalorder %s14, 1
    %p53 = por %p51, %p52
    %p54 = scmp.ne.s32.totalorder %s45, %s46
    %p55 = scmp.eq.s32.totalorder %s14, 0
    %p56 = por %p54, %p55
    %p57 = scmp.ne.s32.totalorder %s45, %s46
    %p58 = scmp.eq.s32.totalorder %s15, 1
    %p59 = por %p57, %p58
    %p61 = scmp.ne.s32.totalorder %s46, %s60
    %p62 = scmp.eq.s32.totalorder %s15, 0
    %p63 = por %p61, %p62
    %s65 = sadd.s32 %s64, 1
    %p68 = scmp.eq.s32.totalorder %s9, 1
    %p69 = scmp.ne.s32.totalorder %s64, %s66
    %p70 = scmp.eq.s32.totalorder %s9, 0
    %p71 = por %p69, %p70
    %p72 = scmp.ne.s32.totalorder %s64, %s66
    %p73 = scmp.eq.s32.totalorder %s14, 1
    %p74 = por %p72, %p73
    %p75 = scmp.ne.s32.totalorder %s66, %s67
    %p76 = scmp.eq.s32.totalorder %s14, 0
    %p77 = por %p75, %p76
    %p78 = scmp.ne.s32.totalorder %s66, %s67
    %p79 = scmp.eq.s32.totalorder %s15, 1
    %p80 = por %p78, %p79
    %p82 = scmp.ne.s32.totalorder %s67, %s81
    %p83 = scmp.eq.s32.totalorder %s15, 0
    %p84 = por %p82, %p83
    %s85 = ssub.s32 %s9, %s16
    %p86 = scmp.eq.s32.totalorder %s85, 0
    %s88 = sadd.s32 %s87, 1
    %s89 = scalar_select %p86, %s87, %s88
    %p92 = pneg %p86
    %p93 = scmp.eq.s32.totalorder %s9, 1
    %p94 = por %p92, %p93
    %p95 = scmp.ne.s32.totalorder %s87, %s90
    %p96 = scmp.eq.s32.totalorder %s9, 0
    %p97 = por %p95, %p96
    %p98 = scmp.ne.s32.totalorder %s87, %s90
    %p99 = scmp.eq.s32.totalorder %s14, 1
    %p100 = por %p98, %p99
    %p101 = scmp.ne.s32.totalorder %s90, %s91
    %p102 = scmp.eq.s32.totalorder %s14, 0
    %p103 = por %p101, %p102
    %p104 = scmp.ne.s32.totalorder %s90, %s91
    %p105 = scmp.eq.s32.totalorder %s15, 1
    %p106 = por %p104, %p105
    %p108 = scmp.ne.s32.totalorder %s91, %s107
    %p109 = scmp.eq.s32.totalorder %s15, 0
    %p110 = por %p108, %p109
    %p111 = scmp.le.s32.totalorder 1, %s9
    %p112 = scmp.lt.s32.totalorder %s9, 3
    %p113 = pnand %p111, %p112
    %p114 = pneg %p113
    // Predicated region
    $region9: #{autoencoder_forward.6} parent=5 // pred_check
      _
    $region10: #{autoencoder_forward.6} parent=5 // pred_check_branch
      %116 = sbr.rel (%p113) target = $region12
    $region11: #{autoencoder_forward.6} parent=5 // pred_region
      %s117 = ssub.s32 %s9, 1
      // Predicated region
      $region13: #{autoencoder_forward.6} parent=11 // pred_check
        %p118 = pneg %p56
      $region14: #{autoencoder_forward.6} parent=11 // pred_check_branch
        %120 = sbr.rel (%p118) target = $region16
      $region15: #{autoencoder_forward.6} parent=11 // pred_region
        _
      $region16: #{autoencoder_forward.6} parent=11 // pred_fallthru
        _
      // Predicated region
      $region17: #{autoencoder_forward.6} parent=11 // pred_check
        %p121 = pneg %p77
      $region18: #{autoencoder_forward.6} parent=11 // pred_check_branch
        %123 = sbr.rel (%p121) target = $region20
      $region19: #{autoencoder_forward.6} parent=11 // pred_region
        _
      $region20: #{autoencoder_forward.6} parent=11 // pred_fallthru
        _
    $region12: #{autoencoder_forward.6} parent=5 // pred_fallthru
      _
    %p124 = scmp.lt.s32.totalorder %s9, 2
    // Predicated region
    $region21: #{autoencoder_forward.6} parent=5 // pred_check
      %p125 = pneg %p124
    $region22: #{autoencoder_forward.6} parent=5 // pred_check_branch
      %127 = sbr.rel (%p125) target = $region24
    $region23: #{autoencoder_forward.6} parent=5 // pred_region
      // Predicated region
      $region25: #{autoencoder_forward.6} parent=23 // pred_check
        %p128 = pneg %p29
      $region26: #{autoencoder_forward.6} parent=23 // pred_check_branch
        %130 = sbr.rel (%p128) target = $region28
      $region27: #{autoencoder_forward.6} parent=23 // pred_region
        %p131 = scmp.lt.s32.totalorder %s9, 1
        %s132 = scalar_select %p131, %s9, 1
        %s133 = smul.addr %s132, 18
        %s134 = smul.addr %s133, 8
        %s135 = scalar_lea.vmem %s0, %s134
      $region28: #{autoencoder_forward.6} parent=23 // pred_fallthru
        _
    $region24: #{autoencoder_forward.6} parent=5 // pred_fallthru
      _
    %p136 = scmp.le.s32.totalorder 1, %s9
    %p137 = scmp.lt.s32.totalorder %s9, 3
    %p138 = pnand %p136, %p137
    %p139 = pneg %p138
    // Predicated region
    $region29: #{autoencoder_forward.6} parent=5 // pred_check
      _
    $region30: #{autoencoder_forward.6} parent=5 // pred_check_branch
      %141 = sbr.rel (%p138) target = $region32
    $region31: #{autoencoder_forward.6} parent=5 // pred_region
      %s142 = ssub.s32 %s9, 1
      %p143 = scmp.lt.s32.totalorder %s14, 1
      %s144 = scalar_select %p143, %s14, 1
      %s145 = smul.addr %s144, 18
      %s146 = smul.addr %s145, 8
      %s147 = scalar_lea.vmem %s0, %s146
      %p148 = pneg %p35
      %p149 = pneg %p32
      %p150 = pneg %p56
      %p151 = pneg %p53
      %p152 = pneg %p77
      %p153 = pneg %p74
      %p154 = pneg %p103
      %p155 = pneg %p100
      %s156 = smul.u32 8, %s14
      %p157 = scmp.lt.s32.totalorder %s156, 15
      %s158 = scalar_select %p157, %s156, 15
      %s159 = smul.addr %s158, 8
      %s160 = scalar_lea.vmem %s3, %s159
      %p161 = scmp.lt.s32.totalorder %s14, 1
      %s162 = scalar_select %p161, %s14, 1
      %s163 = smul.addr %s162, 18
      %s164 = smul.addr %s163, 8
      %s165 = scalar_lea.vmem %s0, %s164
      %s166 = smul.u32 8, %s14
      %p167 = scmp.lt.s32.totalorder %s166, 15
      %s168 = scalar_select %p167, %s166, 15
      %s169 = smul.addr %s168, 8
      %s170 = scalar_lea.vmem %s3, %s169
      %s171 = smul.u32 8, %s14
      %v172 = vld [vmem:[%s165] sm:$0xff]
      %v173 = vld [vmem:[%s165 + $0x10] sm:$0xff]
      %v174 = vld [vmem:[%s165 + $0x20] sm:$0xff]
      %v175 = vld [vmem:[%s165 + $0x30] sm:$0xff]
      %v176 = vld [vmem:[%s165 + $0x40] sm:$0xff]
      %v177 = vld [vmem:[%s165 + $0x50] sm:$0xff]
      %v178 = vld [vmem:[%s165 + $0x60] sm:$0xff]
      %v179 = vld [vmem:[%s165 + $0x70] sm:$0xff]
      %v180 = vld [vmem:[%s1] sm:$0xff]
      %v181 = vld [vmem:[%s1 + $0x8] sm:$0xf]
      %v182 = vld [vmem:[%s165 + $0x1] sm:$0xff]
      %v183 = vld [vmem:[%s165 + $0x11] sm:$0xff]
      %v184 = vld [vmem:[%s165 + $0x21] sm:$0xff]
      %v185 = vld [vmem:[%s165 + $0x31] sm:$0xff]
      %v186 = vld [vmem:[%s165 + $0x41] sm:$0xff]
      %v187 = vld [vmem:[%s165 + $0x51] sm:$0xff]
      %v188 = vld [vmem:[%s165 + $0x61] sm:$0xff]
      %v189 = vld [vmem:[%s165 + $0x71] sm:$0xff]
      %s190 = scalar_lea.vmem %s1, 16
      %v191 = vld [vmem:[%s190] sm:$0xff]
      %v192 = vld [vmem:[%s190 + $0x8] sm:$0xf]
      %vm193 = vcmask 97280
      %v195 = vsel %vm193, %v182, 0
      %v198 = vsel %vm193, %v183, 0
      %v201 = vsel %vm193, %v184, 0
      %v204 = vsel %vm193, %v185, 0
      %v207 = vsel %vm193, %v186, 0
      %v210 = vsel %vm193, %v187, 0
      %v213 = vsel %vm193, %v188, 0
      %v216 = vsel %vm193, %v189, 0
      %vm218 = vcmask 1043456
      %v220 = vsel %vm218, %v192, 0
      %222 = vmatprep.subr.mxu0 0.0
      %223 = vmatpush1.msra.mxu0 %v191
      %224 = vmatprep.subr.mxu0 0.0
      %225 = vmatpush1.msra.mxu0 %v220
      %226 = vmatprep.subr.mxu0 0.0
      %227 = vmatpush1.msra.mxu0 0.0
      %228 = vmatprep.subr.mxu0 0.0
      %229 = vmatpush1.msra.mxu0 0.0
      %230 = vmatprep.subr.mxu0 0.0
      %231 = vmatpush1.msra.mxu0 0.0
      %232 = vmatprep.subr.mxu0 0.0
      %233 = vmatpush1.msra.mxu0 0.0
      %234 = vmatprep.subr.mxu0 0.0
      %235 = vmatpush1.msra.mxu0 0.0
      %236 = vmatprep.subr.mxu0 0.0
      %237 = vmatpush1.msra.mxu0 0.0
      %238 = vmatprep.subr.mxu0 0.0
      %239 = vmatpush1.msra.mxu0 0.0
      %240 = vmatprep.subr.mxu0 0.0
      %241 = vmatpush1.msra.mxu0 0.0
      %242 = vmatprep.subr.mxu0 0.0
      %243 = vmatpush1.msra.mxu0 0.0
      %244 = vmatprep.subr.mxu0 0.0
      %245 = vmatpush1.msra.mxu0 0.0
      %246 = vmatprep.subr.mxu0 0.0
      %247 = vmatpush1.msra.mxu0 0.0
      %248 = vmatprep.subr.mxu0 0.0
      %249 = vmatpush1.msra.mxu0 0.0
      %250 = vmatprep.subr.mxu0 0.0
      %251 = vmatpush1.msra.mxu0 0.0
      %252 = vmatprep.subr.mxu0 0.0
      %253 = vmatpush1.msra.mxu0 0.0
      %254 = vmatprep.subr.mxu0 0.0
      %255 = vmatpush1.msra.mxu0 0.0
      %256 = vmatprep.subr.mxu0 0.0
      %257 = vmatpush1.msra.mxu0 0.0
      %258 = vmatprep.subr.mxu0 0.0
      %259 = vmatpush1.msra.mxu0 0.0
      %260 = vmatprep.subr.mxu0 0.0
      %261 = vmatpush1.msra.mxu0 0.0
      %262 = vmatprep.subr.mxu0 0.0
      %263 = vmatpush1.msra.mxu0 0.0
      %264 = vmatprep.subr.mxu0 0.0
      %265 = vmatpush1.msra.mxu0 0.0
      %266 = vmatprep.subr.mxu0 0.0
      %267 = vmatpush1.msra.mxu0 0.0
      %268 = vmatprep.subr.mxu0 0.0
      %269 = vmatpush1.msra.mxu0 0.0
      %270 = vmatprep.subr.mxu0 0.0
      %271 = vmatpush1.msra.mxu0 0.0
      %272 = vmatprep.subr.mxu0 0.0
      %273 = vmatpush1.msra.mxu0 0.0
      %274 = vmatprep.subr.mxu0 0.0
      %275 = vmatpush1.msra.mxu0 0.0
      %276 = vmatprep.subr.mxu0 0.0
      %277 = vmatpush1.msra.mxu0 0.0
      %278 = vmatprep.subr.mxu0 0.0
      %279 = vmatpush1.msra.mxu0 0.0
      %280 = vmatprep.subr.mxu0 0.0
      %281 = vmatpush1.msra.mxu0 0.0
      %282 = vmatprep.subr.mxu0 0.0
      %283 = vmatpush1.msra.mxu0 0.0
      %284 = vmatprep.subr.mxu0 0.0
      %285 = vmatpush1.msra.mxu0 0.0
      %286 = vmatprep.mubr.f32.mxu0 0.0
      %287 = vmatmul.mubr.f32.gmra.mrb[0].mxu0 %v195
      %v288 = vpop.f32.mrb[0].mxu0
      %v289 = vadd.f32 0.0, %v288
      %v290 = vpop.f32.mrb[0].mxu0
      %291 = vmatprep.mubr.f32.mxu0 0.0
      %292 = vmatmul.mubr.f32.gmra.mrb[0].mxu0 %v198
      %v293 = vpop.f32.mrb[0].mxu0
      %v294 = vadd.f32 0.0, %v293
      %v295 = vpop.f32.mrb[0].mxu0
      %296 = vmatprep.mubr.f32.mxu0 0.0
      %297 = vmatmul.mubr.f32.gmra.mrb[0].mxu0 %v201
      %v298 = vpop.f32.mrb[0].mxu0
      %v299 = vadd.f32 0.0, %v298
      %v300 = vpop.f32.mrb[0].mxu0
      %301 = vmatprep.mubr.f32.mxu0 0.0
      %302 = vmatmul.mubr.f32.gmra.mrb[0].mxu0 %v204
      %v303 = vpop.f32.mrb[0].mxu0
      %v304 = vadd.f32 0.0, %v303
      %v305 = vpop.f32.mrb[0].mxu0
      %306 = vmatprep.mubr.f32.mxu0 0.0
      %307 = vmatmul.mubr.f32.gmra.mrb[0].mxu0 %v207
      %v308 = vpop.f32.mrb[0].mxu0
      %v309 = vadd.f32 0.0, %v308
      %v310 = vpop.f32.mrb[0].mxu0
      %311 = vmatprep.mubr.f32.mxu0 0.0
      %312 = vmatmul.mubr.f32.gmra.mrb[0].mxu0 %v210
      %v313 = vpop.f32.mrb[0].mxu0
      %v314 = vadd.f32 0.0, %v313
      %v315 = vpop.f32.mrb[0].mxu0
      %316 = vmatprep.mubr.f32.mxu0 0.0
      %317 = vmatmul.mubr.f32.gmra.mrb[0].mxu0 %v213
      %v318 = vpop.f32.mrb[0].mxu0
      %v319 = vadd.f32 0.0, %v318
      %v320 = vpop.f32.mrb[0].mxu0
      %321 = vmatprep.mubr.f32.mxu0 0.0
      %322 = vmatmul.mubr.f32.gmra.mrb[0].mxu0 %v216
      %v323 = vpop.f32.mrb[0].mxu0
      %v324 = vadd.f32 0.0, %v323
      %v325 = vpop.f32.mrb[0].mxu0
      %326 = vdwg.mxu0
      %v328 = vsel %vm193, %v172, 0
      %v331 = vsel %vm193, %v173, 0
      %v334 = vsel %vm193, %v174, 0
      %v337 = vsel %vm193, %v175, 0
      %v340 = vsel %vm193, %v176, 0
      %v343 = vsel %vm193, %v177, 0
      %v346 = vsel %vm193, %v178, 0
      %v349 = vsel %vm193, %v179, 0
      %v352 = vsel %vm218, %v181, 0
      %354 = vmatprep.subr.mxu0 0.0
      %355 = vmatpush1.msra.mxu0 %v180
      %356 = vmatprep.subr.mxu0 0.0
      %357 = vmatpush1.msra.mxu0 %v352
      %358 = vmatprep.subr.mxu0 0.0
      %359 = vmatpush1.msra.mxu0 0.0
      %360 = vmatprep.subr.mxu0 0.0
      %361 = vmatpush1.msra.mxu0 0.0
      %362 = vmatprep.subr.mxu0 0.0
      %363 = vmatpush1.msra.mxu0 0.0
      %364 = vmatprep.subr.mxu0 0.0
      %365 = vmatpush1.msra.mxu0 0.0
      %366 = vmatprep.subr.mxu0 0.0
      %367 = vmatpush1.msra.mxu0 0.0
      %368 = vmatprep.subr.mxu0 0.0
      %369 = vmatpush1.msra.mxu0 0.0
      %370 = vmatprep.subr.mxu0 0.0
      %371 = vmatpush1.msra.mxu0 0.0
      %372 = vmatprep.subr.mxu0 0.0
      %373 = vmatpush1.msra.mxu0 0.0
      %374 = vmatprep.subr.mxu0 0.0
      %375 = vmatpush1.msra.mxu0 0.0
      %376 = vmatprep.subr.mxu0 0.0
      %377 = vmatpush1.msra.mxu0 0.0
      %378 = vmatprep.subr.mxu0 0.0
      %379 = vmatpush1.msra.mxu0 0.0
      %380 = vmatprep.subr.mxu0 0.0
      %381 = vmatpush1.msra.mxu0 0.0
      %382 = vmatprep.subr.mxu0 0.0
      %383 = vmatpush1.msra.mxu0 0.0
      %384 = vmatprep.subr.mxu0 0.0
      %385 = vmatpush1.msra.mxu0 0.0
      %386 = vmatprep.subr.mxu0 0.0
      %387 = vmatpush1.msra.mxu0 0.0
      %388 = vmatprep.subr.mxu0 0.0
      %389 = vmatpush1.msra.mxu0 0.0
      %390 = vmatprep.subr.mxu0 0.0
      %391 = vmatpush1.msra.mxu0 0.0
      %392 = vmatprep.subr.mxu0 0.0
      %393 = vmatpush1.msra.mxu0 0.0
      %394 = vmatprep.subr.mxu0 0.0
      %395 = vmatpush1.msra.mxu0 0.0
      %396 = vmatprep.subr.mxu0 0.0
      %397 = vmatpush1.msra.mxu0 0.0
      %398 = vmatprep.subr.mxu0 0.0
      %399 = vmatpush1.msra.mxu0 0.0
      %400 = vmatprep.subr.mxu0 0.0
      %401 = vmatpush1.msra.mxu0 0.0
      %402 = vmatprep.subr.mxu0 0.0
      %403 = vmatpush1.msra.mxu0 0.0
      %404 = vmatprep.subr.mxu0 0.0
      %405 = vmatpush1.msra.mxu0 0.0
      %406 = vmatprep.subr.mxu0 0.0
      %407 = vmatpush1.msra.mxu0 0.0
      %408 = vmatprep.subr.mxu0 0.0
      %409 = vmatpush1.msra.mxu0 0.0
      %410 = vmatprep.subr.mxu0 0.0
      %411 = vmatpush1.msra.mxu0 0.0
      %412 = vmatprep.subr.mxu0 0.0
      %413 = vmatpush1.msra.mxu0 0.0
      %414 = vmatprep.subr.mxu0 0.0
      %415 = vmatpush1.msra.mxu0 0.0
      %416 = vmatprep.subr.mxu0 0.0
      %417 = vmatpush1.msra.mxu0 0.0
      %418 = vmatprep.mubr.f32.mxu0 0.0
      %419 = vmatmul.mubr.f32.gmra.mrb[0].mxu0 %v328
      %v420 = vpop.f32.mrb[0].mxu0
      %v421 = vadd.f32 %v289, %v420
      %v422 = vpop.f32.mrb[0].mxu0
      %423 = vmatprep.mubr.f32.mxu0 0.0
      %424 = vmatmul.mubr.f32.gmra.mrb[0].mxu0 %v331
      %v425 = vpop.f32.mrb[0].mxu0
      %v426 = vadd.f32 %v294, %v425
      %v427 = vpop.f32.mrb[0].mxu0
      %428 = vmatprep.mubr.f32.mxu0 0.0
      %429 = vmatmul.mubr.f32.gmra.mrb[0].mxu0 %v334
      %v430 = vpop.f32.mrb[0].mxu0
      %v431 = vadd.f32 %v299, %v430
      %v432 = vpop.f32.mrb[0].mxu0
      %433 = vmatprep.mubr.f32.mxu0 0.0
      %434 = vmatmul.mubr.f32.gmra.mrb[0].mxu0 %v337
      %v435 = vpop.f32.mrb[0].mxu0
      %v436 = vadd.f32 %v304, %v435
      %v437 = vpop.f32.mrb[0].mxu0
      %438 = vmatprep.mubr.f32.mxu0 0.0
      %439 = vmatmul.mubr.f32.gmra.mrb[0].mxu0 %v340
      %v440 = vpop.f32.mrb[0].mxu0
      %v441 = vadd.f32 %v309, %v440
      %v442 = vpop.f32.mrb[0].mxu0
      %443 = vmatprep.mubr.f32.mxu0 0.0
      %444 = vmatmul.mubr.f32.gmra.mrb[0].mxu0 %v343
      %v445 = vpop.f32.mrb[0].mxu0
      %v446 = vadd.f32 %v314, %v445
      %v447 = vpop.f32.mrb[0].mxu0
      %448 = vmatprep.mubr.f32.mxu0 0.0
      %449 = vmatmul.mubr.f32.gmra.mrb[0].mxu0 %v346
      %v450 = vpop.f32.mrb[0].mxu0
      %v451 = vadd.f32 %v319, %v450
      %v452 = vpop.f32.mrb[0].mxu0
      %453 = vmatprep.mubr.f32.mxu0 0.0
      %454 = vmatmul.mubr.f32.gmra.mrb[0].mxu0 %v349
      %v455 = vpop.f32.mrb[0].mxu0
      %v456 = vadd.f32 %v324, %v455
      %v457 = vpop.f32.mrb[0].mxu0
      %458 = vdwg.mxu0
      %s459 = scalar_lea.vmem %s165, 16
      %v460 = vld [vmem:[%s459] sm:$0xff]
      %v461 = vld [vmem:[%s459 + $0x10] sm:$0xff]
      %v462 = vld [vmem:[%s459 + $0x20] sm:$0xff]
      %v463 = vld [vmem:[%s459 + $0x30] sm:$0xff]
      %v464 = vld [vmem:[%s459 + $0x40] sm:$0xff]
      %v465 = vld [vmem:[%s459 + $0x50] sm:$0xff]
      %v466 = vld [vmem:[%s459 + $0x60] sm:$0xff]
      %v467 = vld [vmem:[%s459 + $0x70] sm:$0xff]
      %s468 = scalar_lea.vmem %s1, 32
      %v469 = vld [vmem:[%s468] sm:$0xff]
      %v470 = vld [vmem:[%s468 + $0x8] sm:$0xf]
      %v472 = vsel %vm193, %v460, 0
      %v475 = vsel %vm193, %v461, 0
      %v478 = vsel %vm193, %v462, 0
      %v481 = vsel %vm193, %v463, 0
      %v484 = vsel %vm193, %v464, 0
      %v487 = vsel %vm193, %v465, 0
      %v490 = vsel %vm193, %v466, 0
      %v493 = vsel %vm193, %v467, 0
      %v496 = vsel %vm218, %v470, 0
      %498 = vmatprep.subr.mxu0 0.0
      %499 = vmatpush1.msra.mxu0 %v469
      %500 = vmatprep.subr.mxu0 0.0
      %501 = vmatpush1.msra.mxu0 %v496
      %502 = vmatprep.subr.mxu0 0.0
      %503 = vmatpush1.msra.mxu0 0.0
      %504 = vmatprep.subr.mxu0 0.0
      %505 = vmatpush1.msra.mxu0 0.0
      %506 = vmatprep.subr.mxu0 0.0
      %507 = vmatpush1.msra.mxu0 0.0
      %508 = vmatprep.subr.mxu0 0.0
      %509 = vmatpush1.msra.mxu0 0.0
      %510 = vmatprep.subr.mxu0 0.0
      %511 = vmatpush1.msra.mxu0 0.0
      %512 = vmatprep.subr.mxu0 0.0
      %513 = vmatpush1.msra.mxu0 0.0
      %514 = vmatprep.subr.mxu0 0.0
      %515 = vmatpush1.msra.mxu0 0.0
      %516 = vmatprep.subr.mxu0 0.0
      %517 = vmatpush1.msra.mxu0 0.0
      %518 = vmatprep.subr.mxu0 0.0
      %519 = vmatpush1.msra.mxu0 0.0
      %520 = vmatprep.subr.mxu0 0.0
      %521 = vmatpush1.msra.mxu0 0.0
      %522 = vmatprep.subr.mxu0 0.0
      %523 = vmatpush1.msra.mxu0 0.0
      %524 = vmatprep.subr.mxu0 0.0
      %525 = vmatpush1.msra.mxu0 0.0
      %526 = vmatprep.subr.mxu0 0.0
      %527 = vmatpush1.msra.mxu0 0.0
      %528 = vmatprep.subr.mxu0 0.0
      %529 = vmatpush1.msra.mxu0 0.0
      %530 = vmatprep.subr.mxu0 0.0
      %531 = vmatpush1.msra.mxu0 0.0
      %532 = vmatprep.subr.mxu0 0.0
      %533 = vmatpush1.msra.mxu0 0.0
      %534 = vmatprep.subr.mxu0 0.0
      %535 = vmatpush1.msra.mxu0 0.0
      %536 = vmatprep.subr.mxu0 0.0
      %537 = vmatpush1.msra.mxu0 0.0
      %538 = vmatprep.subr.mxu0 0.0
      %539 = vmatpush1.msra.mxu0 0.0
      %540 = vmatprep.subr.mxu0 0.0
      %541 = vmatpush1.msra.mxu0 0.0
      %542 = vmatprep.subr.mxu0 0.0
      %543 = vmatpush1.msra.mxu0 0.0
      %544 = vmatprep.subr.mxu0 0.0
      %545 = vmatpush1.msra.mxu0 0.0
      %546 = vmatprep.subr.mxu0 0.0
      %547 = vmatpush1.msra.mxu0 0.0
      %548 = vmatprep.subr.mxu0 0.0
      %549 = vmatpush1.msra.mxu0 0.0
      %550 = vmatprep.subr.mxu0 0.0
      %551 = vmatpush1.msra.mxu0 0.0
      %552 = vmatprep.subr.mxu0 0.0
      %553 = vmatpush1.msra.mxu0 0.0
      %554 = vmatprep.subr.mxu0 0.0
      %555 = vmatpush1.msra.mxu0 0.0
      %556 = vmatprep.subr.mxu0 0.0
      %557 = vmatpush1.msra.mxu0 0.0
      %558 = vmatprep.subr.mxu0 0.0
      %559 = vmatpush1.msra.mxu0 0.0
      %560 = vmatprep.subr.mxu0 0.0
      %561 = vmatpush1.msra.mxu0 0.0
      %562 = vmatprep.mubr.f32.mxu0 0.0
      %563 = vmatmul.mubr.f32.gmra.mrb[0].mxu0 %v472
      %v564 = vpop.f32.mrb[0].mxu0
      %v565 = vadd.f32 0.0, %v564
      %v566 = vpop.f32.mrb[0].mxu0
      %567 = vmatprep.mubr.f32.mxu0 0.0
      %568 = vmatmul.mubr.f32.gmra.mrb[0].mxu0 %v475
      %v569 = vpop.f32.mrb[0].mxu0
      %v570 = vadd.f32 0.0, %v569
      %v571 = vpop.f32.mrb[0].mxu0
      %572 = vmatprep.mubr.f32.mxu0 0.0
      %573 = vmatmul.mubr.f32.gmra.mrb[0].mxu0 %v478
      %v574 = vpop.f32.mrb[0].mxu0
      %v575 = vadd.f32 0.0, %v574
      %v576 = vpop.f32.mrb[0].mxu0
      %577 = vmatprep.mubr.f32.mxu0 0.0
      %578 = vmatmul.mubr.f32.gmra.mrb[0].mxu0 %v481
      %v579 = vpop.f32.mrb[0].mxu0
      %v580 = vadd.f32 0.0, %v579
      %v581 = vpop.f32.mrb[0].mxu0
      %582 = vmatprep.mubr.f32.mxu0 0.0
      %583 = vmatmul.mubr.f32.gmra.mrb[0].mxu0 %v484
      %v584 = vpop.f32.mrb[0].mxu0
      %v585 = vadd.f32 0.0, %v584
      %v586 = vpop.f32.mrb[0].mxu0
      %587 = vmatprep.mubr.f32.mxu0 0.0
      %588 = vmatmul.mubr.f32.gmra.mrb[0].mxu0 %v487
      %v589 = vpop.f32.mrb[0].mxu0
      %v590 = vadd.f32 0.0, %v589
      %v591 = vpop.f32.mrb[0].mxu0
      %592 = vmatprep.mubr.f32.mxu0 0.0
      %593 = vmatmul.mubr.f32.gmra.mrb[0].mxu0 %v490
      %v594 = vpop.f32.mrb[0].mxu0
      %v595 = vadd.f32 0.0, %v594
      %v596 = vpop.f32.mrb[0].mxu0
      %597 = vmatprep.mubr.f32.mxu0 0.0
      %598 = vmatmul.mubr.f32.gmra.mrb[0].mxu0 %v493
      %v599 = vpop.f32.mrb[0].mxu0
      %v600 = vadd.f32 0.0, %v599
      %v601 = vpop.f32.mrb[0].mxu0
      %602 = vdwg.mxu0
      %v603 = vadd.f32 %v421, %v565
      %v604 = vadd.f32 %v426, %v570
      %v605 = vadd.f32 %v431, %v575
      %v606 = vadd.f32 %v436, %v580
      %v607 = vadd.f32 %v441, %v585
      %v608 = vadd.f32 %v446, %v590
      %v609 = vadd.f32 %v451, %v595
      %v610 = vadd.f32 %v456, %v600
      %v611 = vld [vmem:[%s459 + $0x1] sm:$0xff]
      %v612 = vld [vmem:[%s459 + $0x11] sm:$0xff]
      %v613 = vld [vmem:[%s459 + $0x21] sm:$0xff]
      %v614 = vld [vmem:[%s459 + $0x31] sm:$0xff]
      %v615 = vld [vmem:[%s459 + $0x41] sm:$0xff]
      %v616 = vld [vmem:[%s459 + $0x51] sm:$0xff]
      %v617 = vld [vmem:[%s459 + $0x61] sm:$0xff]
      %v618 = vld [vmem:[%s459 + $0x71] sm:$0xff]
      %s619 = scalar_lea.vmem %s1, 48
      %v620 = vld [vmem:[%s619] sm:$0xff]
      %v621 = vld [vmem:[%s619 + $0x8] sm:$0xf]
      %v623 = vsel %vm193, %v611, 0
      %v626 = vsel %vm193, %v612, 0
      %v629 = vsel %vm193, %v613, 0
      %v632 = vsel %vm193, %v614, 0
      %v635 = vsel %vm193, %v615, 0
      %v638 = vsel %vm193, %v616, 0
      %v641 = vsel %vm193, %v617, 0
      %v644 = vsel %vm193, %v618, 0
      %v647 = vsel %vm218, %v621, 0
      %649 = vmatprep.subr.mxu0 0.0
      %650 = vmatpush1.msra.mxu0 %v620
      %651 = vmatprep.subr.mxu0 0.0
      %652 = vmatpush1.msra.mxu0 %v647
      %653 = vmatprep.subr.mxu0 0.0
      %654 = vmatpush1.msra.mxu0 0.0
      %655 = vmatprep.subr.mxu0 0.0
      %656 = vmatpush1.msra.mxu0 0.0
      %657 = vmatprep.subr.mxu0 0.0
      %658 = vmatpush1.msra.mxu0 0.0
      %659 = vmatprep.subr.mxu0 0.0
      %660 = vmatpush1.msra.mxu0 0.0
      %661 = vmatprep.subr.mxu0 0.0
      %662 = vmatpush1.msra.mxu0 0.0
      %663 = vmatprep.subr.mxu0 0.0
      %664 = vmatpush1.msra.mxu0 0.0
      %665 = vmatprep.subr.mxu0 0.0
      %666 = vmatpush1.msra.mxu0 0.0
      %667 = vmatprep.subr.mxu0 0.0
      %668 = vmatpush1.msra.mxu0 0.0
      %669 = vmatprep.subr.mxu0 0.0
      %670 = vmatpush1.msra.mxu0 0.0
      %671 = vmatprep.subr.mxu0 0.0
      %672 = vmatpush1.msra.mxu0 0.0
      %673 = vmatprep.subr.mxu0 0.0
      %674 = vmatpush1.msra.mxu0 0.0
      %675 = vmatprep.subr.mxu0 0.0
      %676 = vmatpush1.msra.mxu0 0.0
      %677 = vmatprep.subr.mxu0 0.0
      %678 = vmatpush1.msra.mxu0 0.0
      %679 = vmatprep.subr.mxu0 0.0
      %680 = vmatpush1.msra.mxu0 0.0
      %681 = vmatprep.subr.mxu0 0.0
      %682 = vmatpush1.msra.mxu0 0.0
      %683 = vmatprep.subr.mxu0 0.0
      %684 = vmatpush1.msra.mxu0 0.0
      %685 = vmatprep.subr.mxu0 0.0
      %686 = vmatpush1.msra.mxu0 0.0
      %687 = vmatprep.subr.mxu0 0.0
      %688 = vmatpush1.msra.mxu0 0.0
      %689 = vmatprep.subr.mxu0 0.0
      %690 = vmatpush1.msra.mxu0 0.0
      %691 = vmatprep.subr.mxu0 0.0
      %692 = vmatpush1.msra.mxu0 0.0
      %693 = vmatprep.subr.mxu0 0.0
      %694 = vmatpush1.msra.mxu0 0.0
      %695 = vmatprep.subr.mxu0 0.0
      %696 = vmatpush1.msra.mxu0 0.0
      %697 = vmatprep.subr.mxu0 0.0
      %698 = vmatpush1.msra.mxu0 0.0
      %699 = vmatprep.subr.mxu0 0.0
      %700 = vmatpush1.msra.mxu0 0.0
      %701 = vmatprep.subr.mxu0 0.0
      %702 = vmatpush1.msra.mxu0 0.0
      %703 = vmatprep.subr.mxu0 0.0
      %704 = vmatpush1.msra.mxu0 0.0
      %705 = vmatprep.subr.mxu0 0.0
      %706 = vmatpush1.msra.mxu0 0.0
      %707 = vmatprep.subr.mxu0 0.0
      %708 = vmatpush1.msra.mxu0 0.0
      %709 = vmatprep.subr.mxu0 0.0
      %710 = vmatpush1.msra.mxu0 0.0
      %711 = vmatprep.subr.mxu0 0.0
      %712 = vmatpush1.msra.mxu0 0.0
      %713 = vmatprep.mubr.f32.mxu0 0.0
      %714 = vmatmul.mubr.f32.gmra.mrb[0].mxu0 %v623
      %v715 = vpop.f32.mrb[0].mxu0
      %v716 = vadd.f32 0.0, %v715
      %v717 = vpop.f32.mrb[0].mxu0
      %718 = vmatprep.mubr.f32.mxu0 0.0
      %719 = vmatmul.mubr.f32.gmra.mrb[0].mxu0 %v626
      %v720 = vpop.f32.mrb[0].mxu0
      %v721 = vadd.f32 0.0, %v720
      %v722 = vpop.f32.mrb[0].mxu0
      %723 = vmatprep.mubr.f32.mxu0 0.0
      %724 = vmatmul.mubr.f32.gmra.mrb[0].mxu0 %v629
      %v725 = vpop.f32.mrb[0].mxu0
      %v726 = vadd.f32 0.0, %v725
      %v727 = vpop.f32.mrb[0].mxu0
      %728 = vmatprep.mubr.f32.mxu0 0.0
      %729 = vmatmul.mubr.f32.gmra.mrb[0].mxu0 %v632
      %v730 = vpop.f32.mrb[0].mxu0
      %v731 = vadd.f32 0.0, %v730
      %v732 = vpop.f32.mrb[0].mxu0
      %733 = vmatprep.mubr.f32.mxu0 0.0
      %734 = vmatmul.mubr.f32.gmra.mrb[0].mxu0 %v635
      %v735 = vpop.f32.mrb[0].mxu0
      %v736 = vadd.f32 0.0, %v735
      %v737 = vpop.f32.mrb[0].mxu0
      %738 = vmatprep.mubr.f32.mxu0 0.0
      %739 = vmatmul.mubr.f32.gmra.mrb[0].mxu0 %v638
      %v740 = vpop.f32.mrb[0].mxu0
      %v741 = vadd.f32 0.0, %v740
      %v742 = vpop.f32.mrb[0].mxu0
      %743 = vmatprep.mubr.f32.mxu0 0.0
      %744 = vmatmul.mubr.f32.gmra.mrb[0].mxu0 %v641
      %v745 = vpop.f32.mrb[0].mxu0
      %v746 = vadd.f32 0.0, %v745
      %v747 = vpop.f32.mrb[0].mxu0
      %748 = vmatprep.mubr.f32.mxu0 0.0
      %749 = vmatmul.mubr.f32.gmra.mrb[0].mxu0 %v644
      %v750 = vpop.f32.mrb[0].mxu0
      %v751 = vadd.f32 0.0, %v750
      %v752 = vpop.f32.mrb[0].mxu0
      %753 = vdwg.mxu0
      %v754 = vadd.f32 %v603, %v716
      %v755 = vadd.f32 %v604, %v721
      %v756 = vadd.f32 %v605, %v726
      %v757 = vadd.f32 %v606, %v731
      %v758 = vadd.f32 %v607, %v736
      %v759 = vadd.f32 %v608, %v741
      %v760 = vadd.f32 %v609, %v746
      %v761 = vadd.f32 %v610, %v751
      %v762 = vld [vmem:[%s2] sm:$0x1]
      %v764 = vlaneseq
      %v765 = vshrl.u32 %v764, 7
      %v766 = vsub.s32 0, %v765
      %v767 = vrot.slane %v762, %v766
      %v769 = vadd.f32 %v754, %v767
      %v770 = vadd.f32 %v755, %v767
      %v771 = vadd.f32 %v756, %v767
      %v772 = vadd.f32 %v757, %v767
      %v773 = vadd.f32 %v758, %v767
      %v774 = vadd.f32 %v759, %v767
      %v775 = vadd.f32 %v760, %v767
      %v776 = vadd.f32 %v761, %v767
      %v777 = vmax.f32 %v769, 0.0
      %v778 = vmax.f32 %v770, 0.0
      %v779 = vmax.f32 %v771, 0.0
      %v780 = vmax.f32 %v772, 0.0
      %v781 = vmax.f32 %v773, 0.0
      %v782 = vmax.f32 %v774, 0.0
      %v783 = vmax.f32 %v775, 0.0
      %v784 = vmax.f32 %v776, 0.0
      %vm785 = vcmask 261120
      %786 = vst.msk [vmem:[%s170] sm:$0xff] %vm785, %v777
      %787 = vst.msk [vmem:[%s170 + $0x8] sm:$0xff] %vm785, %v778
      %788 = vst.msk [vmem:[%s170 + $0x10] sm:$0xff] %vm785, %v779
      %789 = vst.msk [vmem:[%s170 + $0x18] sm:$0xff] %vm785, %v780
      %790 = vst.msk [vmem:[%s170 + $0x20] sm:$0xff] %vm785, %v781
      %791 = vst.msk [vmem:[%s170 + $0x28] sm:$0xff] %vm785, %v782
      %792 = vst.msk [vmem:[%s170 + $0x30] sm:$0xff] %vm785, %v783
      %793 = vst.msk [vmem:[%s170 + $0x38] sm:$0xff] %vm785, %v784
      %s794 = smul.u32 8, %s14
      %p795 = scmp.lt.s32.totalorder %s794, 15
      %s796 = scalar_select %p795, %s794, 15
      %s797 = smul.addr %s796, 8
      %s798 = scalar_lea.vmem %s3, %s797
      // Predicated region
      $region33: #{autoencoder_forward.6} parent=31 // pred_check
        %p799 = pneg %p100
      $region34: #{autoencoder_forward.6} parent=31 // pred_check_branch
        %801 = sbr.rel (%p799) target = $region36
      $region35: #{autoencoder_forward.6} parent=31 // pred_region
        %s802 = smul.u32 8, %s14
      $region36: #{autoencoder_forward.6} parent=31 // pred_fallthru
        _
    $region32: #{autoencoder_forward.6} parent=5 // pred_fallthru
      _
    %p803 = scmp.le.s32.totalorder 2, %s9
    // Predicated region
    $region37: #{autoencoder_forward.6} parent=5 // pred_check
      %p804 = pneg %p803
    $region38: #{autoencoder_forward.6} parent=5 // pred_check_branch
      %806 = sbr.rel (%p804) target = $region40
    $region39: #{autoencoder_forward.6} parent=5 // pred_region
      %s807 = ssub.s32 %s9, 2
      // Predicated region
      $region41: #{autoencoder_forward.6} parent=39 // pred_check
        %p808 = pneg %p106
      $region42: #{autoencoder_forward.6} parent=39 // pred_check_branch
        %810 = sbr.rel (%p808) target = $region44
      $region43: #{autoencoder_forward.6} parent=39 // pred_region
        %s811 = smul.u32 8, %s15
        %p812 = scmp.lt.s32.totalorder %s811, 15
        %s813 = scalar_select %p812, %s811, 15
        %s814 = smul.addr %s813, 8
        %s815 = scalar_lea.vmem %s3, %s814
      $region44: #{autoencoder_forward.6} parent=39 // pred_fallthru
        _
    $region40: #{autoencoder_forward.6} parent=5 // pred_fallthru
      _
  $region6: #{autoencoder_forward.6} parent=0 // loop_footer
    %s13 = sadd.s32 1, %s9
  $region7: #{autoencoder_forward.6} parent=0 // loop_footer_branch
    %8 = sbr.rel target = $region3
  $region8: #{autoencoder_forward.6} parent=0 // loop_exit
    _

// kernel: autoencoder_forward.7
$region0: #{autoencoder_forward.7}
  #allocation0 [shape = 'u32[]', space=smem, size = 0x4, offset = 0x4, fixed_abs, tag = 'smem constant byte address 0x4 - core index']
  #allocation1 [shape = 'u32[144,128]{1,0:T(1,128)}', space=vmem, size = 0x12000, scoped, tag = 'internal scratch']
  %s0 = inlined_call_operand.vmem [shape: f32[2,5,9,128], index: 0, kind: input, shape index: {}]
  %s1 = inlined_call_operand.vmem [shape: f32[4,128,64], index: 1, kind: input, shape index: {}]
  %s2 = inlined_call_operand.vmem [shape: f32[1,64], index: 2, kind: input, shape index: {}]
  %s3 = inlined_call_operand.vmem [shape: f32[64,64], index: 3, kind: output, shape index: {}]
  %s4 = sld [smem:[#allocation0]]
  $region45: #{autoencoder_forward.7} parent=0
    _
  %s6 = ssub.s32 1, %s4
  %s7 = scalar_select 0, %s6, %s4
  loop: start=0, step=1, limit=4
  $region2: #{autoencoder_forward.7} parent=0 // loop_pre_header
    _
  $region3: #{autoencoder_forward.7} parent=0 // loop_header
    %s9 = sphi 0, %s13
    %p10 = scmp.ge.s32.totalorder %s9, 4
    %s19 = sphi 0, %s21
    %s22 = sphi 0, %s19
    %s23 = sphi 0, %s22
    %s39 = sphi 0, %s23
    %s43 = sphi 0, %s43
    %s45 = sphi 0, %s43
    %s46 = sphi 0, %s45
    %s60 = sphi 0, %s46
    %s64 = sphi 0, %s64
    %s66 = sphi 0, %s64
    %s67 = sphi 0, %s66
    %s81 = sphi 0, %s67
    %s87 = sphi 0, %s89
    %s90 = sphi 0, %s87
    %s91 = sphi 0, %s90
    %s107 = sphi 0, %s91
  $region4: #{autoencoder_forward.7} parent=0 // loop_header_branch
    %12 = sbr.rel (%p10) target = $region8
  $region5: #{autoencoder_forward.7} parent=0 // loop_body
    %s14 = ssub.s32 %s9, 1
    %s15 = ssub.s32 %s9, 2
    %s16 = sadd.s32 %s9, 1
    %s17 = ssub.s32 %s9, %s16
    %p18 = scmp.eq.s32.totalorder %s17, 0
    %s20 = sadd.s32 %s19, 1
    %s21 = scalar_select %p18, %s19, %s20
    %p24 = pneg %p18
    %p25 = scmp.eq.s32.totalorder %s9, 1
    %p26 = por %p24, %p25
    %p27 = scmp.ne.s32.totalorder %s19, %s22
    %p28 = scmp.eq.s32.totalorder %s9, 0
    %p29 = por %p27, %p28
    %p30 = scmp.ne.s32.totalorder %s19, %s22
    %p31 = scmp.eq.s32.totalorder %s14, 1
    %p32 = por %p30, %p31
    %p33 = scmp.ne.s32.totalorder %s22, %s23
    %p34 = scmp.eq.s32.totalorder %s14, 0
    %p35 = por %p33, %p34
    %p36 = scmp.ne.s32.totalorder %s22, %s23
    %p37 = scmp.eq.s32.totalorder %s15, 1
    %p38 = por %p36, %p37
    %p40 = scmp.ne.s32.totalorder %s23, %s39
    %p41 = scmp.eq.s32.totalorder %s15, 0
    %p42 = por %p40, %p41
    %s44 = sadd.s32 %s43, 1
    %p47 = scmp.eq.s32.totalorder %s9, 1
    %p48 = scmp.ne.s32.totalorder %s43, %s45
    %p49 = scmp.eq.s32.totalorder %s9, 0
    %p50 = por %p48, %p49
    %p51 = scmp.ne.s32.totalorder %s43, %s45
    %p52 = scmp.eq.s32.totalorder %s14, 1
    %p53 = por %p51, %p52
    %p54 = scmp.ne.s32.totalorder %s45, %s46
    %p55 = scmp.eq.s32.totalorder %s14, 0
    %p56 = por %p54, %p55
    %p57 = scmp.ne.s32.totalorder %s45, %s46
    %p58 = scmp.eq.s32.totalorder %s15, 1
    %p59 = por %p57, %p58
    %p61 = scmp.ne.s32.totalorder %s46, %s60
    %p62 = scmp.eq.s32.totalorder %s15, 0
    %p63 = por %p61, %p62
    %s65 = sadd.s32 %s64, 1
    %p68 = scmp.eq.s32.totalorder %s9, 1
    %p69 = scmp.ne.s32.totalorder %s64, %s66
    %p70 = scmp.eq.s32.totalorder %s9, 0
    %p71 = por %p69, %p70
    %p72 = scmp.ne.s32.totalorder %s64, %s66
    %p73 = scmp.eq.s32.totalorder %s14, 1
    %p74 = por %p72, %p73
    %p75 = scmp.ne.s32.totalorder %s66, %s67
    %p76 = scmp.eq.s32.totalorder %s14, 0
    %p77 = por %p75, %p76
    %p78 = scmp.ne.s32.totalorder %s66, %s67
    %p79 = scmp.eq.s32.totalorder %s15, 1
    %p80 = por %p78, %p79
    %p82 = scmp.ne.s32.totalorder %s67, %s81
    %p83 = scmp.eq.s32.totalorder %s15, 0
    %p84 = por %p82, %p83
    %s85 = ssub.s32 %s9, %s16
    %p86 = scmp.eq.s32.totalorder %s85, 0
    %s88 = sadd.s32 %s87, 1
    %s89 = scalar_select %p86, %s87, %s88
    %p92 = pneg %p86
    %p93 = scmp.eq.s32.totalorder %s9, 1
    %p94 = por %p92, %p93
    %p95 = scmp.ne.s32.totalorder %s87, %s90
    %p96 = scmp.eq.s32.totalorder %s9, 0
    %p97 = por %p95, %p96
    %p98 = scmp.ne.s32.totalorder %s87, %s90
    %p99 = scmp.eq.s32.totalorder %s14, 1
    %p100 = por %p98, %p99
    %p101 = scmp.ne.s32.totalorder %s90, %s91
    %p102 = scmp.eq.s32.totalorder %s14, 0
    %p103 = por %p101, %p102
    %p104 = scmp.ne.s32.totalorder %s90, %s91
    %p105 = scmp.eq.s32.totalorder %s15, 1
    %p106 = por %p104, %p105
    %p108 = scmp.ne.s32.totalorder %s91, %s107
    %p109 = scmp.eq.s32.totalorder %s15, 0
    %p110 = por %p108, %p109
    %p111 = scmp.le.s32.totalorder 1, %s9
    %p112 = scmp.lt.s32.totalorder %s9, 3
    %p113 = pnand %p111, %p112
    %p114 = pneg %p113
    // Predicated region
    $region9: #{autoencoder_forward.7} parent=5 // pred_check
      _
    $region10: #{autoencoder_forward.7} parent=5 // pred_check_branch
      %116 = sbr.rel (%p113) target = $region12
    $region11: #{autoencoder_forward.7} parent=5 // pred_region
      %s117 = ssub.s32 %s9, 1
      // Predicated region
      $region13: #{autoencoder_forward.7} parent=11 // pred_check
        %p118 = pneg %p56
      $region14: #{autoencoder_forward.7} parent=11 // pred_check_branch
        %120 = sbr.rel (%p118) target = $region16
      $region15: #{autoencoder_forward.7} parent=11 // pred_region
        _
      $region16: #{autoencoder_forward.7} parent=11 // pred_fallthru
        _
      // Predicated region
      $region17: #{autoencoder_forward.7} parent=11 // pred_check
        %p121 = pneg %p77
      $region18: #{autoencoder_forward.7} parent=11 // pred_check_branch
        %123 = sbr.rel (%p121) target = $region20
      $region19: #{autoencoder_forward.7} parent=11 // pred_region
        _
      $region20: #{autoencoder_forward.7} parent=11 // pred_fallthru
        _
    $region12: #{autoencoder_forward.7} parent=5 // pred_fallthru
      _
    %p124 = scmp.lt.s32.totalorder %s9, 2
    // Predicated region
    $region21: #{autoencoder_forward.7} parent=5 // pred_check
      %p125 = pneg %p124
    $region22: #{autoencoder_forward.7} parent=5 // pred_check_branch
      %127 = sbr.rel (%p125) target = $region24
    $region23: #{autoencoder_forward.7} parent=5 // pred_region
      // Predicated region
      $region25: #{autoencoder_forward.7} parent=23 // pred_check
        %p128 = pneg %p29
      $region26: #{autoencoder_forward.7} parent=23 // pred_check_branch
        %130 = sbr.rel (%p128) target = $region28
      $region27: #{autoencoder_forward.7} parent=23 // pred_region
        %p131 = scmp.lt.s32.totalorder %s9, 1
        %s132 = scalar_select %p131, %s9, 1
        %s133 = smul.addr %s132, 10
        %s134 = smul.addr %s133, 8
        %s135 = scalar_lea.vmem %s0, %s134
      $region28: #{autoencoder_forward.7} parent=23 // pred_fallthru
        _
    $region24: #{autoencoder_forward.7} parent=5 // pred_fallthru
      _
    %p136 = scmp.le.s32.totalorder 1, %s9
    %p137 = scmp.lt.s32.totalorder %s9, 3
    %p138 = pnand %p136, %p137
    %p139 = pneg %p138
    // Predicated region
    $region29: #{autoencoder_forward.7} parent=5 // pred_check
      _
    $region30: #{autoencoder_forward.7} parent=5 // pred_check_branch
      %141 = sbr.rel (%p138) target = $region32
    $region31: #{autoencoder_forward.7} parent=5 // pred_region
      %s142 = ssub.s32 %s9, 1
      %p143 = scmp.lt.s32.totalorder %s14, 1
      %s144 = scalar_select %p143, %s14, 1
      %s145 = smul.addr %s144, 10
      %s146 = smul.addr %s145, 8
      %s147 = scalar_lea.vmem %s0, %s146
      %p148 = pneg %p35
      %p149 = pneg %p32
      %p150 = pneg %p56
      %p151 = pneg %p53
      %p152 = pneg %p77
      %p153 = pneg %p74
      %p154 = pneg %p103
      %p155 = pneg %p100
      %s156 = smul.u32 4, %s14
      %p157 = scmp.lt.s32.totalorder %s156, 7
      %s158 = scalar_select %p157, %s156, 7
      %s159 = smul.addr %s158, 8
      %s160 = scalar_lea.vmem %s3, %s159
      %p161 = scmp.lt.s32.totalorder %s14, 1
      %s162 = scalar_select %p161, %s14, 1
      %s163 = smul.addr %s162, 10
      %s164 = smul.addr %s163, 8
      %s165 = scalar_lea.vmem %s0, %s164
      %s166 = smul.u32 4, %s14
      %p167 = scmp.lt.s32.totalorder %s166, 7
      %s168 = scalar_select %p167, %s166, 7
      %s169 = smul.addr %s168, 8
      %s170 = scalar_lea.vmem %s3, %s169
      %s171 = smul.u32 4, %s14
      %v172 = vld [vmem:[%s165] sm:$0xff]
      %v173 = vld [vmem:[%s165 + $0x10] sm:$0xff]
      %v174 = vld [vmem:[%s165 + $0x20] sm:$0xff]
      %v175 = vld [vmem:[%s165 + $0x30] sm:$0xff]
      %v176 = vld [vmem:[%s1] sm:$0xff]
      %v177 = vld [vmem:[%s1 + $0x8] sm:$0xff]
      %v178 = vld [vmem:[%s1 + $0x10] sm:$0xff]
      %v179 = vld [vmem:[%s1 + $0x18] sm:$0xff]
      %v180 = vld [vmem:[%s1 + $0x20] sm:$0xff]
      %v181 = vld [vmem:[%s1 + $0x28] sm:$0xff]
      %v182 = vld [vmem:[%s1 + $0x30] sm:$0xff]
      %v183 = vld [vmem:[%s1 + $0x38] sm:$0xff]
      %v184 = vld [vmem:[%s1 + $0x40] sm:$0xff]
      %v185 = vld [vmem:[%s1 + $0x48] sm:$0xff]
      %v186 = vld [vmem:[%s1 + $0x50] sm:$0xff]
      %v187 = vld [vmem:[%s1 + $0x58] sm:$0xff]
      %v188 = vld [vmem:[%s1 + $0x60] sm:$0xff]
      %v189 = vld [vmem:[%s1 + $0x68] sm:$0xff]
      %v190 = vld [vmem:[%s1 + $0x70] sm:$0xff]
      %v191 = vld [vmem:[%s1 + $0x78] sm:$0xff]
      %v192 = vld [vmem:[%s165 + $0x1] sm:$0xff]
      %v193 = vld [vmem:[%s165 + $0x11] sm:$0xff]
      %v194 = vld [vmem:[%s165 + $0x21] sm:$0xff]
      %v195 = vld [vmem:[%s165 + $0x31] sm:$0xff]
      %s196 = scalar_lea.vmem %s1, 128
      %v197 = vld [vmem:[%s196] sm:$0xff]
      %v198 = vld [vmem:[%s196 + $0x8] sm:$0xff]
      %v199 = vld [vmem:[%s196 + $0x10] sm:$0xff]
      %v200 = vld [vmem:[%s196 + $0x18] sm:$0xff]
      %v201 = vld [vmem:[%s196 + $0x20] sm:$0xff]
      %v202 = vld [vmem:[%s196 + $0x28] sm:$0xff]
      %v203 = vld [vmem:[%s196 + $0x30] sm:$0xff]
      %v204 = vld [vmem:[%s196 + $0x38] sm:$0xff]
      %v205 = vld [vmem:[%s196 + $0x40] sm:$0xff]
      %v206 = vld [vmem:[%s196 + $0x48] sm:$0xff]
      %v207 = vld [vmem:[%s196 + $0x50] sm:$0xff]
      %v208 = vld [vmem:[%s196 + $0x58] sm:$0xff]
      %v209 = vld [vmem:[%s196 + $0x60] sm:$0xff]
      %v210 = vld [vmem:[%s196 + $0x68] sm:$0xff]
      %v211 = vld [vmem:[%s196 + $0x70] sm:$0xff]
      %v212 = vld [vmem:[%s196 + $0x78] sm:$0xff]
      %213 = vmatprep.subr.mxu0 0.0
      %214 = vmatpush1.msra.mxu0 %v197
      %215 = vmatprep.subr.mxu0 0.0
      %216 = vmatpush1.msra.mxu0 %v198
      %217 = vmatprep.subr.mxu0 0.0
      %218 = vmatpush1.msra.mxu0 %v199
      %219 = vmatprep.subr.mxu0 0.0
      %220 = vmatpush1.msra.mxu0 %v200
      %221 = vmatprep.subr.mxu0 0.0
      %222 = vmatpush1.msra.mxu0 %v201
      %223 = vmatprep.subr.mxu0 0.0
      %224 = vmatpush1.msra.mxu0 %v202
      %225 = vmatprep.subr.mxu0 0.0
      %226 = vmatpush1.msra.mxu0 %v203
      %227 = vmatprep.subr.mxu0 0.0
      %228 = vmatpush1.msra.mxu0 %v204
      %229 = vmatprep.subr.mxu0 0.0
      %230 = vmatpush1.msra.mxu0 %v205
      %231 = vmatprep.subr.mxu0 0.0
      %232 = vmatpush1.msra.mxu0 %v206
      %233 = vmatprep.subr.mxu0 0.0
      %234 = vmatpush1.msra.mxu0 %v207
      %235 = vmatprep.subr.mxu0 0.0
      %236 = vmatpush1.msra.mxu0 %v208
      %237 = vmatprep.subr.mxu0 0.0
      %238 = vmatpush1.msra.mxu0 %v209
      %239 = vmatprep.subr.mxu0 0.0
      %240 = vmatpush1.msra.mxu0 %v210
      %241 = vmatprep.subr.mxu0 0.0
      %242 = vmatpush1.msra.mxu0 %v211
      %243 = vmatprep.subr.mxu0 0.0
      %244 = vmatpush1.msra.mxu0 %v212
      %245 = vmatprep.subr.mxu0 0.0
      %246 = vmatpush1.msra.mxu0 0.0
      %247 = vmatprep.subr.mxu0 0.0
      %248 = vmatpush1.msra.mxu0 0.0
      %249 = vmatprep.subr.mxu0 0.0
      %250 = vmatpush1.msra.mxu0 0.0
      %251 = vmatprep.subr.mxu0 0.0
      %252 = vmatpush1.msra.mxu0 0.0
      %253 = vmatprep.subr.mxu0 0.0
      %254 = vmatpush1.msra.mxu0 0.0
      %255 = vmatprep.subr.mxu0 0.0
      %256 = vmatpush1.msra.mxu0 0.0
      %257 = vmatprep.subr.mxu0 0.0
      %258 = vmatpush1.msra.mxu0 0.0
      %259 = vmatprep.subr.mxu0 0.0
      %260 = vmatpush1.msra.mxu0 0.0
      %261 = vmatprep.subr.mxu0 0.0
      %262 = vmatpush1.msra.mxu0 0.0
      %263 = vmatprep.subr.mxu0 0.0
      %264 = vmatpush1.msra.mxu0 0.0
      %265 = vmatprep.subr.mxu0 0.0
      %266 = vmatpush1.msra.mxu0 0.0
      %267 = vmatprep.subr.mxu0 0.0
      %268 = vmatpush1.msra.mxu0 0.0
      %269 = vmatprep.subr.mxu0 0.0
      %270 = vmatpush1.msra.mxu0 0.0
      %271 = vmatprep.subr.mxu0 0.0
      %272 = vmatpush1.msra.mxu0 0.0
      %273 = vmatprep.subr.mxu0 0.0
      %274 = vmatpush1.msra.mxu0 0.0
      %275 = vmatprep.subr.mxu0 0.0
      %276 = vmatpush1.msra.mxu0 0.0
      %277 = vmatprep.mubr.f32.mxu0 0.0
      %278 = vmatmul.mubr.f32.gmra.mrb[0].mxu0 %v192
      %v279 = vpop.f32.mrb[0].mxu0
      %v280 = vadd.f32 0.0, %v279
      %v281 = vpop.f32.mrb[0].mxu0
      %282 = vmatprep.mubr.f32.mxu0 0.0
      %283 = vmatmul.mubr.f32.gmra.mrb[0].mxu0 %v193
      %v284 = vpop.f32.mrb[0].mxu0
      %v285 = vadd.f32 0.0, %v284
      %v286 = vpop.f32.mrb[0].mxu0
      %287 = vmatprep.mubr.f32.mxu0 0.0
      %288 = vmatmul.mubr.f32.gmra.mrb[0].mxu0 %v194
      %v289 = vpop.f32.mrb[0].mxu0
      %v290 = vadd.f32 0.0, %v289
      %v291 = vpop.f32.mrb[0].mxu0
      %292 = vmatprep.mubr.f32.mxu0 0.0
      %293 = vmatmul.mubr.f32.gmra.mrb[0].mxu0 %v195
      %v294 = vpop.f32.mrb[0].mxu0
      %v295 = vadd.f32 0.0, %v294
      %v296 = vpop.f32.mrb[0].mxu0
      %297 = vdwg.mxu0
      %298 = vmatprep.subr.mxu0 0.0
      %299 = vmatpush1.msra.mxu0 %v176
      %300 = vmatprep.subr.mxu0 0.0
      %301 = vmatpush1.msra.mxu0 %v177
      %302 = vmatprep.subr.mxu0 0.0
      %303 = vmatpush1.msra.mxu0 %v178
      %304 = vmatprep.subr.mxu0 0.0
      %305 = vmatpush1.msra.mxu0 %v179
      %306 = vmatprep.subr.mxu0 0.0
      %307 = vmatpush1.msra.mxu0 %v180
      %308 = vmatprep.subr.mxu0 0.0
      %309 = vmatpush1.msra.mxu0 %v181
      %310 = vmatprep.subr.mxu0 0.0
      %311 = vmatpush1.msra.mxu0 %v182
      %312 = vmatprep.subr.mxu0 0.0
      %313 = vmatpush1.msra.mxu0 %v183
      %314 = vmatprep.subr.mxu0 0.0
      %315 = vmatpush1.msra.mxu0 %v184
      %316 = vmatprep.subr.mxu0 0.0
      %317 = vmatpush1.msra.mxu0 %v185
      %318 = vmatprep.subr.mxu0 0.0
      %319 = vmatpush1.msra.mxu0 %v186
      %320 = vmatprep.subr.mxu0 0.0
      %321 = vmatpush1.msra.mxu0 %v187
      %322 = vmatprep.subr.mxu0 0.0
      %323 = vmatpush1.msra.mxu0 %v188
      %324 = vmatprep.subr.mxu0 0.0
      %325 = vmatpush1.msra.mxu0 %v189
      %326 = vmatprep.subr.mxu0 0.0
      %327 = vmatpush1.msra.mxu0 %v190
      %328 = vmatprep.subr.mxu0 0.0
      %329 = vmatpush1.msra.mxu0 %v191
      %330 = vmatprep.subr.mxu0 0.0
      %331 = vmatpush1.msra.mxu0 0.0
      %332 = vmatprep.subr.mxu0 0.0
      %333 = vmatpush1.msra.mxu0 0.0
      %334 = vmatprep.subr.mxu0 0.0
      %335 = vmatpush1.msra.mxu0 0.0
      %336 = vmatprep.subr.mxu0 0.0
      %337 = vmatpush1.msra.mxu0 0.0
      %338 = vmatprep.subr.mxu0 0.0
      %339 = vmatpush1.msra.mxu0 0.0
      %340 = vmatprep.subr.mxu0 0.0
      %341 = vmatpush1.msra.mxu0 0.0
      %342 = vmatprep.subr.mxu0 0.0
      %343 = vmatpush1.msra.mxu0 0.0
      %344 = vmatprep.subr.mxu0 0.0
      %345 = vmatpush1.msra.mxu0 0.0
      %346 = vmatprep.subr.mxu0 0.0
      %347 = vmatpush1.msra.mxu0 0.0
      %348 = vmatprep.subr.mxu0 0.0
      %349 = vmatpush1.msra.mxu0 0.0
      %350 = vmatprep.subr.mxu0 0.0
      %351 = vmatpush1.msra.mxu0 0.0
      %352 = vmatprep.subr.mxu0 0.0
      %353 = vmatpush1.msra.mxu0 0.0
      %354 = vmatprep.subr.mxu0 0.0
      %355 = vmatpush1.msra.mxu0 0.0
      %356 = vmatprep.subr.mxu0 0.0
      %357 = vmatpush1.msra.mxu0 0.0
      %358 = vmatprep.subr.mxu0 0.0
      %359 = vmatpush1.msra.mxu0 0.0
      %360 = vmatprep.subr.mxu0 0.0
      %361 = vmatpush1.msra.mxu0 0.0
      %362 = vmatprep.mubr.f32.mxu0 0.0
      %363 = vmatmul.mubr.f32.gmra.mrb[0].mxu0 %v172
      %v364 = vpop.f32.mrb[0].mxu0
      %v365 = vadd.f32 %v280, %v364
      %v366 = vpop.f32.mrb[0].mxu0
      %367 = vmatprep.mubr.f32.mxu0 0.0
      %368 = vmatmul.mubr.f32.gmra.mrb[0].mxu0 %v173
      %v369 = vpop.f32.mrb[0].mxu0
      %v370 = vadd.f32 %v285, %v369
      %v371 = vpop.f32.mrb[0].mxu0
      %372 = vmatprep.mubr.f32.mxu0 0.0
      %373 = vmatmul.mubr.f32.gmra.mrb[0].mxu0 %v174
      %v374 = vpop.f32.mrb[0].mxu0
      %v375 = vadd.f32 %v290, %v374
      %v376 = vpop.f32.mrb[0].mxu0
      %377 = vmatprep.mubr.f32.mxu0 0.0
      %378 = vmatmul.mubr.f32.gmra.mrb[0].mxu0 %v175
      %v379 = vpop.f32.mrb[0].mxu0
      %v380 = vadd.f32 %v295, %v379
      %v381 = vpop.f32.mrb[0].mxu0
      %382 = vdwg.mxu0
      %s383 = scalar_lea.vmem %s165, 16
      %v384 = vld [vmem:[%s383] sm:$0xff]
      %v385 = vld [vmem:[%s383 + $0x10] sm:$0xff]
      %v386 = vld [vmem:[%s383 + $0x20] sm:$0xff]
      %v387 = vld [vmem:[%s383 + $0x30] sm:$0xff]
      %s388 = scalar_lea.vmem %s1, 256
      %v389 = vld [vmem:[%s388] sm:$0xff]
      %v390 = vld [vmem:[%s388 + $0x8] sm:$0xff]
      %v391 = vld [vmem:[%s388 + $0x10] sm:$0xff]
      %v392 = vld [vmem:[%s388 + $0x18] sm:$0xff]
      %v393 = vld [vmem:[%s388 + $0x20] sm:$0xff]
      %v394 = vld [vmem:[%s388 + $0x28] sm:$0xff]
      %v395 = vld [vmem:[%s388 + $0x30] sm:$0xff]
      %v396 = vld [vmem:[%s388 + $0x38] sm:$0xff]
      %v397 = vld [vmem:[%s388 + $0x40] sm:$0xff]
      %v398 = vld [vmem:[%s388 + $0x48] sm:$0xff]
      %v399 = vld [vmem:[%s388 + $0x50] sm:$0xff]
      %v400 = vld [vmem:[%s388 + $0x58] sm:$0xff]
      %v401 = vld [vmem:[%s388 + $0x60] sm:$0xff]
      %v402 = vld [vmem:[%s388 + $0x68] sm:$0xff]
      %v403 = vld [vmem:[%s388 + $0x70] sm:$0xff]
      %v404 = vld [vmem:[%s388 + $0x78] sm:$0xff]
      %405 = vmatprep.subr.mxu0 0.0
      %406 = vmatpush1.msra.mxu0 %v389
      %407 = vmatprep.subr.mxu0 0.0
      %408 = vmatpush1.msra.mxu0 %v390
      %409 = vmatprep.subr.mxu0 0.0
      %410 = vmatpush1.msra.mxu0 %v391
      %411 = vmatprep.subr.mxu0 0.0
      %412 = vmatpush1.msra.mxu0 %v392
      %413 = vmatprep.subr.mxu0 0.0
      %414 = vmatpush1.msra.mxu0 %v393
      %415 = vmatprep.subr.mxu0 0.0
      %416 = vmatpush1.msra.mxu0 %v394
      %417 = vmatprep.subr.mxu0 0.0
      %418 = vmatpush1.msra.mxu0 %v395
      %419 = vmatprep.subr.mxu0 0.0
      %420 = vmatpush1.msra.mxu0 %v396
      %421 = vmatprep.subr.mxu0 0.0
      %422 = vmatpush1.msra.mxu0 %v397
      %423 = vmatprep.subr.mxu0 0.0
      %424 = vmatpush1.msra.mxu0 %v398
      %425 = vmatprep.subr.mxu0 0.0
      %426 = vmatpush1.msra.mxu0 %v399
      %427 = vmatprep.subr.mxu0 0.0
      %428 = vmatpush1.msra.mxu0 %v400
      %429 = vmatprep.subr.mxu0 0.0
      %430 = vmatpush1.msra.mxu0 %v401
      %431 = vmatprep.subr.mxu0 0.0
      %432 = vmatpush1.msra.mxu0 %v402
      %433 = vmatprep.subr.mxu0 0.0
      %434 = vmatpush1.msra.mxu0 %v403
      %435 = vmatprep.subr.mxu0 0.0
      %436 = vmatpush1.msra.mxu0 %v404
      %437 = vmatprep.subr.mxu0 0.0
      %438 = vmatpush1.msra.mxu0 0.0
      %439 = vmatprep.subr.mxu0 0.0
      %440 = vmatpush1.msra.mxu0 0.0
      %441 = vmatprep.subr.mxu0 0.0
      %442 = vmatpush1.msra.mxu0 0.0
      %443 = vmatprep.subr.mxu0 0.0
      %444 = vmatpush1.msra.mxu0 0.0
      %445 = vmatprep.subr.mxu0 0.0
      %446 = vmatpush1.msra.mxu0 0.0
      %447 = vmatprep.subr.mxu0 0.0
      %448 = vmatpush1.msra.mxu0 0.0
      %449 = vmatprep.subr.mxu0 0.0
      %450 = vmatpush1.msra.mxu0 0.0
      %451 = vmatprep.subr.mxu0 0.0
      %452 = vmatpush1.msra.mxu0 0.0
      %453 = vmatprep.subr.mxu0 0.0
      %454 = vmatpush1.msra.mxu0 0.0
      %455 = vmatprep.subr.mxu0 0.0
      %456 = vmatpush1.msra.mxu0 0.0
      %457 = vmatprep.subr.mxu0 0.0
      %458 = vmatpush1.msra.mxu0 0.0
      %459 = vmatprep.subr.mxu0 0.0
      %460 = vmatpush1.msra.mxu0 0.0
      %461 = vmatprep.subr.mxu0 0.0
      %462 = vmatpush1.msra.mxu0 0.0
      %463 = vmatprep.subr.mxu0 0.0
      %464 = vmatpush1.msra.mxu0 0.0
      %465 = vmatprep.subr.mxu0 0.0
      %466 = vmatpush1.msra.mxu0 0.0
      %467 = vmatprep.subr.mxu0 0.0
      %468 = vmatpush1.msra.mxu0 0.0
      %469 = vmatprep.mubr.f32.mxu0 0.0
      %470 = vmatmul.mubr.f32.gmra.mrb[0].mxu0 %v384
      %v471 = vpop.f32.mrb[0].mxu0
      %v472 = vadd.f32 0.0, %v471
      %v473 = vpop.f32.mrb[0].mxu0
      %474 = vmatprep.mubr.f32.mxu0 0.0
      %475 = vmatmul.mubr.f32.gmra.mrb[0].mxu0 %v385
      %v476 = vpop.f32.mrb[0].mxu0
      %v477 = vadd.f32 0.0, %v476
      %v478 = vpop.f32.mrb[0].mxu0
      %479 = vmatprep.mubr.f32.mxu0 0.0
      %480 = vmatmul.mubr.f32.gmra.mrb[0].mxu0 %v386
      %v481 = vpop.f32.mrb[0].mxu0
      %v482 = vadd.f32 0.0, %v481
      %v483 = vpop.f32.mrb[0].mxu0
      %484 = vmatprep.mubr.f32.mxu0 0.0
      %485 = vmatmul.mubr.f32.gmra.mrb[0].mxu0 %v387
      %v486 = vpop.f32.mrb[0].mxu0
      %v487 = vadd.f32 0.0, %v486
      %v488 = vpop.f32.mrb[0].mxu0
      %489 = vdwg.mxu0
      %v490 = vadd.f32 %v365, %v472
      %v491 = vadd.f32 %v370, %v477
      %v492 = vadd.f32 %v375, %v482
      %v493 = vadd.f32 %v380, %v487
      %v494 = vld [vmem:[%s383 + $0x1] sm:$0xff]
      %v495 = vld [vmem:[%s383 + $0x11] sm:$0xff]
      %v496 = vld [vmem:[%s383 + $0x21] sm:$0xff]
      %v497 = vld [vmem:[%s383 + $0x31] sm:$0xff]
      %s498 = scalar_lea.vmem %s1, 384
      %v499 = vld [vmem:[%s498] sm:$0xff]
      %v500 = vld [vmem:[%s498 + $0x8] sm:$0xff]
      %v501 = vld [vmem:[%s498 + $0x10] sm:$0xff]
      %v502 = vld [vmem:[%s498 + $0x18] sm:$0xff]
      %v503 = vld [vmem:[%s498 + $0x20] sm:$0xff]
      %v504 = vld [vmem:[%s498 + $0x28] sm:$0xff]
      %v505 = vld [vmem:[%s498 + $0x30] sm:$0xff]
      %v506 = vld [vmem:[%s498 + $0x38] sm:$0xff]
      %v507 = vld [vmem:[%s498 + $0x40] sm:$0xff]
      %v508 = vld [vmem:[%s498 + $0x48] sm:$0xff]
      %v509 = vld [vmem:[%s498 + $0x50] sm:$0xff]
      %v510 = vld [vmem:[%s498 + $0x58] sm:$0xff]
      %v511 = vld [vmem:[%s498 + $0x60] sm:$0xff]
      %v512 = vld [vmem:[%s498 + $0x68] sm:$0xff]
      %v513 = vld [vmem:[%s498 + $0x70] sm:$0xff]
      %v514 = vld [vmem:[%s498 + $0x78] sm:$0xff]
      %515 = vmatprep.subr.mxu0 0.0
      %516 = vmatpush1.msra.mxu0 %v499
      %517 = vmatprep.subr.mxu0 0.0
      %518 = vmatpush1.msra.mxu0 %v500
      %519 = vmatprep.subr.mxu0 0.0
      %520 = vmatpush1.msra.mxu0 %v501
      %521 = vmatprep.subr.mxu0 0.0
      %522 = vmatpush1.msra.mxu0 %v502
      %523 = vmatprep.subr.mxu0 0.0
      %524 = vmatpush1.msra.mxu0 %v503
      %525 = vmatprep.subr.mxu0 0.0
      %526 = vmatpush1.msra.mxu0 %v504
      %527 = vmatprep.subr.mxu0 0.0
      %528 = vmatpush1.msra.mxu0 %v505
      %529 = vmatprep.subr.mxu0 0.0
      %530 = vmatpush1.msra.mxu0 %v506
      %531 = vmatprep.subr.mxu0 0.0
      %532 = vmatpush1.msra.mxu0 %v507
      %533 = vmatprep.subr.mxu0 0.0
      %534 = vmatpush1.msra.mxu0 %v508
      %535 = vmatprep.subr.mxu0 0.0
      %536 = vmatpush1.msra.mxu0 %v509
      %537 = vmatprep.subr.mxu0 0.0
      %538 = vmatpush1.msra.mxu0 %v510
      %539 = vmatprep.subr.mxu0 0.0
      %540 = vmatpush1.msra.mxu0 %v511
      %541 = vmatprep.subr.mxu0 0.0
      %542 = vmatpush1.msra.mxu0 %v512
      %543 = vmatprep.subr.mxu0 0.0
      %544 = vmatpush1.msra.mxu0 %v513
      %545 = vmatprep.subr.mxu0 0.0
      %546 = vmatpush1.msra.mxu0 %v514
      %547 = vmatprep.subr.mxu0 0.0
      %548 = vmatpush1.msra.mxu0 0.0
      %549 = vmatprep.subr.mxu0 0.0
      %550 = vmatpush1.msra.mxu0 0.0
      %551 = vmatprep.subr.mxu0 0.0
      %552 = vmatpush1.msra.mxu0 0.0
      %553 = vmatprep.subr.mxu0 0.0
      %554 = vmatpush1.msra.mxu0 0.0
      %555 = vmatprep.subr.mxu0 0.0
      %556 = vmatpush1.msra.mxu0 0.0
      %557 = vmatprep.subr.mxu0 0.0
      %558 = vmatpush1.msra.mxu0 0.0
      %559 = vmatprep.subr.mxu0 0.0
      %560 = vmatpush1.msra.mxu0 0.0
      %561 = vmatprep.subr.mxu0 0.0
      %562 = vmatpush1.msra.mxu0 0.0
      %563 = vmatprep.subr.mxu0 0.0
      %564 = vmatpush1.msra.mxu0 0.0
      %565 = vmatprep.subr.mxu0 0.0
      %566 = vmatpush1.msra.mxu0 0.0
      %567 = vmatprep.subr.mxu0 0.0
      %568 = vmatpush1.msra.mxu0 0.0
      %569 = vmatprep.subr.mxu0 0.0
      %570 = vmatpush1.msra.mxu0 0.0
      %571 = vmatprep.subr.mxu0 0.0
      %572 = vmatpush1.msra.mxu0 0.0
      %573 = vmatprep.subr.mxu0 0.0
      %574 = vmatpush1.msra.mxu0 0.0
      %575 = vmatprep.subr.mxu0 0.0
      %576 = vmatpush1.msra.mxu0 0.0
      %577 = vmatprep.subr.mxu0 0.0
      %578 = vmatpush1.msra.mxu0 0.0
      %579 = vmatprep.mubr.f32.mxu0 0.0
      %580 = vmatmul.mubr.f32.gmra.mrb[0].mxu0 %v494
      %v581 = vpop.f32.mrb[0].mxu0
      %v582 = vadd.f32 0.0, %v581
      %v583 = vpop.f32.mrb[0].mxu0
      %584 = vmatprep.mubr.f32.mxu0 0.0
      %585 = vmatmul.mubr.f32.gmra.mrb[0].mxu0 %v495
      %v586 = vpop.f32.mrb[0].mxu0
      %v587 = vadd.f32 0.0, %v586
      %v588 = vpop.f32.mrb[0].mxu0
      %589 = vmatprep.mubr.f32.mxu0 0.0
      %590 = vmatmul.mubr.f32.gmra.mrb[0].mxu0 %v496
      %v591 = vpop.f32.mrb[0].mxu0
      %v592 = vadd.f32 0.0, %v591
      %v593 = vpop.f32.mrb[0].mxu0
      %594 = vmatprep.mubr.f32.mxu0 0.0
      %595 = vmatmul.mubr.f32.gmra.mrb[0].mxu0 %v497
      %v596 = vpop.f32.mrb[0].mxu0
      %v597 = vadd.f32 0.0, %v596
      %v598 = vpop.f32.mrb[0].mxu0
      %599 = vdwg.mxu0
      %v600 = vadd.f32 %v490, %v582
      %v601 = vadd.f32 %v491, %v587
      %v602 = vadd.f32 %v492, %v592
      %v603 = vadd.f32 %v493, %v597
      %v604 = vld [vmem:[%s2] sm:$0x1]
      %v606 = vlaneseq
      %v607 = vshrl.u32 %v606, 7
      %v608 = vsub.s32 0, %v607
      %v609 = vrot.slane %v604, %v608
      %v611 = vadd.f32 %v600, %v609
      %v612 = vadd.f32 %v601, %v609
      %v613 = vadd.f32 %v602, %v609
      %v614 = vadd.f32 %v603, %v609
      %v615 = vmax.f32 %v611, 0.0
      %v616 = vmax.f32 %v612, 0.0
      %v617 = vmax.f32 %v613, 0.0
      %v618 = vmax.f32 %v614, 0.0
      %vm619 = vcmask 523264
      %620 = vst.msk [vmem:[%s170] sm:$0xff] %vm619, %v615
      %621 = vst.msk [vmem:[%s170 + $0x8] sm:$0xff] %vm619, %v616
      %622 = vst.msk [vmem:[%s170 + $0x10] sm:$0xff] %vm619, %v617
      %623 = vst.msk [vmem:[%s170 + $0x18] sm:$0xff] %vm619, %v618
      %s624 = smul.u32 4, %s14
      %p625 = scmp.lt.s32.totalorder %s624, 7
      %s626 = scalar_select %p625, %s624, 7
      %s627 = smul.addr %s626, 8
      %s628 = scalar_lea.vmem %s3, %s627
      // Predicated region
      $region33: #{autoencoder_forward.7} parent=31 // pred_check
        %p629 = pneg %p100
      $region34: #{autoencoder_forward.7} parent=31 // pred_check_branch
        %631 = sbr.rel (%p629) target = $region36
      $region35: #{autoencoder_forward.7} parent=31 // pred_region
        %s632 = smul.u32 4, %s14
      $region36: #{autoencoder_forward.7} parent=31 // pred_fallthru
        _
    $region32: #{autoencoder_forward.7} parent=5 // pred_fallthru
      _
    %p633 = scmp.le.s32.totalorder 2, %s9
    // Predicated region
    $region37: #{autoencoder_forward.7} parent=5 // pred_check
      %p634 = pneg %p633
    $region38: #{autoencoder_forward.7} parent=5 // pred_check_branch
      %636 = sbr.rel (%p634) target = $region40
    $region39: #{autoencoder_forward.7} parent=5 // pred_region
      %s637 = ssub.s32 %s9, 2
      // Predicated region
      $region41: #{autoencoder_forward.7} parent=39 // pred_check
        %p638 = pneg %p106
      $region42: #{autoencoder_forward.7} parent=39 // pred_check_branch
        %640 = sbr.rel (%p638) target = $region44
      $region43: #{autoencoder_forward.7} parent=39 // pred_region
        %s641 = smul.u32 4, %s15
        %p642 = scmp.lt.s32.totalorder %s641, 7
        %s643 = scalar_select %p642, %s641, 7
        %s644 = smul.addr %s643, 8
        %s645 = scalar_lea.vmem %s3, %s644
      $region44: #{autoencoder_forward.7} parent=39 // pred_fallthru
        _
    $region40: #{autoencoder_forward.7} parent=5 // pred_fallthru
      _
  $region6: #{autoencoder_forward.7} parent=0 // loop_footer
    %s13 = sadd.s32 1, %s9
  $region7: #{autoencoder_forward.7} parent=0 // loop_footer_branch
    %8 = sbr.rel target = $region3
  $region8: #{autoencoder_forward.7} parent=0 // loop_exit
    _

// kernel: autoencoder_forward.8
$region0: #{autoencoder_forward.8}
  #allocation0 [shape = 'u32[]', space=smem, size = 0x4, offset = 0x4, fixed_abs, tag = 'smem constant byte address 0x4 - core index']
  #allocation1 [shape = 'u32[144,128]{1,0:T(1,128)}', space=vmem, size = 0x12000, scoped, tag = 'internal scratch']
  %s0 = inlined_call_operand.vmem [shape: f32[2,1024], index: 0, kind: input, shape index: {}]
  %s1 = inlined_call_operand.vmem [shape: f32[1024,128], index: 1, kind: input, shape index: {}]
  %s2 = inlined_call_operand.vmem [shape: f32[1,128], index: 2, kind: input, shape index: {}]
  %s3 = inlined_call_operand.vmem [shape: f32[2,128], index: 3, kind: output, shape index: {}]
  %s4 = sld [smem:[#allocation0]]
  $region49: #{autoencoder_forward.8} parent=0
    _
  %s6 = ssub.s32 1, %s4
  %s7 = scalar_select 0, %s6, %s4
  loop: start=0, step=1, limit=6
  $region2: #{autoencoder_forward.8} parent=0 // loop_pre_header
    _
  $region3: #{autoencoder_forward.8} parent=0 // loop_header
    %s9 = sphi 0, %s13
    %p10 = scmp.ge.s32.totalorder %s9, 6
    %s19 = sphi 0, %s21
    %s22 = sphi 0, %s19
    %s23 = sphi 0, %s22
    %s39 = sphi 0, %s23
    %s45 = sphi 0, %s47
    %s48 = sphi 0, %s45
    %s49 = sphi 0, %s48
    %s65 = sphi 0, %s49
    %s69 = sphi 0, %s69
    %s71 = sphi 0, %s69
    %s72 = sphi 0, %s71
    %s86 = sphi 0, %s72
    %s90 = sphi 0, %s90
    %s92 = sphi 0, %s90
    %s93 = sphi 0, %s92
    %s107 = sphi 0, %s93
  $region4: #{autoencoder_forward.8} parent=0 // loop_header_branch
    %12 = sbr.rel (%p10) target = $region8
  $region5: #{autoencoder_forward.8} parent=0 // loop_body
    %s14 = ssub.s32 %s9, 1
    %s15 = ssub.s32 %s9, 2
    %s16 = sadd.s32 %s9, 1
    %s17 = ssub.s32 %s9, %s16
    %p18 = scmp.eq.s32.totalorder %s17, 0
    %s20 = sadd.s32 %s19, 1
    %s21 = scalar_select %p18, %s19, %s20
    %p24 = pneg %p18
    %p25 = scmp.eq.s32.totalorder %s9, 3
    %p26 = por %p24, %p25
    %p27 = scmp.ne.s32.totalorder %s19, %s22
    %p28 = scmp.eq.s32.totalorder %s9, 0
    %p29 = por %p27, %p28
    %p30 = scmp.ne.s32.totalorder %s19, %s22
    %p31 = scmp.eq.s32.totalorder %s14, 3
    %p32 = por %p30, %p31
    %p33 = scmp.ne.s32.totalorder %s22, %s23
    %p34 = scmp.eq.s32.totalorder %s14, 0
    %p35 = por %p33, %p34
    %p36 = scmp.ne.s32.totalorder %s22, %s23
    %p37 = scmp.eq.s32.totalorder %s15, 3
    %p38 = por %p36, %p37
    %p40 = scmp.ne.s32.totalorder %s23, %s39
    %p41 = scmp.eq.s32.totalorder %s15, 0
    %p42 = por %p40, %p41
    %s43 = ssub.s32 %s9, %s16
    %p44 = scmp.eq.s32.totalorder %s43, 0
    %s46 = sadd.s32 %s45, 1
    %s47 = scalar_select %p44, %s45, %s46
    %p50 = pneg %p44
    %p51 = scmp.eq.s32.totalorder %s9, 3
    %p52 = por %p50, %p51
    %p53 = scmp.ne.s32.totalorder %s45, %s48
    %p54 = scmp.eq.s32.totalorder %s9, 0
    %p55 = por %p53, %p54
    %p56 = scmp.ne.s32.totalorder %s45, %s48
    %p57 = scmp.eq.s32.totalorder %s14, 3
    %p58 = por %p56, %p57
    %p59 = scmp.ne.s32.totalorder %s48, %s49
    %p60 = scmp.eq.s32.totalorder %s14, 0
    %p61 = por %p59, %p60
    %p62 = scmp.ne.s32.totalorder %s48, %s49
    %p63 = scmp.eq.s32.totalorder %s15, 3
    %p64 = por %p62, %p63
    %p66 = scmp.ne.s32.totalorder %s49, %s65
    %p67 = scmp.eq.s32.totalorder %s15, 0
    %p68 = por %p66, %p67
    %s70 = sadd.s32 %s69, 1
    %p73 = scmp.eq.s32.totalorder %s9, 3
    %p74 = scmp.ne.s32.totalorder %s69, %s71
    %p75 = scmp.eq.s32.totalorder %s9, 0
    %p76 = por %p74, %p75
    %p77 = scmp.ne.s32.totalorder %s69, %s71
    %p78 = scmp.eq.s32.totalorder %s14, 3
    %p79 = por %p77, %p78
    %p80 = scmp.ne.s32.totalorder %s71, %s72
    %p81 = scmp.eq.s32.totalorder %s14, 0
    %p82 = por %p80, %p81
    %p83 = scmp.ne.s32.totalorder %s71, %s72
    %p84 = scmp.eq.s32.totalorder %s15, 3
    %p85 = por %p83, %p84
    %p87 = scmp.ne.s32.totalorder %s72, %s86
    %p88 = scmp.eq.s32.totalorder %s15, 0
    %p89 = por %p87, %p88
    %s91 = sadd.s32 %s90, 1
    %p94 = scmp.eq.s32.totalorder %s9, 3
    %p95 = scmp.ne.s32.totalorder %s90, %s92
    %p96 = scmp.eq.s32.totalorder %s9, 0
    %p97 = por %p95, %p96
    %p98 = scmp.ne.s32.totalorder %s90, %s92
    %p99 = scmp.eq.s32.totalorder %s14, 3
    %p100 = por %p98, %p99
    %p101 = scmp.ne.s32.totalorder %s92, %s93
    %p102 = scmp.eq.s32.totalorder %s14, 0
    %p103 = por %p101, %p102
    %p104 = scmp.ne.s32.totalorder %s92, %s93
    %p105 = scmp.eq.s32.totalorder %s15, 3
    %p106 = por %p104, %p105
    %p108 = scmp.ne.s32.totalorder %s93, %s107
    %p109 = scmp.eq.s32.totalorder %s15, 0
    %p110 = por %p108, %p109
    %p111 = scmp.le.s32.totalorder 1, %s9
    %p112 = scmp.lt.s32.totalorder %s9, 5
    %p113 = pnand %p111, %p112
    %p114 = pneg %p113
    // Predicated region
    $region9: #{autoencoder_forward.8} parent=5 // pred_check
      _
    $region10: #{autoencoder_forward.8} parent=5 // pred_check_branch
      %116 = sbr.rel (%p113) target = $region12
    $region11: #{autoencoder_forward.8} parent=5 // pred_region
      %s117 = ssub.s32 %s9, 1
      // Predicated region
      $region13: #{autoencoder_forward.8} parent=11 // pred_check
        %p118 = pneg %p82
      $region14: #{autoencoder_forward.8} parent=11 // pred_check_branch
        %120 = sbr.rel (%p118) target = $region16
      $region15: #{autoencoder_forward.8} parent=11 // pred_region
        _
      $region16: #{autoencoder_forward.8} parent=11 // pred_fallthru
        _
    $region12: #{autoencoder_forward.8} parent=5 // pred_fallthru
      _
    %p121 = scmp.lt.s32.totalorder %s9, 4
    // Predicated region
    $region17: #{autoencoder_forward.8} parent=5 // pred_check
      %p122 = pneg %p121
    $region18: #{autoencoder_forward.8} parent=5 // pred_check_branch
      %124 = sbr.rel (%p122) target = $region20
    $region19: #{autoencoder_forward.8} parent=5 // pred_region
      // Predicated region
      $region21: #{autoencoder_forward.8} parent=19 // pred_check
        %p125 = pneg %p29
      $region22: #{autoencoder_forward.8} parent=19 // pred_check_branch
        %127 = sbr.rel (%p125) target = $region24
      $region23: #{autoencoder_forward.8} parent=19 // pred_region
        %s128 = smul.u32 2, %s9
        %p129 = scmp.lt.s32.totalorder %s128, 7
        %s130 = scalar_select %p129, %s128, 7
        %s131 = smul.addr %s130, 2
        %s132 = scalar_lea.vmem %s0, %s131
        %s133 = smul.u32 2, %s9
      $region24: #{autoencoder_forward.8} parent=19 // pred_fallthru
        _
      // Predicated region
      $region25: #{autoencoder_forward.8} parent=19 // pred_check
        %p134 = pneg %p55
      $region26: #{autoencoder_forward.8} parent=19 // pred_check_branch
        %136 = sbr.rel (%p134) target = $region28
      $region27: #{autoencoder_forward.8} parent=19 // pred_region
        %s137 = smul.u32 32, %s9
        %p138 = scmp.lt.s32.totalorder %s137, 127
        %s139 = scalar_select %p138, %s137, 127
        %s140 = smul.addr %s139, 8
        %s141 = scalar_lea.vmem %s1, %s140
        %s142 = smul.u32 32, %s9
      $region28: #{autoencoder_forward.8} parent=19 // pred_fallthru
        _
    $region20: #{autoencoder_forward.8} parent=5 // pred_fallthru
      _
    %p143 = scmp.le.s32.totalorder 1, %s9
    %p144 = scmp.lt.s32.totalorder %s9, 5
    %p145 = pnand %p143, %p144
    %p146 = pneg %p145
    // Predicated region
    $region29: #{autoencoder_forward.8} parent=5 // pred_check
      _
    $region30: #{autoencoder_forward.8} parent=5 // pred_check_branch
      %148 = sbr.rel (%p145) target = $region32
    $region31: #{autoencoder_forward.8} parent=5 // pred_region
      %s149 = ssub.s32 %s9, 1
      %s150 = smul.u32 2, %s14
      %p151 = scmp.lt.s32.totalorder %s150, 7
      %s152 = scalar_select %p151, %s150, 7
      %s153 = smul.addr %s152, 2
      %s154 = scalar_lea.vmem %s0, %s153
      %p155 = pneg %p35
      %p156 = pneg %p32
      %s157 = smul.u32 32, %s14
      %p158 = scmp.lt.s32.totalorder %s157, 127
      %s159 = scalar_select %p158, %s157, 127
      %s160 = smul.addr %s159, 8
      %s161 = scalar_lea.vmem %s1, %s160
      %p162 = pneg %p61
      %p163 = pneg %p58
      %p164 = pneg %p82
      %p165 = pneg %p79
      %p166 = pneg %p103
      %p167 = pneg %p100
      %s168 = smul.u32 2, %s14
      %p169 = scmp.lt.s32.totalorder %s168, 7
      %s170 = scalar_select %p169, %s168, 7
      %s171 = smul.addr %s170, 2
      %s172 = scalar_lea.vmem %s0, %s171
      %s173 = smul.u32 2, %s14
      %s174 = smul.u32 32, %s14
      %p175 = scmp.lt.s32.totalorder %s174, 127
      %s176 = scalar_select %p175, %s174, 127
      %s177 = smul.addr %s176, 8
      %s178 = scalar_lea.vmem %s1, %s177
      %s179 = smul.u32 32, %s14
      %p180 = scmp.eq.s32.totalorder %s14, 0
      // Predicated region
      $region33: #{autoencoder_forward.8} parent=31 // pred_check
        %p181 = pneg %p180
      $region34: #{autoencoder_forward.8} parent=31 // pred_check_branch
        %183 = sbr.rel (%p181) target = $region36
      $region35: #{autoencoder_forward.8} parent=31 // pred_region
        %v184 = vld [vmem:[%s2] sm:$0x1]
        %v186 = vlaneseq
        %v187 = vshrl.u32 %v186, 7
        %v188 = vsub.s32 0, %v187
        %v189 = vrot.slane %v184, %v188
        %191 = vst [vmem:[%s3] sm:$0x3] %v189
      $region36: #{autoencoder_forward.8} parent=31 // pred_fallthru
        _
      %v192 = vld [vmem:[%s3] sm:$0x3]
      %v193 = vld [vmem:[%s172] sm:$0xf]
      %v194 = vld [vmem:[%s178] sm:$0xff]
      %v195 = vld [vmem:[%s178 + $0x8] sm:$0xff]
      %v196 = vld [vmem:[%s178 + $0x10] sm:$0xff]
      %v197 = vld [vmem:[%s178 + $0x18] sm:$0xff]
      %v198 = vld [vmem:[%s178 + $0x20] sm:$0xff]
      %v199 = vld [vmem:[%s178 + $0x28] sm:$0xff]
      %v200 = vld [vmem:[%s178 + $0x30] sm:$0xff]
      %v201 = vld [vmem:[%s178 + $0x38] sm:$0xff]
      %v202 = vld [vmem:[%s178 + $0x40] sm:$0xff]
      %v203 = vld [vmem:[%s178 + $0x48] sm:$0xff]
      %v204 = vld [vmem:[%s178 + $0x50] sm:$0xff]
      %v205 = vld [vmem:[%s178 + $0x58] sm:$0xff]
      %v206 = vld [vmem:[%s178 + $0x60] sm:$0xff]
      %v207 = vld [vmem:[%s178 + $0x68] sm:$0xff]
      %v208 = vld [vmem:[%s178 + $0x70] sm:$0xff]
      %v209 = vld [vmem:[%s178 + $0x78] sm:$0xff]
      %v210 = vld [vmem:[%s178 + $0x80] sm:$0xff]
      %v211 = vld [vmem:[%s178 + $0x88] sm:$0xff]
      %v212 = vld [vmem:[%s178 + $0x90] sm:$0xff]
      %v213 = vld [vmem:[%s178 + $0x98] sm:$0xff]
      %v214 = vld [vmem:[%s178 + $0xa0] sm:$0xff]
      %v215 = vld [vmem:[%s178 + $0xa8] sm:$0xff]
      %v216 = vld [vmem:[%s178 + $0xb0] sm:$0xff]
      %v217 = vld [vmem:[%s178 + $0xb8] sm:$0xff]
      %v218 = vld [vmem:[%s178 + $0xc0] sm:$0xff]
      %v219 = vld [vmem:[%s178 + $0xc8] sm:$0xff]
      %v220 = vld [vmem:[%s178 + $0xd0] sm:$0xff]
      %v221 = vld [vmem:[%s178 + $0xd8] sm:$0xff]
      %v222 = vld [vmem:[%s178 + $0xe0] sm:$0xff]
      %v223 = vld [vmem:[%s178 + $0xe8] sm:$0xff]
      %v224 = vld [vmem:[%s178 + $0xf0] sm:$0xff]
      %v225 = vld [vmem:[%s178 + $0xf8] sm:$0xff]
      %v228 = vunpack.c.l.s4 1983009808
      %v229 = vunpack.c.0.s8 %v228
      %v230 = vlaneseq
      %v231 = vshrl.u32 %v230, 7
      %v232 = vsub.s32 %v229, %v231
      %v233 = vrot.slane %v193, %v232
      %v234 = vcombine.high %v233, %v233
      %237 = vmatprep.subr.mxu0 0.0
      %238 = vmatpush1.msra.mxu0 %v194
      %239 = vmatprep.subr.mxu0 0.0
      %240 = vmatpush1.msra.mxu0 %v195
      %241 = vmatprep.subr.mxu0 0.0
      %242 = vmatpush1.msra.mxu0 %v196
      %243 = vmatprep.subr.mxu0 0.0
      %244 = vmatpush1.msra.mxu0 %v197
      %245 = vmatprep.subr.mxu0 0.0
      %246 = vmatpush1.msra.mxu0 %v198
      %247 = vmatprep.subr.mxu0 0.0
      %248 = vmatpush1.msra.mxu0 %v199
      %249 = vmatprep.subr.mxu0 0.0
      %250 = vmatpush1.msra.mxu0 %v200
      %251 = vmatprep.subr.mxu0 0.0
      %252 = vmatpush1.msra.mxu0 %v201
      %253 = vmatprep.subr.mxu0 0.0
      %254 = vmatpush1.msra.mxu0 %v202
      %255 = vmatprep.subr.mxu0 0.0
      %256 = vmatpush1.msra.mxu0 %v203
      %257 = vmatprep.subr.mxu0 0.0
      %258 = vmatpush1.msra.mxu0 %v204
      %259 = vmatprep.subr.mxu0 0.0
      %260 = vmatpush1.msra.mxu0 %v205
      %261 = vmatprep.subr.mxu0 0.0
      %262 = vmatpush1.msra.mxu0 %v206
      %263 = vmatprep.subr.mxu0 0.0
      %264 = vmatpush1.msra.mxu0 %v207
      %265 = vmatprep.subr.mxu0 0.0
      %266 = vmatpush1.msra.mxu0 %v208
      %267 = vmatprep.subr.mxu0 0.0
      %268 = vmatpush1.msra.mxu0 %v209
      %269 = vmatprep.subr.mxu0 0.0
      %270 = vmatpush1.msra.mxu0 %v210
      %271 = vmatprep.subr.mxu0 0.0
      %272 = vmatpush1.msra.mxu0 %v211
      %273 = vmatprep.subr.mxu0 0.0
      %274 = vmatpush1.msra.mxu0 %v212
      %275 = vmatprep.subr.mxu0 0.0
      %276 = vmatpush1.msra.mxu0 %v213
      %277 = vmatprep.subr.mxu0 0.0
      %278 = vmatpush1.msra.mxu0 %v214
      %279 = vmatprep.subr.mxu0 0.0
      %280 = vmatpush1.msra.mxu0 %v215
      %281 = vmatprep.subr.mxu0 0.0
      %282 = vmatpush1.msra.mxu0 %v216
      %283 = vmatprep.subr.mxu0 0.0
      %284 = vmatpush1.msra.mxu0 %v217
      %285 = vmatprep.subr.mxu0 0.0
      %286 = vmatpush1.msra.mxu0 %v218
      %287 = vmatprep.subr.mxu0 0.0
      %288 = vmatpush1.msra.mxu0 %v219
      %289 = vmatprep.subr.mxu0 0.0
      %290 = vmatpush1.msra.mxu0 %v220
      %291 = vmatprep.subr.mxu0 0.0
      %292 = vmatpush1.msra.mxu0 %v221
      %293 = vmatprep.subr.mxu0 0.0
      %294 = vmatpush1.msra.mxu0 %v222
      %295 = vmatprep.subr.mxu0 0.0
      %296 = vmatpush1.msra.mxu0 %v223
      %297 = vmatprep.subr.mxu0 0.0
      %298 = vmatpush1.msra.mxu0 %v224
      %299 = vmatprep.subr.mxu0 0.0
      %300 = vmatpush1.msra.mxu0 %v225
      %301 = vmatprep.mubr.f32.mxu0 %v234
      %302 = vmatmul.mubr.f32.gmra.mrb[0].mxu0 %v233
      %v303 = vpop.f32.mrb[0].mxu0
      %v304 = vadd.f32 0.0, %v303
      %v305 = vpop.f32.mrb[0].mxu0
      %306 = vdwg.mxu0
      %v307 = vadd.f32 %v192, %v304
      %308 = vst [vmem:[%s3] sm:$0x3] %v307
      // Predicated region
      $region37: #{autoencoder_forward.8} parent=31 // pred_check
        %p309 = pneg %p100
      $region38: #{autoencoder_forward.8} parent=31 // pred_check_branch
        %311 = sbr.rel (%p309) target = $region40
      $region39: #{autoencoder_forward.8} parent=31 // pred_region
        _
      $region40: #{autoencoder_forward.8} parent=31 // pred_fallthru
        _
      // Predicated region
      $region41: #{autoencoder_forward.8} parent=31 // pred_check
        %p312 = pneg %p100
      $region42: #{autoencoder_forward.8} parent=31 // pred_check_branch
        %314 = sbr.rel (%p312) target = $region44
      $region43: #{autoencoder_forward.8} parent=31 // pred_region
        _
      $region44: #{autoencoder_forward.8} parent=31 // pred_fallthru
        _
    $region32: #{autoencoder_forward.8} parent=5 // pred_fallthru
      _
    %p315 = scmp.le.s32.totalorder 2, %s9
    // Predicated region
    $region45: #{autoencoder_forward.8} parent=5 // pred_check
      %p316 = pneg %p315
    $region46: #{autoencoder_forward.8} parent=5 // pred_check_branch
      %318 = sbr.rel (%p316) target = $region48
    $region47: #{autoencoder_forward.8} parent=5 // pred_region
      %s319 = ssub.s32 %s9, 2
    $region48: #{autoencoder_forward.8} parent=5 // pred_fallthru
      _
  $region6: #{autoencoder_forward.8} parent=0 // loop_footer
    %s13 = sadd.s32 1, %s9
  $region7: #{autoencoder_forward.8} parent=0 // loop_footer_branch
    %8 = sbr.rel target = $region3
  $region8: #{autoencoder_forward.8} parent=0 // loop_exit
    _

// kernel: autoencoder_forward.9
$region0: #{autoencoder_forward.9}
  #allocation0 [shape = 'u32[]', space=smem, size = 0x4, offset = 0x4, fixed_abs, tag = 'smem constant byte address 0x4 - core index']
  #allocation1 [shape = 'u32[144,128]{1,0:T(1,128)}', space=vmem, size = 0x12000, scoped, tag = 'internal scratch']
  %s0 = inlined_call_operand.vmem [shape: f32[2,128], index: 0, kind: input, shape index: {}]
  %s1 = inlined_call_operand.vmem [shape: f32[128,1024], index: 1, kind: input, shape index: {}]
  %s2 = inlined_call_operand.vmem [shape: f32[1,1024], index: 2, kind: input, shape index: {}]
  %s3 = inlined_call_operand.vmem [shape: f32[2,1024], index: 3, kind: output, shape index: {}]
  %s4 = sld [smem:[#allocation0]]
  $region68: #{autoencoder_forward.9} parent=0
    _
  %s6 = ssub.s32 1, %s4
  %s7 = scalar_select 0, %s6, %s4
  $region1: #{autoencoder_forward.9} parent=0
    #allocation2 [shape = 'u8[524288]{0}', space=vmem, size = 0x80000, scoped, tag = 'input window, operand 1']
    loop: start=0, step=1, limit=4
    $region2: #{autoencoder_forward.9} parent=1 // loop_pre_header
      _
    $region3: #{autoencoder_forward.9} parent=1 // loop_header
      %s9 = sphi 0, %s13
      %p10 = scmp.ge.s32.totalorder %s9, 4
      %s17 = sphi 0, %s17
      %s19 = sphi 0, %s17
      %s20 = sphi 0, %s19
      %s34 = sphi 0, %s20
      %s40 = sphi 0, %s42
      %s43 = sphi 0, %s40
      %s44 = sphi 0, %s43
      %s60 = sphi 0, %s44
      %s66 = sphi 0, %s68
      %s69 = sphi 0, %s66
      %s70 = sphi 0, %s69
      %s86 = sphi 0, %s70
      %s92 = sphi 0, %s94
      %s95 = sphi 0, %s92
      %s96 = sphi 0, %s95
      %s112 = sphi 0, %s96
    $region4: #{autoencoder_forward.9} parent=1 // loop_header_branch
      %12 = sbr.rel (%p10) target = $region8
    $region5: #{autoencoder_forward.9} parent=1 // loop_body
      %s14 = ssub.s32 %s9, 1
      %s15 = ssub.s32 %s9, 2
      %s16 = sadd.s32 %s9, 1
      %s18 = sadd.s32 %s17, 1
      %p21 = scmp.eq.s32.totalorder %s9, 1
      %p22 = scmp.ne.s32.totalorder %s17, %s19
      %p23 = scmp.eq.s32.totalorder %s9, 0
      %p24 = por %p22, %p23
      %p25 = scmp.ne.s32.totalorder %s17, %s19
      %p26 = scmp.eq.s32.totalorder %s14, 1
      %p27 = por %p25, %p26
      %p28 = scmp.ne.s32.totalorder %s19, %s20
      %p29 = scmp.eq.s32.totalorder %s14, 0
      %p30 = por %p28, %p29
      %p31 = scmp.ne.s32.totalorder %s19, %s20
      %p32 = scmp.eq.s32.totalorder %s15, 1
      %p33 = por %p31, %p32
      %p35 = scmp.ne.s32.totalorder %s20, %s34
      %p36 = scmp.eq.s32.totalorder %s15, 0
      %p37 = por %p35, %p36
      %s38 = ssub.s32 %s9, %s16
      %p39 = scmp.eq.s32.totalorder %s38, 0
      %s41 = sadd.s32 %s40, 1
      %s42 = scalar_select %p39, %s40, %s41
      %p45 = pneg %p39
      %p46 = scmp.eq.s32.totalorder %s9, 1
      %p47 = por %p45, %p46
      %p48 = scmp.ne.s32.totalorder %s40, %s43
      %p49 = scmp.eq.s32.totalorder %s9, 0
      %p50 = por %p48, %p49
      %p51 = scmp.ne.s32.totalorder %s40, %s43
      %p52 = scmp.eq.s32.totalorder %s14, 1
      %p53 = por %p51, %p52
      %p54 = scmp.ne.s32.totalorder %s43, %s44
      %p55 = scmp.eq.s32.totalorder %s14, 0
      %p56 = por %p54, %p55
      %p57 = scmp.ne.s32.totalorder %s43, %s44
      %p58 = scmp.eq.s32.totalorder %s15, 1
      %p59 = por %p57, %p58
      %p61 = scmp.ne.s32.totalorder %s44, %s60
      %p62 = scmp.eq.s32.totalorder %s15, 0
      %p63 = por %p61, %p62
      %s64 = ssub.s32 %s9, %s16
      %p65 = scmp.eq.s32.totalorder %s64, 0
      %s67 = sadd.s32 %s66, 1
      %s68 = scalar_select %p65, %s66, %s67
      %p71 = pneg %p65
      %p72 = scmp.eq.s32.totalorder %s9, 1
      %p73 = por %p71, %p72
      %p74 = scmp.ne.s32.totalorder %s66, %s69
      %p75 = scmp.eq.s32.totalorder %s9, 0
      %p76 = por %p74, %p75
      %p77 = scmp.ne.s32.totalorder %s66, %s69
      %p78 = scmp.eq.s32.totalorder %s14, 1
      %p79 = por %p77, %p78
      %p80 = scmp.ne.s32.totalorder %s69, %s70
      %p81 = scmp.eq.s32.totalorder %s14, 0
      %p82 = por %p80, %p81
      %p83 = scmp.ne.s32.totalorder %s69, %s70
      %p84 = scmp.eq.s32.totalorder %s15, 1
      %p85 = por %p83, %p84
      %p87 = scmp.ne.s32.totalorder %s70, %s86
      %p88 = scmp.eq.s32.totalorder %s15, 0
      %p89 = por %p87, %p88
      %s90 = ssub.s32 %s9, %s16
      %p91 = scmp.eq.s32.totalorder %s90, 0
      %s93 = sadd.s32 %s92, 1
      %s94 = scalar_select %p91, %s92, %s93
      %p97 = pneg %p91
      %p98 = scmp.eq.s32.totalorder %s9, 1
      %p99 = por %p97, %p98
      %p100 = scmp.ne.s32.totalorder %s92, %s95
      %p101 = scmp.eq.s32.totalorder %s9, 0
      %p102 = por %p100, %p101
      %p103 = scmp.ne.s32.totalorder %s92, %s95
      %p104 = scmp.eq.s32.totalorder %s14, 1
      %p105 = por %p103, %p104
      %p106 = scmp.ne.s32.totalorder %s95, %s96
      %p107 = scmp.eq.s32.totalorder %s14, 0
      %p108 = por %p106, %p107
      %p109 = scmp.ne.s32.totalorder %s95, %s96
      %p110 = scmp.eq.s32.totalorder %s15, 1
      %p111 = por %p109, %p110
      %p113 = scmp.ne.s32.totalorder %s96, %s112
      %p114 = scmp.eq.s32.totalorder %s15, 0
      %p115 = por %p113, %p114
      %p116 = scmp.le.s32.totalorder 1, %s9
      %p117 = scmp.lt.s32.totalorder %s9, 3
      %p118 = pnand %p116, %p117
      %p119 = pneg %p118
      // Predicated region
      $region9: #{autoencoder_forward.9} parent=5 // pred_check
        _
      $region10: #{autoencoder_forward.9} parent=5 // pred_check_branch
        %121 = sbr.rel (%p118) target = $region12
      $region11: #{autoencoder_forward.9} parent=5 // pred_region
        %s122 = ssub.s32 %s9, 1
        // Predicated region
        $region13: #{autoencoder_forward.9} parent=11 // pred_check
          %p123 = pneg %p30
        $region14: #{autoencoder_forward.9} parent=11 // pred_check_branch
          %125 = sbr.rel (%p123) target = $region16
        $region15: #{autoencoder_forward.9} parent=11 // pred_region
          _
        $region16: #{autoencoder_forward.9} parent=11 // pred_fallthru
          _
      $region12: #{autoencoder_forward.9} parent=5 // pred_fallthru
        _
      %p126 = scmp.lt.s32.totalorder %s9, 2
      // Predicated region
      $region17: #{autoencoder_forward.9} parent=5 // pred_check
        %p127 = pneg %p126
      $region18: #{autoencoder_forward.9} parent=5 // pred_check_branch
        %129 = sbr.rel (%p127) target = $region20
      $region19: #{autoencoder_forward.9} parent=5 // pred_region
        // Predicated region
        $region21: #{autoencoder_forward.9} parent=19 // pred_check
          %p130 = pneg %p50
        $region22: #{autoencoder_forward.9} parent=19 // pred_check_branch
          %132 = sbr.rel (%p130) target = $region24
        $region23: #{autoencoder_forward.9} parent=19 // pred_region
          %s133 = sand.u32 %s40, 1
          %s134 = sand.u32 %s40, 1
          %s135 = smul.addr %s134, 512
          %s136 = scalar_lea.vmem [#allocation2], %s135
          %s137 = smul.u32 4, %s9
          %s138 = smul.addr %s137, 8
          %s139 = scalar_lea.vmem %s1, %s138
          // Predicated region
          $region25: #{autoencoder_forward.9} parent=23 // pred_check
            _
          $region26: #{autoencoder_forward.9} parent=23 // pred_check_branch
            %141 = sbr.rel (0) target = $region28
          $region27: #{autoencoder_forward.9} parent=23 // pred_region
            // Predicated region
            $region29: #{autoencoder_forward.9} parent=27 // pred_check
              _
            $region30: #{autoencoder_forward.9} parent=27 // pred_check_branch
              %143 = sbr.rel (0) target = $region32
            $region31: #{autoencoder_forward.9} parent=27 // pred_region
              loop: start=0, step=1, limit=1
              $region33: #{autoencoder_forward.9} parent=31 // loop_pre_header
                _
              $region34: #{autoencoder_forward.9} parent=31 // loop_header
                %s145 = sphi 0, %s149
                %p146 = scmp.ge.s32.totalorder %s145, 1
                %s150 = sphi %s139, %s139
                %s151 = sphi %s136, %s136
              $region35: #{autoencoder_forward.9} parent=31 // loop_header_branch
                %148 = sbr.rel (%p146) target = $region39
              $region36: #{autoencoder_forward.9} parent=31 // loop_body
                %v152 = vld [vmem:[%s150] sm:$0xff]
                %153 = vst [vmem:[%s151] sm:$0xff] %v152
                %v154 = vld [vmem:[%s150 + $0x8] sm:$0xff]
                %155 = vst [vmem:[%s151 + $0x8] sm:$0xff] %v154
                %v156 = vld [vmem:[%s150 + $0x10] sm:$0xff]
                %157 = vst [vmem:[%s151 + $0x10] sm:$0xff] %v156
                %v158 = vld [vmem:[%s150 + $0x18] sm:$0xff]
                %159 = vst [vmem:[%s151 + $0x18] sm:$0xff] %v158
                %v160 = vld [vmem:[%s150 + $0x40] sm:$0xff]
                %161 = vst [vmem:[%s151 + $0x20] sm:$0xff] %v160
                %v162 = vld [vmem:[%s150 + $0x48] sm:$0xff]
                %163 = vst [vmem:[%s151 + $0x28] sm:$0xff] %v162
                %v164 = vld [vmem:[%s150 + $0x50] sm:$0xff]
                %165 = vst [vmem:[%s151 + $0x30] sm:$0xff] %v164
                %v166 = vld [vmem:[%s150 + $0x58] sm:$0xff]
                %167 = vst [vmem:[%s151 + $0x38] sm:$0xff] %v166
                %v168 = vld [vmem:[%s150 + $0x80] sm:$0xff]
                %169 = vst [vmem:[%s151 + $0x40] sm:$0xff] %v168
                %v170 = vld [vmem:[%s150 + $0x88] sm:$0xff]
                %171 = vst [vmem:[%s151 + $0x48] sm:$0xff] %v170
                %v172 = vld [vmem:[%s150 + $0x90] sm:$0xff]
                %173 = vst [vmem:[%s151 + $0x50] sm:$0xff] %v172
                %v174 = vld [vmem:[%s150 + $0x98] sm:$0xff]
                %175 = vst [vmem:[%s151 + $0x58] sm:$0xff] %v174
                %v176 = vld [vmem:[%s150 + $0xc0] sm:$0xff]
                %177 = vst [vmem:[%s151 + $0x60] sm:$0xff] %v176
                %v178 = vld [vmem:[%s150 + $0xc8] sm:$0xff]
                %179 = vst [vmem:[%s151 + $0x68] sm:$0xff] %v178
                %v180 = vld [vmem:[%s150 + $0xd0] sm:$0xff]
                %181 = vst [vmem:[%s151 + $0x70] sm:$0xff] %v180
                %v182 = vld [vmem:[%s150 + $0xd8] sm:$0xff]
                %183 = vst [vmem:[%s151 + $0x78] sm:$0xff] %v182
                %v184 = vld [vmem:[%s150 + $0x100] sm:$0xff]
                %185 = vst [vmem:[%s151 + $0x80] sm:$0xff] %v184
                %v186 = vld [vmem:[%s150 + $0x108] sm:$0xff]
                %187 = vst [vmem:[%s151 + $0x88] sm:$0xff] %v186
                %v188 = vld [vmem:[%s150 + $0x110] sm:$0xff]
                %189 = vst [vmem:[%s151 + $0x90] sm:$0xff] %v188
                %v190 = vld [vmem:[%s150 + $0x118] sm:$0xff]
                %191 = vst [vmem:[%s151 + $0x98] sm:$0xff] %v190
                %v192 = vld [vmem:[%s150 + $0x140] sm:$0xff]
                %193 = vst [vmem:[%s151 + $0xa0] sm:$0xff] %v192
                %v194 = vld [vmem:[%s150 + $0x148] sm:$0xff]
                %195 = vst [vmem:[%s151 + $0xa8] sm:$0xff] %v194
                %v196 = vld [vmem:[%s150 + $0x150] sm:$0xff]
                %197 = vst [vmem:[%s151 + $0xb0] sm:$0xff] %v196
                %v198 = vld [vmem:[%s150 + $0x158] sm:$0xff]
                %199 = vst [vmem:[%s151 + $0xb8] sm:$0xff] %v198
                %v200 = vld [vmem:[%s150 + $0x180] sm:$0xff]
                %201 = vst [vmem:[%s151 + $0xc0] sm:$0xff] %v200
                %v202 = vld [vmem:[%s150 + $0x188] sm:$0xff]
                %203 = vst [vmem:[%s151 + $0xc8] sm:$0xff] %v202
                %v204 = vld [vmem:[%s150 + $0x190] sm:$0xff]
                %205 = vst [vmem:[%s151 + $0xd0] sm:$0xff] %v204
                %v206 = vld [vmem:[%s150 + $0x198] sm:$0xff]
                %207 = vst [vmem:[%s151 + $0xd8] sm:$0xff] %v206
                %v208 = vld [vmem:[%s150 + $0x1c0] sm:$0xff]
                %209 = vst [vmem:[%s151 + $0xe0] sm:$0xff] %v208
                %v210 = vld [vmem:[%s150 + $0x1c8] sm:$0xff]
                %211 = vst [vmem:[%s151 + $0xe8] sm:$0xff] %v210
                %v212 = vld [vmem:[%s150 + $0x1d0] sm:$0xff]
                %213 = vst [vmem:[%s151 + $0xf0] sm:$0xff] %v212
                %v214 = vld [vmem:[%s150 + $0x1d8] sm:$0xff]
                %215 = vst [vmem:[%s151 + $0xf8] sm:$0xff] %v214
                %v216 = vld [vmem:[%s150 + $0x200] sm:$0xff]
                %217 = vst [vmem:[%s151 + $0x100] sm:$0xff] %v216
                %v218 = vld [vmem:[%s150 + $0x208] sm:$0xff]
                %219 = vst [vmem:[%s151 + $0x108] sm:$0xff] %v218
                %v220 = vld [vmem:[%s150 + $0x210] sm:$0xff]
                %221 = vst [vmem:[%s151 + $0x110] sm:$0xff] %v220
                %v222 = vld [vmem:[%s150 + $0x218] sm:$0xff]
                %223 = vst [vmem:[%s151 + $0x118] sm:$0xff] %v222
                %v224 = vld [vmem:[%s150 + $0x240] sm:$0xff]
                %225 = vst [vmem:[%s151 + $0x120] sm:$0xff] %v224
                %v226 = vld [vmem:[%s150 + $0x248] sm:$0xff]
                %227 = vst [vmem:[%s151 + $0x128] sm:$0xff] %v226
                %v228 = vld [vmem:[%s150 + $0x250] sm:$0xff]
                %229 = vst [vmem:[%s151 + $0x130] sm:$0xff] %v228
                %v230 = vld [vmem:[%s150 + $0x258] sm:$0xff]
                %231 = vst [vmem:[%s151 + $0x138] sm:$0xff] %v230
                %v232 = vld [vmem:[%s150 + $0x280] sm:$0xff]
                %233 = vst [vmem:[%s151 + $0x140] sm:$0xff] %v232
                %v234 = vld [vmem:[%s150 + $0x288] sm:$0xff]
                %235 = vst [vmem:[%s151 + $0x148] sm:$0xff] %v234
                %v236 = vld [vmem:[%s150 + $0x290] sm:$0xff]
                %237 = vst [vmem:[%s151 + $0x150] sm:$0xff] %v236
                %v238 = vld [vmem:[%s150 + $0x298] sm:$0xff]
                %239 = vst [vmem:[%s151 + $0x158] sm:$0xff] %v238
                %v240 = vld [vmem:[%s150 + $0x2c0] sm:$0xff]
                %241 = vst [vmem:[%s151 + $0x160] sm:$0xff] %v240
                %v242 = vld [vmem:[%s150 + $0x2c8] sm:$0xff]
                %243 = vst [vmem:[%s151 + $0x168] sm:$0xff] %v242
                %v244 = vld [vmem:[%s150 + $0x2d0] sm:$0xff]
                %245 = vst [vmem:[%s151 + $0x170] sm:$0xff] %v244
                %v246 = vld [vmem:[%s150 + $0x2d8] sm:$0xff]
                %247 = vst [vmem:[%s151 + $0x178] sm:$0xff] %v246
                %v248 = vld [vmem:[%s150 + $0x300] sm:$0xff]
                %249 = vst [vmem:[%s151 + $0x180] sm:$0xff] %v248
                %v250 = vld [vmem:[%s150 + $0x308] sm:$0xff]
                %251 = vst [vmem:[%s151 + $0x188] sm:$0xff] %v250
                %v252 = vld [vmem:[%s150 + $0x310] sm:$0xff]
                %253 = vst [vmem:[%s151 + $0x190] sm:$0xff] %v252
                %v254 = vld [vmem:[%s150 + $0x318] sm:$0xff]
                %255 = vst [vmem:[%s151 + $0x198] sm:$0xff] %v254
                %v256 = vld [vmem:[%s150 + $0x340] sm:$0xff]
                %257 = vst [vmem:[%s151 + $0x1a0] sm:$0xff] %v256
                %v258 = vld [vmem:[%s150 + $0x348] sm:$0xff]
                %259 = vst [vmem:[%s151 + $0x1a8] sm:$0xff] %v258
                %v260 = vld [vmem:[%s150 + $0x350] sm:$0xff]
                %261 = vst [vmem:[%s151 + $0x1b0] sm:$0xff] %v260
                %v262 = vld [vmem:[%s150 + $0x358] sm:$0xff]
                %263 = vst [vmem:[%s151 + $0x1b8] sm:$0xff] %v262
                %v264 = vld [vmem:[%s150 + $0x380] sm:$0xff]
                %265 = vst [vmem:[%s151 + $0x1c0] sm:$0xff] %v264
                %v266 = vld [vmem:[%s150 + $0x388] sm:$0xff]
                %267 = vst [vmem:[%s151 + $0x1c8] sm:$0xff] %v266
                %v268 = vld [vmem:[%s150 + $0x390] sm:$0xff]
                %269 = vst [vmem:[%s151 + $0x1d0] sm:$0xff] %v268
                %v270 = vld [vmem:[%s150 + $0x398] sm:$0xff]
                %271 = vst [vmem:[%s151 + $0x1d8] sm:$0xff] %v270
                %v272 = vld [vmem:[%s150 + $0x3c0] sm:$0xff]
                %273 = vst [vmem:[%s151 + $0x1e0] sm:$0xff] %v272
                %v274 = vld [vmem:[%s150 + $0x3c8] sm:$0xff]
                %275 = vst [vmem:[%s151 + $0x1e8] sm:$0xff] %v274
                %v276 = vld [vmem:[%s150 + $0x3d0] sm:$0xff]
                %277 = vst [vmem:[%s151 + $0x1f0] sm:$0xff] %v276
                %v278 = vld [vmem:[%s150 + $0x3d8] sm:$0xff]
                %279 = vst [vmem:[%s151 + $0x1f8] sm:$0xff] %v278
              $region37: #{autoencoder_forward.9} parent=31 // loop_footer
                %s149 = sadd.s32 1, %s145
              $region38: #{autoencoder_forward.9} parent=31 // loop_footer_branch
                %144 = sbr.rel target = $region34
              $region39: #{autoencoder_forward.9} parent=31 // loop_exit
                _
            $region32: #{autoencoder_forward.9} parent=27 // pred_fallthru
              _
            // Predicated region
            $region40: #{autoencoder_forward.9} parent=27 // pred_check
              _
            $region41: #{autoencoder_forward.9} parent=27 // pred_check_branch
              %281 = sbr.rel target = $region43
            $region42: #{autoencoder_forward.9} parent=27 // pred_region
              _
            $region43: #{autoencoder_forward.9} parent=27 // pred_fallthru
              _
          $region28: #{autoencoder_forward.9} parent=23 // pred_fallthru
            _
          %282 = vnop
        $region24: #{autoencoder_forward.9} parent=19 // pred_fallthru
          _
        // Predicated region
        $region44: #{autoencoder_forward.9} parent=19 // pred_check
          %p283 = pneg %p76
        $region45: #{autoencoder_forward.9} parent=19 // pred_check_branch
          %285 = sbr.rel (%p283) target = $region47
        $region46: #{autoencoder_forward.9} parent=19 // pred_region
          %s286 = smul.u32 4, %s9
          %p287 = scmp.lt.s32.totalorder %s286, 7
          %s288 = scalar_select %p287, %s286, 7
          %s289 = scalar_lea.vmem %s2, %s288
          %s290 = smul.u32 4, %s9
        $region47: #{autoencoder_forward.9} parent=19 // pred_fallthru
          _
      $region20: #{autoencoder_forward.9} parent=5 // pred_fallthru
        _
      %p291 = scmp.le.s32.totalorder 1, %s9
      %p292 = scmp.lt.s32.totalorder %s9, 3
      %p293 = pnand %p291, %p292
      %p294 = pneg %p293
      // Predicated region
      $region48: #{autoencoder_forward.9} parent=5 // pred_check
        _
      $region49: #{autoencoder_forward.9} parent=5 // pred_check_branch
        %296 = sbr.rel (%p293) target = $region51
      $region50: #{autoencoder_forward.9} parent=5 // pred_region
        %s297 = ssub.s32 %s9, 1
        %s298 = sand.u32 %s43, 1
        %s299 = sand.u32 %s43, 1
        %s300 = smul.addr %s299, 512
        %s301 = scalar_lea.vmem [#allocation2], %s300
        // Predicated region
        $region52: #{autoencoder_forward.9} parent=50 // pred_check
          %p302 = pneg %p56
        $region53: #{autoencoder_forward.9} parent=50 // pred_check_branch
          %304 = sbr.rel (%p302) target = $region55
        $region54: #{autoencoder_forward.9} parent=50 // pred_region
          _
        $region55: #{autoencoder_forward.9} parent=50 // pred_fallthru
          _
        %p305 = pneg %p30
        %p306 = pneg %p27
        %s307 = sand.u32 %s43, 1
        %s308 = sand.u32 %s43, 1
        %s309 = smul.addr %s308, 512
        %s310 = scalar_lea.vmem [#allocation2], %s309
        %p311 = pneg %p56
        %p312 = pneg %p53
        %s313 = smul.u32 4, %s14
        %p314 = scmp.lt.s32.totalorder %s313, 7
        %s315 = scalar_select %p314, %s313, 7
        %s316 = scalar_lea.vmem %s2, %s315
        %p317 = pneg %p82
        %p318 = pneg %p79
        %p319 = pneg %p108
        %p320 = pneg %p105
        %s321 = smul.u32 4, %s14
        %p322 = scmp.lt.s32.totalorder %s321, 7
        %s323 = scalar_select %p322, %s321, 7
        %s324 = smul.addr %s323, 2
        %s325 = scalar_lea.vmem %s3, %s324
        %s326 = smul.u32 4, %s14
        %s327 = smul.u32 4, %s14
        %p328 = scmp.lt.s32.totalorder %s327, 7
        %s329 = scalar_select %p328, %s327, 7
        %s330 = scalar_lea.vmem %s2, %s329
        %s331 = smul.u32 4, %s14
        %s332 = smul.u32 4, %s14
        %p333 = scmp.lt.s32.totalorder %s332, 7
        %s334 = scalar_select %p333, %s332, 7
        %s335 = smul.addr %s334, 2
        %s336 = scalar_lea.vmem %s3, %s335
        %s337 = smul.u32 4, %s14
        %v338 = vld [vmem:[%s0] sm:$0x3]
        %v339 = vld [vmem:[%s301] sm:$0xff]
        %v340 = vld [vmem:[%s301 + $0x8] sm:$0xff]
        %v341 = vld [vmem:[%s301 + $0x10] sm:$0xff]
        %v342 = vld [vmem:[%s301 + $0x18] sm:$0xff]
        %v343 = vld [vmem:[%s301 + $0x20] sm:$0xff]
        %v344 = vld [vmem:[%s301 + $0x28] sm:$0xff]
        %v345 = vld [vmem:[%s301 + $0x30] sm:$0xff]
        %v346 = vld [vmem:[%s301 + $0x38] sm:$0xff]
        %v347 = vld [vmem:[%s301 + $0x40] sm:$0xff]
        %v348 = vld [vmem:[%s301 + $0x48] sm:$0xff]
        %v349 = vld [vmem:[%s301 + $0x50] sm:$0xff]
        %v350 = vld [vmem:[%s301 + $0x58] sm:$0xff]
        %v351 = vld [vmem:[%s301 + $0x60] sm:$0xff]
        %v352 = vld [vmem:[%s301 + $0x68] sm:$0xff]
        %v353 = vld [vmem:[%s301 + $0x70] sm:$0xff]
        %v354 = vld [vmem:[%s301 + $0x78] sm:$0xff]
        %v355 = vld [vmem:[%s301 + $0x80] sm:$0xff]
        %v356 = vld [vmem:[%s301 + $0x88] sm:$0xff]
        %v357 = vld [vmem:[%s301 + $0x90] sm:$0xff]
        %v358 = vld [vmem:[%s301 + $0x98] sm:$0xff]
        %v359 = vld [vmem:[%s301 + $0xa0] sm:$0xff]
        %v360 = vld [vmem:[%s301 + $0xa8] sm:$0xff]
        %v361 = vld [vmem:[%s301 + $0xb0] sm:$0xff]
        %v362 = vld [vmem:[%s301 + $0xb8] sm:$0xff]
        %v363 = vld [vmem:[%s301 + $0xc0] sm:$0xff]
        %v364 = vld [vmem:[%s301 + $0xc8] sm:$0xff]
        %v365 = vld [vmem:[%s301 + $0xd0] sm:$0xff]
        %v366 = vld [vmem:[%s301 + $0xd8] sm:$0xff]
        %v367 = vld [vmem:[%s301 + $0xe0] sm:$0xff]
        %v368 = vld [vmem:[%s301 + $0xe8] sm:$0xff]
        %v369 = vld [vmem:[%s301 + $0xf0] sm:$0xff]
        %v370 = vld [vmem:[%s301 + $0xf8] sm:$0xff]
        %v371 = vld [vmem:[%s301 + $0x100] sm:$0xff]
        %v372 = vld [vmem:[%s301 + $0x108] sm:$0xff]
        %v373 = vld [vmem:[%s301 + $0x110] sm:$0xff]
        %v374 = vld [vmem:[%s301 + $0x118] sm:$0xff]
        %v375 = vld [vmem:[%s301 + $0x120] sm:$0xff]
        %v376 = vld [vmem:[%s301 + $0x128] sm:$0xff]
        %v377 = vld [vmem:[%s301 + $0x130] sm:$0xff]
        %v378 = vld [vmem:[%s301 + $0x138] sm:$0xff]
        %v379 = vld [vmem:[%s301 + $0x140] sm:$0xff]
        %v380 = vld [vmem:[%s301 + $0x148] sm:$0xff]
        %v381 = vld [vmem:[%s301 + $0x150] sm:$0xff]
        %v382 = vld [vmem:[%s301 + $0x158] sm:$0xff]
        %v383 = vld [vmem:[%s301 + $0x160] sm:$0xff]
        %v384 = vld [vmem:[%s301 + $0x168] sm:$0xff]
        %v385 = vld [vmem:[%s301 + $0x170] sm:$0xff]
        %v386 = vld [vmem:[%s301 + $0x178] sm:$0xff]
        %v387 = vld [vmem:[%s301 + $0x180] sm:$0xff]
        %v388 = vld [vmem:[%s301 + $0x188] sm:$0xff]
        %v389 = vld [vmem:[%s301 + $0x190] sm:$0xff]
        %v390 = vld [vmem:[%s301 + $0x198] sm:$0xff]
        %v391 = vld [vmem:[%s301 + $0x1a0] sm:$0xff]
        %v392 = vld [vmem:[%s301 + $0x1a8] sm:$0xff]
        %v393 = vld [vmem:[%s301 + $0x1b0] sm:$0xff]
        %v394 = vld [vmem:[%s301 + $0x1b8] sm:$0xff]
        %v395 = vld [vmem:[%s301 + $0x1c0] sm:$0xff]
        %v396 = vld [vmem:[%s301 + $0x1c8] sm:$0xff]
        %v397 = vld [vmem:[%s301 + $0x1d0] sm:$0xff]
        %v398 = vld [vmem:[%s301 + $0x1d8] sm:$0xff]
        %v399 = vld [vmem:[%s301 + $0x1e0] sm:$0xff]
        %v400 = vld [vmem:[%s301 + $0x1e8] sm:$0xff]
        %v401 = vld [vmem:[%s301 + $0x1f0] sm:$0xff]
        %v402 = vld [vmem:[%s301 + $0x1f8] sm:$0xff]
        %v403 = vld [vmem:[%s330] sm:$0xf]
        %v405 = vlaneseq
        %v406 = vshrl.u32 %v405, 7
        %v407 = vsub.s32 0, %v406
        %v408 = vrot.slane %v403, %v407
        %v409 = vlaneseq
        %v410 = vshrl.u32 %v409, 7
        %v411 = vsub.s32 1, %v410
        %v412 = vrot.slane %v403, %v411
        %v413 = vlaneseq
        %v414 = vshrl.u32 %v413, 7
        %v415 = vsub.s32 2, %v414
        %v416 = vrot.slane %v403, %v415
        %v417 = vlaneseq
        %v418 = vshrl.u32 %v417, 7
        %v419 = vsub.s32 3, %v418
        %v420 = vrot.slane %v403, %v419
        %425 = vmatprep.subr.mxu0 %v340
        %426 = vmatpush1.msra.mxu0 %v339
        %427 = vmatprep.subr.mxu0 %v344
        %428 = vmatpush1.msra.mxu0 %v343
        %429 = vmatprep.subr.mxu0 %v348
        %430 = vmatpush1.msra.mxu0 %v347
        %431 = vmatprep.subr.mxu0 %v352
        %432 = vmatpush1.msra.mxu0 %v351
        %433 = vmatprep.subr.mxu0 %v356
        %434 = vmatpush1.msra.mxu0 %v355
        %435 = vmatprep.subr.mxu0 %v360
        %436 = vmatpush1.msra.mxu0 %v359
        %437 = vmatprep.subr.mxu0 %v364
        %438 = vmatpush1.msra.mxu0 %v363
        %439 = vmatprep.subr.mxu0 %v368
        %440 = vmatpush1.msra.mxu0 %v367
        %441 = vmatprep.subr.mxu0 %v372
        %442 = vmatpush1.msra.mxu0 %v371
        %443 = vmatprep.subr.mxu0 %v376
        %444 = vmatpush1.msra.mxu0 %v375
        %445 = vmatprep.subr.mxu0 %v380
        %446 = vmatpush1.msra.mxu0 %v379
        %447 = vmatprep.subr.mxu0 %v384
        %448 = vmatpush1.msra.mxu0 %v383
        %449 = vmatprep.subr.mxu0 %v388
        %450 = vmatpush1.msra.mxu0 %v387
        %451 = vmatprep.subr.mxu0 %v392
        %452 = vmatpush1.msra.mxu0 %v391
        %453 = vmatprep.subr.mxu0 %v396
        %454 = vmatpush1.msra.mxu0 %v395
        %455 = vmatprep.subr.mxu0 %v400
        %456 = vmatpush1.msra.mxu0 %v399
        %457 = vmatprep.subr.mxu0 0.0
        %458 = vmatpush1.msra.mxu0 0.0
        %459 = vmatprep.subr.mxu0 0.0
        %460 = vmatpush1.msra.mxu0 0.0
        %461 = vmatprep.subr.mxu0 0.0
        %462 = vmatpush1.msra.mxu0 0.0
        %463 = vmatprep.subr.mxu0 0.0
        %464 = vmatpush1.msra.mxu0 0.0
        %465 = vmatprep.subr.mxu0 0.0
        %466 = vmatpush1.msra.mxu0 0.0
        %467 = vmatprep.subr.mxu0 0.0
        %468 = vmatpush1.msra.mxu0 0.0
        %469 = vmatprep.subr.mxu0 0.0
        %470 = vmatpush1.msra.mxu0 0.0
        %471 = vmatprep.subr.mxu0 0.0
        %472 = vmatpush1.msra.mxu0 0.0
        %473 = vmatprep.subr.mxu0 0.0
        %474 = vmatpush1.msra.mxu0 0.0
        %475 = vmatprep.subr.mxu0 0.0
        %476 = vmatpush1.msra.mxu0 0.0
        %477 = vmatprep.subr.mxu0 0.0
        %478 = vmatpush1.msra.mxu0 0.0
        %479 = vmatprep.subr.mxu0 0.0
        %480 = vmatpush1.msra.mxu0 0.0
        %481 = vmatprep.subr.mxu0 0.0
        %482 = vmatpush1.msra.mxu0 0.0
        %483 = vmatprep.subr.mxu0 0.0
        %484 = vmatpush1.msra.mxu0 0.0
        %485 = vmatprep.subr.mxu0 0.0
        %486 = vmatpush1.msra.mxu0 0.0
        %487 = vmatprep.subr.mxu0 0.0
        %488 = vmatpush1.msra.mxu0 0.0
        %489 = vmatprep.mubr.f32.mxu0 0.0
        %490 = vmatmul.mubr.f32.gmra.mrb[0].mxu0 %v338
        %v491 = vpop.f32.mrb[0].mxu0
        %v492 = vadd.f32 %v408, %v491
        %v493 = vpop.f32.mrb[0].mxu0
        %v494 = vadd.f32 %v412, %v493
        %495 = vdwg.mxu0
        %496 = vmatprep.subr.mxu0 %v342
        %497 = vmatpush1.msra.mxu0 %v341
        %498 = vmatprep.subr.mxu0 %v346
        %499 = vmatpush1.msra.mxu0 %v345
        %500 = vmatprep.subr.mxu0 %v350
        %501 = vmatpush1.msra.mxu0 %v349
        %502 = vmatprep.subr.mxu0 %v354
        %503 = vmatpush1.msra.mxu0 %v353
        %504 = vmatprep.subr.mxu0 %v358
        %505 = vmatpush1.msra.mxu0 %v357
        %506 = vmatprep.subr.mxu0 %v362
        %507 = vmatpush1.msra.mxu0 %v361
        %508 = vmatprep.subr.mxu0 %v366
        %509 = vmatpush1.msra.mxu0 %v365
        %510 = vmatprep.subr.mxu0 %v370
        %511 = vmatpush1.msra.mxu0 %v369
        %512 = vmatprep.subr.mxu0 %v374
        %513 = vmatpush1.msra.mxu0 %v373
        %514 = vmatprep.subr.mxu0 %v378
        %515 = vmatpush1.msra.mxu0 %v377
        %516 = vmatprep.subr.mxu0 %v382
        %517 = vmatpush1.msra.mxu0 %v381
        %518 = vmatprep.subr.mxu0 %v386
        %519 = vmatpush1.msra.mxu0 %v385
        %520 = vmatprep.subr.mxu0 %v390
        %521 = vmatpush1.msra.mxu0 %v389
        %522 = vmatprep.subr.mxu0 %v394
        %523 = vmatpush1.msra.mxu0 %v393
        %524 = vmatprep.subr.mxu0 %v398
        %525 = vmatpush1.msra.mxu0 %v397
        %526 = vmatprep.subr.mxu0 %v402
        %527 = vmatpush1.msra.mxu0 %v401
        %528 = vmatprep.subr.mxu0 0.0
        %529 = vmatpush1.msra.mxu0 0.0
        %530 = vmatprep.subr.mxu0 0.0
        %531 = vmatpush1.msra.mxu0 0.0
        %532 = vmatprep.subr.mxu0 0.0
        %533 = vmatpush1.msra.mxu0 0.0
        %534 = vmatprep.subr.mxu0 0.0
        %535 = vmatpush1.msra.mxu0 0.0
        %536 = vmatprep.subr.mxu0 0.0
        %537 = vmatpush1.msra.mxu0 0.0
        %538 = vmatprep.subr.mxu0 0.0
        %539 = vmatpush1.msra.mxu0 0.0
        %540 = vmatprep.subr.mxu0 0.0
        %541 = vmatpush1.msra.mxu0 0.0
        %542 = vmatprep.subr.mxu0 0.0
        %543 = vmatpush1.msra.mxu0 0.0
        %544 = vmatprep.subr.mxu0 0.0
        %545 = vmatpush1.msra.mxu0 0.0
        %546 = vmatprep.subr.mxu0 0.0
        %547 = vmatpush1.msra.mxu0 0.0
        %548 = vmatprep.subr.mxu0 0.0
        %549 = vmatpush1.msra.mxu0 0.0
        %550 = vmatprep.subr.mxu0 0.0
        %551 = vmatpush1.msra.mxu0 0.0
        %552 = vmatprep.subr.mxu0 0.0
        %553 = vmatpush1.msra.mxu0 0.0
        %554 = vmatprep.subr.mxu0 0.0
        %555 = vmatpush1.msra.mxu0 0.0
        %556 = vmatprep.subr.mxu0 0.0
        %557 = vmatpush1.msra.mxu0 0.0
        %558 = vmatprep.subr.mxu0 0.0
        %559 = vmatpush1.msra.mxu0 0.0
        %560 = vmatprep.mubr.f32.mxu0 0.0
        %561 = vmatmul.mubr.f32.gmra.mrb[0].mxu0 %v338
        %v562 = vpop.f32.mrb[0].mxu0
        %v563 = vadd.f32 %v416, %v562
        %v564 = vpop.f32.mrb[0].mxu0
        %v565 = vadd.f32 %v420, %v564
        %566 = vdwg.mxu0
        %v567 = vmax.f32 %v492, 0.0
        %v568 = vmax.f32 %v494, 0.0
        %v569 = vmax.f32 %v563, 0.0
        %v570 = vmax.f32 %v565, 0.0
        %v575 = vcombine.low %v567, %v568
        %v576 = vcombine.low %v569, %v570
        %v578 = vunpack.c.l.s4 1983009808
        %v579 = vunpack.c.0.s8 %v578
        %v580 = vlaneseq
        %v581 = vshrl.u32 %v580, 7
        %v582 = vsub.s32 %v579, %v581
        %v583 = vrot.slane %v575, %v582
        %v585 = vunpack.c.l.s4 1983009808
        %v586 = vunpack.c.0.s8 %v585
        %v587 = vlaneseq
        %v588 = vshrl.u32 %v587, 7
        %v589 = vsub.s32 %v586, %v588
        %v590 = vrot.slane %v576, %v589
        %v591 = vcombine.low %v583, %v590
        %593 = vst [vmem:[%s336] sm:$0xff] %v591
        %s594 = smul.u32 4, %s14
        %p595 = scmp.lt.s32.totalorder %s594, 7
        %s596 = scalar_select %p595, %s594, 7
        %s597 = smul.addr %s596, 2
        %s598 = scalar_lea.vmem %s3, %s597
        // Predicated region
        $region56: #{autoencoder_forward.9} parent=50 // pred_check
          %p599 = pneg %p105
        $region57: #{autoencoder_forward.9} parent=50 // pred_check_branch
          %601 = sbr.rel (%p599) target = $region59
        $region58: #{autoencoder_forward.9} parent=50 // pred_region
          %s602 = smul.u32 4, %s14
        $region59: #{autoencoder_forward.9} parent=50 // pred_fallthru
          _
      $region51: #{autoencoder_forward.9} parent=5 // pred_fallthru
        _
      %p603 = scmp.le.s32.totalorder 2, %s9
      // Predicated region
      $region60: #{autoencoder_forward.9} parent=5 // pred_check
        %p604 = pneg %p603
      $region61: #{autoencoder_forward.9} parent=5 // pred_check_branch
        %606 = sbr.rel (%p604) target = $region63
      $region62: #{autoencoder_forward.9} parent=5 // pred_region
        %s607 = ssub.s32 %s9, 2
        // Predicated region
        $region64: #{autoencoder_forward.9} parent=62 // pred_check
          %p608 = pneg %p111
        $region65: #{autoencoder_forward.9} parent=62 // pred_check_branch
          %610 = sbr.rel (%p608) target = $region67
        $region66: #{autoencoder_forward.9} parent=62 // pred_region
          %s611 = smul.u32 4, %s15
          %p612 = scmp.lt.s32.totalorder %s611, 7
          %s613 = scalar_select %p612, %s611, 7
          %s614 = smul.addr %s613, 2
          %s615 = scalar_lea.vmem %s3, %s614
        $region67: #{autoencoder_forward.9} parent=62 // pred_fallthru
          _
      $region63: #{autoencoder_forward.9} parent=5 // pred_fallthru
        _
    $region6: #{autoencoder_forward.9} parent=1 // loop_footer
      %s13 = sadd.s32 1, %s9
    $region7: #{autoencoder_forward.9} parent=1 // loop_footer_branch
      %8 = sbr.rel target = $region3
    $region8: #{autoencoder_forward.9} parent=1 // loop_exit
      _

// kernel: autoencoder_forward.10
$region0: #{autoencoder_forward.10}
  #allocation0 [shape = 'u32[]', space=smem, size = 0x4, offset = 0x4, fixed_abs, tag = 'smem constant byte address 0x4 - core index']
  #allocation1 [shape = 'u32[144,128]{1,0:T(1,128)}', space=vmem, size = 0x12000, scoped, tag = 'internal scratch']
  %s0 = inlined_call_operand.vmem [shape: f32[2,6,10,64], index: 0, kind: input, shape index: {}]
  %s1 = inlined_call_operand.vmem [shape: f32[4,4,64,32], index: 1, kind: input, shape index: {}]
  %s2 = inlined_call_operand.vmem [shape: f32[1,32], index: 2, kind: input, shape index: {}]
  %s3 = inlined_call_operand.vmem [shape: f32[4,64,32], index: 3, kind: output, shape index: {}]
  %s4 = sld [smem:[#allocation0]]
  $region79: #{autoencoder_forward.10} parent=0
    _
  %s6 = ssub.s32 1, %s4
  %s7 = scalar_select 0, %s6, %s4
  $region1: #{autoencoder_forward.10} parent=0
    #allocation2 [shape = 'u8[131072]{0}', space=vmem, size = 0x20000, scoped, tag = 'output window, operand 0']
    loop: start=0, step=1, limit=4
    $region2: #{autoencoder_forward.10} parent=1 // loop_pre_header
      _
    $region3: #{autoencoder_forward.10} parent=1 // loop_header
      %s9 = sphi 0, %s13
      %p10 = scmp.ge.s32.totalorder %s9, 4
      %s19 = sphi 0, %s21
      %s22 = sphi 0, %s19
      %s23 = sphi 0, %s22
      %s39 = sphi 0, %s23
      %s43 = sphi 0, %s43
      %s45 = sphi 0, %s43
      %s46 = sphi 0, %s45
      %s60 = sphi 0, %s46
      %s64 = sphi 0, %s64
      %s66 = sphi 0, %s64
      %s67 = sphi 0, %s66
      %s81 = sphi 0, %s67
      %s87 = sphi 0, %s89
      %s90 = sphi 0, %s87
      %s91 = sphi 0, %s90
      %s107 = sphi 0, %s91
    $region4: #{autoencoder_forward.10} parent=1 // loop_header_branch
      %12 = sbr.rel (%p10) target = $region8
    $region5: #{autoencoder_forward.10} parent=1 // loop_body
      %s14 = ssub.s32 %s9, 1
      %s15 = ssub.s32 %s9, 2
      %s16 = sadd.s32 %s9, 1
      %s17 = ssub.s32 %s9, %s16
      %p18 = scmp.eq.s32.totalorder %s17, 0
      %s20 = sadd.s32 %s19, 1
      %s21 = scalar_select %p18, %s19, %s20
      %p24 = pneg %p18
      %p25 = scmp.eq.s32.totalorder %s9, 1
      %p26 = por %p24, %p25
      %p27 = scmp.ne.s32.totalorder %s19, %s22
      %p28 = scmp.eq.s32.totalorder %s9, 0
      %p29 = por %p27, %p28
      %p30 = scmp.ne.s32.totalorder %s19, %s22
      %p31 = scmp.eq.s32.totalorder %s14, 1
      %p32 = por %p30, %p31
      %p33 = scmp.ne.s32.totalorder %s22, %s23
      %p34 = scmp.eq.s32.totalorder %s14, 0
      %p35 = por %p33, %p34
      %p36 = scmp.ne.s32.totalorder %s22, %s23
      %p37 = scmp.eq.s32.totalorder %s15, 1
      %p38 = por %p36, %p37
      %p40 = scmp.ne.s32.totalorder %s23, %s39
      %p41 = scmp.eq.s32.totalorder %s15, 0
      %p42 = por %p40, %p41
      %s44 = sadd.s32 %s43, 1
      %p47 = scmp.eq.s32.totalorder %s9, 1
      %p48 = scmp.ne.s32.totalorder %s43, %s45
      %p49 = scmp.eq.s32.totalorder %s9, 0
      %p50 = por %p48, %p49
      %p51 = scmp.ne.s32.totalorder %s43, %s45
      %p52 = scmp.eq.s32.totalorder %s14, 1
      %p53 = por %p51, %p52
      %p54 = scmp.ne.s32.totalorder %s45, %s46
      %p55 = scmp.eq.s32.totalorder %s14, 0
      %p56 = por %p54, %p55
      %p57 = scmp.ne.s32.totalorder %s45, %s46
      %p58 = scmp.eq.s32.totalorder %s15, 1
      %p59 = por %p57, %p58
      %p61 = scmp.ne.s32.totalorder %s46, %s60
      %p62 = scmp.eq.s32.totalorder %s15, 0
      %p63 = por %p61, %p62
      %s65 = sadd.s32 %s64, 1
      %p68 = scmp.eq.s32.totalorder %s9, 1
      %p69 = scmp.ne.s32.totalorder %s64, %s66
      %p70 = scmp.eq.s32.totalorder %s9, 0
      %p71 = por %p69, %p70
      %p72 = scmp.ne.s32.totalorder %s64, %s66
      %p73 = scmp.eq.s32.totalorder %s14, 1
      %p74 = por %p72, %p73
      %p75 = scmp.ne.s32.totalorder %s66, %s67
      %p76 = scmp.eq.s32.totalorder %s14, 0
      %p77 = por %p75, %p76
      %p78 = scmp.ne.s32.totalorder %s66, %s67
      %p79 = scmp.eq.s32.totalorder %s15, 1
      %p80 = por %p78, %p79
      %p82 = scmp.ne.s32.totalorder %s67, %s81
      %p83 = scmp.eq.s32.totalorder %s15, 0
      %p84 = por %p82, %p83
      %s85 = ssub.s32 %s9, %s16
      %p86 = scmp.eq.s32.totalorder %s85, 0
      %s88 = sadd.s32 %s87, 1
      %s89 = scalar_select %p86, %s87, %s88
      %p92 = pneg %p86
      %p93 = scmp.eq.s32.totalorder %s9, 1
      %p94 = por %p92, %p93
      %p95 = scmp.ne.s32.totalorder %s87, %s90
      %p96 = scmp.eq.s32.totalorder %s9, 0
      %p97 = por %p95, %p96
      %p98 = scmp.ne.s32.totalorder %s87, %s90
      %p99 = scmp.eq.s32.totalorder %s14, 1
      %p100 = por %p98, %p99
      %p101 = scmp.ne.s32.totalorder %s90, %s91
      %p102 = scmp.eq.s32.totalorder %s14, 0
      %p103 = por %p101, %p102
      %p104 = scmp.ne.s32.totalorder %s90, %s91
      %p105 = scmp.eq.s32.totalorder %s15, 1
      %p106 = por %p104, %p105
      %p108 = scmp.ne.s32.totalorder %s91, %s107
      %p109 = scmp.eq.s32.totalorder %s15, 0
      %p110 = por %p108, %p109
      %p111 = scmp.le.s32.totalorder 1, %s9
      %p112 = scmp.lt.s32.totalorder %s9, 3
      %p113 = pnand %p111, %p112
      %p114 = pneg %p113
      // Predicated region
      $region9: #{autoencoder_forward.10} parent=5 // pred_check
        _
      $region10: #{autoencoder_forward.10} parent=5 // pred_check_branch
        %116 = sbr.rel (%p113) target = $region12
      $region11: #{autoencoder_forward.10} parent=5 // pred_region
        %s117 = ssub.s32 %s9, 1
        // Predicated region
        $region13: #{autoencoder_forward.10} parent=11 // pred_check
          %p118 = pneg %p56
        $region14: #{autoencoder_forward.10} parent=11 // pred_check_branch
          %120 = sbr.rel (%p118) target = $region16
        $region15: #{autoencoder_forward.10} parent=11 // pred_region
          _
        $region16: #{autoencoder_forward.10} parent=11 // pred_fallthru
          _
        // Predicated region
        $region17: #{autoencoder_forward.10} parent=11 // pred_check
          %p121 = pneg %p77
        $region18: #{autoencoder_forward.10} parent=11 // pred_check_branch
          %123 = sbr.rel (%p121) target = $region20
        $region19: #{autoencoder_forward.10} parent=11 // pred_region
          _
        $region20: #{autoencoder_forward.10} parent=11 // pred_fallthru
          _
      $region12: #{autoencoder_forward.10} parent=5 // pred_fallthru
        _
      %p124 = scmp.lt.s32.totalorder %s9, 2
      // Predicated region
      $region21: #{autoencoder_forward.10} parent=5 // pred_check
        %p125 = pneg %p124
      $region22: #{autoencoder_forward.10} parent=5 // pred_check_branch
        %127 = sbr.rel (%p125) target = $region24
      $region23: #{autoencoder_forward.10} parent=5 // pred_region
        // Predicated region
        $region25: #{autoencoder_forward.10} parent=23 // pred_check
          %p128 = pneg %p29
        $region26: #{autoencoder_forward.10} parent=23 // pred_check_branch
          %130 = sbr.rel (%p128) target = $region28
        $region27: #{autoencoder_forward.10} parent=23 // pred_region
          %p131 = scmp.lt.s32.totalorder %s9, 1
          %s132 = scalar_select %p131, %s9, 1
          %s133 = smul.addr %s132, 12
          %s134 = smul.addr %s133, 8
          %s135 = scalar_lea.vmem %s0, %s134
        $region28: #{autoencoder_forward.10} parent=23 // pred_fallthru
          _
      $region24: #{autoencoder_forward.10} parent=5 // pred_fallthru
        _
      %p136 = scmp.le.s32.totalorder 1, %s9
      %p137 = scmp.lt.s32.totalorder %s9, 3
      %p138 = pnand %p136, %p137
      %p139 = pneg %p138
      // Predicated region
      $region29: #{autoencoder_forward.10} parent=5 // pred_check
        _
      $region30: #{autoencoder_forward.10} parent=5 // pred_check_branch
        %141 = sbr.rel (%p138) target = $region32
      $region31: #{autoencoder_forward.10} parent=5 // pred_region
        %s142 = ssub.s32 %s9, 1
        %p143 = scmp.lt.s32.totalorder %s14, 1
        %s144 = scalar_select %p143, %s14, 1
        %s145 = smul.addr %s144, 12
        %s146 = smul.addr %s145, 8
        %s147 = scalar_lea.vmem %s0, %s146
        %p148 = pneg %p35
        %p149 = pneg %p32
        %p150 = pneg %p56
        %p151 = pneg %p53
        %p152 = pneg %p77
        %p153 = pneg %p74
        %p154 = pneg %p103
        %p155 = pneg %p100
        %s156 = sand.u32 %s90, 1
        %s157 = sand.u32 %s90, 1
        %s158 = smul.addr %s157, 128
        %s159 = scalar_lea.vmem [#allocation2], %s158
        %p160 = scmp.lt.s32.totalorder %s14, 1
        %s161 = scalar_select %p160, %s14, 1
        %s162 = smul.addr %s161, 12
        %s163 = smul.addr %s162, 8
        %s164 = scalar_lea.vmem %s0, %s163
        %s165 = smul.u32 4, %s14
        %v166 = vld [vmem:[%s164] sm:$0xff]
        %v167 = vld [vmem:[%s164 + $0x10] sm:$0xff]
        %v168 = vld [vmem:[%s164 + $0x20] sm:$0xff]
        %v169 = vld [vmem:[%s164 + $0x30] sm:$0xff]
        %v170 = vld [vmem:[%s1] sm:$0xff]
        %v171 = vld [vmem:[%s1 + $0x8] sm:$0xff]
        %v172 = vld [vmem:[%s1 + $0x10] sm:$0xff]
        %v173 = vld [vmem:[%s1 + $0x18] sm:$0xff]
        %v174 = vld [vmem:[%s1 + $0x20] sm:$0xff]
        %v175 = vld [vmem:[%s1 + $0x28] sm:$0xff]
        %v176 = vld [vmem:[%s1 + $0x30] sm:$0xff]
        %v177 = vld [vmem:[%s1 + $0x38] sm:$0xff]
        %v178 = vld [vmem:[%s164 + $0x1] sm:$0xff]
        %v179 = vld [vmem:[%s164 + $0x11] sm:$0xff]
        %v180 = vld [vmem:[%s164 + $0x21] sm:$0xff]
        %v181 = vld [vmem:[%s164 + $0x31] sm:$0xff]
        %s182 = scalar_lea.vmem %s1, 64
        %v183 = vld [vmem:[%s182] sm:$0xff]
        %v184 = vld [vmem:[%s182 + $0x8] sm:$0xff]
        %v185 = vld [vmem:[%s182 + $0x10] sm:$0xff]
        %v186 = vld [vmem:[%s182 + $0x18] sm:$0xff]
        %v187 = vld [vmem:[%s182 + $0x20] sm:$0xff]
        %v188 = vld [vmem:[%s182 + $0x28] sm:$0xff]
        %v189 = vld [vmem:[%s182 + $0x30] sm:$0xff]
        %v190 = vld [vmem:[%s182 + $0x38] sm:$0xff]
        %vm191 = vcmask 523264
        %v193 = vsel %vm191, %v178, 0
        %v196 = vsel %vm191, %v179, 0
        %v199 = vsel %vm191, %v180, 0
        %v202 = vsel %vm191, %v181, 0
        %204 = vmatprep.subr.mxu0 0.0
        %205 = vmatpush1.msra.mxu0 %v183
        %206 = vmatprep.subr.mxu0 0.0
        %207 = vmatpush1.msra.mxu0 %v184
        %208 = vmatprep.subr.mxu0 0.0
        %209 = vmatpush1.msra.mxu0 %v185
        %210 = vmatprep.subr.mxu0 0.0
        %211 = vmatpush1.msra.mxu0 %v186
        %212 = vmatprep.subr.mxu0 0.0
        %213 = vmatpush1.msra.mxu0 %v187
        %214 = vmatprep.subr.mxu0 0.0
        %215 = vmatpush1.msra.mxu0 %v188
        %216 = vmatprep.subr.mxu0 0.0
        %217 = vmatpush1.msra.mxu0 %v189
        %218 = vmatprep.subr.mxu0 0.0
        %219 = vmatpush1.msra.mxu0 %v190
        %220 = vmatprep.subr.mxu0 0.0
        %221 = vmatpush1.msra.mxu0 0.0
        %222 = vmatprep.subr.mxu0 0.0
        %223 = vmatpush1.msra.mxu0 0.0
        %224 = vmatprep.subr.mxu0 0.0
        %225 = vmatpush1.msra.mxu0 0.0
        %226 = vmatprep.subr.mxu0 0.0
        %227 = vmatpush1.msra.mxu0 0.0
        %228 = vmatprep.subr.mxu0 0.0
        %229 = vmatpush1.msra.mxu0 0.0
        %230 = vmatprep.subr.mxu0 0.0
        %231 = vmatpush1.msra.mxu0 0.0
        %232 = vmatprep.subr.mxu0 0.0
        %233 = vmatpush1.msra.mxu0 0.0
        %234 = vmatprep.subr.mxu0 0.0
        %235 = vmatpush1.msra.mxu0 0.0
        %236 = vmatprep.subr.mxu0 0.0
        %237 = vmatpush1.msra.mxu0 0.0
        %238 = vmatprep.subr.mxu0 0.0
        %239 = vmatpush1.msra.mxu0 0.0
        %240 = vmatprep.subr.mxu0 0.0
        %241 = vmatpush1.msra.mxu0 0.0
        %242 = vmatprep.subr.mxu0 0.0
        %243 = vmatpush1.msra.mxu0 0.0
        %244 = vmatprep.subr.mxu0 0.0
        %245 = vmatpush1.msra.mxu0 0.0
        %246 = vmatprep.subr.mxu0 0.0
        %247 = vmatpush1.msra.mxu0 0.0
        %248 = vmatprep.subr.mxu0 0.0
        %249 = vmatpush1.msra.mxu0 0.0
        %250 = vmatprep.subr.mxu0 0.0
        %251 = vmatpush1.msra.mxu0 0.0
        %252 = vmatprep.subr.mxu0 0.0
        %253 = vmatpush1.msra.mxu0 0.0
        %254 = vmatprep.subr.mxu0 0.0
        %255 = vmatpush1.msra.mxu0 0.0
        %256 = vmatprep.subr.mxu0 0.0
        %257 = vmatpush1.msra.mxu0 0.0
        %258 = vmatprep.subr.mxu0 0.0
        %259 = vmatpush1.msra.mxu0 0.0
        %260 = vmatprep.subr.mxu0 0.0
        %261 = vmatpush1.msra.mxu0 0.0
        %262 = vmatprep.subr.mxu0 0.0
        %263 = vmatpush1.msra.mxu0 0.0
        %264 = vmatprep.subr.mxu0 0.0
        %265 = vmatpush1.msra.mxu0 0.0
        %266 = vmatprep.subr.mxu0 0.0
        %267 = vmatpush1.msra.mxu0 0.0
        %268 = vmatprep.mubr.f32.mxu0 0.0
        %269 = vmatmul.mubr.f32.gmra.mrb[0].mxu0 %v193
        %v270 = vpop.f32.mrb[0].mxu0
        %v271 = vadd.f32 0.0, %v270
        %v272 = vpop.f32.mrb[0].mxu0
        %273 = vmatprep.mubr.f32.mxu0 0.0
        %274 = vmatmul.mubr.f32.gmra.mrb[0].mxu0 %v196
        %v275 = vpop.f32.mrb[0].mxu0
        %v276 = vadd.f32 0.0, %v275
        %v277 = vpop.f32.mrb[0].mxu0
        %278 = vmatprep.mubr.f32.mxu0 0.0
        %279 = vmatmul.mubr.f32.gmra.mrb[0].mxu0 %v199
        %v280 = vpop.f32.mrb[0].mxu0
        %v281 = vadd.f32 0.0, %v280
        %v282 = vpop.f32.mrb[0].mxu0
        %283 = vmatprep.mubr.f32.mxu0 0.0
        %284 = vmatmul.mubr.f32.gmra.mrb[0].mxu0 %v202
        %v285 = vpop.f32.mrb[0].mxu0
        %v286 = vadd.f32 0.0, %v285
        %v287 = vpop.f32.mrb[0].mxu0
        %288 = vdwg.mxu0
        %v290 = vsel %vm191, %v166, 0
        %v293 = vsel %vm191, %v167, 0
        %v296 = vsel %vm191, %v168, 0
        %v299 = vsel %vm191, %v169, 0
        %301 = vmatprep.subr.mxu0 0.0
        %302 = vmatpush1.msra.mxu0 %v170
        %303 = vmatprep.subr.mxu0 0.0
        %304 = vmatpush1.msra.mxu0 %v171
        %305 = vmatprep.subr.mxu0 0.0
        %306 = vmatpush1.msra.mxu0 %v172
        %307 = vmatprep.subr.mxu0 0.0
        %308 = vmatpush1.msra.mxu0 %v173
        %309 = vmatprep.subr.mxu0 0.0
        %310 = vmatpush1.msra.mxu0 %v174
        %311 = vmatprep.subr.mxu0 0.0
        %312 = vmatpush1.msra.mxu0 %v175
        %313 = vmatprep.subr.mxu0 0.0
        %314 = vmatpush1.msra.mxu0 %v176
        %315 = vmatprep.subr.mxu0 0.0
        %316 = vmatpush1.msra.mxu0 %v177
        %317 = vmatprep.subr.mxu0 0.0
        %318 = vmatpush1.msra.mxu0 0.0
        %319 = vmatprep.subr.mxu0 0.0
        %320 = vmatpush1.msra.mxu0 0.0
        %321 = vmatprep.subr.mxu0 0.0
        %322 = vmatpush1.msra.mxu0 0.0
        %323 = vmatprep.subr.mxu0 0.0
        %324 = vmatpush1.msra.mxu0 0.0
        %325 = vmatprep.subr.mxu0 0.0
        %326 = vmatpush1.msra.mxu0 0.0
        %327 = vmatprep.subr.mxu0 0.0
        %328 = vmatpush1.msra.mxu0 0.0
        %329 = vmatprep.subr.mxu0 0.0
        %330 = vmatpush1.msra.mxu0 0.0
        %331 = vmatprep.subr.mxu0 0.0
        %332 = vmatpush1.msra.mxu0 0.0
        %333 = vmatprep.subr.mxu0 0.0
        %334 = vmatpush1.msra.mxu0 0.0
        %335 = vmatprep.subr.mxu0 0.0
        %336 = vmatpush1.msra.mxu0 0.0
        %337 = vmatprep.subr.mxu0 0.0
        %338 = vmatpush1.msra.mxu0 0.0
        %339 = vmatprep.subr.mxu0 0.0
        %340 = vmatpush1.msra.mxu0 0.0
        %341 = vmatprep.subr.mxu0 0.0
        %342 = vmatpush1.msra.mxu0 0.0
        %343 = vmatprep.subr.mxu0 0.0
        %344 = vmatpush1.msra.mxu0 0.0
        %345 = vmatprep.subr.mxu0 0.0
        %346 = vmatpush1.msra.mxu0 0.0
        %347 = vmatprep.subr.mxu0 0.0
        %348 = vmatpush1.msra.mxu0 0.0
        %349 = vmatprep.subr.mxu0 0.0
        %350 = vmatpush1.msra.mxu0 0.0
        %351 = vmatprep.subr.mxu0 0.0
        %352 = vmatpush1.msra.mxu0 0.0
        %353 = vmatprep.subr.mxu0 0.0
        %354 = vmatpush1.msra.mxu0 0.0
        %355 = vmatprep.subr.mxu0 0.0
        %356 = vmatpush1.msra.mxu0 0.0
        %357 = vmatprep.subr.mxu0 0.0
        %358 = vmatpush1.msra.mxu0 0.0
        %359 = vmatprep.subr.mxu0 0.0
        %360 = vmatpush1.msra.mxu0 0.0
        %361 = vmatprep.subr.mxu0 0.0
        %362 = vmatpush1.msra.mxu0 0.0
        %363 = vmatprep.subr.mxu0 0.0
        %364 = vmatpush1.msra.mxu0 0.0
        %365 = vmatprep.mubr.f32.mxu0 0.0
        %366 = vmatmul.mubr.f32.gmra.mrb[0].mxu0 %v290
        %v367 = vpop.f32.mrb[0].mxu0
        %v368 = vadd.f32 %v271, %v367
        %v369 = vpop.f32.mrb[0].mxu0
        %370 = vmatprep.mubr.f32.mxu0 0.0
        %371 = vmatmul.mubr.f32.gmra.mrb[0].mxu0 %v293
        %v372 = vpop.f32.mrb[0].mxu0
        %v373 = vadd.f32 %v276, %v372
        %v374 = vpop.f32.mrb[0].mxu0
        %375 = vmatprep.mubr.f32.mxu0 0.0
        %376 = vmatmul.mubr.f32.gmra.mrb[0].mxu0 %v296
        %v377 = vpop.f32.mrb[0].mxu0
        %v378 = vadd.f32 %v281, %v377
        %v379 = vpop.f32.mrb[0].mxu0
        %380 = vmatprep.mubr.f32.mxu0 0.0
        %381 = vmatmul.mubr.f32.gmra.mrb[0].mxu0 %v299
        %v382 = vpop.f32.mrb[0].mxu0
        %v383 = vadd.f32 %v286, %v382
        %v384 = vpop.f32.mrb[0].mxu0
        %385 = vdwg.mxu0
        %s386 = scalar_lea.vmem %s164, 16
        %v387 = vld [vmem:[%s386] sm:$0xff]
        %v388 = vld [vmem:[%s386 + $0x10] sm:$0xff]
        %v389 = vld [vmem:[%s386 + $0x20] sm:$0xff]
        %v390 = vld [vmem:[%s386 + $0x30] sm:$0xff]
        %s391 = scalar_lea.vmem %s1, 128
        %v392 = vld [vmem:[%s391] sm:$0xff]
        %v393 = vld [vmem:[%s391 + $0x8] sm:$0xff]
        %v394 = vld [vmem:[%s391 + $0x10] sm:$0xff]
        %v395 = vld [vmem:[%s391 + $0x18] sm:$0xff]
        %v396 = vld [vmem:[%s391 + $0x20] sm:$0xff]
        %v397 = vld [vmem:[%s391 + $0x28] sm:$0xff]
        %v398 = vld [vmem:[%s391 + $0x30] sm:$0xff]
        %v399 = vld [vmem:[%s391 + $0x38] sm:$0xff]
        %v401 = vsel %vm191, %v387, 0
        %v404 = vsel %vm191, %v388, 0
        %v407 = vsel %vm191, %v389, 0
        %v410 = vsel %vm191, %v390, 0
        %412 = vmatprep.subr.mxu0 0.0
        %413 = vmatpush1.msra.mxu0 %v392
        %414 = vmatprep.subr.mxu0 0.0
        %415 = vmatpush1.msra.mxu0 %v393
        %416 = vmatprep.subr.mxu0 0.0
        %417 = vmatpush1.msra.mxu0 %v394
        %418 = vmatprep.subr.mxu0 0.0
        %419 = vmatpush1.msra.mxu0 %v395
        %420 = vmatprep.subr.mxu0 0.0
        %421 = vmatpush1.msra.mxu0 %v396
        %422 = vmatprep.subr.mxu0 0.0
        %423 = vmatpush1.msra.mxu0 %v397
        %424 = vmatprep.subr.mxu0 0.0
        %425 = vmatpush1.msra.mxu0 %v398
        %426 = vmatprep.subr.mxu0 0.0
        %427 = vmatpush1.msra.mxu0 %v399
        %428 = vmatprep.subr.mxu0 0.0
        %429 = vmatpush1.msra.mxu0 0.0
        %430 = vmatprep.subr.mxu0 0.0
        %431 = vmatpush1.msra.mxu0 0.0
        %432 = vmatprep.subr.mxu0 0.0
        %433 = vmatpush1.msra.mxu0 0.0
        %434 = vmatprep.subr.mxu0 0.0
        %435 = vmatpush1.msra.mxu0 0.0
        %436 = vmatprep.subr.mxu0 0.0
        %437 = vmatpush1.msra.mxu0 0.0
        %438 = vmatprep.subr.mxu0 0.0
        %439 = vmatpush1.msra.mxu0 0.0
        %440 = vmatprep.subr.mxu0 0.0
        %441 = vmatpush1.msra.mxu0 0.0
        %442 = vmatprep.subr.mxu0 0.0
        %443 = vmatpush1.msra.mxu0 0.0
        %444 = vmatprep.subr.mxu0 0.0
        %445 = vmatpush1.msra.mxu0 0.0
        %446 = vmatprep.subr.mxu0 0.0
        %447 = vmatpush1.msra.mxu0 0.0
        %448 = vmatprep.subr.mxu0 0.0
        %449 = vmatpush1.msra.mxu0 0.0
        %450 = vmatprep.subr.mxu0 0.0
        %451 = vmatpush1.msra.mxu0 0.0
        %452 = vmatprep.subr.mxu0 0.0
        %453 = vmatpush1.msra.mxu0 0.0
        %454 = vmatprep.subr.mxu0 0.0
        %455 = vmatpush1.msra.mxu0 0.0
        %456 = vmatprep.subr.mxu0 0.0
        %457 = vmatpush1.msra.mxu0 0.0
        %458 = vmatprep.subr.mxu0 0.0
        %459 = vmatpush1.msra.mxu0 0.0
        %460 = vmatprep.subr.mxu0 0.0
        %461 = vmatpush1.msra.mxu0 0.0
        %462 = vmatprep.subr.mxu0 0.0
        %463 = vmatpush1.msra.mxu0 0.0
        %464 = vmatprep.subr.mxu0 0.0
        %465 = vmatpush1.msra.mxu0 0.0
        %466 = vmatprep.subr.mxu0 0.0
        %467 = vmatpush1.msra.mxu0 0.0
        %468 = vmatprep.subr.mxu0 0.0
        %469 = vmatpush1.msra.mxu0 0.0
        %470 = vmatprep.subr.mxu0 0.0
        %471 = vmatpush1.msra.mxu0 0.0
        %472 = vmatprep.subr.mxu0 0.0
        %473 = vmatpush1.msra.mxu0 0.0
        %474 = vmatprep.subr.mxu0 0.0
        %475 = vmatpush1.msra.mxu0 0.0
        %476 = vmatprep.mubr.f32.mxu0 0.0
        %477 = vmatmul.mubr.f32.gmra.mrb[0].mxu0 %v401
        %v478 = vpop.f32.mrb[0].mxu0
        %v479 = vadd.f32 0.0, %v478
        %v480 = vpop.f32.mrb[0].mxu0
        %481 = vmatprep.mubr.f32.mxu0 0.0
        %482 = vmatmul.mubr.f32.gmra.mrb[0].mxu0 %v404
        %v483 = vpop.f32.mrb[0].mxu0
        %v484 = vadd.f32 0.0, %v483
        %v485 = vpop.f32.mrb[0].mxu0
        %486 = vmatprep.mubr.f32.mxu0 0.0
        %487 = vmatmul.mubr.f32.gmra.mrb[0].mxu0 %v407
        %v488 = vpop.f32.mrb[0].mxu0
        %v489 = vadd.f32 0.0, %v488
        %v490 = vpop.f32.mrb[0].mxu0
        %491 = vmatprep.mubr.f32.mxu0 0.0
        %492 = vmatmul.mubr.f32.gmra.mrb[0].mxu0 %v410
        %v493 = vpop.f32.mrb[0].mxu0
        %v494 = vadd.f32 0.0, %v493
        %v495 = vpop.f32.mrb[0].mxu0
        %496 = vdwg.mxu0
        %v497 = vadd.f32 %v368, %v479
        %v498 = vadd.f32 %v373, %v484
        %v499 = vadd.f32 %v378, %v489
        %v500 = vadd.f32 %v383, %v494
        %v501 = vld [vmem:[%s386 + $0x1] sm:$0xff]
        %v502 = vld [vmem:[%s386 + $0x11] sm:$0xff]
        %v503 = vld [vmem:[%s386 + $0x21] sm:$0xff]
        %v504 = vld [vmem:[%s386 + $0x31] sm:$0xff]
        %s505 = scalar_lea.vmem %s1, 192
        %v506 = vld [vmem:[%s505] sm:$0xff]
        %v507 = vld [vmem:[%s505 + $0x8] sm:$0xff]
        %v508 = vld [vmem:[%s505 + $0x10] sm:$0xff]
        %v509 = vld [vmem:[%s505 + $0x18] sm:$0xff]
        %v510 = vld [vmem:[%s505 + $0x20] sm:$0xff]
        %v511 = vld [vmem:[%s505 + $0x28] sm:$0xff]
        %v512 = vld [vmem:[%s505 + $0x30] sm:$0xff]
        %v513 = vld [vmem:[%s505 + $0x38] sm:$0xff]
        %v515 = vsel %vm191, %v501, 0
        %v518 = vsel %vm191, %v502, 0
        %v521 = vsel %vm191, %v503, 0
        %v524 = vsel %vm191, %v504, 0
        %526 = vmatprep.subr.mxu0 0.0
        %527 = vmatpush1.msra.mxu0 %v506
        %528 = vmatprep.subr.mxu0 0.0
        %529 = vmatpush1.msra.mxu0 %v507
        %530 = vmatprep.subr.mxu0 0.0
        %531 = vmatpush1.msra.mxu0 %v508
        %532 = vmatprep.subr.mxu0 0.0
        %533 = vmatpush1.msra.mxu0 %v509
        %534 = vmatprep.subr.mxu0 0.0
        %535 = vmatpush1.msra.mxu0 %v510
        %536 = vmatprep.subr.mxu0 0.0
        %537 = vmatpush1.msra.mxu0 %v511
        %538 = vmatprep.subr.mxu0 0.0
        %539 = vmatpush1.msra.mxu0 %v512
        %540 = vmatprep.subr.mxu0 0.0
        %541 = vmatpush1.msra.mxu0 %v513
        %542 = vmatprep.subr.mxu0 0.0
        %543 = vmatpush1.msra.mxu0 0.0
        %544 = vmatprep.subr.mxu0 0.0
        %545 = vmatpush1.msra.mxu0 0.0
        %546 = vmatprep.subr.mxu0 0.0
        %547 = vmatpush1.msra.mxu0 0.0
        %548 = vmatprep.subr.mxu0 0.0
        %549 = vmatpush1.msra.mxu0 0.0
        %550 = vmatprep.subr.mxu0 0.0
        %551 = vmatpush1.msra.mxu0 0.0
        %552 = vmatprep.subr.mxu0 0.0
        %553 = vmatpush1.msra.mxu0 0.0
        %554 = vmatprep.subr.mxu0 0.0
        %555 = vmatpush1.msra.mxu0 0.0
        %556 = vmatprep.subr.mxu0 0.0
        %557 = vmatpush1.msra.mxu0 0.0
        %558 = vmatprep.subr.mxu0 0.0
        %559 = vmatpush1.msra.mxu0 0.0
        %560 = vmatprep.subr.mxu0 0.0
        %561 = vmatpush1.msra.mxu0 0.0
        %562 = vmatprep.subr.mxu0 0.0
        %563 = vmatpush1.msra.mxu0 0.0
        %564 = vmatprep.subr.mxu0 0.0
        %565 = vmatpush1.msra.mxu0 0.0
        %566 = vmatprep.subr.mxu0 0.0
        %567 = vmatpush1.msra.mxu0 0.0
        %568 = vmatprep.subr.mxu0 0.0
        %569 = vmatpush1.msra.mxu0 0.0
        %570 = vmatprep.subr.mxu0 0.0
        %571 = vmatpush1.msra.mxu0 0.0
        %572 = vmatprep.subr.mxu0 0.0
        %573 = vmatpush1.msra.mxu0 0.0
        %574 = vmatprep.subr.mxu0 0.0
        %575 = vmatpush1.msra.mxu0 0.0
        %576 = vmatprep.subr.mxu0 0.0
        %577 = vmatpush1.msra.mxu0 0.0
        %578 = vmatprep.subr.mxu0 0.0
        %579 = vmatpush1.msra.mxu0 0.0
        %580 = vmatprep.subr.mxu0 0.0
        %581 = vmatpush1.msra.mxu0 0.0
        %582 = vmatprep.subr.mxu0 0.0
        %583 = vmatpush1.msra.mxu0 0.0
        %584 = vmatprep.subr.mxu0 0.0
        %585 = vmatpush1.msra.mxu0 0.0
        %586 = vmatprep.subr.mxu0 0.0
        %587 = vmatpush1.msra.mxu0 0.0
        %588 = vmatprep.subr.mxu0 0.0
        %589 = vmatpush1.msra.mxu0 0.0
        %590 = vmatprep.mubr.f32.mxu0 0.0
        %591 = vmatmul.mubr.f32.gmra.mrb[0].mxu0 %v515
        %v592 = vpop.f32.mrb[0].mxu0
        %v593 = vadd.f32 0.0, %v592
        %v594 = vpop.f32.mrb[0].mxu0
        %595 = vmatprep.mubr.f32.mxu0 0.0
        %596 = vmatmul.mubr.f32.gmra.mrb[0].mxu0 %v518
        %v597 = vpop.f32.mrb[0].mxu0
        %v598 = vadd.f32 0.0, %v597
        %v599 = vpop.f32.mrb[0].mxu0
        %600 = vmatprep.mubr.f32.mxu0 0.0
        %601 = vmatmul.mubr.f32.gmra.mrb[0].mxu0 %v521
        %v602 = vpop.f32.mrb[0].mxu0
        %v603 = vadd.f32 0.0, %v602
        %v604 = vpop.f32.mrb[0].mxu0
        %605 = vmatprep.mubr.f32.mxu0 0.0
        %606 = vmatmul.mubr.f32.gmra.mrb[0].mxu0 %v524
        %v607 = vpop.f32.mrb[0].mxu0
        %v608 = vadd.f32 0.0, %v607
        %v609 = vpop.f32.mrb[0].mxu0
        %610 = vdwg.mxu0
        %v611 = vadd.f32 %v497, %v593
        %v612 = vadd.f32 %v498, %v598
        %v613 = vadd.f32 %v499, %v603
        %v614 = vadd.f32 %v500, %v608
        %v615 = vld [vmem:[%s2] sm:$0x1]
        %v617 = vlaneseq
        %v618 = vshrl.u32 %v617, 7
        %v619 = vsub.s32 0, %v618
        %v620 = vrot.slane %v615, %v619
        %v622 = vadd.f32 %v611, %v620
        %v623 = vadd.f32 %v612, %v620
        %v624 = vadd.f32 %v613, %v620
        %v625 = vadd.f32 %v614, %v620
        %v626 = vmax.f32 %v622, 0.0
        %v627 = vmax.f32 %v623, 0.0
        %v628 = vmax.f32 %v624, 0.0
        %v629 = vmax.f32 %v625, 0.0
        %vm630 = vcmask 261120
        %631 = vst.msk [vmem:[%s159] sm:$0xff] %vm630, %v626
        %632 = vst.msk [vmem:[%s159 + $0x8] sm:$0xff] %vm630, %v627
        %633 = vst.msk [vmem:[%s159 + $0x10] sm:$0xff] %vm630, %v628
        %634 = vst.msk [vmem:[%s159 + $0x18] sm:$0xff] %vm630, %v629
        %v635 = vld [vmem:[%s164 + $0x1] sm:$0xff]
        %v636 = vld [vmem:[%s164 + $0x11] sm:$0xff]
        %v637 = vld [vmem:[%s164 + $0x21] sm:$0xff]
        %v638 = vld [vmem:[%s164 + $0x31] sm:$0xff]
        %s639 = scalar_lea.vmem %s1, 256
        %v640 = vld [vmem:[%s639] sm:$0xff]
        %v641 = vld [vmem:[%s639 + $0x8] sm:$0xff]
        %v642 = vld [vmem:[%s639 + $0x10] sm:$0xff]
        %v643 = vld [vmem:[%s639 + $0x18] sm:$0xff]
        %v644 = vld [vmem:[%s639 + $0x20] sm:$0xff]
        %v645 = vld [vmem:[%s639 + $0x28] sm:$0xff]
        %v646 = vld [vmem:[%s639 + $0x30] sm:$0xff]
        %v647 = vld [vmem:[%s639 + $0x38] sm:$0xff]
        %v648 = vld [vmem:[%s164 + $0x2] sm:$0xff]
        %v649 = vld [vmem:[%s164 + $0x12] sm:$0xff]
        %v650 = vld [vmem:[%s164 + $0x22] sm:$0xff]
        %v651 = vld [vmem:[%s164 + $0x32] sm:$0xff]
        %s652 = scalar_lea.vmem %s1, 320
        %v653 = vld [vmem:[%s652] sm:$0xff]
        %v654 = vld [vmem:[%s652 + $0x8] sm:$0xff]
        %v655 = vld [vmem:[%s652 + $0x10] sm:$0xff]
        %v656 = vld [vmem:[%s652 + $0x18] sm:$0xff]
        %v657 = vld [vmem:[%s652 + $0x20] sm:$0xff]
        %v658 = vld [vmem:[%s652 + $0x28] sm:$0xff]
        %v659 = vld [vmem:[%s652 + $0x30] sm:$0xff]
        %v660 = vld [vmem:[%s652 + $0x38] sm:$0xff]
        %v662 = vsel %vm191, %v648, 0
        %v665 = vsel %vm191, %v649, 0
        %v668 = vsel %vm191, %v650, 0
        %v671 = vsel %vm191, %v651, 0
        %673 = vmatprep.subr.mxu0 0.0
        %674 = vmatpush1.msra.mxu0 %v653
        %675 = vmatprep.subr.mxu0 0.0
        %676 = vmatpush1.msra.mxu0 %v654
        %677 = vmatprep.subr.mxu0 0.0
        %678 = vmatpush1.msra.mxu0 %v655
        %679 = vmatprep.subr.mxu0 0.0
        %680 = vmatpush1.msra.mxu0 %v656
        %681 = vmatprep.subr.mxu0 0.0
        %682 = vmatpush1.msra.mxu0 %v657
        %683 = vmatprep.subr.mxu0 0.0
        %684 = vmatpush1.msra.mxu0 %v658
        %685 = vmatprep.subr.mxu0 0.0
        %686 = vmatpush1.msra.mxu0 %v659
        %687 = vmatprep.subr.mxu0 0.0
        %688 = vmatpush1.msra.mxu0 %v660
        %689 = vmatprep.subr.mxu0 0.0
        %690 = vmatpush1.msra.mxu0 0.0
        %691 = vmatprep.subr.mxu0 0.0
        %692 = vmatpush1.msra.mxu0 0.0
        %693 = vmatprep.subr.mxu0 0.0
        %694 = vmatpush1.msra.mxu0 0.0
        %695 = vmatprep.subr.mxu0 0.0
        %696 = vmatpush1.msra.mxu0 0.0
        %697 = vmatprep.subr.mxu0 0.0
        %698 = vmatpush1.msra.mxu0 0.0
        %699 = vmatprep.subr.mxu0 0.0
        %700 = vmatpush1.msra.mxu0 0.0
        %701 = vmatprep.subr.mxu0 0.0
        %702 = vmatpush1.msra.mxu0 0.0
        %703 = vmatprep.subr.mxu0 0.0
        %704 = vmatpush1.msra.mxu0 0.0
        %705 = vmatprep.subr.mxu0 0.0
        %706 = vmatpush1.msra.mxu0 0.0
        %707 = vmatprep.subr.mxu0 0.0
        %708 = vmatpush1.msra.mxu0 0.0
        %709 = vmatprep.subr.mxu0 0.0
        %710 = vmatpush1.msra.mxu0 0.0
        %711 = vmatprep.subr.mxu0 0.0
        %712 = vmatpush1.msra.mxu0 0.0
        %713 = vmatprep.subr.mxu0 0.0
        %714 = vmatpush1.msra.mxu0 0.0
        %715 = vmatprep.subr.mxu0 0.0
        %716 = vmatpush1.msra.mxu0 0.0
        %717 = vmatprep.subr.mxu0 0.0
        %718 = vmatpush1.msra.mxu0 0.0
        %719 = vmatprep.subr.mxu0 0.0
        %720 = vmatpush1.msra.mxu0 0.0
        %721 = vmatprep.subr.mxu0 0.0
        %722 = vmatpush1.msra.mxu0 0.0
        %723 = vmatprep.subr.mxu0 0.0
        %724 = vmatpush1.msra.mxu0 0.0
        %725 = vmatprep.subr.mxu0 0.0
        %726 = vmatpush1.msra.mxu0 0.0
        %727 = vmatprep.subr.mxu0 0.0
        %728 = vmatpush1.msra.mxu0 0.0
        %729 = vmatprep.subr.mxu0 0.0
        %730 = vmatpush1.msra.mxu0 0.0
        %731 = vmatprep.subr.mxu0 0.0
        %732 = vmatpush1.msra.mxu0 0.0
        %733 = vmatprep.subr.mxu0 0.0
        %734 = vmatpush1.msra.mxu0 0.0
        %735 = vmatprep.subr.mxu0 0.0
        %736 = vmatpush1.msra.mxu0 0.0
        %737 = vmatprep.mubr.f32.mxu0 0.0
        %738 = vmatmul.mubr.f32.gmra.mrb[0].mxu0 %v662
        %v739 = vpop.f32.mrb[0].mxu0
        %v740 = vadd.f32 0.0, %v739
        %v741 = vpop.f32.mrb[0].mxu0
        %742 = vmatprep.mubr.f32.mxu0 0.0
        %743 = vmatmul.mubr.f32.gmra.mrb[0].mxu0 %v665
        %v744 = vpop.f32.mrb[0].mxu0
        %v745 = vadd.f32 0.0, %v744
        %v746 = vpop.f32.mrb[0].mxu0
        %747 = vmatprep.mubr.f32.mxu0 0.0
        %748 = vmatmul.mubr.f32.gmra.mrb[0].mxu0 %v668
        %v749 = vpop.f32.mrb[0].mxu0
        %v750 = vadd.f32 0.0, %v749
        %v751 = vpop.f32.mrb[0].mxu0
        %752 = vmatprep.mubr.f32.mxu0 0.0
        %753 = vmatmul.mubr.f32.gmra.mrb[0].mxu0 %v671
        %v754 = vpop.f32.mrb[0].mxu0
        %v755 = vadd.f32 0.0, %v754
        %v756 = vpop.f32.mrb[0].mxu0
        %757 = vdwg.mxu0
        %v759 = vsel %vm191, %v635, 0
        %v762 = vsel %vm191, %v636, 0
        %v765 = vsel %vm191, %v637, 0
        %v768 = vsel %vm191, %v638, 0
        %770 = vmatprep.subr.mxu0 0.0
        %771 = vmatpush1.msra.mxu0 %v640
        %772 = vmatprep.subr.mxu0 0.0
        %773 = vmatpush1.msra.mxu0 %v641
        %774 = vmatprep.subr.mxu0 0.0
        %775 = vmatpush1.msra.mxu0 %v642
        %776 = vmatprep.subr.mxu0 0.0
        %777 = vmatpush1.msra.mxu0 %v643
        %778 = vmatprep.subr.mxu0 0.0
        %779 = vmatpush1.msra.mxu0 %v644
        %780 = vmatprep.subr.mxu0 0.0
        %781 = vmatpush1.msra.mxu0 %v645
        %782 = vmatprep.subr.mxu0 0.0
        %783 = vmatpush1.msra.mxu0 %v646
        %784 = vmatprep.subr.mxu0 0.0
        %785 = vmatpush1.msra.mxu0 %v647
        %786 = vmatprep.subr.mxu0 0.0
        %787 = vmatpush1.msra.mxu0 0.0
        %788 = vmatprep.subr.mxu0 0.0
        %789 = vmatpush1.msra.mxu0 0.0
        %790 = vmatprep.subr.mxu0 0.0
        %791 = vmatpush1.msra.mxu0 0.0
        %792 = vmatprep.subr.mxu0 0.0
        %793 = vmatpush1.msra.mxu0 0.0
        %794 = vmatprep.subr.mxu0 0.0
        %795 = vmatpush1.msra.mxu0 0.0
        %796 = vmatprep.subr.mxu0 0.0
        %797 = vmatpush1.msra.mxu0 0.0
        %798 = vmatprep.subr.mxu0 0.0
        %799 = vmatpush1.msra.mxu0 0.0
        %800 = vmatprep.subr.mxu0 0.0
        %801 = vmatpush1.msra.mxu0 0.0
        %802 = vmatprep.subr.mxu0 0.0
        %803 = vmatpush1.msra.mxu0 0.0
        %804 = vmatprep.subr.mxu0 0.0
        %805 = vmatpush1.msra.mxu0 0.0
        %806 = vmatprep.subr.mxu0 0.0
        %807 = vmatpush1.msra.mxu0 0.0
        %808 = vmatprep.subr.mxu0 0.0
        %809 = vmatpush1.msra.mxu0 0.0
        %810 = vmatprep.subr.mxu0 0.0
        %811 = vmatpush1.msra.mxu0 0.0
        %812 = vmatprep.subr.mxu0 0.0
        %813 = vmatpush1.msra.mxu0 0.0
        %814 = vmatprep.subr.mxu0 0.0
        %815 = vmatpush1.msra.mxu0 0.0
        %816 = vmatprep.subr.mxu0 0.0
        %817 = vmatpush1.msra.mxu0 0.0
        %818 = vmatprep.subr.mxu0 0.0
        %819 = vmatpush1.msra.mxu0 0.0
        %820 = vmatprep.subr.mxu0 0.0
        %821 = vmatpush1.msra.mxu0 0.0
        %822 = vmatprep.subr.mxu0 0.0
        %823 = vmatpush1.msra.mxu0 0.0
        %824 = vmatprep.subr.mxu0 0.0
        %825 = vmatpush1.msra.mxu0 0.0
        %826 = vmatprep.subr.mxu0 0.0
        %827 = vmatpush1.msra.mxu0 0.0
        %828 = vmatprep.subr.mxu0 0.0
        %829 = vmatpush1.msra.mxu0 0.0
        %830 = vmatprep.subr.mxu0 0.0
        %831 = vmatpush1.msra.mxu0 0.0
        %832 = vmatprep.subr.mxu0 0.0
        %833 = vmatpush1.msra.mxu0 0.0
        %834 = vmatprep.mubr.f32.mxu0 0.0
        %835 = vmatmul.mubr.f32.gmra.mrb[0].mxu0 %v759
        %v836 = vpop.f32.mrb[0].mxu0
        %v837 = vadd.f32 %v740, %v836
        %v838 = vpop.f32.mrb[0].mxu0
        %839 = vmatprep.mubr.f32.mxu0 0.0
        %840 = vmatmul.mubr.f32.gmra.mrb[0].mxu0 %v762
        %v841 = vpop.f32.mrb[0].mxu0
        %v842 = vadd.f32 %v745, %v841
        %v843 = vpop.f32.mrb[0].mxu0
        %844 = vmatprep.mubr.f32.mxu0 0.0
        %845 = vmatmul.mubr.f32.gmra.mrb[0].mxu0 %v765
        %v846 = vpop.f32.mrb[0].mxu0
        %v847 = vadd.f32 %v750, %v846
        %v848 = vpop.f32.mrb[0].mxu0
        %849 = vmatprep.mubr.f32.mxu0 0.0
        %850 = vmatmul.mubr.f32.gmra.mrb[0].mxu0 %v768
        %v851 = vpop.f32.mrb[0].mxu0
        %v852 = vadd.f32 %v755, %v851
        %v853 = vpop.f32.mrb[0].mxu0
        %854 = vdwg.mxu0
        %v855 = vld [vmem:[%s386 + $0x1] sm:$0xff]
        %v856 = vld [vmem:[%s386 + $0x11] sm:$0xff]
        %v857 = vld [vmem:[%s386 + $0x21] sm:$0xff]
        %v858 = vld [vmem:[%s386 + $0x31] sm:$0xff]
        %s859 = scalar_lea.vmem %s1, 384
        %v860 = vld [vmem:[%s859] sm:$0xff]
        %v861 = vld [vmem:[%s859 + $0x8] sm:$0xff]
        %v862 = vld [vmem:[%s859 + $0x10] sm:$0xff]
        %v863 = vld [vmem:[%s859 + $0x18] sm:$0xff]
        %v864 = vld [vmem:[%s859 + $0x20] sm:$0xff]
        %v865 = vld [vmem:[%s859 + $0x28] sm:$0xff]
        %v866 = vld [vmem:[%s859 + $0x30] sm:$0xff]
        %v867 = vld [vmem:[%s859 + $0x38] sm:$0xff]
        %v869 = vsel %vm191, %v855, 0
        %v872 = vsel %vm191, %v856, 0
        %v875 = vsel %vm191, %v857, 0
        %v878 = vsel %vm191, %v858, 0
        %880 = vmatprep.subr.mxu0 0.0
        %881 = vmatpush1.msra.mxu0 %v860
        %882 = vmatprep.subr.mxu0 0.0
        %883 = vmatpush1.msra.mxu0 %v861
        %884 = vmatprep.subr.mxu0 0.0
        %885 = vmatpush1.msra.mxu0 %v862
        %886 = vmatprep.subr.mxu0 0.0
        %887 = vmatpush1.msra.mxu0 %v863
        %888 = vmatprep.subr.mxu0 0.0
        %889 = vmatpush1.msra.mxu0 %v864
        %890 = vmatprep.subr.mxu0 0.0
        %891 = vmatpush1.msra.mxu0 %v865
        %892 = vmatprep.subr.mxu0 0.0
        %893 = vmatpush1.msra.mxu0 %v866
        %894 = vmatprep.subr.mxu0 0.0
        %895 = vmatpush1.msra.mxu0 %v867
        %896 = vmatprep.subr.mxu0 0.0
        %897 = vmatpush1.msra.mxu0 0.0
        %898 = vmatprep.subr.mxu0 0.0
        %899 = vmatpush1.msra.mxu0 0.0
        %900 = vmatprep.subr.mxu0 0.0
        %901 = vmatpush1.msra.mxu0 0.0
        %902 = vmatprep.subr.mxu0 0.0
        %903 = vmatpush1.msra.mxu0 0.0
        %904 = vmatprep.subr.mxu0 0.0
        %905 = vmatpush1.msra.mxu0 0.0
        %906 = vmatprep.subr.mxu0 0.0
        %907 = vmatpush1.msra.mxu0 0.0
        %908 = vmatprep.subr.mxu0 0.0
        %909 = vmatpush1.msra.mxu0 0.0
        %910 = vmatprep.subr.mxu0 0.0
        %911 = vmatpush1.msra.mxu0 0.0
        %912 = vmatprep.subr.mxu0 0.0
        %913 = vmatpush1.msra.mxu0 0.0
        %914 = vmatprep.subr.mxu0 0.0
        %915 = vmatpush1.msra.mxu0 0.0
        %916 = vmatprep.subr.mxu0 0.0
        %917 = vmatpush1.msra.mxu0 0.0
        %918 = vmatprep.subr.mxu0 0.0
        %919 = vmatpush1.msra.mxu0 0.0
        %920 = vmatprep.subr.mxu0 0.0
        %921 = vmatpush1.msra.mxu0 0.0
        %922 = vmatprep.subr.mxu0 0.0
        %923 = vmatpush1.msra.mxu0 0.0
        %924 = vmatprep.subr.mxu0 0.0
        %925 = vmatpush1.msra.mxu0 0.0
        %926 = vmatprep.subr.mxu0 0.0
        %927 = vmatpush1.msra.mxu0 0.0
        %928 = vmatprep.subr.mxu0 0.0
        %929 = vmatpush1.msra.mxu0 0.0
        %930 = vmatprep.subr.mxu0 0.0
        %931 = vmatpush1.msra.mxu0 0.0
        %932 = vmatprep.subr.mxu0 0.0
        %933 = vmatpush1.msra.mxu0 0.0
        %934 = vmatprep.subr.mxu0 0.0
        %935 = vmatpush1.msra.mxu0 0.0
        %936 = vmatprep.subr.mxu0 0.0
        %937 = vmatpush1.msra.mxu0 0.0
        %938 = vmatprep.subr.mxu0 0.0
        %939 = vmatpush1.msra.mxu0 0.0
        %940 = vmatprep.subr.mxu0 0.0
        %941 = vmatpush1.msra.mxu0 0.0
        %942 = vmatprep.subr.mxu0 0.0
        %943 = vmatpush1.msra.mxu0 0.0
        %944 = vmatprep.mubr.f32.mxu0 0.0
        %945 = vmatmul.mubr.f32.gmra.mrb[0].mxu0 %v869
        %v946 = vpop.f32.mrb[0].mxu0
        %v947 = vadd.f32 0.0, %v946
        %v948 = vpop.f32.mrb[0].mxu0
        %949 = vmatprep.mubr.f32.mxu0 0.0
        %950 = vmatmul.mubr.f32.gmra.mrb[0].mxu0 %v872
        %v951 = vpop.f32.mrb[0].mxu0
        %v952 = vadd.f32 0.0, %v951
        %v953 = vpop.f32.mrb[0].mxu0
        %954 = vmatprep.mubr.f32.mxu0 0.0
        %955 = vmatmul.mubr.f32.gmra.mrb[0].mxu0 %v875
        %v956 = vpop.f32.mrb[0].mxu0
        %v957 = vadd.f32 0.0, %v956
        %v958 = vpop.f32.mrb[0].mxu0
        %959 = vmatprep.mubr.f32.mxu0 0.0
        %960 = vmatmul.mubr.f32.gmra.mrb[0].mxu0 %v878
        %v961 = vpop.f32.mrb[0].mxu0
        %v962 = vadd.f32 0.0, %v961
        %v963 = vpop.f32.mrb[0].mxu0
        %964 = vdwg.mxu0
        %v965 = vadd.f32 %v837, %v947
        %v966 = vadd.f32 %v842, %v952
        %v967 = vadd.f32 %v847, %v957
        %v968 = vadd.f32 %v852, %v962
        %v969 = vld [vmem:[%s386 + $0x2] sm:$0xff]
        %v970 = vld [vmem:[%s386 + $0x12] sm:$0xff]
        %v971 = vld [vmem:[%s386 + $0x22] sm:$0xff]
        %v972 = vld [vmem:[%s386 + $0x32] sm:$0xff]
        %s973 = scalar_lea.vmem %s1, 448
        %v974 = vld [vmem:[%s973] sm:$0xff]
        %v975 = vld [vmem:[%s973 + $0x8] sm:$0xff]
        %v976 = vld [vmem:[%s973 + $0x10] sm:$0xff]
        %v977 = vld [vmem:[%s973 + $0x18] sm:$0xff]
        %v978 = vld [vmem:[%s973 + $0x20] sm:$0xff]
        %v979 = vld [vmem:[%s973 + $0x28] sm:$0xff]
        %v980 = vld [vmem:[%s973 + $0x30] sm:$0xff]
        %v981 = vld [vmem:[%s973 + $0x38] sm:$0xff]
        %v983 = vsel %vm191, %v969, 0
        %v986 = vsel %vm191, %v970, 0
        %v989 = vsel %vm191, %v971, 0
        %v992 = vsel %vm191, %v972, 0
        %994 = vmatprep.subr.mxu0 0.0
        %995 = vmatpush1.msra.mxu0 %v974
        %996 = vmatprep.subr.mxu0 0.0
        %997 = vmatpush1.msra.mxu0 %v975
        %998 = vmatprep.subr.mxu0 0.0
        %999 = vmatpush1.msra.mxu0 %v976
        %1000 = vmatprep.subr.mxu0 0.0
        %1001 = vmatpush1.msra.mxu0 %v977
        %1002 = vmatprep.subr.mxu0 0.0
        %1003 = vmatpush1.msra.mxu0 %v978
        %1004 = vmatprep.subr.mxu0 0.0
        %1005 = vmatpush1.msra.mxu0 %v979
        %1006 = vmatprep.subr.mxu0 0.0
        %1007 = vmatpush1.msra.mxu0 %v980
        %1008 = vmatprep.subr.mxu0 0.0
        %1009 = vmatpush1.msra.mxu0 %v981
        %1010 = vmatprep.subr.mxu0 0.0
        %1011 = vmatpush1.msra.mxu0 0.0
        %1012 = vmatprep.subr.mxu0 0.0
        %1013 = vmatpush1.msra.mxu0 0.0
        %1014 = vmatprep.subr.mxu0 0.0
        %1015 = vmatpush1.msra.mxu0 0.0
        %1016 = vmatprep.subr.mxu0 0.0
        %1017 = vmatpush1.msra.mxu0 0.0
        %1018 = vmatprep.subr.mxu0 0.0
        %1019 = vmatpush1.msra.mxu0 0.0
        %1020 = vmatprep.subr.mxu0 0.0
        %1021 = vmatpush1.msra.mxu0 0.0
        %1022 = vmatprep.subr.mxu0 0.0
        %1023 = vmatpush1.msra.mxu0 0.0
        %1024 = vmatprep.subr.mxu0 0.0
        %1025 = vmatpush1.msra.mxu0 0.0
        %1026 = vmatprep.subr.mxu0 0.0
        %1027 = vmatpush1.msra.mxu0 0.0
        %1028 = vmatprep.subr.mxu0 0.0
        %1029 = vmatpush1.msra.mxu0 0.0
        %1030 = vmatprep.subr.mxu0 0.0
        %1031 = vmatpush1.msra.mxu0 0.0
        %1032 = vmatprep.subr.mxu0 0.0
        %1033 = vmatpush1.msra.mxu0 0.0
        %1034 = vmatprep.subr.mxu0 0.0
        %1035 = vmatpush1.msra.mxu0 0.0
        %1036 = vmatprep.subr.mxu0 0.0
        %1037 = vmatpush1.msra.mxu0 0.0
        %1038 = vmatprep.subr.mxu0 0.0
        %1039 = vmatpush1.msra.mxu0 0.0
        %1040 = vmatprep.subr.mxu0 0.0
        %1041 = vmatpush1.msra.mxu0 0.0
        %1042 = vmatprep.subr.mxu0 0.0
        %1043 = vmatpush1.msra.mxu0 0.0
        %1044 = vmatprep.subr.mxu0 0.0
        %1045 = vmatpush1.msra.mxu0 0.0
        %1046 = vmatprep.subr.mxu0 0.0
        %1047 = vmatpush1.msra.mxu0 0.0
        %1048 = vmatprep.subr.mxu0 0.0
        %1049 = vmatpush1.msra.mxu0 0.0
        %1050 = vmatprep.subr.mxu0 0.0
        %1051 = vmatpush1.msra.mxu0 0.0
        %1052 = vmatprep.subr.mxu0 0.0
        %1053 = vmatpush1.msra.mxu0 0.0
        %1054 = vmatprep.subr.mxu0 0.0
        %1055 = vmatpush1.msra.mxu0 0.0
        %1056 = vmatprep.subr.mxu0 0.0
        %1057 = vmatpush1.msra.mxu0 0.0
        %1058 = vmatprep.mubr.f32.mxu0 0.0
        %1059 = vmatmul.mubr.f32.gmra.mrb[0].mxu0 %v983
        %v1060 = vpop.f32.mrb[0].mxu0
        %v1061 = vadd.f32 0.0, %v1060
        %v1062 = vpop.f32.mrb[0].mxu0
        %1063 = vmatprep.mubr.f32.mxu0 0.0
        %1064 = vmatmul.mubr.f32.gmra.mrb[0].mxu0 %v986
        %v1065 = vpop.f32.mrb[0].mxu0
        %v1066 = vadd.f32 0.0, %v1065
        %v1067 = vpop.f32.mrb[0].mxu0
        %1068 = vmatprep.mubr.f32.mxu0 0.0
        %1069 = vmatmul.mubr.f32.gmra.mrb[0].mxu0 %v989
        %v1070 = vpop.f32.mrb[0].mxu0
        %v1071 = vadd.f32 0.0, %v1070
        %v1072 = vpop.f32.mrb[0].mxu0
        %1073 = vmatprep.mubr.f32.mxu0 0.0
        %1074 = vmatmul.mubr.f32.gmra.mrb[0].mxu0 %v992
        %v1075 = vpop.f32.mrb[0].mxu0
        %v1076 = vadd.f32 0.0, %v1075
        %v1077 = vpop.f32.mrb[0].mxu0
        %1078 = vdwg.mxu0
        %v1079 = vadd.f32 %v965, %v1061
        %v1080 = vadd.f32 %v966, %v1066
        %v1081 = vadd.f32 %v967, %v1071
        %v1082 = vadd.f32 %v968, %v1076
        %v1083 = vld [vmem:[%s2] sm:$0x1]
        %v1085 = vlaneseq
        %v1086 = vshrl.u32 %v1085, 7
        %v1087 = vsub.s32 0, %v1086
        %v1088 = vrot.slane %v1083, %v1087
        %v1090 = vadd.f32 %v1079, %v1088
        %v1091 = vadd.f32 %v1080, %v1088
        %v1092 = vadd.f32 %v1081, %v1088
        %v1093 = vadd.f32 %v1082, %v1088
        %v1094 = vmax.f32 %v1090, 0.0
        %v1095 = vmax.f32 %v1091, 0.0
        %v1096 = vmax.f32 %v1092, 0.0
        %v1097 = vmax.f32 %v1093, 0.0
        %s1098 = scalar_lea.vmem %s159, 32 [#allocation2]
        %1099 = vst.msk [vmem:[%s1098] sm:$0xff] %vm630, %v1094
        %1100 = vst.msk [vmem:[%s1098 + $0x8] sm:$0xff] %vm630, %v1095
        %1101 = vst.msk [vmem:[%s1098 + $0x10] sm:$0xff] %vm630, %v1096
        %1102 = vst.msk [vmem:[%s1098 + $0x18] sm:$0xff] %vm630, %v1097
        %v1103 = vld [vmem:[%s386] sm:$0xff]
        %v1104 = vld [vmem:[%s386 + $0x10] sm:$0xff]
        %v1105 = vld [vmem:[%s386 + $0x20] sm:$0xff]
        %v1106 = vld [vmem:[%s386 + $0x30] sm:$0xff]
        %s1107 = scalar_lea.vmem %s1, 512
        %v1108 = vld [vmem:[%s1107] sm:$0xff]
        %v1109 = vld [vmem:[%s1107 + $0x8] sm:$0xff]
        %v1110 = vld [vmem:[%s1107 + $0x10] sm:$0xff]
        %v1111 = vld [vmem:[%s1107 + $0x18] sm:$0xff]
        %v1112 = vld [vmem:[%s1107 + $0x20] sm:$0xff]
        %v1113 = vld [vmem:[%s1107 + $0x28] sm:$0xff]
        %v1114 = vld [vmem:[%s1107 + $0x30] sm:$0xff]
        %v1115 = vld [vmem:[%s1107 + $0x38] sm:$0xff]
        %v1116 = vld [vmem:[%s386 + $0x1] sm:$0xff]
        %v1117 = vld [vmem:[%s386 + $0x11] sm:$0xff]
        %v1118 = vld [vmem:[%s386 + $0x21] sm:$0xff]
        %v1119 = vld [vmem:[%s386 + $0x31] sm:$0xff]
        %s1120 = scalar_lea.vmem %s1, 576
        %v1121 = vld [vmem:[%s1120] sm:$0xff]
        %v1122 = vld [vmem:[%s1120 + $0x8] sm:$0xff]
        %v1123 = vld [vmem:[%s1120 + $0x10] sm:$0xff]
        %v1124 = vld [vmem:[%s1120 + $0x18] sm:$0xff]
        %v1125 = vld [vmem:[%s1120 + $0x20] sm:$0xff]
        %v1126 = vld [vmem:[%s1120 + $0x28] sm:$0xff]
        %v1127 = vld [vmem:[%s1120 + $0x30] sm:$0xff]
        %v1128 = vld [vmem:[%s1120 + $0x38] sm:$0xff]
        %v1130 = vsel %vm191, %v1116, 0
        %v1133 = vsel %vm191, %v1117, 0
        %v1136 = vsel %vm191, %v1118, 0
        %v1139 = vsel %vm191, %v1119, 0
        %1141 = vmatprep.subr.mxu0 0.0
        %1142 = vmatpush1.msra.mxu0 %v1121
        %1143 = vmatprep.subr.mxu0 0.0
        %1144 = vmatpush1.msra.mxu0 %v1122
        %1145 = vmatprep.subr.mxu0 0.0
        %1146 = vmatpush1.msra.mxu0 %v1123
        %1147 = vmatprep.subr.mxu0 0.0
        %1148 = vmatpush1.msra.mxu0 %v1124
        %1149 = vmatprep.subr.mxu0 0.0
        %1150 = vmatpush1.msra.mxu0 %v1125
        %1151 = vmatprep.subr.mxu0 0.0
        %1152 = vmatpush1.msra.mxu0 %v1126
        %1153 = vmatprep.subr.mxu0 0.0
        %1154 = vmatpush1.msra.mxu0 %v1127
        %1155 = vmatprep.subr.mxu0 0.0
        %1156 = vmatpush1.msra.mxu0 %v1128
        %1157 = vmatprep.subr.mxu0 0.0
        %1158 = vmatpush1.msra.mxu0 0.0
        %1159 = vmatprep.subr.mxu0 0.0
        %1160 = vmatpush1.msra.mxu0 0.0
        %1161 = vmatprep.subr.mxu0 0.0
        %1162 = vmatpush1.msra.mxu0 0.0
        %1163 = vmatprep.subr.mxu0 0.0
        %1164 = vmatpush1.msra.mxu0 0.0
        %1165 = vmatprep.subr.mxu0 0.0
        %1166 = vmatpush1.msra.mxu0 0.0
        %1167 = vmatprep.subr.mxu0 0.0
        %1168 = vmatpush1.msra.mxu0 0.0
        %1169 = vmatprep.subr.mxu0 0.0
        %1170 = vmatpush1.msra.mxu0 0.0
        %1171 = vmatprep.subr.mxu0 0.0
        %1172 = vmatpush1.msra.mxu0 0.0
        %1173 = vmatprep.subr.mxu0 0.0
        %1174 = vmatpush1.msra.mxu0 0.0
        %1175 = vmatprep.subr.mxu0 0.0
        %1176 = vmatpush1.msra.mxu0 0.0
        %1177 = vmatprep.subr.mxu0 0.0
        %1178 = vmatpush1.msra.mxu0 0.0
        %1179 = vmatprep.subr.mxu0 0.0
        %1180 = vmatpush1.msra.mxu0 0.0
        %1181 = vmatprep.subr.mxu0 0.0
        %1182 = vmatpush1.msra.mxu0 0.0
        %1183 = vmatprep.subr.mxu0 0.0
        %1184 = vmatpush1.msra.mxu0 0.0
        %1185 = vmatprep.subr.mxu0 0.0
        %1186 = vmatpush1.msra.mxu0 0.0
        %1187 = vmatprep.subr.mxu0 0.0
        %1188 = vmatpush1.msra.mxu0 0.0
        %1189 = vmatprep.subr.mxu0 0.0
        %1190 = vmatpush1.msra.mxu0 0.0
        %1191 = vmatprep.subr.mxu0 0.0
        %1192 = vmatpush1.msra.mxu0 0.0
        %1193 = vmatprep.subr.mxu0 0.0
        %1194 = vmatpush1.msra.mxu0 0.0
        %1195 = vmatprep.subr.mxu0 0.0
        %1196 = vmatpush1.msra.mxu0 0.0
        %1197 = vmatprep.subr.mxu0 0.0
        %1198 = vmatpush1.msra.mxu0 0.0
        %1199 = vmatprep.subr.mxu0 0.0
        %1200 = vmatpush1.msra.mxu0 0.0
        %1201 = vmatprep.subr.mxu0 0.0
        %1202 = vmatpush1.msra.mxu0 0.0
        %1203 = vmatprep.subr.mxu0 0.0
        %1204 = vmatpush1.msra.mxu0 0.0
        %1205 = vmatprep.mubr.f32.mxu0 0.0
        %1206 = vmatmul.mubr.f32.gmra.mrb[0].mxu0 %v1130
        %v1207 = vpop.f32.mrb[0].mxu0
        %v1208 = vadd.f32 0.0, %v1207
        %v1209 = vpop.f32.mrb[0].mxu0
        %1210 = vmatprep.mubr.f32.mxu0 0.0
        %1211 = vmatmul.mubr.f32.gmra.mrb[0].mxu0 %v1133
        %v1212 = vpop.f32.mrb[0].mxu0
        %v1213 = vadd.f32 0.0, %v1212
        %v1214 = vpop.f32.mrb[0].mxu0
        %1215 = vmatprep.mubr.f32.mxu0 0.0
        %1216 = vmatmul.mubr.f32.gmra.mrb[0].mxu0 %v1136
        %v1217 = vpop.f32.mrb[0].mxu0
        %v1218 = vadd.f32 0.0, %v1217
        %v1219 = vpop.f32.mrb[0].mxu0
        %1220 = vmatprep.mubr.f32.mxu0 0.0
        %1221 = vmatmul.mubr.f32.gmra.mrb[0].mxu0 %v1139
        %v1222 = vpop.f32.mrb[0].mxu0
        %v1223 = vadd.f32 0.0, %v1222
        %v1224 = vpop.f32.mrb[0].mxu0
        %1225 = vdwg.mxu0
        %v1227 = vsel %vm191, %v1103, 0
        %v1230 = vsel %vm191, %v1104, 0
        %v1233 = vsel %vm191, %v1105, 0
        %v1236 = vsel %vm191, %v1106, 0
        %1238 = vmatprep.subr.mxu0 0.0
        %1239 = vmatpush1.msra.mxu0 %v1108
        %1240 = vmatprep.subr.mxu0 0.0
        %1241 = vmatpush1.msra.mxu0 %v1109
        %1242 = vmatprep.subr.mxu0 0.0
        %1243 = vmatpush1.msra.mxu0 %v1110
        %1244 = vmatprep.subr.mxu0 0.0
        %1245 = vmatpush1.msra.mxu0 %v1111
        %1246 = vmatprep.subr.mxu0 0.0
        %1247 = vmatpush1.msra.mxu0 %v1112
        %1248 = vmatprep.subr.mxu0 0.0
        %1249 = vmatpush1.msra.mxu0 %v1113
        %1250 = vmatprep.subr.mxu0 0.0
        %1251 = vmatpush1.msra.mxu0 %v1114
        %1252 = vmatprep.subr.mxu0 0.0
        %1253 = vmatpush1.msra.mxu0 %v1115
        %1254 = vmatprep.subr.mxu0 0.0
        %1255 = vmatpush1.msra.mxu0 0.0
        %1256 = vmatprep.subr.mxu0 0.0
        %1257 = vmatpush1.msra.mxu0 0.0
        %1258 = vmatprep.subr.mxu0 0.0
        %1259 = vmatpush1.msra.mxu0 0.0
        %1260 = vmatprep.subr.mxu0 0.0
        %1261 = vmatpush1.msra.mxu0 0.0
        %1262 = vmatprep.subr.mxu0 0.0
        %1263 = vmatpush1.msra.mxu0 0.0
        %1264 = vmatprep.subr.mxu0 0.0
        %1265 = vmatpush1.msra.mxu0 0.0
        %1266 = vmatprep.subr.mxu0 0.0
        %1267 = vmatpush1.msra.mxu0 0.0
        %1268 = vmatprep.subr.mxu0 0.0
        %1269 = vmatpush1.msra.mxu0 0.0
        %1270 = vmatprep.subr.mxu0 0.0
        %1271 = vmatpush1.msra.mxu0 0.0
        %1272 = vmatprep.subr.mxu0 0.0
        %1273 = vmatpush1.msra.mxu0 0.0
        %1274 = vmatprep.subr.mxu0 0.0
        %1275 = vmatpush1.msra.mxu0 0.0
        %1276 = vmatprep.subr.mxu0 0.0
        %1277 = vmatpush1.msra.mxu0 0.0
        %1278 = vmatprep.subr.mxu0 0.0
        %1279 = vmatpush1.msra.mxu0 0.0
        %1280 = vmatprep.subr.mxu0 0.0
        %1281 = vmatpush1.msra.mxu0 0.0
        %1282 = vmatprep.subr.mxu0 0.0
        %1283 = vmatpush1.msra.mxu0 0.0
        %1284 = vmatprep.subr.mxu0 0.0
        %1285 = vmatpush1.msra.mxu0 0.0
        %1286 = vmatprep.subr.mxu0 0.0
        %1287 = vmatpush1.msra.mxu0 0.0
        %1288 = vmatprep.subr.mxu0 0.0
        %1289 = vmatpush1.msra.mxu0 0.0
        %1290 = vmatprep.subr.mxu0 0.0
        %1291 = vmatpush1.msra.mxu0 0.0
        %1292 = vmatprep.subr.mxu0 0.0
        %1293 = vmatpush1.msra.mxu0 0.0
        %1294 = vmatprep.subr.mxu0 0.0
        %1295 = vmatpush1.msra.mxu0 0.0
        %1296 = vmatprep.subr.mxu0 0.0
        %1297 = vmatpush1.msra.mxu0 0.0
        %1298 = vmatprep.subr.mxu0 0.0
        %1299 = vmatpush1.msra.mxu0 0.0
        %1300 = vmatprep.subr.mxu0 0.0
        %1301 = vmatpush1.msra.mxu0 0.0
        %1302 = vmatprep.mubr.f32.mxu0 0.0
        %1303 = vmatmul.mubr.f32.gmra.mrb[0].mxu0 %v1227
        %v1304 = vpop.f32.mrb[0].mxu0
        %v1305 = vadd.f32 %v1208, %v1304
        %v1306 = vpop.f32.mrb[0].mxu0
        %1307 = vmatprep.mubr.f32.mxu0 0.0
        %1308 = vmatmul.mubr.f32.gmra.mrb[0].mxu0 %v1230
        %v1309 = vpop.f32.mrb[0].mxu0
        %v1310 = vadd.f32 %v1213, %v1309
        %v1311 = vpop.f32.mrb[0].mxu0
        %1312 = vmatprep.mubr.f32.mxu0 0.0
        %1313 = vmatmul.mubr.f32.gmra.mrb[0].mxu0 %v1233
        %v1314 = vpop.f32.mrb[0].mxu0
        %v1315 = vadd.f32 %v1218, %v1314
        %v1316 = vpop.f32.mrb[0].mxu0
        %1317 = vmatprep.mubr.f32.mxu0 0.0
        %1318 = vmatmul.mubr.f32.gmra.mrb[0].mxu0 %v1236
        %v1319 = vpop.f32.mrb[0].mxu0
        %v1320 = vadd.f32 %v1223, %v1319
        %v1321 = vpop.f32.mrb[0].mxu0
        %1322 = vdwg.mxu0
        %s1323 = scalar_lea.vmem %s164, 32
        %v1324 = vld [vmem:[%s1323] sm:$0xff]
        %v1325 = vld [vmem:[%s1323 + $0x10] sm:$0xff]
        %v1326 = vld [vmem:[%s1323 + $0x20] sm:$0xff]
        %v1327 = vld [vmem:[%s1323 + $0x30] sm:$0xff]
        %s1328 = scalar_lea.vmem %s1, 640
        %v1329 = vld [vmem:[%s1328] sm:$0xff]
        %v1330 = vld [vmem:[%s1328 + $0x8] sm:$0xff]
        %v1331 = vld [vmem:[%s1328 + $0x10] sm:$0xff]
        %v1332 = vld [vmem:[%s1328 + $0x18] sm:$0xff]
        %v1333 = vld [vmem:[%s1328 + $0x20] sm:$0xff]
        %v1334 = vld [vmem:[%s1328 + $0x28] sm:$0xff]
        %v1335 = vld [vmem:[%s1328 + $0x30] sm:$0xff]
        %v1336 = vld [vmem:[%s1328 + $0x38] sm:$0xff]
        %v1338 = vsel %vm191, %v1324, 0
        %v1341 = vsel %vm191, %v1325, 0
        %v1344 = vsel %vm191, %v1326, 0
        %v1347 = vsel %vm191, %v1327, 0
        %1349 = vmatprep.subr.mxu0 0.0
        %1350 = vmatpush1.msra.mxu0 %v1329
        %1351 = vmatprep.subr.mxu0 0.0
        %1352 = vmatpush1.msra.mxu0 %v1330
        %1353 = vmatprep.subr.mxu0 0.0
        %1354 = vmatpush1.msra.mxu0 %v1331
        %1355 = vmatprep.subr.mxu0 0.0
        %1356 = vmatpush1.msra.mxu0 %v1332
        %1357 = vmatprep.subr.mxu0 0.0
        %1358 = vmatpush1.msra.mxu0 %v1333
        %1359 = vmatprep.subr.mxu0 0.0
        %1360 = vmatpush1.msra.mxu0 %v1334
        %1361 = vmatprep.subr.mxu0 0.0
        %1362 = vmatpush1.msra.mxu0 %v1335
        %1363 = vmatprep.subr.mxu0 0.0
        %1364 = vmatpush1.msra.mxu0 %v1336
        %1365 = vmatprep.subr.mxu0 0.0
        %1366 = vmatpush1.msra.mxu0 0.0
        %1367 = vmatprep.subr.mxu0 0.0
        %1368 = vmatpush1.msra.mxu0 0.0
        %1369 = vmatprep.subr.mxu0 0.0
        %1370 = vmatpush1.msra.mxu0 0.0
        %1371 = vmatprep.subr.mxu0 0.0
        %1372 = vmatpush1.msra.mxu0 0.0
        %1373 = vmatprep.subr.mxu0 0.0
        %1374 = vmatpush1.msra.mxu0 0.0
        %1375 = vmatprep.subr.mxu0 0.0
        %1376 = vmatpush1.msra.mxu0 0.0
        %1377 = vmatprep.subr.mxu0 0.0
        %1378 = vmatpush1.msra.mxu0 0.0
        %1379 = vmatprep.subr.mxu0 0.0
        %1380 = vmatpush1.msra.mxu0 0.0
        %1381 = vmatprep.subr.mxu0 0.0
        %1382 = vmatpush1.msra.mxu0 0.0
        %1383 = vmatprep.subr.mxu0 0.0
        %1384 = vmatpush1.msra.mxu0 0.0
        %1385 = vmatprep.subr.mxu0 0.0
        %1386 = vmatpush1.msra.mxu0 0.0
        %1387 = vmatprep.subr.mxu0 0.0
        %1388 = vmatpush1.msra.mxu0 0.0
        %1389 = vmatprep.subr.mxu0 0.0
        %1390 = vmatpush1.msra.mxu0 0.0
        %1391 = vmatprep.subr.mxu0 0.0
        %1392 = vmatpush1.msra.mxu0 0.0
        %1393 = vmatprep.subr.mxu0 0.0
        %1394 = vmatpush1.msra.mxu0 0.0
        %1395 = vmatprep.subr.mxu0 0.0
        %1396 = vmatpush1.msra.mxu0 0.0
        %1397 = vmatprep.subr.mxu0 0.0
        %1398 = vmatpush1.msra.mxu0 0.0
        %1399 = vmatprep.subr.mxu0 0.0
        %1400 = vmatpush1.msra.mxu0 0.0
        %1401 = vmatprep.subr.mxu0 0.0
        %1402 = vmatpush1.msra.mxu0 0.0
        %1403 = vmatprep.subr.mxu0 0.0
        %1404 = vmatpush1.msra.mxu0 0.0
        %1405 = vmatprep.subr.mxu0 0.0
        %1406 = vmatpush1.msra.mxu0 0.0
        %1407 = vmatprep.subr.mxu0 0.0
        %1408 = vmatpush1.msra.mxu0 0.0
        %1409 = vmatprep.subr.mxu0 0.0
        %1410 = vmatpush1.msra.mxu0 0.0
        %1411 = vmatprep.subr.mxu0 0.0
        %1412 = vmatpush1.msra.mxu0 0.0
        %1413 = vmatprep.mubr.f32.mxu0 0.0
        %1414 = vmatmul.mubr.f32.gmra.mrb[0].mxu0 %v1338
        %v1415 = vpop.f32.mrb[0].mxu0
        %v1416 = vadd.f32 0.0, %v1415
        %v1417 = vpop.f32.mrb[0].mxu0
        %1418 = vmatprep.mubr.f32.mxu0 0.0
        %1419 = vmatmul.mubr.f32.gmra.mrb[0].mxu0 %v1341
        %v1420 = vpop.f32.mrb[0].mxu0
        %v1421 = vadd.f32 0.0, %v1420
        %v1422 = vpop.f32.mrb[0].mxu0
        %1423 = vmatprep.mubr.f32.mxu0 0.0
        %1424 = vmatmul.mubr.f32.gmra.mrb[0].mxu0 %v1344
        %v1425 = vpop.f32.mrb[0].mxu0
        %v1426 = vadd.f32 0.0, %v1425
        %v1427 = vpop.f32.mrb[0].mxu0
        %1428 = vmatprep.mubr.f32.mxu0 0.0
        %1429 = vmatmul.mubr.f32.gmra.mrb[0].mxu0 %v1347
        %v1430 = vpop.f32.mrb[0].mxu0
        %v1431 = vadd.f32 0.0, %v1430
        %v1432 = vpop.f32.mrb[0].mxu0
        %1433 = vdwg.mxu0
        %v1434 = vadd.f32 %v1305, %v1416
        %v1435 = vadd.f32 %v1310, %v1421
        %v1436 = vadd.f32 %v1315, %v1426
        %v1437 = vadd.f32 %v1320, %v1431
        %v1438 = vld [vmem:[%s1323 + $0x1] sm:$0xff]
        %v1439 = vld [vmem:[%s1323 + $0x11] sm:$0xff]
        %v1440 = vld [vmem:[%s1323 + $0x21] sm:$0xff]
        %v1441 = vld [vmem:[%s1323 + $0x31] sm:$0xff]
        %s1442 = scalar_lea.vmem %s1, 704
        %v1443 = vld [vmem:[%s1442] sm:$0xff]
        %v1444 = vld [vmem:[%s1442 + $0x8] sm:$0xff]
        %v1445 = vld [vmem:[%s1442 + $0x10] sm:$0xff]
        %v1446 = vld [vmem:[%s1442 + $0x18] sm:$0xff]
        %v1447 = vld [vmem:[%s1442 + $0x20] sm:$0xff]
        %v1448 = vld [vmem:[%s1442 + $0x28] sm:$0xff]
        %v1449 = vld [vmem:[%s1442 + $0x30] sm:$0xff]
        %v1450 = vld [vmem:[%s1442 + $0x38] sm:$0xff]
        %v1452 = vsel %vm191, %v1438, 0
        %v1455 = vsel %vm191, %v1439, 0
        %v1458 = vsel %vm191, %v1440, 0
        %v1461 = vsel %vm191, %v1441, 0
        %1463 = vmatprep.subr.mxu0 0.0
        %1464 = vmatpush1.msra.mxu0 %v1443
        %1465 = vmatprep.subr.mxu0 0.0
        %1466 = vmatpush1.msra.mxu0 %v1444
        %1467 = vmatprep.subr.mxu0 0.0
        %1468 = vmatpush1.msra.mxu0 %v1445
        %1469 = vmatprep.subr.mxu0 0.0
        %1470 = vmatpush1.msra.mxu0 %v1446
        %1471 = vmatprep.subr.mxu0 0.0
        %1472 = vmatpush1.msra.mxu0 %v1447
        %1473 = vmatprep.subr.mxu0 0.0
        %1474 = vmatpush1.msra.mxu0 %v1448
        %1475 = vmatprep.subr.mxu0 0.0
        %1476 = vmatpush1.msra.mxu0 %v1449
        %1477 = vmatprep.subr.mxu0 0.0
        %1478 = vmatpush1.msra.mxu0 %v1450
        %1479 = vmatprep.subr.mxu0 0.0
        %1480 = vmatpush1.msra.mxu0 0.0
        %1481 = vmatprep.subr.mxu0 0.0
        %1482 = vmatpush1.msra.mxu0 0.0
        %1483 = vmatprep.subr.mxu0 0.0
        %1484 = vmatpush1.msra.mxu0 0.0
        %1485 = vmatprep.subr.mxu0 0.0
        %1486 = vmatpush1.msra.mxu0 0.0
        %1487 = vmatprep.subr.mxu0 0.0
        %1488 = vmatpush1.msra.mxu0 0.0
        %1489 = vmatprep.subr.mxu0 0.0
        %1490 = vmatpush1.msra.mxu0 0.0
        %1491 = vmatprep.subr.mxu0 0.0
        %1492 = vmatpush1.msra.mxu0 0.0
        %1493 = vmatprep.subr.mxu0 0.0
        %1494 = vmatpush1.msra.mxu0 0.0
        %1495 = vmatprep.subr.mxu0 0.0
        %1496 = vmatpush1.msra.mxu0 0.0
        %1497 = vmatprep.subr.mxu0 0.0
        %1498 = vmatpush1.msra.mxu0 0.0
        %1499 = vmatprep.subr.mxu0 0.0
        %1500 = vmatpush1.msra.mxu0 0.0
        %1501 = vmatprep.subr.mxu0 0.0
        %1502 = vmatpush1.msra.mxu0 0.0
        %1503 = vmatprep.subr.mxu0 0.0
        %1504 = vmatpush1.msra.mxu0 0.0
        %1505 = vmatprep.subr.mxu0 0.0
        %1506 = vmatpush1.msra.mxu0 0.0
        %1507 = vmatprep.subr.mxu0 0.0
        %1508 = vmatpush1.msra.mxu0 0.0
        %1509 = vmatprep.subr.mxu0 0.0
        %1510 = vmatpush1.msra.mxu0 0.0
        %1511 = vmatprep.subr.mxu0 0.0
        %1512 = vmatpush1.msra.mxu0 0.0
        %1513 = vmatprep.subr.mxu0 0.0
        %1514 = vmatpush1.msra.mxu0 0.0
        %1515 = vmatprep.subr.mxu0 0.0
        %1516 = vmatpush1.msra.mxu0 0.0
        %1517 = vmatprep.subr.mxu0 0.0
        %1518 = vmatpush1.msra.mxu0 0.0
        %1519 = vmatprep.subr.mxu0 0.0
        %1520 = vmatpush1.msra.mxu0 0.0
        %1521 = vmatprep.subr.mxu0 0.0
        %1522 = vmatpush1.msra.mxu0 0.0
        %1523 = vmatprep.subr.mxu0 0.0
        %1524 = vmatpush1.msra.mxu0 0.0
        %1525 = vmatprep.subr.mxu0 0.0
        %1526 = vmatpush1.msra.mxu0 0.0
        %1527 = vmatprep.mubr.f32.mxu0 0.0
        %1528 = vmatmul.mubr.f32.gmra.mrb[0].mxu0 %v1452
        %v1529 = vpop.f32.mrb[0].mxu0
        %v1530 = vadd.f32 0.0, %v1529
        %v1531 = vpop.f32.mrb[0].mxu0
        %1532 = vmatprep.mubr.f32.mxu0 0.0
        %1533 = vmatmul.mubr.f32.gmra.mrb[0].mxu0 %v1455
        %v1534 = vpop.f32.mrb[0].mxu0
        %v1535 = vadd.f32 0.0, %v1534
        %v1536 = vpop.f32.mrb[0].mxu0
        %1537 = vmatprep.mubr.f32.mxu0 0.0
        %1538 = vmatmul.mubr.f32.gmra.mrb[0].mxu0 %v1458
        %v1539 = vpop.f32.mrb[0].mxu0
        %v1540 = vadd.f32 0.0, %v1539
        %v1541 = vpop.f32.mrb[0].mxu0
        %1542 = vmatprep.mubr.f32.mxu0 0.0
        %1543 = vmatmul.mubr.f32.gmra.mrb[0].mxu0 %v1461
        %v1544 = vpop.f32.mrb[0].mxu0
        %v1545 = vadd.f32 0.0, %v1544
        %v1546 = vpop.f32.mrb[0].mxu0
        %1547 = vdwg.mxu0
        %v1548 = vadd.f32 %v1434, %v1530
        %v1549 = vadd.f32 %v1435, %v1535
        %v1550 = vadd.f32 %v1436, %v1540
        %v1551 = vadd.f32 %v1437, %v1545
        %v1552 = vld [vmem:[%s2] sm:$0x1]
        %v1554 = vlaneseq
        %v1555 = vshrl.u32 %v1554, 7
        %v1556 = vsub.s32 0, %v1555
        %v1557 = vrot.slane %v1552, %v1556
        %v1559 = vadd.f32 %v1548, %v1557
        %v1560 = vadd.f32 %v1549, %v1557
        %v1561 = vadd.f32 %v1550, %v1557
        %v1562 = vadd.f32 %v1551, %v1557
        %v1563 = vmax.f32 %v1559, 0.0
        %v1564 = vmax.f32 %v1560, 0.0
        %v1565 = vmax.f32 %v1561, 0.0
        %v1566 = vmax.f32 %v1562, 0.0
        %s1567 = scalar_lea.vmem %s159, 64 [#allocation2]
        %1568 = vst.msk [vmem:[%s1567] sm:$0xff] %vm630, %v1563
        %1569 = vst.msk [vmem:[%s1567 + $0x8] sm:$0xff] %vm630, %v1564
        %1570 = vst.msk [vmem:[%s1567 + $0x10] sm:$0xff] %vm630, %v1565
        %1571 = vst.msk [vmem:[%s1567 + $0x18] sm:$0xff] %vm630, %v1566
        %v1572 = vld [vmem:[%s386 + $0x1] sm:$0xff]
        %v1573 = vld [vmem:[%s386 + $0x11] sm:$0xff]
        %v1574 = vld [vmem:[%s386 + $0x21] sm:$0xff]
        %v1575 = vld [vmem:[%s386 + $0x31] sm:$0xff]
        %s1576 = scalar_lea.vmem %s1, 768
        %v1577 = vld [vmem:[%s1576] sm:$0xff]
        %v1578 = vld [vmem:[%s1576 + $0x8] sm:$0xff]
        %v1579 = vld [vmem:[%s1576 + $0x10] sm:$0xff]
        %v1580 = vld [vmem:[%s1576 + $0x18] sm:$0xff]
        %v1581 = vld [vmem:[%s1576 + $0x20] sm:$0xff]
        %v1582 = vld [vmem:[%s1576 + $0x28] sm:$0xff]
        %v1583 = vld [vmem:[%s1576 + $0x30] sm:$0xff]
        %v1584 = vld [vmem:[%s1576 + $0x38] sm:$0xff]
        %v1585 = vld [vmem:[%s386 + $0x2] sm:$0xff]
        %v1586 = vld [vmem:[%s386 + $0x12] sm:$0xff]
        %v1587 = vld [vmem:[%s386 + $0x22] sm:$0xff]
        %v1588 = vld [vmem:[%s386 + $0x32] sm:$0xff]
        %s1589 = scalar_lea.vmem %s1, 832
        %v1590 = vld [vmem:[%s1589] sm:$0xff]
        %v1591 = vld [vmem:[%s1589 + $0x8] sm:$0xff]
        %v1592 = vld [vmem:[%s1589 + $0x10] sm:$0xff]
        %v1593 = vld [vmem:[%s1589 + $0x18] sm:$0xff]
        %v1594 = vld [vmem:[%s1589 + $0x20] sm:$0xff]
        %v1595 = vld [vmem:[%s1589 + $0x28] sm:$0xff]
        %v1596 = vld [vmem:[%s1589 + $0x30] sm:$0xff]
        %v1597 = vld [vmem:[%s1589 + $0x38] sm:$0xff]
        %v1599 = vsel %vm191, %v1585, 0
        %v1602 = vsel %vm191, %v1586, 0
        %v1605 = vsel %vm191, %v1587, 0
        %v1608 = vsel %vm191, %v1588, 0
        %1610 = vmatprep.subr.mxu0 0.0
        %1611 = vmatpush1.msra.mxu0 %v1590
        %1612 = vmatprep.subr.mxu0 0.0
        %1613 = vmatpush1.msra.mxu0 %v1591
        %1614 = vmatprep.subr.mxu0 0.0
        %1615 = vmatpush1.msra.mxu0 %v1592
        %1616 = vmatprep.subr.mxu0 0.0
        %1617 = vmatpush1.msra.mxu0 %v1593
        %1618 = vmatprep.subr.mxu0 0.0
        %1619 = vmatpush1.msra.mxu0 %v1594
        %1620 = vmatprep.subr.mxu0 0.0
        %1621 = vmatpush1.msra.mxu0 %v1595
        %1622 = vmatprep.subr.mxu0 0.0
        %1623 = vmatpush1.msra.mxu0 %v1596
        %1624 = vmatprep.subr.mxu0 0.0
        %1625 = vmatpush1.msra.mxu0 %v1597
        %1626 = vmatprep.subr.mxu0 0.0
        %1627 = vmatpush1.msra.mxu0 0.0
        %1628 = vmatprep.subr.mxu0 0.0
        %1629 = vmatpush1.msra.mxu0 0.0
        %1630 = vmatprep.subr.mxu0 0.0
        %1631 = vmatpush1.msra.mxu0 0.0
        %1632 = vmatprep.subr.mxu0 0.0
        %1633 = vmatpush1.msra.mxu0 0.0
        %1634 = vmatprep.subr.mxu0 0.0
        %1635 = vmatpush1.msra.mxu0 0.0
        %1636 = vmatprep.subr.mxu0 0.0
        %1637 = vmatpush1.msra.mxu0 0.0
        %1638 = vmatprep.subr.mxu0 0.0
        %1639 = vmatpush1.msra.mxu0 0.0
        %1640 = vmatprep.subr.mxu0 0.0
        %1641 = vmatpush1.msra.mxu0 0.0
        %1642 = vmatprep.subr.mxu0 0.0
        %1643 = vmatpush1.msra.mxu0 0.0
        %1644 = vmatprep.subr.mxu0 0.0
        %1645 = vmatpush1.msra.mxu0 0.0
        %1646 = vmatprep.subr.mxu0 0.0
        %1647 = vmatpush1.msra.mxu0 0.0
        %1648 = vmatprep.subr.mxu0 0.0
        %1649 = vmatpush1.msra.mxu0 0.0
        %1650 = vmatprep.subr.mxu0 0.0
        %1651 = vmatpush1.msra.mxu0 0.0
        %1652 = vmatprep.subr.mxu0 0.0
        %1653 = vmatpush1.msra.mxu0 0.0
        %1654 = vmatprep.subr.mxu0 0.0
        %1655 = vmatpush1.msra.mxu0 0.0
        %1656 = vmatprep.subr.mxu0 0.0
        %1657 = vmatpush1.msra.mxu0 0.0
        %1658 = vmatprep.subr.mxu0 0.0
        %1659 = vmatpush1.msra.mxu0 0.0
        %1660 = vmatprep.subr.mxu0 0.0
        %1661 = vmatpush1.msra.mxu0 0.0
        %1662 = vmatprep.subr.mxu0 0.0
        %1663 = vmatpush1.msra.mxu0 0.0
        %1664 = vmatprep.subr.mxu0 0.0
        %1665 = vmatpush1.msra.mxu0 0.0
        %1666 = vmatprep.subr.mxu0 0.0
        %1667 = vmatpush1.msra.mxu0 0.0
        %1668 = vmatprep.subr.mxu0 0.0
        %1669 = vmatpush1.msra.mxu0 0.0
        %1670 = vmatprep.subr.mxu0 0.0
        %1671 = vmatpush1.msra.mxu0 0.0
        %1672 = vmatprep.subr.mxu0 0.0
        %1673 = vmatpush1.msra.mxu0 0.0
        %1674 = vmatprep.mubr.f32.mxu0 0.0
        %1675 = vmatmul.mubr.f32.gmra.mrb[0].mxu0 %v1599
        %v1676 = vpop.f32.mrb[0].mxu0
        %v1677 = vadd.f32 0.0, %v1676
        %v1678 = vpop.f32.mrb[0].mxu0
        %1679 = vmatprep.mubr.f32.mxu0 0.0
        %1680 = vmatmul.mubr.f32.gmra.mrb[0].mxu0 %v1602
        %v1681 = vpop.f32.mrb[0].mxu0
        %v1682 = vadd.f32 0.0, %v1681
        %v1683 = vpop.f32.mrb[0].mxu0
        %1684 = vmatprep.mubr.f32.mxu0 0.0
        %1685 = vmatmul.mubr.f32.gmra.mrb[0].mxu0 %v1605
        %v1686 = vpop.f32.mrb[0].mxu0
        %v1687 = vadd.f32 0.0, %v1686
        %v1688 = vpop.f32.mrb[0].mxu0
        %1689 = vmatprep.mubr.f32.mxu0 0.0
        %1690 = vmatmul.mubr.f32.gmra.mrb[0].mxu0 %v1608
        %v1691 = vpop.f32.mrb[0].mxu0
        %v1692 = vadd.f32 0.0, %v1691
        %v1693 = vpop.f32.mrb[0].mxu0
        %1694 = vdwg.mxu0
        %v1696 = vsel %vm191, %v1572, 0
        %v1699 = vsel %vm191, %v1573, 0
        %v1702 = vsel %vm191, %v1574, 0
        %v1705 = vsel %vm191, %v1575, 0
        %1707 = vmatprep.subr.mxu0 0.0
        %1708 = vmatpush1.msra.mxu0 %v1577
        %1709 = vmatprep.subr.mxu0 0.0
        %1710 = vmatpush1.msra.mxu0 %v1578
        %1711 = vmatprep.subr.mxu0 0.0
        %1712 = vmatpush1.msra.mxu0 %v1579
        %1713 = vmatprep.subr.mxu0 0.0
        %1714 = vmatpush1.msra.mxu0 %v1580
        %1715 = vmatprep.subr.mxu0 0.0
        %1716 = vmatpush1.msra.mxu0 %v1581
        %1717 = vmatprep.subr.mxu0 0.0
        %1718 = vmatpush1.msra.mxu0 %v1582
        %1719 = vmatprep.subr.mxu0 0.0
        %1720 = vmatpush1.msra.mxu0 %v1583
        %1721 = vmatprep.subr.mxu0 0.0
        %1722 = vmatpush1.msra.mxu0 %v1584
        %1723 = vmatprep.subr.mxu0 0.0
        %1724 = vmatpush1.msra.mxu0 0.0
        %1725 = vmatprep.subr.mxu0 0.0
        %1726 = vmatpush1.msra.mxu0 0.0
        %1727 = vmatprep.subr.mxu0 0.0
        %1728 = vmatpush1.msra.mxu0 0.0
        %1729 = vmatprep.subr.mxu0 0.0
        %1730 = vmatpush1.msra.mxu0 0.0
        %1731 = vmatprep.subr.mxu0 0.0
        %1732 = vmatpush1.msra.mxu0 0.0
        %1733 = vmatprep.subr.mxu0 0.0
        %1734 = vmatpush1.msra.mxu0 0.0
        %1735 = vmatprep.subr.mxu0 0.0
        %1736 = vmatpush1.msra.mxu0 0.0
        %1737 = vmatprep.subr.mxu0 0.0
        %1738 = vmatpush1.msra.mxu0 0.0
        %1739 = vmatprep.subr.mxu0 0.0
        %1740 = vmatpush1.msra.mxu0 0.0
        %1741 = vmatprep.subr.mxu0 0.0
        %1742 = vmatpush1.msra.mxu0 0.0
        %1743 = vmatprep.subr.mxu0 0.0
        %1744 = vmatpush1.msra.mxu0 0.0
        %1745 = vmatprep.subr.mxu0 0.0
        %1746 = vmatpush1.msra.mxu0 0.0
        %1747 = vmatprep.subr.mxu0 0.0
        %1748 = vmatpush1.msra.mxu0 0.0
        %1749 = vmatprep.subr.mxu0 0.0
        %1750 = vmatpush1.msra.mxu0 0.0
        %1751 = vmatprep.subr.mxu0 0.0
        %1752 = vmatpush1.msra.mxu0 0.0
        %1753 = vmatprep.subr.mxu0 0.0
        %1754 = vmatpush1.msra.mxu0 0.0
        %1755 = vmatprep.subr.mxu0 0.0
        %1756 = vmatpush1.msra.mxu0 0.0
        %1757 = vmatprep.subr.mxu0 0.0
        %1758 = vmatpush1.msra.mxu0 0.0
        %1759 = vmatprep.subr.mxu0 0.0
        %1760 = vmatpush1.msra.mxu0 0.0
        %1761 = vmatprep.subr.mxu0 0.0
        %1762 = vmatpush1.msra.mxu0 0.0
        %1763 = vmatprep.subr.mxu0 0.0
        %1764 = vmatpush1.msra.mxu0 0.0
        %1765 = vmatprep.subr.mxu0 0.0
        %1766 = vmatpush1.msra.mxu0 0.0
        %1767 = vmatprep.subr.mxu0 0.0
        %1768 = vmatpush1.msra.mxu0 0.0
        %1769 = vmatprep.subr.mxu0 0.0
        %1770 = vmatpush1.msra.mxu0 0.0
        %1771 = vmatprep.mubr.f32.mxu0 0.0
        %1772 = vmatmul.mubr.f32.gmra.mrb[0].mxu0 %v1696
        %v1773 = vpop.f32.mrb[0].mxu0
        %v1774 = vadd.f32 %v1677, %v1773
        %v1775 = vpop.f32.mrb[0].mxu0
        %1776 = vmatprep.mubr.f32.mxu0 0.0
        %1777 = vmatmul.mubr.f32.gmra.mrb[0].mxu0 %v1699
        %v1778 = vpop.f32.mrb[0].mxu0
        %v1779 = vadd.f32 %v1682, %v1778
        %v1780 = vpop.f32.mrb[0].mxu0
        %1781 = vmatprep.mubr.f32.mxu0 0.0
        %1782 = vmatmul.mubr.f32.gmra.mrb[0].mxu0 %v1702
        %v1783 = vpop.f32.mrb[0].mxu0
        %v1784 = vadd.f32 %v1687, %v1783
        %v1785 = vpop.f32.mrb[0].mxu0
        %1786 = vmatprep.mubr.f32.mxu0 0.0
        %1787 = vmatmul.mubr.f32.gmra.mrb[0].mxu0 %v1705
        %v1788 = vpop.f32.mrb[0].mxu0
        %v1789 = vadd.f32 %v1692, %v1788
        %v1790 = vpop.f32.mrb[0].mxu0
        %1791 = vdwg.mxu0
        %v1792 = vld [vmem:[%s1323 + $0x1] sm:$0xff]
        %v1793 = vld [vmem:[%s1323 + $0x11] sm:$0xff]
        %v1794 = vld [vmem:[%s1323 + $0x21] sm:$0xff]
        %v1795 = vld [vmem:[%s1323 + $0x31] sm:$0xff]
        %s1796 = scalar_lea.vmem %s1, 896
        %v1797 = vld [vmem:[%s1796] sm:$0xff]
        %v1798 = vld [vmem:[%s1796 + $0x8] sm:$0xff]
        %v1799 = vld [vmem:[%s1796 + $0x10] sm:$0xff]
        %v1800 = vld [vmem:[%s1796 + $0x18] sm:$0xff]
        %v1801 = vld [vmem:[%s1796 + $0x20] sm:$0xff]
        %v1802 = vld [vmem:[%s1796 + $0x28] sm:$0xff]
        %v1803 = vld [vmem:[%s1796 + $0x30] sm:$0xff]
        %v1804 = vld [vmem:[%s1796 + $0x38] sm:$0xff]
        %v1806 = vsel %vm191, %v1792, 0
        %v1809 = vsel %vm191, %v1793, 0
        %v1812 = vsel %vm191, %v1794, 0
        %v1815 = vsel %vm191, %v1795, 0
        %1817 = vmatprep.subr.mxu0 0.0
        %1818 = vmatpush1.msra.mxu0 %v1797
        %1819 = vmatprep.subr.mxu0 0.0
        %1820 = vmatpush1.msra.mxu0 %v1798
        %1821 = vmatprep.subr.mxu0 0.0
        %1822 = vmatpush1.msra.mxu0 %v1799
        %1823 = vmatprep.subr.mxu0 0.0
        %1824 = vmatpush1.msra.mxu0 %v1800
        %1825 = vmatprep.subr.mxu0 0.0
        %1826 = vmatpush1.msra.mxu0 %v1801
        %1827 = vmatprep.subr.mxu0 0.0
        %1828 = vmatpush1.msra.mxu0 %v1802
        %1829 = vmatprep.subr.mxu0 0.0
        %1830 = vmatpush1.msra.mxu0 %v1803
        %1831 = vmatprep.subr.mxu0 0.0
        %1832 = vmatpush1.msra.mxu0 %v1804
        %1833 = vmatprep.subr.mxu0 0.0
        %1834 = vmatpush1.msra.mxu0 0.0
        %1835 = vmatprep.subr.mxu0 0.0
        %1836 = vmatpush1.msra.mxu0 0.0
        %1837 = vmatprep.subr.mxu0 0.0
        %1838 = vmatpush1.msra.mxu0 0.0
        %1839 = vmatprep.subr.mxu0 0.0
        %1840 = vmatpush1.msra.mxu0 0.0
        %1841 = vmatprep.subr.mxu0 0.0
        %1842 = vmatpush1.msra.mxu0 0.0
        %1843 = vmatprep.subr.mxu0 0.0
        %1844 = vmatpush1.msra.mxu0 0.0
        %1845 = vmatprep.subr.mxu0 0.0
        %1846 = vmatpush1.msra.mxu0 0.0
        %1847 = vmatprep.subr.mxu0 0.0
        %1848 = vmatpush1.msra.mxu0 0.0
        %1849 = vmatprep.subr.mxu0 0.0
        %1850 = vmatpush1.msra.mxu0 0.0
        %1851 = vmatprep.subr.mxu0 0.0
        %1852 = vmatpush1.msra.mxu0 0.0
        %1853 = vmatprep.subr.mxu0 0.0
        %1854 = vmatpush1.msra.mxu0 0.0
        %1855 = vmatprep.subr.mxu0 0.0
        %1856 = vmatpush1.msra.mxu0 0.0
        %1857 = vmatprep.subr.mxu0 0.0
        %1858 = vmatpush1.msra.mxu0 0.0
        %1859 = vmatprep.subr.mxu0 0.0
        %1860 = vmatpush1.msra.mxu0 0.0
        %1861 = vmatprep.subr.mxu0 0.0
        %1862 = vmatpush1.msra.mxu0 0.0
        %1863 = vmatprep.subr.mxu0 0.0
        %1864 = vmatpush1.msra.mxu0 0.0
        %1865 = vmatprep.subr.mxu0 0.0
        %1866 = vmatpush1.msra.mxu0 0.0
        %1867 = vmatprep.subr.mxu0 0.0
        %1868 = vmatpush1.msra.mxu0 0.0
        %1869 = vmatprep.subr.mxu0 0.0
        %1870 = vmatpush1.msra.mxu0 0.0
        %1871 = vmatprep.subr.mxu0 0.0
        %1872 = vmatpush1.msra.mxu0 0.0
        %1873 = vmatprep.subr.mxu0 0.0
        %1874 = vmatpush1.msra.mxu0 0.0
        %1875 = vmatprep.subr.mxu0 0.0
        %1876 = vmatpush1.msra.mxu0 0.0
        %1877 = vmatprep.subr.mxu0 0.0
        %1878 = vmatpush1.msra.mxu0 0.0
        %1879 = vmatprep.subr.mxu0 0.0
        %1880 = vmatpush1.msra.mxu0 0.0
        %1881 = vmatprep.mubr.f32.mxu0 0.0
        %1882 = vmatmul.mubr.f32.gmra.mrb[0].mxu0 %v1806
        %v1883 = vpop.f32.mrb[0].mxu0
        %v1884 = vadd.f32 0.0, %v1883
        %v1885 = vpop.f32.mrb[0].mxu0
        %1886 = vmatprep.mubr.f32.mxu0 0.0
        %1887 = vmatmul.mubr.f32.gmra.mrb[0].mxu0 %v1809
        %v1888 = vpop.f32.mrb[0].mxu0
        %v1889 = vadd.f32 0.0, %v1888
        %v1890 = vpop.f32.mrb[0].mxu0
        %1891 = vmatprep.mubr.f32.mxu0 0.0
        %1892 = vmatmul.mubr.f32.gmra.mrb[0].mxu0 %v1812
        %v1893 = vpop.f32.mrb[0].mxu0
        %v1894 = vadd.f32 0.0, %v1893
        %v1895 = vpop.f32.mrb[0].mxu0
        %1896 = vmatprep.mubr.f32.mxu0 0.0
        %1897 = vmatmul.mubr.f32.gmra.mrb[0].mxu0 %v1815
        %v1898 = vpop.f32.mrb[0].mxu0
        %v1899 = vadd.f32 0.0, %v1898
        %v1900 = vpop.f32.mrb[0].mxu0
        %1901 = vdwg.mxu0
        %v1902 = vadd.f32 %v1774, %v1884
        %v1903 = vadd.f32 %v1779, %v1889
        %v1904 = vadd.f32 %v1784, %v1894
        %v1905 = vadd.f32 %v1789, %v1899
        %v1906 = vld [vmem:[%s1323 + $0x2] sm:$0xff]
        %v1907 = vld [vmem:[%s1323 + $0x12] sm:$0xff]
        %v1908 = vld [vmem:[%s1323 + $0x22] sm:$0xff]
        %v1909 = vld [vmem:[%s1323 + $0x32] sm:$0xff]
        %s1910 = scalar_lea.vmem %s1, 960
        %v1911 = vld [vmem:[%s1910] sm:$0xff]
        %v1912 = vld [vmem:[%s1910 + $0x8] sm:$0xff]
        %v1913 = vld [vmem:[%s1910 + $0x10] sm:$0xff]
        %v1914 = vld [vmem:[%s1910 + $0x18] sm:$0xff]
        %v1915 = vld [vmem:[%s1910 + $0x20] sm:$0xff]
        %v1916 = vld [vmem:[%s1910 + $0x28] sm:$0xff]
        %v1917 = vld [vmem:[%s1910 + $0x30] sm:$0xff]
        %v1918 = vld [vmem:[%s1910 + $0x38] sm:$0xff]
        %v1920 = vsel %vm191, %v1906, 0
        %v1923 = vsel %vm191, %v1907, 0
        %v1926 = vsel %vm191, %v1908, 0
        %v1929 = vsel %vm191, %v1909, 0
        %1931 = vmatprep.subr.mxu0 0.0
        %1932 = vmatpush1.msra.mxu0 %v1911
        %1933 = vmatprep.subr.mxu0 0.0
        %1934 = vmatpush1.msra.mxu0 %v1912
        %1935 = vmatprep.subr.mxu0 0.0
        %1936 = vmatpush1.msra.mxu0 %v1913
        %1937 = vmatprep.subr.mxu0 0.0
        %1938 = vmatpush1.msra.mxu0 %v1914
        %1939 = vmatprep.subr.mxu0 0.0
        %1940 = vmatpush1.msra.mxu0 %v1915
        %1941 = vmatprep.subr.mxu0 0.0
        %1942 = vmatpush1.msra.mxu0 %v1916
        %1943 = vmatprep.subr.mxu0 0.0
        %1944 = vmatpush1.msra.mxu0 %v1917
        %1945 = vmatprep.subr.mxu0 0.0
        %1946 = vmatpush1.msra.mxu0 %v1918
        %1947 = vmatprep.subr.mxu0 0.0
        %1948 = vmatpush1.msra.mxu0 0.0
        %1949 = vmatprep.subr.mxu0 0.0
        %1950 = vmatpush1.msra.mxu0 0.0
        %1951 = vmatprep.subr.mxu0 0.0
        %1952 = vmatpush1.msra.mxu0 0.0
        %1953 = vmatprep.subr.mxu0 0.0
        %1954 = vmatpush1.msra.mxu0 0.0
        %1955 = vmatprep.subr.mxu0 0.0
        %1956 = vmatpush1.msra.mxu0 0.0
        %1957 = vmatprep.subr.mxu0 0.0
        %1958 = vmatpush1.msra.mxu0 0.0
        %1959 = vmatprep.subr.mxu0 0.0
        %1960 = vmatpush1.msra.mxu0 0.0
        %1961 = vmatprep.subr.mxu0 0.0
        %1962 = vmatpush1.msra.mxu0 0.0
        %1963 = vmatprep.subr.mxu0 0.0
        %1964 = vmatpush1.msra.mxu0 0.0
        %1965 = vmatprep.subr.mxu0 0.0
        %1966 = vmatpush1.msra.mxu0 0.0
        %1967 = vmatprep.subr.mxu0 0.0
        %1968 = vmatpush1.msra.mxu0 0.0
        %1969 = vmatprep.subr.mxu0 0.0
        %1970 = vmatpush1.msra.mxu0 0.0
        %1971 = vmatprep.subr.mxu0 0.0
        %1972 = vmatpush1.msra.mxu0 0.0
        %1973 = vmatprep.subr.mxu0 0.0
        %1974 = vmatpush1.msra.mxu0 0.0
        %1975 = vmatprep.subr.mxu0 0.0
        %1976 = vmatpush1.msra.mxu0 0.0
        %1977 = vmatprep.subr.mxu0 0.0
        %1978 = vmatpush1.msra.mxu0 0.0
        %1979 = vmatprep.subr.mxu0 0.0
        %1980 = vmatpush1.msra.mxu0 0.0
        %1981 = vmatprep.subr.mxu0 0.0
        %1982 = vmatpush1.msra.mxu0 0.0
        %1983 = vmatprep.subr.mxu0 0.0
        %1984 = vmatpush1.msra.mxu0 0.0
        %1985 = vmatprep.subr.mxu0 0.0
        %1986 = vmatpush1.msra.mxu0 0.0
        %1987 = vmatprep.subr.mxu0 0.0
        %1988 = vmatpush1.msra.mxu0 0.0
        %1989 = vmatprep.subr.mxu0 0.0
        %1990 = vmatpush1.msra.mxu0 0.0
        %1991 = vmatprep.subr.mxu0 0.0
        %1992 = vmatpush1.msra.mxu0 0.0
        %1993 = vmatprep.subr.mxu0 0.0
        %1994 = vmatpush1.msra.mxu0 0.0
        %1995 = vmatprep.mubr.f32.mxu0 0.0
        %1996 = vmatmul.mubr.f32.gmra.mrb[0].mxu0 %v1920
        %v1997 = vpop.f32.mrb[0].mxu0
        %v1998 = vadd.f32 0.0, %v1997
        %v1999 = vpop.f32.mrb[0].mxu0
        %2000 = vmatprep.mubr.f32.mxu0 0.0
        %2001 = vmatmul.mubr.f32.gmra.mrb[0].mxu0 %v1923
        %v2002 = vpop.f32.mrb[0].mxu0
        %v2003 = vadd.f32 0.0, %v2002
        %v2004 = vpop.f32.mrb[0].mxu0
        %2005 = vmatprep.mubr.f32.mxu0 0.0
        %2006 = vmatmul.mubr.f32.gmra.mrb[0].mxu0 %v1926
        %v2007 = vpop.f32.mrb[0].mxu0
        %v2008 = vadd.f32 0.0, %v2007
        %v2009 = vpop.f32.mrb[0].mxu0
        %2010 = vmatprep.mubr.f32.mxu0 0.0
        %2011 = vmatmul.mubr.f32.gmra.mrb[0].mxu0 %v1929
        %v2012 = vpop.f32.mrb[0].mxu0
        %v2013 = vadd.f32 0.0, %v2012
        %v2014 = vpop.f32.mrb[0].mxu0
        %2015 = vdwg.mxu0
        %v2016 = vadd.f32 %v1902, %v1998
        %v2017 = vadd.f32 %v1903, %v2003
        %v2018 = vadd.f32 %v1904, %v2008
        %v2019 = vadd.f32 %v1905, %v2013
        %v2020 = vld [vmem:[%s2] sm:$0x1]
        %v2022 = vlaneseq
        %v2023 = vshrl.u32 %v2022, 7
        %v2024 = vsub.s32 0, %v2023
        %v2025 = vrot.slane %v2020, %v2024
        %v2027 = vadd.f32 %v2016, %v2025
        %v2028 = vadd.f32 %v2017, %v2025
        %v2029 = vadd.f32 %v2018, %v2025
        %v2030 = vadd.f32 %v2019, %v2025
        %v2031 = vmax.f32 %v2027, 0.0
        %v2032 = vmax.f32 %v2028, 0.0
        %v2033 = vmax.f32 %v2029, 0.0
        %v2034 = vmax.f32 %v2030, 0.0
        %s2035 = scalar_lea.vmem %s159, 96 [#allocation2]
        %2036 = vst.msk [vmem:[%s2035] sm:$0xff] %vm630, %v2031
        %2037 = vst.msk [vmem:[%s2035 + $0x8] sm:$0xff] %vm630, %v2032
        %2038 = vst.msk [vmem:[%s2035 + $0x10] sm:$0xff] %vm630, %v2033
        %2039 = vst.msk [vmem:[%s2035 + $0x18] sm:$0xff] %vm630, %v2034
        %s2040 = sand.u32 %s90, 1
        %s2041 = sand.u32 %s90, 1
        %s2042 = smul.addr %s2041, 128
        %s2043 = scalar_lea.vmem [#allocation2], %s2042
        // Predicated region
        $region33: #{autoencoder_forward.10} parent=31 // pred_check
          %p2044 = pneg %p100
        $region34: #{autoencoder_forward.10} parent=31 // pred_check_branch
          %2046 = sbr.rel (%p2044) target = $region36
        $region35: #{autoencoder_forward.10} parent=31 // pred_region
          %s2047 = smul.u32 4, %s14
          %s2048 = smul.addr %s2047, 8
          %s2049 = scalar_lea.vmem %s3, %s2048
          // Predicated region
          $region37: #{autoencoder_forward.10} parent=35 // pred_check
            _
          $region38: #{autoencoder_forward.10} parent=35 // pred_check_branch
            %2051 = sbr.rel (0) target = $region40
          $region39: #{autoencoder_forward.10} parent=35 // pred_region
            // Predicated region
            $region41: #{autoencoder_forward.10} parent=39 // pred_check
              _
            $region42: #{autoencoder_forward.10} parent=39 // pred_check_branch
              %2053 = sbr.rel (0) target = $region44
            $region43: #{autoencoder_forward.10} parent=39 // pred_region
              // Predicated region
              $region56: #{autoencoder_forward.10} parent=43 // pred_check
                _
              $region57: #{autoencoder_forward.10} parent=43 // pred_check_branch
                %2098 = sbr.rel (0) target = $region59
              $region58: #{autoencoder_forward.10} parent=43 // pred_region
                loop: start=0, step=1, limit=1
                $region60: #{autoencoder_forward.10} parent=58 // loop_pre_header
                  _
                $region61: #{autoencoder_forward.10} parent=58 // loop_header
                  %s2100 = sphi 0, %s2104
                  %p2101 = scmp.ge.s32.totalorder %s2100, 1
                  %s2105 = sphi %s2043, %s2043
                  %s2106 = sphi %s2049, %s2049
                $region62: #{autoencoder_forward.10} parent=58 // loop_header_branch
                  %2103 = sbr.rel (%p2101) target = $region66
                $region63: #{autoencoder_forward.10} parent=58 // loop_body
                  %v2107 = vld [vmem:[%s2105] sm:$0xff]
                  %2108 = vst [vmem:[%s2106] sm:$0xff] %v2107
                  %v2109 = vld [vmem:[%s2105 + $0x8] sm:$0xff]
                  %2110 = vst [vmem:[%s2106 + $0x8] sm:$0xff] %v2109
                  %v2111 = vld [vmem:[%s2105 + $0x10] sm:$0xff]
                  %2112 = vst [vmem:[%s2106 + $0x10] sm:$0xff] %v2111
                  %v2113 = vld [vmem:[%s2105 + $0x18] sm:$0xff]
                  %2114 = vst [vmem:[%s2106 + $0x18] sm:$0xff] %v2113
                  %v2115 = vld [vmem:[%s2105 + $0x20] sm:$0xff]
                  %2116 = vst [vmem:[%s2106 + $0x40] sm:$0xff] %v2115
                  %v2117 = vld [vmem:[%s2105 + $0x28] sm:$0xff]
                  %2118 = vst [vmem:[%s2106 + $0x48] sm:$0xff] %v2117
                  %v2119 = vld [vmem:[%s2105 + $0x30] sm:$0xff]
                  %2120 = vst [vmem:[%s2106 + $0x50] sm:$0xff] %v2119
                  %v2121 = vld [vmem:[%s2105 + $0x38] sm:$0xff]
                  %2122 = vst [vmem:[%s2106 + $0x58] sm:$0xff] %v2121
                  %v2123 = vld [vmem:[%s2105 + $0x40] sm:$0xff]
                  %2124 = vst [vmem:[%s2106 + $0x80] sm:$0xff] %v2123
                  %v2125 = vld [vmem:[%s2105 + $0x48] sm:$0xff]
                  %2126 = vst [vmem:[%s2106 + $0x88] sm:$0xff] %v2125
                  %v2127 = vld [vmem:[%s2105 + $0x50] sm:$0xff]
                  %2128 = vst [vmem:[%s2106 + $0x90] sm:$0xff] %v2127
                  %v2129 = vld [vmem:[%s2105 + $0x58] sm:$0xff]
                  %2130 = vst [vmem:[%s2106 + $0x98] sm:$0xff] %v2129
                  %v2131 = vld [vmem:[%s2105 + $0x60] sm:$0xff]
                  %2132 = vst [vmem:[%s2106 + $0xc0] sm:$0xff] %v2131
                  %v2133 = vld [vmem:[%s2105 + $0x68] sm:$0xff]
                  %2134 = vst [vmem:[%s2106 + $0xc8] sm:$0xff] %v2133
                  %v2135 = vld [vmem:[%s2105 + $0x70] sm:$0xff]
                  %2136 = vst [vmem:[%s2106 + $0xd0] sm:$0xff] %v2135
                  %v2137 = vld [vmem:[%s2105 + $0x78] sm:$0xff]
                  %2138 = vst [vmem:[%s2106 + $0xd8] sm:$0xff] %v2137
                $region64: #{autoencoder_forward.10} parent=58 // loop_footer
                  %s2104 = sadd.s32 1, %s2100
                $region65: #{autoencoder_forward.10} parent=58 // loop_footer_branch
                  %2099 = sbr.rel target = $region61
                $region66: #{autoencoder_forward.10} parent=58 // loop_exit
                  _
              $region59: #{autoencoder_forward.10} parent=43 // pred_fallthru
                _
              // Predicated region
              $region67: #{autoencoder_forward.10} parent=43 // pred_check
                _
              $region68: #{autoencoder_forward.10} parent=43 // pred_check_branch
                %2140 = sbr.rel target = $region70
              $region69: #{autoencoder_forward.10} parent=43 // pred_region
                _
              $region70: #{autoencoder_forward.10} parent=43 // pred_fallthru
                _
            $region44: #{autoencoder_forward.10} parent=39 // pred_fallthru
              _
            // Predicated region
            $region45: #{autoencoder_forward.10} parent=39 // pred_check
              _
            $region46: #{autoencoder_forward.10} parent=39 // pred_check_branch
              %2055 = sbr.rel target = $region48
            $region47: #{autoencoder_forward.10} parent=39 // pred_region
              loop: start=0, step=1, limit=1
              $region49: #{autoencoder_forward.10} parent=47 // loop_pre_header
                _
              $region50: #{autoencoder_forward.10} parent=47 // loop_header
                %s2058 = sphi 0, %s2062
                %p2059 = scmp.ge.s32.totalorder %s2058, 1
                %s2063 = sphi %s2043, %s2043
                %s2064 = sphi %s2049, %s2049
              $region51: #{autoencoder_forward.10} parent=47 // loop_header_branch
                %2061 = sbr.rel (%p2059) target = $region55
              $region52: #{autoencoder_forward.10} parent=47 // loop_body
                %v2065 = vld [vmem:[%s2063] sm:$0xff]
                %2066 = vst [vmem:[%s2064] sm:$0xff] %v2065
                %v2067 = vld [vmem:[%s2063 + $0x8] sm:$0xff]
                %2068 = vst [vmem:[%s2064 + $0x8] sm:$0xff] %v2067
                %v2069 = vld [vmem:[%s2063 + $0x10] sm:$0xff]
                %2070 = vst [vmem:[%s2064 + $0x10] sm:$0xff] %v2069
                %v2071 = vld [vmem:[%s2063 + $0x18] sm:$0xff]
                %2072 = vst [vmem:[%s2064 + $0x18] sm:$0xff] %v2071
                %v2073 = vld [vmem:[%s2063 + $0x20] sm:$0xff]
                %2074 = vst [vmem:[%s2064 + $0x40] sm:$0xff] %v2073
                %v2075 = vld [vmem:[%s2063 + $0x28] sm:$0xff]
                %2076 = vst [vmem:[%s2064 + $0x48] sm:$0xff] %v2075
                %v2077 = vld [vmem:[%s2063 + $0x30] sm:$0xff]
                %2078 = vst [vmem:[%s2064 + $0x50] sm:$0xff] %v2077
                %v2079 = vld [vmem:[%s2063 + $0x38] sm:$0xff]
                %2080 = vst [vmem:[%s2064 + $0x58] sm:$0xff] %v2079
                %v2081 = vld [vmem:[%s2063 + $0x40] sm:$0xff]
                %2082 = vst [vmem:[%s2064 + $0x80] sm:$0xff] %v2081
                %v2083 = vld [vmem:[%s2063 + $0x48] sm:$0xff]
                %2084 = vst [vmem:[%s2064 + $0x88] sm:$0xff] %v2083
                %v2085 = vld [vmem:[%s2063 + $0x50] sm:$0xff]
                %2086 = vst [vmem:[%s2064 + $0x90] sm:$0xff] %v2085
                %v2087 = vld [vmem:[%s2063 + $0x58] sm:$0xff]
                %2088 = vst [vmem:[%s2064 + $0x98] sm:$0xff] %v2087
                %v2089 = vld [vmem:[%s2063 + $0x60] sm:$0xff]
                %2090 = vst [vmem:[%s2064 + $0xc0] sm:$0xff] %v2089
                %v2091 = vld [vmem:[%s2063 + $0x68] sm:$0xff]
                %2092 = vst [vmem:[%s2064 + $0xc8] sm:$0xff] %v2091
                %v2093 = vld [vmem:[%s2063 + $0x70] sm:$0xff]
                %2094 = vst [vmem:[%s2064 + $0xd0] sm:$0xff] %v2093
                %v2095 = vld [vmem:[%s2063 + $0x78] sm:$0xff]
                %2096 = vst [vmem:[%s2064 + $0xd8] sm:$0xff] %v2095
              $region53: #{autoencoder_forward.10} parent=47 // loop_footer
                %s2062 = sadd.s32 1, %s2058
              $region54: #{autoencoder_forward.10} parent=47 // loop_footer_branch
                %2057 = sbr.rel target = $region50
              $region55: #{autoencoder_forward.10} parent=47 // loop_exit
                _
            $region48: #{autoencoder_forward.10} parent=39 // pred_fallthru
              _
          $region40: #{autoencoder_forward.10} parent=35 // pred_fallthru
            _
          %2141 = vnop
        $region36: #{autoencoder_forward.10} parent=31 // pred_fallthru
          _
      $region32: #{autoencoder_forward.10} parent=5 // pred_fallthru
        _
      %p2142 = scmp.le.s32.totalorder 2, %s9
      // Predicated region
      $region71: #{autoencoder_forward.10} parent=5 // pred_check
        %p2143 = pneg %p2142
      $region72: #{autoencoder_forward.10} parent=5 // pred_check_branch
        %2145 = sbr.rel (%p2143) target = $region74
      $region73: #{autoencoder_forward.10} parent=5 // pred_region
        %s2146 = ssub.s32 %s9, 2
        // Predicated region
        $region75: #{autoencoder_forward.10} parent=73 // pred_check
          %p2147 = pneg %p106
        $region76: #{autoencoder_forward.10} parent=73 // pred_check_branch
          %2149 = sbr.rel (%p2147) target = $region78
        $region77: #{autoencoder_forward.10} parent=73 // pred_region
          %s2150 = sand.u32 %s91, 1
          %s2151 = sand.u32 %s91, 1
          %s2152 = smul.addr %s2151, 128
          %s2153 = scalar_lea.vmem [#allocation2], %s2152
        $region78: #{autoencoder_forward.10} parent=73 // pred_fallthru
          _
      $region74: #{autoencoder_forward.10} parent=5 // pred_fallthru
        _
    $region6: #{autoencoder_forward.10} parent=1 // loop_footer
      %s13 = sadd.s32 1, %s9
    $region7: #{autoencoder_forward.10} parent=1 // loop_footer_branch
      %8 = sbr.rel target = $region3
    $region8: #{autoencoder_forward.10} parent=1 // loop_exit
      _

// kernel: autoencoder_forward.11
$region0: #{autoencoder_forward.11}
  #allocation0 [shape = 'u32[]', space=smem, size = 0x4, offset = 0x4, fixed_abs, tag = 'smem constant byte address 0x4 - core index']
  #allocation1 [shape = 'u32[144,128]{1,0:T(1,128)}', space=vmem, size = 0x12000, scoped, tag = 'internal scratch']
  %s0 = inlined_call_operand.vmem [shape: f32[2,10,10,32], index: 0, kind: input, shape index: {}]
  %s1 = inlined_call_operand.vmem [shape: f32[4,4,32,3], index: 1, kind: input, shape index: {}]
  %s2 = inlined_call_operand.vmem [shape: f32[1,3], index: 2, kind: input, shape index: {}]
  %s3 = inlined_call_operand.vmem [shape: f32[4,128,3], index: 3, kind: output, shape index: {}]
  %s4 = sld [smem:[#allocation0]]
  $region79: #{autoencoder_forward.11} parent=0
    _
  %s6 = ssub.s32 1, %s4
  %s7 = scalar_select 0, %s6, %s4
  $region1: #{autoencoder_forward.11} parent=0
    #allocation2 [shape = 'u8[262144]{0}', space=vmem, size = 0x40000, scoped, tag = 'output window, operand 0']
    loop: start=0, step=1, limit=4
    $region2: #{autoencoder_forward.11} parent=1 // loop_pre_header
      _
    $region3: #{autoencoder_forward.11} parent=1 // loop_header
      %s9 = sphi 0, %s13
      %p10 = scmp.ge.s32.totalorder %s9, 4
      %s19 = sphi 0, %s21
      %s22 = sphi 0, %s19
      %s23 = sphi 0, %s22
      %s39 = sphi 0, %s23
      %s43 = sphi 0, %s43
      %s45 = sphi 0, %s43
      %s46 = sphi 0, %s45
      %s60 = sphi 0, %s46
      %s64 = sphi 0, %s64
      %s66 = sphi 0, %s64
      %s67 = sphi 0, %s66
      %s81 = sphi 0, %s67
      %s87 = sphi 0, %s89
      %s90 = sphi 0, %s87
      %s91 = sphi 0, %s90
      %s107 = sphi 0, %s91
    $region4: #{autoencoder_forward.11} parent=1 // loop_header_branch
      %12 = sbr.rel (%p10) target = $region8
    $region5: #{autoencoder_forward.11} parent=1 // loop_body
      %s14 = ssub.s32 %s9, 1
      %s15 = ssub.s32 %s9, 2
      %s16 = sadd.s32 %s9, 1
      %s17 = ssub.s32 %s9, %s16
      %p18 = scmp.eq.s32.totalorder %s17, 0
      %s20 = sadd.s32 %s19, 1
      %s21 = scalar_select %p18, %s19, %s20
      %p24 = pneg %p18
      %p25 = scmp.eq.s32.totalorder %s9, 1
      %p26 = por %p24, %p25
      %p27 = scmp.ne.s32.totalorder %s19, %s22
      %p28 = scmp.eq.s32.totalorder %s9, 0
      %p29 = por %p27, %p28
      %p30 = scmp.ne.s32.totalorder %s19, %s22
      %p31 = scmp.eq.s32.totalorder %s14, 1
      %p32 = por %p30, %p31
      %p33 = scmp.ne.s32.totalorder %s22, %s23
      %p34 = scmp.eq.s32.totalorder %s14, 0
      %p35 = por %p33, %p34
      %p36 = scmp.ne.s32.totalorder %s22, %s23
      %p37 = scmp.eq.s32.totalorder %s15, 1
      %p38 = por %p36, %p37
      %p40 = scmp.ne.s32.totalorder %s23, %s39
      %p41 = scmp.eq.s32.totalorder %s15, 0
      %p42 = por %p40, %p41
      %s44 = sadd.s32 %s43, 1
      %p47 = scmp.eq.s32.totalorder %s9, 1
      %p48 = scmp.ne.s32.totalorder %s43, %s45
      %p49 = scmp.eq.s32.totalorder %s9, 0
      %p50 = por %p48, %p49
      %p51 = scmp.ne.s32.totalorder %s43, %s45
      %p52 = scmp.eq.s32.totalorder %s14, 1
      %p53 = por %p51, %p52
      %p54 = scmp.ne.s32.totalorder %s45, %s46
      %p55 = scmp.eq.s32.totalorder %s14, 0
      %p56 = por %p54, %p55
      %p57 = scmp.ne.s32.totalorder %s45, %s46
      %p58 = scmp.eq.s32.totalorder %s15, 1
      %p59 = por %p57, %p58
      %p61 = scmp.ne.s32.totalorder %s46, %s60
      %p62 = scmp.eq.s32.totalorder %s15, 0
      %p63 = por %p61, %p62
      %s65 = sadd.s32 %s64, 1
      %p68 = scmp.eq.s32.totalorder %s9, 1
      %p69 = scmp.ne.s32.totalorder %s64, %s66
      %p70 = scmp.eq.s32.totalorder %s9, 0
      %p71 = por %p69, %p70
      %p72 = scmp.ne.s32.totalorder %s64, %s66
      %p73 = scmp.eq.s32.totalorder %s14, 1
      %p74 = por %p72, %p73
      %p75 = scmp.ne.s32.totalorder %s66, %s67
      %p76 = scmp.eq.s32.totalorder %s14, 0
      %p77 = por %p75, %p76
      %p78 = scmp.ne.s32.totalorder %s66, %s67
      %p79 = scmp.eq.s32.totalorder %s15, 1
      %p80 = por %p78, %p79
      %p82 = scmp.ne.s32.totalorder %s67, %s81
      %p83 = scmp.eq.s32.totalorder %s15, 0
      %p84 = por %p82, %p83
      %s85 = ssub.s32 %s9, %s16
      %p86 = scmp.eq.s32.totalorder %s85, 0
      %s88 = sadd.s32 %s87, 1
      %s89 = scalar_select %p86, %s87, %s88
      %p92 = pneg %p86
      %p93 = scmp.eq.s32.totalorder %s9, 1
      %p94 = por %p92, %p93
      %p95 = scmp.ne.s32.totalorder %s87, %s90
      %p96 = scmp.eq.s32.totalorder %s9, 0
      %p97 = por %p95, %p96
      %p98 = scmp.ne.s32.totalorder %s87, %s90
      %p99 = scmp.eq.s32.totalorder %s14, 1
      %p100 = por %p98, %p99
      %p101 = scmp.ne.s32.totalorder %s90, %s91
      %p102 = scmp.eq.s32.totalorder %s14, 0
      %p103 = por %p101, %p102
      %p104 = scmp.ne.s32.totalorder %s90, %s91
      %p105 = scmp.eq.s32.totalorder %s15, 1
      %p106 = por %p104, %p105
      %p108 = scmp.ne.s32.totalorder %s91, %s107
      %p109 = scmp.eq.s32.totalorder %s15, 0
      %p110 = por %p108, %p109
      %p111 = scmp.le.s32.totalorder 1, %s9
      %p112 = scmp.lt.s32.totalorder %s9, 3
      %p113 = pnand %p111, %p112
      %p114 = pneg %p113
      // Predicated region
      $region9: #{autoencoder_forward.11} parent=5 // pred_check
        _
      $region10: #{autoencoder_forward.11} parent=5 // pred_check_branch
        %116 = sbr.rel (%p113) target = $region12
      $region11: #{autoencoder_forward.11} parent=5 // pred_region
        %s117 = ssub.s32 %s9, 1
        // Predicated region
        $region13: #{autoencoder_forward.11} parent=11 // pred_check
          %p118 = pneg %p56
        $region14: #{autoencoder_forward.11} parent=11 // pred_check_branch
          %120 = sbr.rel (%p118) target = $region16
        $region15: #{autoencoder_forward.11} parent=11 // pred_region
          _
        $region16: #{autoencoder_forward.11} parent=11 // pred_fallthru
          _
        // Predicated region
        $region17: #{autoencoder_forward.11} parent=11 // pred_check
          %p121 = pneg %p77
        $region18: #{autoencoder_forward.11} parent=11 // pred_check_branch
          %123 = sbr.rel (%p121) target = $region20
        $region19: #{autoencoder_forward.11} parent=11 // pred_region
          _
        $region20: #{autoencoder_forward.11} parent=11 // pred_fallthru
          _
      $region12: #{autoencoder_forward.11} parent=5 // pred_fallthru
        _
      %p124 = scmp.lt.s32.totalorder %s9, 2
      // Predicated region
      $region21: #{autoencoder_forward.11} parent=5 // pred_check
        %p125 = pneg %p124
      $region22: #{autoencoder_forward.11} parent=5 // pred_check_branch
        %127 = sbr.rel (%p125) target = $region24
      $region23: #{autoencoder_forward.11} parent=5 // pred_region
        // Predicated region
        $region25: #{autoencoder_forward.11} parent=23 // pred_check
          %p128 = pneg %p29
        $region26: #{autoencoder_forward.11} parent=23 // pred_check_branch
          %130 = sbr.rel (%p128) target = $region28
        $region27: #{autoencoder_forward.11} parent=23 // pred_region
          %p131 = scmp.lt.s32.totalorder %s9, 1
          %s132 = scalar_select %p131, %s9, 1
          %s133 = smul.addr %s132, 20
          %s134 = smul.addr %s133, 8
          %s135 = scalar_lea.vmem %s0, %s134
        $region28: #{autoencoder_forward.11} parent=23 // pred_fallthru
          _
      $region24: #{autoencoder_forward.11} parent=5 // pred_fallthru
        _
      %p136 = scmp.le.s32.totalorder 1, %s9
      %p137 = scmp.lt.s32.totalorder %s9, 3
      %p138 = pnand %p136, %p137
      %p139 = pneg %p138
      // Predicated region
      $region29: #{autoencoder_forward.11} parent=5 // pred_check
        _
      $region30: #{autoencoder_forward.11} parent=5 // pred_check_branch
        %141 = sbr.rel (%p138) target = $region32
      $region31: #{autoencoder_forward.11} parent=5 // pred_region
        %s142 = ssub.s32 %s9, 1
        %p143 = scmp.lt.s32.totalorder %s14, 1
        %s144 = scalar_select %p143, %s14, 1
        %s145 = smul.addr %s144, 20
        %s146 = smul.addr %s145, 8
        %s147 = scalar_lea.vmem %s0, %s146
        %p148 = pneg %p35
        %p149 = pneg %p32
        %p150 = pneg %p56
        %p151 = pneg %p53
        %p152 = pneg %p77
        %p153 = pneg %p74
        %p154 = pneg %p103
        %p155 = pneg %p100
        %s156 = sand.u32 %s90, 1
        %s157 = sand.u32 %s90, 1
        %s158 = smul.addr %s157, 256
        %s159 = scalar_lea.vmem [#allocation2], %s158
        %p160 = scmp.lt.s32.totalorder %s14, 1
        %s161 = scalar_select %p160, %s14, 1
        %s162 = smul.addr %s161, 20
        %s163 = smul.addr %s162, 8
        %s164 = scalar_lea.vmem %s0, %s163
        %s165 = smul.u32 8, %s14
        %v166 = vld [vmem:[%s164] sm:$0xff]
        %v167 = vld [vmem:[%s164 + $0x10] sm:$0xff]
        %v168 = vld [vmem:[%s164 + $0x20] sm:$0xff]
        %v169 = vld [vmem:[%s164 + $0x30] sm:$0xff]
        %v170 = vld [vmem:[%s164 + $0x40] sm:$0xff]
        %v171 = vld [vmem:[%s164 + $0x50] sm:$0xff]
        %v172 = vld [vmem:[%s164 + $0x60] sm:$0xff]
        %v173 = vld [vmem:[%s164 + $0x70] sm:$0xff]
        %v174 = vld [vmem:[%s1] sm:$0xff]
        %v175 = vld [vmem:[%s1 + $0x8] sm:$0xff]
        %v176 = vld [vmem:[%s1 + $0x10] sm:$0xff]
        %v177 = vld [vmem:[%s1 + $0x18] sm:$0xff]
        %v178 = vld [vmem:[%s164 + $0x1] sm:$0xff]
        %v179 = vld [vmem:[%s164 + $0x11] sm:$0xff]
        %v180 = vld [vmem:[%s164 + $0x21] sm:$0xff]
        %v181 = vld [vmem:[%s164 + $0x31] sm:$0xff]
        %v182 = vld [vmem:[%s164 + $0x41] sm:$0xff]
        %v183 = vld [vmem:[%s164 + $0x51] sm:$0xff]
        %v184 = vld [vmem:[%s164 + $0x61] sm:$0xff]
        %v185 = vld [vmem:[%s164 + $0x71] sm:$0xff]
        %s186 = scalar_lea.vmem %s1, 32
        %v187 = vld [vmem:[%s186] sm:$0xff]
        %v188 = vld [vmem:[%s186 + $0x8] sm:$0xff]
        %v189 = vld [vmem:[%s186 + $0x10] sm:$0xff]
        %v190 = vld [vmem:[%s186 + $0x18] sm:$0xff]
        %vm191 = vcmask 261120
        %v193 = vsel %vm191, %v178, 0
        %v196 = vsel %vm191, %v179, 0
        %v199 = vsel %vm191, %v180, 0
        %v202 = vsel %vm191, %v181, 0
        %v205 = vsel %vm191, %v182, 0
        %v208 = vsel %vm191, %v183, 0
        %v211 = vsel %vm191, %v184, 0
        %v214 = vsel %vm191, %v185, 0
        %216 = vmatprep.subr.mxu0 0.0
        %217 = vmatpush1.msra.mxu0 %v187
        %218 = vmatprep.subr.mxu0 0.0
        %219 = vmatpush1.msra.mxu0 %v188
        %220 = vmatprep.subr.mxu0 0.0
        %221 = vmatpush1.msra.mxu0 %v189
        %222 = vmatprep.subr.mxu0 0.0
        %223 = vmatpush1.msra.mxu0 %v190
        %224 = vmatprep.subr.mxu0 0.0
        %225 = vmatpush1.msra.mxu0 0.0
        %226 = vmatprep.subr.mxu0 0.0
        %227 = vmatpush1.msra.mxu0 0.0
        %228 = vmatprep.subr.mxu0 0.0
        %229 = vmatpush1.msra.mxu0 0.0
        %230 = vmatprep.subr.mxu0 0.0
        %231 = vmatpush1.msra.mxu0 0.0
        %232 = vmatprep.subr.mxu0 0.0
        %233 = vmatpush1.msra.mxu0 0.0
        %234 = vmatprep.subr.mxu0 0.0
        %235 = vmatpush1.msra.mxu0 0.0
        %236 = vmatprep.subr.mxu0 0.0
        %237 = vmatpush1.msra.mxu0 0.0
        %238 = vmatprep.subr.mxu0 0.0
        %239 = vmatpush1.msra.mxu0 0.0
        %240 = vmatprep.subr.mxu0 0.0
        %241 = vmatpush1.msra.mxu0 0.0
        %242 = vmatprep.subr.mxu0 0.0
        %243 = vmatpush1.msra.mxu0 0.0
        %244 = vmatprep.subr.mxu0 0.0
        %245 = vmatpush1.msra.mxu0 0.0
        %246 = vmatprep.subr.mxu0 0.0
        %247 = vmatpush1.msra.mxu0 0.0
        %248 = vmatprep.subr.mxu0 0.0
        %249 = vmatpush1.msra.mxu0 0.0
        %250 = vmatprep.subr.mxu0 0.0
        %251 = vmatpush1.msra.mxu0 0.0
        %252 = vmatprep.subr.mxu0 0.0
        %253 = vmatpush1.msra.mxu0 0.0
        %254 = vmatprep.subr.mxu0 0.0
        %255 = vmatpush1.msra.mxu0 0.0
        %256 = vmatprep.subr.mxu0 0.0
        %257 = vmatpush1.msra.mxu0 0.0
        %258 = vmatprep.subr.mxu0 0.0
        %259 = vmatpush1.msra.mxu0 0.0
        %260 = vmatprep.subr.mxu0 0.0
        %261 = vmatpush1.msra.mxu0 0.0
        %262 = vmatprep.subr.mxu0 0.0
        %263 = vmatpush1.msra.mxu0 0.0
        %264 = vmatprep.subr.mxu0 0.0
        %265 = vmatpush1.msra.mxu0 0.0
        %266 = vmatprep.subr.mxu0 0.0
        %267 = vmatpush1.msra.mxu0 0.0
        %268 = vmatprep.subr.mxu0 0.0
        %269 = vmatpush1.msra.mxu0 0.0
        %270 = vmatprep.subr.mxu0 0.0
        %271 = vmatpush1.msra.mxu0 0.0
        %272 = vmatprep.subr.mxu0 0.0
        %273 = vmatpush1.msra.mxu0 0.0
        %274 = vmatprep.subr.mxu0 0.0
        %275 = vmatpush1.msra.mxu0 0.0
        %276 = vmatprep.subr.mxu0 0.0
        %277 = vmatpush1.msra.mxu0 0.0
        %278 = vmatprep.subr.mxu0 0.0
        %279 = vmatpush1.msra.mxu0 0.0
        %280 = vmatprep.mubr.f32.mxu0 0.0
        %281 = vmatmul.mubr.f32.gmra.mrb[0].mxu0 %v193
        %v282 = vpop.f32.mrb[0].mxu0
        %v283 = vadd.f32 0.0, %v282
        %v284 = vpop.f32.mrb[0].mxu0
        %285 = vmatprep.mubr.f32.mxu0 0.0
        %286 = vmatmul.mubr.f32.gmra.mrb[0].mxu0 %v196
        %v287 = vpop.f32.mrb[0].mxu0
        %v288 = vadd.f32 0.0, %v287
        %v289 = vpop.f32.mrb[0].mxu0
        %290 = vmatprep.mubr.f32.mxu0 0.0
        %291 = vmatmul.mubr.f32.gmra.mrb[0].mxu0 %v199
        %v292 = vpop.f32.mrb[0].mxu0
        %v293 = vadd.f32 0.0, %v292
        %v294 = vpop.f32.mrb[0].mxu0
        %295 = vmatprep.mubr.f32.mxu0 0.0
        %296 = vmatmul.mubr.f32.gmra.mrb[0].mxu0 %v202
        %v297 = vpop.f32.mrb[0].mxu0
        %v298 = vadd.f32 0.0, %v297
        %v299 = vpop.f32.mrb[0].mxu0
        %300 = vmatprep.mubr.f32.mxu0 0.0
        %301 = vmatmul.mubr.f32.gmra.mrb[0].mxu0 %v205
        %v302 = vpop.f32.mrb[0].mxu0
        %v303 = vadd.f32 0.0, %v302
        %v304 = vpop.f32.mrb[0].mxu0
        %305 = vmatprep.mubr.f32.mxu0 0.0
        %306 = vmatmul.mubr.f32.gmra.mrb[0].mxu0 %v208
        %v307 = vpop.f32.mrb[0].mxu0
        %v308 = vadd.f32 0.0, %v307
        %v309 = vpop.f32.mrb[0].mxu0
        %310 = vmatprep.mubr.f32.mxu0 0.0
        %311 = vmatmul.mubr.f32.gmra.mrb[0].mxu0 %v211
        %v312 = vpop.f32.mrb[0].mxu0
        %v313 = vadd.f32 0.0, %v312
        %v314 = vpop.f32.mrb[0].mxu0
        %315 = vmatprep.mubr.f32.mxu0 0.0
        %316 = vmatmul.mubr.f32.gmra.mrb[0].mxu0 %v214
        %v317 = vpop.f32.mrb[0].mxu0
        %v318 = vadd.f32 0.0, %v317
        %v319 = vpop.f32.mrb[0].mxu0
        %320 = vdwg.mxu0
        %v322 = vsel %vm191, %v166, 0
        %v325 = vsel %vm191, %v167, 0
        %v328 = vsel %vm191, %v168, 0
        %v331 = vsel %vm191, %v169, 0
        %v334 = vsel %vm191, %v170, 0
        %v337 = vsel %vm191, %v171, 0
        %v340 = vsel %vm191, %v172, 0
        %v343 = vsel %vm191, %v173, 0
        %345 = vmatprep.subr.mxu0 0.0
        %346 = vmatpush1.msra.mxu0 %v174
        %347 = vmatprep.subr.mxu0 0.0
        %348 = vmatpush1.msra.mxu0 %v175
        %349 = vmatprep.subr.mxu0 0.0
        %350 = vmatpush1.msra.mxu0 %v176
        %351 = vmatprep.subr.mxu0 0.0
        %352 = vmatpush1.msra.mxu0 %v177
        %353 = vmatprep.subr.mxu0 0.0
        %354 = vmatpush1.msra.mxu0 0.0
        %355 = vmatprep.subr.mxu0 0.0
        %356 = vmatpush1.msra.mxu0 0.0
        %357 = vmatprep.subr.mxu0 0.0
        %358 = vmatpush1.msra.mxu0 0.0
        %359 = vmatprep.subr.mxu0 0.0
        %360 = vmatpush1.msra.mxu0 0.0
        %361 = vmatprep.subr.mxu0 0.0
        %362 = vmatpush1.msra.mxu0 0.0
        %363 = vmatprep.subr.mxu0 0.0
        %364 = vmatpush1.msra.mxu0 0.0
        %365 = vmatprep.subr.mxu0 0.0
        %366 = vmatpush1.msra.mxu0 0.0
        %367 = vmatprep.subr.mxu0 0.0
        %368 = vmatpush1.msra.mxu0 0.0
        %369 = vmatprep.subr.mxu0 0.0
        %370 = vmatpush1.msra.mxu0 0.0
        %371 = vmatprep.subr.mxu0 0.0
        %372 = vmatpush1.msra.mxu0 0.0
        %373 = vmatprep.subr.mxu0 0.0
        %374 = vmatpush1.msra.mxu0 0.0
        %375 = vmatprep.subr.mxu0 0.0
        %376 = vmatpush1.msra.mxu0 0.0
        %377 = vmatprep.subr.mxu0 0.0
        %378 = vmatpush1.msra.mxu0 0.0
        %379 = vmatprep.subr.mxu0 0.0
        %380 = vmatpush1.msra.mxu0 0.0
        %381 = vmatprep.subr.mxu0 0.0
        %382 = vmatpush1.msra.mxu0 0.0
        %383 = vmatprep.subr.mxu0 0.0
        %384 = vmatpush1.msra.mxu0 0.0
        %385 = vmatprep.subr.mxu0 0.0
        %386 = vmatpush1.msra.mxu0 0.0
        %387 = vmatprep.subr.mxu0 0.0
        %388 = vmatpush1.msra.mxu0 0.0
        %389 = vmatprep.subr.mxu0 0.0
        %390 = vmatpush1.msra.mxu0 0.0
        %391 = vmatprep.subr.mxu0 0.0
        %392 = vmatpush1.msra.mxu0 0.0
        %393 = vmatprep.subr.mxu0 0.0
        %394 = vmatpush1.msra.mxu0 0.0
        %395 = vmatprep.subr.mxu0 0.0
        %396 = vmatpush1.msra.mxu0 0.0
        %397 = vmatprep.subr.mxu0 0.0
        %398 = vmatpush1.msra.mxu0 0.0
        %399 = vmatprep.subr.mxu0 0.0
        %400 = vmatpush1.msra.mxu0 0.0
        %401 = vmatprep.subr.mxu0 0.0
        %402 = vmatpush1.msra.mxu0 0.0
        %403 = vmatprep.subr.mxu0 0.0
        %404 = vmatpush1.msra.mxu0 0.0
        %405 = vmatprep.subr.mxu0 0.0
        %406 = vmatpush1.msra.mxu0 0.0
        %407 = vmatprep.subr.mxu0 0.0
        %408 = vmatpush1.msra.mxu0 0.0
        %409 = vmatprep.mubr.f32.mxu0 0.0
        %410 = vmatmul.mubr.f32.gmra.mrb[0].mxu0 %v322
        %v411 = vpop.f32.mrb[0].mxu0
        %v412 = vadd.f32 %v283, %v411
        %v413 = vpop.f32.mrb[0].mxu0
        %414 = vmatprep.mubr.f32.mxu0 0.0
        %415 = vmatmul.mubr.f32.gmra.mrb[0].mxu0 %v325
        %v416 = vpop.f32.mrb[0].mxu0
        %v417 = vadd.f32 %v288, %v416
        %v418 = vpop.f32.mrb[0].mxu0
        %419 = vmatprep.mubr.f32.mxu0 0.0
        %420 = vmatmul.mubr.f32.gmra.mrb[0].mxu0 %v328
        %v421 = vpop.f32.mrb[0].mxu0
        %v422 = vadd.f32 %v293, %v421
        %v423 = vpop.f32.mrb[0].mxu0
        %424 = vmatprep.mubr.f32.mxu0 0.0
        %425 = vmatmul.mubr.f32.gmra.mrb[0].mxu0 %v331
        %v426 = vpop.f32.mrb[0].mxu0
        %v427 = vadd.f32 %v298, %v426
        %v428 = vpop.f32.mrb[0].mxu0
        %429 = vmatprep.mubr.f32.mxu0 0.0
        %430 = vmatmul.mubr.f32.gmra.mrb[0].mxu0 %v334
        %v431 = vpop.f32.mrb[0].mxu0
        %v432 = vadd.f32 %v303, %v431
        %v433 = vpop.f32.mrb[0].mxu0
        %434 = vmatprep.mubr.f32.mxu0 0.0
        %435 = vmatmul.mubr.f32.gmra.mrb[0].mxu0 %v337
        %v436 = vpop.f32.mrb[0].mxu0
        %v437 = vadd.f32 %v308, %v436
        %v438 = vpop.f32.mrb[0].mxu0
        %439 = vmatprep.mubr.f32.mxu0 0.0
        %440 = vmatmul.mubr.f32.gmra.mrb[0].mxu0 %v340
        %v441 = vpop.f32.mrb[0].mxu0
        %v442 = vadd.f32 %v313, %v441
        %v443 = vpop.f32.mrb[0].mxu0
        %444 = vmatprep.mubr.f32.mxu0 0.0
        %445 = vmatmul.mubr.f32.gmra.mrb[0].mxu0 %v343
        %v446 = vpop.f32.mrb[0].mxu0
        %v447 = vadd.f32 %v318, %v446
        %v448 = vpop.f32.mrb[0].mxu0
        %449 = vdwg.mxu0
        %s450 = scalar_lea.vmem %s164, 16
        %v451 = vld [vmem:[%s450] sm:$0xff]
        %v452 = vld [vmem:[%s450 + $0x10] sm:$0xff]
        %v453 = vld [vmem:[%s450 + $0x20] sm:$0xff]
        %v454 = vld [vmem:[%s450 + $0x30] sm:$0xff]
        %v455 = vld [vmem:[%s450 + $0x40] sm:$0xff]
        %v456 = vld [vmem:[%s450 + $0x50] sm:$0xff]
        %v457 = vld [vmem:[%s450 + $0x60] sm:$0xff]
        %v458 = vld [vmem:[%s450 + $0x70] sm:$0xff]
        %s459 = scalar_lea.vmem %s1, 64
        %v460 = vld [vmem:[%s459] sm:$0xff]
        %v461 = vld [vmem:[%s459 + $0x8] sm:$0xff]
        %v462 = vld [vmem:[%s459 + $0x10] sm:$0xff]
        %v463 = vld [vmem:[%s459 + $0x18] sm:$0xff]
        %v465 = vsel %vm191, %v451, 0
        %v468 = vsel %vm191, %v452, 0
        %v471 = vsel %vm191, %v453, 0
        %v474 = vsel %vm191, %v454, 0
        %v477 = vsel %vm191, %v455, 0
        %v480 = vsel %vm191, %v456, 0
        %v483 = vsel %vm191, %v457, 0
        %v486 = vsel %vm191, %v458, 0
        %488 = vmatprep.subr.mxu0 0.0
        %489 = vmatpush1.msra.mxu0 %v460
        %490 = vmatprep.subr.mxu0 0.0
        %491 = vmatpush1.msra.mxu0 %v461
        %492 = vmatprep.subr.mxu0 0.0
        %493 = vmatpush1.msra.mxu0 %v462
        %494 = vmatprep.subr.mxu0 0.0
        %495 = vmatpush1.msra.mxu0 %v463
        %496 = vmatprep.subr.mxu0 0.0
        %497 = vmatpush1.msra.mxu0 0.0
        %498 = vmatprep.subr.mxu0 0.0
        %499 = vmatpush1.msra.mxu0 0.0
        %500 = vmatprep.subr.mxu0 0.0
        %501 = vmatpush1.msra.mxu0 0.0
        %502 = vmatprep.subr.mxu0 0.0
        %503 = vmatpush1.msra.mxu0 0.0
        %504 = vmatprep.subr.mxu0 0.0
        %505 = vmatpush1.msra.mxu0 0.0
        %506 = vmatprep.subr.mxu0 0.0
        %507 = vmatpush1.msra.mxu0 0.0
        %508 = vmatprep.subr.mxu0 0.0
        %509 = vmatpush1.msra.mxu0 0.0
        %510 = vmatprep.subr.mxu0 0.0
        %511 = vmatpush1.msra.mxu0 0.0
        %512 = vmatprep.subr.mxu0 0.0
        %513 = vmatpush1.msra.mxu0 0.0
        %514 = vmatprep.subr.mxu0 0.0
        %515 = vmatpush1.msra.mxu0 0.0
        %516 = vmatprep.subr.mxu0 0.0
        %517 = vmatpush1.msra.mxu0 0.0
        %518 = vmatprep.subr.mxu0 0.0
        %519 = vmatpush1.msra.mxu0 0.0
        %520 = vmatprep.subr.mxu0 0.0
        %521 = vmatpush1.msra.mxu0 0.0
        %522 = vmatprep.subr.mxu0 0.0
        %523 = vmatpush1.msra.mxu0 0.0
        %524 = vmatprep.subr.mxu0 0.0
        %525 = vmatpush1.msra.mxu0 0.0
        %526 = vmatprep.subr.mxu0 0.0
        %527 = vmatpush1.msra.mxu0 0.0
        %528 = vmatprep.subr.mxu0 0.0
        %529 = vmatpush1.msra.mxu0 0.0
        %530 = vmatprep.subr.mxu0 0.0
        %531 = vmatpush1.msra.mxu0 0.0
        %532 = vmatprep.subr.mxu0 0.0
        %533 = vmatpush1.msra.mxu0 0.0
        %534 = vmatprep.subr.mxu0 0.0
        %535 = vmatpush1.msra.mxu0 0.0
        %536 = vmatprep.subr.mxu0 0.0
        %537 = vmatpush1.msra.mxu0 0.0
        %538 = vmatprep.subr.mxu0 0.0
        %539 = vmatpush1.msra.mxu0 0.0
        %540 = vmatprep.subr.mxu0 0.0
        %541 = vmatpush1.msra.mxu0 0.0
        %542 = vmatprep.subr.mxu0 0.0
        %543 = vmatpush1.msra.mxu0 0.0
        %544 = vmatprep.subr.mxu0 0.0
        %545 = vmatpush1.msra.mxu0 0.0
        %546 = vmatprep.subr.mxu0 0.0
        %547 = vmatpush1.msra.mxu0 0.0
        %548 = vmatprep.subr.mxu0 0.0
        %549 = vmatpush1.msra.mxu0 0.0
        %550 = vmatprep.subr.mxu0 0.0
        %551 = vmatpush1.msra.mxu0 0.0
        %552 = vmatprep.mubr.f32.mxu0 0.0
        %553 = vmatmul.mubr.f32.gmra.mrb[0].mxu0 %v465
        %v554 = vpop.f32.mrb[0].mxu0
        %v555 = vadd.f32 0.0, %v554
        %v556 = vpop.f32.mrb[0].mxu0
        %557 = vmatprep.mubr.f32.mxu0 0.0
        %558 = vmatmul.mubr.f32.gmra.mrb[0].mxu0 %v468
        %v559 = vpop.f32.mrb[0].mxu0
        %v560 = vadd.f32 0.0, %v559
        %v561 = vpop.f32.mrb[0].mxu0
        %562 = vmatprep.mubr.f32.mxu0 0.0
        %563 = vmatmul.mubr.f32.gmra.mrb[0].mxu0 %v471
        %v564 = vpop.f32.mrb[0].mxu0
        %v565 = vadd.f32 0.0, %v564
        %v566 = vpop.f32.mrb[0].mxu0
        %567 = vmatprep.mubr.f32.mxu0 0.0
        %568 = vmatmul.mubr.f32.gmra.mrb[0].mxu0 %v474
        %v569 = vpop.f32.mrb[0].mxu0
        %v570 = vadd.f32 0.0, %v569
        %v571 = vpop.f32.mrb[0].mxu0
        %572 = vmatprep.mubr.f32.mxu0 0.0
        %573 = vmatmul.mubr.f32.gmra.mrb[0].mxu0 %v477
        %v574 = vpop.f32.mrb[0].mxu0
        %v575 = vadd.f32 0.0, %v574
        %v576 = vpop.f32.mrb[0].mxu0
        %577 = vmatprep.mubr.f32.mxu0 0.0
        %578 = vmatmul.mubr.f32.gmra.mrb[0].mxu0 %v480
        %v579 = vpop.f32.mrb[0].mxu0
        %v580 = vadd.f32 0.0, %v579
        %v581 = vpop.f32.mrb[0].mxu0
        %582 = vmatprep.mubr.f32.mxu0 0.0
        %583 = vmatmul.mubr.f32.gmra.mrb[0].mxu0 %v483
        %v584 = vpop.f32.mrb[0].mxu0
        %v585 = vadd.f32 0.0, %v584
        %v586 = vpop.f32.mrb[0].mxu0
        %587 = vmatprep.mubr.f32.mxu0 0.0
        %588 = vmatmul.mubr.f32.gmra.mrb[0].mxu0 %v486
        %v589 = vpop.f32.mrb[0].mxu0
        %v590 = vadd.f32 0.0, %v589
        %v591 = vpop.f32.mrb[0].mxu0
        %592 = vdwg.mxu0
        %v593 = vadd.f32 %v412, %v555
        %v594 = vadd.f32 %v417, %v560
        %v595 = vadd.f32 %v422, %v565
        %v596 = vadd.f32 %v427, %v570
        %v597 = vadd.f32 %v432, %v575
        %v598 = vadd.f32 %v437, %v580
        %v599 = vadd.f32 %v442, %v585
        %v600 = vadd.f32 %v447, %v590
        %v601 = vld [vmem:[%s450 + $0x1] sm:$0xff]
        %v602 = vld [vmem:[%s450 + $0x11] sm:$0xff]
        %v603 = vld [vmem:[%s450 + $0x21] sm:$0xff]
        %v604 = vld [vmem:[%s450 + $0x31] sm:$0xff]
        %v605 = vld [vmem:[%s450 + $0x41] sm:$0xff]
        %v606 = vld [vmem:[%s450 + $0x51] sm:$0xff]
        %v607 = vld [vmem:[%s450 + $0x61] sm:$0xff]
        %v608 = vld [vmem:[%s450 + $0x71] sm:$0xff]
        %s609 = scalar_lea.vmem %s1, 96
        %v610 = vld [vmem:[%s609] sm:$0xff]
        %v611 = vld [vmem:[%s609 + $0x8] sm:$0xff]
        %v612 = vld [vmem:[%s609 + $0x10] sm:$0xff]
        %v613 = vld [vmem:[%s609 + $0x18] sm:$0xff]
        %v615 = vsel %vm191, %v601, 0
        %v618 = vsel %vm191, %v602, 0
        %v621 = vsel %vm191, %v603, 0
        %v624 = vsel %vm191, %v604, 0
        %v627 = vsel %vm191, %v605, 0
        %v630 = vsel %vm191, %v606, 0
        %v633 = vsel %vm191, %v607, 0
        %v636 = vsel %vm191, %v608, 0
        %638 = vmatprep.subr.mxu0 0.0
        %639 = vmatpush1.msra.mxu0 %v610
        %640 = vmatprep.subr.mxu0 0.0
        %641 = vmatpush1.msra.mxu0 %v611
        %642 = vmatprep.subr.mxu0 0.0
        %643 = vmatpush1.msra.mxu0 %v612
        %644 = vmatprep.subr.mxu0 0.0
        %645 = vmatpush1.msra.mxu0 %v613
        %646 = vmatprep.subr.mxu0 0.0
        %647 = vmatpush1.msra.mxu0 0.0
        %648 = vmatprep.subr.mxu0 0.0
        %649 = vmatpush1.msra.mxu0 0.0
        %650 = vmatprep.subr.mxu0 0.0
        %651 = vmatpush1.msra.mxu0 0.0
        %652 = vmatprep.subr.mxu0 0.0
        %653 = vmatpush1.msra.mxu0 0.0
        %654 = vmatprep.subr.mxu0 0.0
        %655 = vmatpush1.msra.mxu0 0.0
        %656 = vmatprep.subr.mxu0 0.0
        %657 = vmatpush1.msra.mxu0 0.0
        %658 = vmatprep.subr.mxu0 0.0
        %659 = vmatpush1.msra.mxu0 0.0
        %660 = vmatprep.subr.mxu0 0.0
        %661 = vmatpush1.msra.mxu0 0.0
        %662 = vmatprep.subr.mxu0 0.0
        %663 = vmatpush1.msra.mxu0 0.0
        %664 = vmatprep.subr.mxu0 0.0
        %665 = vmatpush1.msra.mxu0 0.0
        %666 = vmatprep.subr.mxu0 0.0
        %667 = vmatpush1.msra.mxu0 0.0
        %668 = vmatprep.subr.mxu0 0.0
        %669 = vmatpush1.msra.mxu0 0.0
        %670 = vmatprep.subr.mxu0 0.0
        %671 = vmatpush1.msra.mxu0 0.0
        %672 = vmatprep.subr.mxu0 0.0
        %673 = vmatpush1.msra.mxu0 0.0
        %674 = vmatprep.subr.mxu0 0.0
        %675 = vmatpush1.msra.mxu0 0.0
        %676 = vmatprep.subr.mxu0 0.0
        %677 = vmatpush1.msra.mxu0 0.0
        %678 = vmatprep.subr.mxu0 0.0
        %679 = vmatpush1.msra.mxu0 0.0
        %680 = vmatprep.subr.mxu0 0.0
        %681 = vmatpush1.msra.mxu0 0.0
        %682 = vmatprep.subr.mxu0 0.0
        %683 = vmatpush1.msra.mxu0 0.0
        %684 = vmatprep.subr.mxu0 0.0
        %685 = vmatpush1.msra.mxu0 0.0
        %686 = vmatprep.subr.mxu0 0.0
        %687 = vmatpush1.msra.mxu0 0.0
        %688 = vmatprep.subr.mxu0 0.0
        %689 = vmatpush1.msra.mxu0 0.0
        %690 = vmatprep.subr.mxu0 0.0
        %691 = vmatpush1.msra.mxu0 0.0
        %692 = vmatprep.subr.mxu0 0.0
        %693 = vmatpush1.msra.mxu0 0.0
        %694 = vmatprep.subr.mxu0 0.0
        %695 = vmatpush1.msra.mxu0 0.0
        %696 = vmatprep.subr.mxu0 0.0
        %697 = vmatpush1.msra.mxu0 0.0
        %698 = vmatprep.subr.mxu0 0.0
        %699 = vmatpush1.msra.mxu0 0.0
        %700 = vmatprep.subr.mxu0 0.0
        %701 = vmatpush1.msra.mxu0 0.0
        %702 = vmatprep.mubr.f32.mxu0 0.0
        %703 = vmatmul.mubr.f32.gmra.mrb[0].mxu0 %v615
        %v704 = vpop.f32.mrb[0].mxu0
        %v705 = vadd.f32 0.0, %v704
        %v706 = vpop.f32.mrb[0].mxu0
        %707 = vmatprep.mubr.f32.mxu0 0.0
        %708 = vmatmul.mubr.f32.gmra.mrb[0].mxu0 %v618
        %v709 = vpop.f32.mrb[0].mxu0
        %v710 = vadd.f32 0.0, %v709
        %v711 = vpop.f32.mrb[0].mxu0
        %712 = vmatprep.mubr.f32.mxu0 0.0
        %713 = vmatmul.mubr.f32.gmra.mrb[0].mxu0 %v621
        %v714 = vpop.f32.mrb[0].mxu0
        %v715 = vadd.f32 0.0, %v714
        %v716 = vpop.f32.mrb[0].mxu0
        %717 = vmatprep.mubr.f32.mxu0 0.0
        %718 = vmatmul.mubr.f32.gmra.mrb[0].mxu0 %v624
        %v719 = vpop.f32.mrb[0].mxu0
        %v720 = vadd.f32 0.0, %v719
        %v721 = vpop.f32.mrb[0].mxu0
        %722 = vmatprep.mubr.f32.mxu0 0.0
        %723 = vmatmul.mubr.f32.gmra.mrb[0].mxu0 %v627
        %v724 = vpop.f32.mrb[0].mxu0
        %v725 = vadd.f32 0.0, %v724
        %v726 = vpop.f32.mrb[0].mxu0
        %727 = vmatprep.mubr.f32.mxu0 0.0
        %728 = vmatmul.mubr.f32.gmra.mrb[0].mxu0 %v630
        %v729 = vpop.f32.mrb[0].mxu0
        %v730 = vadd.f32 0.0, %v729
        %v731 = vpop.f32.mrb[0].mxu0
        %732 = vmatprep.mubr.f32.mxu0 0.0
        %733 = vmatmul.mubr.f32.gmra.mrb[0].mxu0 %v633
        %v734 = vpop.f32.mrb[0].mxu0
        %v735 = vadd.f32 0.0, %v734
        %v736 = vpop.f32.mrb[0].mxu0
        %737 = vmatprep.mubr.f32.mxu0 0.0
        %738 = vmatmul.mubr.f32.gmra.mrb[0].mxu0 %v636
        %v739 = vpop.f32.mrb[0].mxu0
        %v740 = vadd.f32 0.0, %v739
        %v741 = vpop.f32.mrb[0].mxu0
        %742 = vdwg.mxu0
        %v743 = vadd.f32 %v593, %v705
        %v744 = vadd.f32 %v594, %v710
        %v745 = vadd.f32 %v595, %v715
        %v746 = vadd.f32 %v596, %v720
        %v747 = vadd.f32 %v597, %v725
        %v748 = vadd.f32 %v598, %v730
        %v749 = vadd.f32 %v599, %v735
        %v750 = vadd.f32 %v600, %v740
        %v751 = vld [vmem:[%s2] sm:$0x1]
        %v753 = vlaneseq
        %v754 = vshrl.u32 %v753, 7
        %v755 = vsub.s32 0, %v754
        %v756 = vrot.slane %v751, %v755
        %v758 = vadd.f32 %v743, %v756
        %v759 = vadd.f32 %v744, %v756
        %v760 = vadd.f32 %v745, %v756
        %v761 = vadd.f32 %v746, %v756
        %v762 = vadd.f32 %v747, %v756
        %v763 = vadd.f32 %v748, %v756
        %v764 = vadd.f32 %v749, %v756
        %v765 = vadd.f32 %v750, %v756
        %v766 = vsub.f32 0.0, %v758
        %v767 = vsub.f32 0.0, %v759
        %v768 = vsub.f32 0.0, %v760
        %v769 = vsub.f32 0.0, %v761
        %v770 = vsub.f32 0.0, %v762
        %v771 = vsub.f32 0.0, %v763
        %v772 = vsub.f32 0.0, %v764
        %v773 = vsub.f32 0.0, %v765
        %v774 = vmul.f32 %v766, 1.442695
        %v775 = vpow.pop %v774
        %v776 = vmul.f32 %v767, 1.442695
        %v777 = vpow.pop %v776
        %v778 = vmul.f32 %v768, 1.442695
        %v779 = vpow.pop %v778
        %v780 = vmul.f32 %v769, 1.442695
        %v781 = vpow.pop %v780
        %v782 = vmul.f32 %v770, 1.442695
        %v783 = vpow.pop %v782
        %v784 = vmul.f32 %v771, 1.442695
        %v785 = vpow.pop %v784
        %v786 = vmul.f32 %v772, 1.442695
        %v787 = vpow.pop %v786
        %v788 = vmul.f32 %v773, 1.442695
        %v789 = vpow.pop %v788
        %v790 = vadd.f32 %v775, 1.0
        %v791 = vadd.f32 %v777, 1.0
        %v792 = vadd.f32 %v779, 1.0
        %v793 = vadd.f32 %v781, 1.0
        %v794 = vadd.f32 %v783, 1.0
        %v795 = vadd.f32 %v785, 1.0
        %v796 = vadd.f32 %v787, 1.0
        %v797 = vadd.f32 %v789, 1.0
        %v798 = vrcp.pop %v790
        %v799 = vmul.f32 1.0, %v798
        %v800 = vrcp.pop %v791
        %v801 = vmul.f32 1.0, %v800
        %v802 = vrcp.pop %v792
        %v803 = vmul.f32 1.0, %v802
        %v804 = vrcp.pop %v793
        %v805 = vmul.f32 1.0, %v804
        %v806 = vrcp.pop %v794
        %v807 = vmul.f32 1.0, %v806
        %v808 = vrcp.pop %v795
        %v809 = vmul.f32 1.0, %v808
        %v810 = vrcp.pop %v796
        %v811 = vmul.f32 1.0, %v810
        %v812 = vrcp.pop %v797
        %v813 = vmul.f32 1.0, %v812
        %vm814 = vcmask 23552
        %815 = vst.msk [vmem:[%s159] sm:$0xff] %vm814, %v799
        %816 = vst.msk [vmem:[%s159 + $0x8] sm:$0xff] %vm814, %v801
        %817 = vst.msk [vmem:[%s159 + $0x10] sm:$0xff] %vm814, %v803
        %818 = vst.msk [vmem:[%s159 + $0x18] sm:$0xff] %vm814, %v805
        %819 = vst.msk [vmem:[%s159 + $0x20] sm:$0xff] %vm814, %v807
        %820 = vst.msk [vmem:[%s159 + $0x28] sm:$0xff] %vm814, %v809
        %821 = vst.msk [vmem:[%s159 + $0x30] sm:$0xff] %vm814, %v811
        %822 = vst.msk [vmem:[%s159 + $0x38] sm:$0xff] %vm814, %v813
        %v823 = vld [vmem:[%s164 + $0x1] sm:$0xff]
        %v824 = vld [vmem:[%s164 + $0x11] sm:$0xff]
        %v825 = vld [vmem:[%s164 + $0x21] sm:$0xff]
        %v826 = vld [vmem:[%s164 + $0x31] sm:$0xff]
        %v827 = vld [vmem:[%s164 + $0x41] sm:$0xff]
        %v828 = vld [vmem:[%s164 + $0x51] sm:$0xff]
        %v829 = vld [vmem:[%s164 + $0x61] sm:$0xff]
        %v830 = vld [vmem:[%s164 + $0x71] sm:$0xff]
        %s831 = scalar_lea.vmem %s1, 128
        %v832 = vld [vmem:[%s831] sm:$0xff]
        %v833 = vld [vmem:[%s831 + $0x8] sm:$0xff]
        %v834 = vld [vmem:[%s831 + $0x10] sm:$0xff]
        %v835 = vld [vmem:[%s831 + $0x18] sm:$0xff]
        %v836 = vld [vmem:[%s164 + $0x2] sm:$0xff]
        %v837 = vld [vmem:[%s164 + $0x12] sm:$0xff]
        %v838 = vld [vmem:[%s164 + $0x22] sm:$0xff]
        %v839 = vld [vmem:[%s164 + $0x32] sm:$0xff]
        %v840 = vld [vmem:[%s164 + $0x42] sm:$0xff]
        %v841 = vld [vmem:[%s164 + $0x52] sm:$0xff]
        %v842 = vld [vmem:[%s164 + $0x62] sm:$0xff]
        %v843 = vld [vmem:[%s164 + $0x72] sm:$0xff]
        %s844 = scalar_lea.vmem %s1, 160
        %v845 = vld [vmem:[%s844] sm:$0xff]
        %v846 = vld [vmem:[%s844 + $0x8] sm:$0xff]
        %v847 = vld [vmem:[%s844 + $0x10] sm:$0xff]
        %v848 = vld [vmem:[%s844 + $0x18] sm:$0xff]
        %v850 = vsel %vm191, %v836, 0
        %v853 = vsel %vm191, %v837, 0
        %v856 = vsel %vm191, %v838, 0
        %v859 = vsel %vm191, %v839, 0
        %v862 = vsel %vm191, %v840, 0
        %v865 = vsel %vm191, %v841, 0
        %v868 = vsel %vm191, %v842, 0
        %v871 = vsel %vm191, %v843, 0
        %873 = vmatprep.subr.mxu0 0.0
        %874 = vmatpush1.msra.mxu0 %v845
        %875 = vmatprep.subr.mxu0 0.0
        %876 = vmatpush1.msra.mxu0 %v846
        %877 = vmatprep.subr.mxu0 0.0
        %878 = vmatpush1.msra.mxu0 %v847
        %879 = vmatprep.subr.mxu0 0.0
        %880 = vmatpush1.msra.mxu0 %v848
        %881 = vmatprep.subr.mxu0 0.0
        %882 = vmatpush1.msra.mxu0 0.0
        %883 = vmatprep.subr.mxu0 0.0
        %884 = vmatpush1.msra.mxu0 0.0
        %885 = vmatprep.subr.mxu0 0.0
        %886 = vmatpush1.msra.mxu0 0.0
        %887 = vmatprep.subr.mxu0 0.0
        %888 = vmatpush1.msra.mxu0 0.0
        %889 = vmatprep.subr.mxu0 0.0
        %890 = vmatpush1.msra.mxu0 0.0
        %891 = vmatprep.subr.mxu0 0.0
        %892 = vmatpush1.msra.mxu0 0.0
        %893 = vmatprep.subr.mxu0 0.0
        %894 = vmatpush1.msra.mxu0 0.0
        %895 = vmatprep.subr.mxu0 0.0
        %896 = vmatpush1.msra.mxu0 0.0
        %897 = vmatprep.subr.mxu0 0.0
        %898 = vmatpush1.msra.mxu0 0.0
        %899 = vmatprep.subr.mxu0 0.0
        %900 = vmatpush1.msra.mxu0 0.0
        %901 = vmatprep.subr.mxu0 0.0
        %902 = vmatpush1.msra.mxu0 0.0
        %903 = vmatprep.subr.mxu0 0.0
        %904 = vmatpush1.msra.mxu0 0.0
        %905 = vmatprep.subr.mxu0 0.0
        %906 = vmatpush1.msra.mxu0 0.0
        %907 = vmatprep.subr.mxu0 0.0
        %908 = vmatpush1.msra.mxu0 0.0
        %909 = vmatprep.subr.mxu0 0.0
        %910 = vmatpush1.msra.mxu0 0.0
        %911 = vmatprep.subr.mxu0 0.0
        %912 = vmatpush1.msra.mxu0 0.0
        %913 = vmatprep.subr.mxu0 0.0
        %914 = vmatpush1.msra.mxu0 0.0
        %915 = vmatprep.subr.mxu0 0.0
        %916 = vmatpush1.msra.mxu0 0.0
        %917 = vmatprep.subr.mxu0 0.0
        %918 = vmatpush1.msra.mxu0 0.0
        %919 = vmatprep.subr.mxu0 0.0
        %920 = vmatpush1.msra.mxu0 0.0
        %921 = vmatprep.subr.mxu0 0.0
        %922 = vmatpush1.msra.mxu0 0.0
        %923 = vmatprep.subr.mxu0 0.0
        %924 = vmatpush1.msra.mxu0 0.0
        %925 = vmatprep.subr.mxu0 0.0
        %926 = vmatpush1.msra.mxu0 0.0
        %927 = vmatprep.subr.mxu0 0.0
        %928 = vmatpush1.msra.mxu0 0.0
        %929 = vmatprep.subr.mxu0 0.0
        %930 = vmatpush1.msra.mxu0 0.0
        %931 = vmatprep.subr.mxu0 0.0
        %932 = vmatpush1.msra.mxu0 0.0
        %933 = vmatprep.subr.mxu0 0.0
        %934 = vmatpush1.msra.mxu0 0.0
        %935 = vmatprep.subr.mxu0 0.0
        %936 = vmatpush1.msra.mxu0 0.0
        %937 = vmatprep.mubr.f32.mxu0 0.0
        %938 = vmatmul.mubr.f32.gmra.mrb[0].mxu0 %v850
        %v939 = vpop.f32.mrb[0].mxu0
        %v940 = vadd.f32 0.0, %v939
        %v941 = vpop.f32.mrb[0].mxu0
        %942 = vmatprep.mubr.f32.mxu0 0.0
        %943 = vmatmul.mubr.f32.gmra.mrb[0].mxu0 %v853
        %v944 = vpop.f32.mrb[0].mxu0
        %v945 = vadd.f32 0.0, %v944
        %v946 = vpop.f32.mrb[0].mxu0
        %947 = vmatprep.mubr.f32.mxu0 0.0
        %948 = vmatmul.mubr.f32.gmra.mrb[0].mxu0 %v856
        %v949 = vpop.f32.mrb[0].mxu0
        %v950 = vadd.f32 0.0, %v949
        %v951 = vpop.f32.mrb[0].mxu0
        %952 = vmatprep.mubr.f32.mxu0 0.0
        %953 = vmatmul.mubr.f32.gmra.mrb[0].mxu0 %v859
        %v954 = vpop.f32.mrb[0].mxu0
        %v955 = vadd.f32 0.0, %v954
        %v956 = vpop.f32.mrb[0].mxu0
        %957 = vmatprep.mubr.f32.mxu0 0.0
        %958 = vmatmul.mubr.f32.gmra.mrb[0].mxu0 %v862
        %v959 = vpop.f32.mrb[0].mxu0
        %v960 = vadd.f32 0.0, %v959
        %v961 = vpop.f32.mrb[0].mxu0
        %962 = vmatprep.mubr.f32.mxu0 0.0
        %963 = vmatmul.mubr.f32.gmra.mrb[0].mxu0 %v865
        %v964 = vpop.f32.mrb[0].mxu0
        %v965 = vadd.f32 0.0, %v964
        %v966 = vpop.f32.mrb[0].mxu0
        %967 = vmatprep.mubr.f32.mxu0 0.0
        %968 = vmatmul.mubr.f32.gmra.mrb[0].mxu0 %v868
        %v969 = vpop.f32.mrb[0].mxu0
        %v970 = vadd.f32 0.0, %v969
        %v971 = vpop.f32.mrb[0].mxu0
        %972 = vmatprep.mubr.f32.mxu0 0.0
        %973 = vmatmul.mubr.f32.gmra.mrb[0].mxu0 %v871
        %v974 = vpop.f32.mrb[0].mxu0
        %v975 = vadd.f32 0.0, %v974
        %v976 = vpop.f32.mrb[0].mxu0
        %977 = vdwg.mxu0
        %v979 = vsel %vm191, %v823, 0
        %v982 = vsel %vm191, %v824, 0
        %v985 = vsel %vm191, %v825, 0
        %v988 = vsel %vm191, %v826, 0
        %v991 = vsel %vm191, %v827, 0
        %v994 = vsel %vm191, %v828, 0
        %v997 = vsel %vm191, %v829, 0
        %v1000 = vsel %vm191, %v830, 0
        %1002 = vmatprep.subr.mxu0 0.0
        %1003 = vmatpush1.msra.mxu0 %v832
        %1004 = vmatprep.subr.mxu0 0.0
        %1005 = vmatpush1.msra.mxu0 %v833
        %1006 = vmatprep.subr.mxu0 0.0
        %1007 = vmatpush1.msra.mxu0 %v834
        %1008 = vmatprep.subr.mxu0 0.0
        %1009 = vmatpush1.msra.mxu0 %v835
        %1010 = vmatprep.subr.mxu0 0.0
        %1011 = vmatpush1.msra.mxu0 0.0
        %1012 = vmatprep.subr.mxu0 0.0
        %1013 = vmatpush1.msra.mxu0 0.0
        %1014 = vmatprep.subr.mxu0 0.0
        %1015 = vmatpush1.msra.mxu0 0.0
        %1016 = vmatprep.subr.mxu0 0.0
        %1017 = vmatpush1.msra.mxu0 0.0
        %1018 = vmatprep.subr.mxu0 0.0
        %1019 = vmatpush1.msra.mxu0 0.0
        %1020 = vmatprep.subr.mxu0 0.0
        %1021 = vmatpush1.msra.mxu0 0.0
        %1022 = vmatprep.subr.mxu0 0.0
        %1023 = vmatpush1.msra.mxu0 0.0
        %1024 = vmatprep.subr.mxu0 0.0
        %1025 = vmatpush1.msra.mxu0 0.0
        %1026 = vmatprep.subr.mxu0 0.0
        %1027 = vmatpush1.msra.mxu0 0.0
        %1028 = vmatprep.subr.mxu0 0.0
        %1029 = vmatpush1.msra.mxu0 0.0
        %1030 = vmatprep.subr.mxu0 0.0
        %1031 = vmatpush1.msra.mxu0 0.0
        %1032 = vmatprep.subr.mxu0 0.0
        %1033 = vmatpush1.msra.mxu0 0.0
        %1034 = vmatprep.subr.mxu0 0.0
        %1035 = vmatpush1.msra.mxu0 0.0
        %1036 = vmatprep.subr.mxu0 0.0
        %1037 = vmatpush1.msra.mxu0 0.0
        %1038 = vmatprep.subr.mxu0 0.0
        %1039 = vmatpush1.msra.mxu0 0.0
        %1040 = vmatprep.subr.mxu0 0.0
        %1041 = vmatpush1.msra.mxu0 0.0
        %1042 = vmatprep.subr.mxu0 0.0
        %1043 = vmatpush1.msra.mxu0 0.0
        %1044 = vmatprep.subr.mxu0 0.0
        %1045 = vmatpush1.msra.mxu0 0.0
        %1046 = vmatprep.subr.mxu0 0.0
        %1047 = vmatpush1.msra.mxu0 0.0
        %1048 = vmatprep.subr.mxu0 0.0
        %1049 = vmatpush1.msra.mxu0 0.0
        %1050 = vmatprep.subr.mxu0 0.0
        %1051 = vmatpush1.msra.mxu0 0.0
        %1052 = vmatprep.subr.mxu0 0.0
        %1053 = vmatpush1.msra.mxu0 0.0
        %1054 = vmatprep.subr.mxu0 0.0
        %1055 = vmatpush1.msra.mxu0 0.0
        %1056 = vmatprep.subr.mxu0 0.0
        %1057 = vmatpush1.msra.mxu0 0.0
        %1058 = vmatprep.subr.mxu0 0.0
        %1059 = vmatpush1.msra.mxu0 0.0
        %1060 = vmatprep.subr.mxu0 0.0
        %1061 = vmatpush1.msra.mxu0 0.0
        %1062 = vmatprep.subr.mxu0 0.0
        %1063 = vmatpush1.msra.mxu0 0.0
        %1064 = vmatprep.subr.mxu0 0.0
        %1065 = vmatpush1.msra.mxu0 0.0
        %1066 = vmatprep.mubr.f32.mxu0 0.0
        %1067 = vmatmul.mubr.f32.gmra.mrb[0].mxu0 %v979
        %v1068 = vpop.f32.mrb[0].mxu0
        %v1069 = vadd.f32 %v940, %v1068
        %v1070 = vpop.f32.mrb[0].mxu0
        %1071 = vmatprep.mubr.f32.mxu0 0.0
        %1072 = vmatmul.mubr.f32.gmra.mrb[0].mxu0 %v982
        %v1073 = vpop.f32.mrb[0].mxu0
        %v1074 = vadd.f32 %v945, %v1073
        %v1075 = vpop.f32.mrb[0].mxu0
        %1076 = vmatprep.mubr.f32.mxu0 0.0
        %1077 = vmatmul.mubr.f32.gmra.mrb[0].mxu0 %v985
        %v1078 = vpop.f32.mrb[0].mxu0
        %v1079 = vadd.f32 %v950, %v1078
        %v1080 = vpop.f32.mrb[0].mxu0
        %1081 = vmatprep.mubr.f32.mxu0 0.0
        %1082 = vmatmul.mubr.f32.gmra.mrb[0].mxu0 %v988
        %v1083 = vpop.f32.mrb[0].mxu0
        %v1084 = vadd.f32 %v955, %v1083
        %v1085 = vpop.f32.mrb[0].mxu0
        %1086 = vmatprep.mubr.f32.mxu0 0.0
        %1087 = vmatmul.mubr.f32.gmra.mrb[0].mxu0 %v991
        %v1088 = vpop.f32.mrb[0].mxu0
        %v1089 = vadd.f32 %v960, %v1088
        %v1090 = vpop.f32.mrb[0].mxu0
        %1091 = vmatprep.mubr.f32.mxu0 0.0
        %1092 = vmatmul.mubr.f32.gmra.mrb[0].mxu0 %v994
        %v1093 = vpop.f32.mrb[0].mxu0
        %v1094 = vadd.f32 %v965, %v1093
        %v1095 = vpop.f32.mrb[0].mxu0
        %1096 = vmatprep.mubr.f32.mxu0 0.0
        %1097 = vmatmul.mubr.f32.gmra.mrb[0].mxu0 %v997
        %v1098 = vpop.f32.mrb[0].mxu0
        %v1099 = vadd.f32 %v970, %v1098
        %v1100 = vpop.f32.mrb[0].mxu0
        %1101 = vmatprep.mubr.f32.mxu0 0.0
        %1102 = vmatmul.mubr.f32.gmra.mrb[0].mxu0 %v1000
        %v1103 = vpop.f32.mrb[0].mxu0
        %v1104 = vadd.f32 %v975, %v1103
        %v1105 = vpop.f32.mrb[0].mxu0
        %1106 = vdwg.mxu0
        %v1107 = vld [vmem:[%s450 + $0x1] sm:$0xff]
        %v1108 = vld [vmem:[%s450 + $0x11] sm:$0xff]
        %v1109 = vld [vmem:[%s450 + $0x21] sm:$0xff]
        %v1110 = vld [vmem:[%s450 + $0x31] sm:$0xff]
        %v1111 = vld [vmem:[%s450 + $0x41] sm:$0xff]
        %v1112 = vld [vmem:[%s450 + $0x51] sm:$0xff]
        %v1113 = vld [vmem:[%s450 + $0x61] sm:$0xff]
        %v1114 = vld [vmem:[%s450 + $0x71] sm:$0xff]
        %s1115 = scalar_lea.vmem %s1, 192
        %v1116 = vld [vmem:[%s1115] sm:$0xff]
        %v1117 = vld [vmem:[%s1115 + $0x8] sm:$0xff]
        %v1118 = vld [vmem:[%s1115 + $0x10] sm:$0xff]
        %v1119 = vld [vmem:[%s1115 + $0x18] sm:$0xff]
        %v1121 = vsel %vm191, %v1107, 0
        %v1124 = vsel %vm191, %v1108, 0
        %v1127 = vsel %vm191, %v1109, 0
        %v1130 = vsel %vm191, %v1110, 0
        %v1133 = vsel %vm191, %v1111, 0
        %v1136 = vsel %vm191, %v1112, 0
        %v1139 = vsel %vm191, %v1113, 0
        %v1142 = vsel %vm191, %v1114, 0
        %1144 = vmatprep.subr.mxu0 0.0
        %1145 = vmatpush1.msra.mxu0 %v1116
        %1146 = vmatprep.subr.mxu0 0.0
        %1147 = vmatpush1.msra.mxu0 %v1117
        %1148 = vmatprep.subr.mxu0 0.0
        %1149 = vmatpush1.msra.mxu0 %v1118
        %1150 = vmatprep.subr.mxu0 0.0
        %1151 = vmatpush1.msra.mxu0 %v1119
        %1152 = vmatprep.subr.mxu0 0.0
        %1153 = vmatpush1.msra.mxu0 0.0
        %1154 = vmatprep.subr.mxu0 0.0
        %1155 = vmatpush1.msra.mxu0 0.0
        %1156 = vmatprep.subr.mxu0 0.0
        %1157 = vmatpush1.msra.mxu0 0.0
        %1158 = vmatprep.subr.mxu0 0.0
        %1159 = vmatpush1.msra.mxu0 0.0
        %1160 = vmatprep.subr.mxu0 0.0
        %1161 = vmatpush1.msra.mxu0 0.0
        %1162 = vmatprep.subr.mxu0 0.0
        %1163 = vmatpush1.msra.mxu0 0.0
        %1164 = vmatprep.subr.mxu0 0.0
        %1165 = vmatpush1.msra.mxu0 0.0
        %1166 = vmatprep.subr.mxu0 0.0
        %1167 = vmatpush1.msra.mxu0 0.0
        %1168 = vmatprep.subr.mxu0 0.0
        %1169 = vmatpush1.msra.mxu0 0.0
        %1170 = vmatprep.subr.mxu0 0.0
        %1171 = vmatpush1.msra.mxu0 0.0
        %1172 = vmatprep.subr.mxu0 0.0
        %1173 = vmatpush1.msra.mxu0 0.0
        %1174 = vmatprep.subr.mxu0 0.0
        %1175 = vmatpush1.msra.mxu0 0.0
        %1176 = vmatprep.subr.mxu0 0.0
        %1177 = vmatpush1.msra.mxu0 0.0
        %1178 = vmatprep.subr.mxu0 0.0
        %1179 = vmatpush1.msra.mxu0 0.0
        %1180 = vmatprep.subr.mxu0 0.0
        %1181 = vmatpush1.msra.mxu0 0.0
        %1182 = vmatprep.subr.mxu0 0.0
        %1183 = vmatpush1.msra.mxu0 0.0
        %1184 = vmatprep.subr.mxu0 0.0
        %1185 = vmatpush1.msra.mxu0 0.0
        %1186 = vmatprep.subr.mxu0 0.0
        %1187 = vmatpush1.msra.mxu0 0.0
        %1188 = vmatprep.subr.mxu0 0.0
        %1189 = vmatpush1.msra.mxu0 0.0
        %1190 = vmatprep.subr.mxu0 0.0
        %1191 = vmatpush1.msra.mxu0 0.0
        %1192 = vmatprep.subr.mxu0 0.0
        %1193 = vmatpush1.msra.mxu0 0.0
        %1194 = vmatprep.subr.mxu0 0.0
        %1195 = vmatpush1.msra.mxu0 0.0
        %1196 = vmatprep.subr.mxu0 0.0
        %1197 = vmatpush1.msra.mxu0 0.0
        %1198 = vmatprep.subr.mxu0 0.0
        %1199 = vmatpush1.msra.mxu0 0.0
        %1200 = vmatprep.subr.mxu0 0.0
        %1201 = vmatpush1.msra.mxu0 0.0
        %1202 = vmatprep.subr.mxu0 0.0
        %1203 = vmatpush1.msra.mxu0 0.0
        %1204 = vmatprep.subr.mxu0 0.0
        %1205 = vmatpush1.msra.mxu0 0.0
        %1206 = vmatprep.subr.mxu0 0.0
        %1207 = vmatpush1.msra.mxu0 0.0
        %1208 = vmatprep.mubr.f32.mxu0 0.0
        %1209 = vmatmul.mubr.f32.gmra.mrb[0].mxu0 %v1121
        %v1210 = vpop.f32.mrb[0].mxu0
        %v1211 = vadd.f32 0.0, %v1210
        %v1212 = vpop.f32.mrb[0].mxu0
        %1213 = vmatprep.mubr.f32.mxu0 0.0
        %1214 = vmatmul.mubr.f32.gmra.mrb[0].mxu0 %v1124
        %v1215 = vpop.f32.mrb[0].mxu0
        %v1216 = vadd.f32 0.0, %v1215
        %v1217 = vpop.f32.mrb[0].mxu0
        %1218 = vmatprep.mubr.f32.mxu0 0.0
        %1219 = vmatmul.mubr.f32.gmra.mrb[0].mxu0 %v1127
        %v1220 = vpop.f32.mrb[0].mxu0
        %v1221 = vadd.f32 0.0, %v1220
        %v1222 = vpop.f32.mrb[0].mxu0
        %1223 = vmatprep.mubr.f32.mxu0 0.0
        %1224 = vmatmul.mubr.f32.gmra.mrb[0].mxu0 %v1130
        %v1225 = vpop.f32.mrb[0].mxu0
        %v1226 = vadd.f32 0.0, %v1225
        %v1227 = vpop.f32.mrb[0].mxu0
        %1228 = vmatprep.mubr.f32.mxu0 0.0
        %1229 = vmatmul.mubr.f32.gmra.mrb[0].mxu0 %v1133
        %v1230 = vpop.f32.mrb[0].mxu0
        %v1231 = vadd.f32 0.0, %v1230
        %v1232 = vpop.f32.mrb[0].mxu0
        %1233 = vmatprep.mubr.f32.mxu0 0.0
        %1234 = vmatmul.mubr.f32.gmra.mrb[0].mxu0 %v1136
        %v1235 = vpop.f32.mrb[0].mxu0
        %v1236 = vadd.f32 0.0, %v1235
        %v1237 = vpop.f32.mrb[0].mxu0
        %1238 = vmatprep.mubr.f32.mxu0 0.0
        %1239 = vmatmul.mubr.f32.gmra.mrb[0].mxu0 %v1139
        %v1240 = vpop.f32.mrb[0].mxu0
        %v1241 = vadd.f32 0.0, %v1240
        %v1242 = vpop.f32.mrb[0].mxu0
        %1243 = vmatprep.mubr.f32.mxu0 0.0
        %1244 = vmatmul.mubr.f32.gmra.mrb[0].mxu0 %v1142
        %v1245 = vpop.f32.mrb[0].mxu0
        %v1246 = vadd.f32 0.0, %v1245
        %v1247 = vpop.f32.mrb[0].mxu0
        %1248 = vdwg.mxu0
        %v1249 = vadd.f32 %v1069, %v1211
        %v1250 = vadd.f32 %v1074, %v1216
        %v1251 = vadd.f32 %v1079, %v1221
        %v1252 = vadd.f32 %v1084, %v1226
        %v1253 = vadd.f32 %v1089, %v1231
        %v1254 = vadd.f32 %v1094, %v1236
        %v1255 = vadd.f32 %v1099, %v1241
        %v1256 = vadd.f32 %v1104, %v1246
        %v1257 = vld [vmem:[%s450 + $0x2] sm:$0xff]
        %v1258 = vld [vmem:[%s450 + $0x12] sm:$0xff]
        %v1259 = vld [vmem:[%s450 + $0x22] sm:$0xff]
        %v1260 = vld [vmem:[%s450 + $0x32] sm:$0xff]
        %v1261 = vld [vmem:[%s450 + $0x42] sm:$0xff]
        %v1262 = vld [vmem:[%s450 + $0x52] sm:$0xff]
        %v1263 = vld [vmem:[%s450 + $0x62] sm:$0xff]
        %v1264 = vld [vmem:[%s450 + $0x72] sm:$0xff]
        %s1265 = scalar_lea.vmem %s1, 224
        %v1266 = vld [vmem:[%s1265] sm:$0xff]
        %v1267 = vld [vmem:[%s1265 + $0x8] sm:$0xff]
        %v1268 = vld [vmem:[%s1265 + $0x10] sm:$0xff]
        %v1269 = vld [vmem:[%s1265 + $0x18] sm:$0xff]
        %v1271 = vsel %vm191, %v1257, 0
        %v1274 = vsel %vm191, %v1258, 0
        %v1277 = vsel %vm191, %v1259, 0
        %v1280 = vsel %vm191, %v1260, 0
        %v1283 = vsel %vm191, %v1261, 0
        %v1286 = vsel %vm191, %v1262, 0
        %v1289 = vsel %vm191, %v1263, 0
        %v1292 = vsel %vm191, %v1264, 0
        %1294 = vmatprep.subr.mxu0 0.0
        %1295 = vmatpush1.msra.mxu0 %v1266
        %1296 = vmatprep.subr.mxu0 0.0
        %1297 = vmatpush1.msra.mxu0 %v1267
        %1298 = vmatprep.subr.mxu0 0.0
        %1299 = vmatpush1.msra.mxu0 %v1268
        %1300 = vmatprep.subr.mxu0 0.0
        %1301 = vmatpush1.msra.mxu0 %v1269
        %1302 = vmatprep.subr.mxu0 0.0
        %1303 = vmatpush1.msra.mxu0 0.0
        %1304 = vmatprep.subr.mxu0 0.0
        %1305 = vmatpush1.msra.mxu0 0.0
        %1306 = vmatprep.subr.mxu0 0.0
        %1307 = vmatpush1.msra.mxu0 0.0
        %1308 = vmatprep.subr.mxu0 0.0
        %1309 = vmatpush1.msra.mxu0 0.0
        %1310 = vmatprep.subr.mxu0 0.0
        %1311 = vmatpush1.msra.mxu0 0.0
        %1312 = vmatprep.subr.mxu0 0.0
        %1313 = vmatpush1.msra.mxu0 0.0
        %1314 = vmatprep.subr.mxu0 0.0
        %1315 = vmatpush1.msra.mxu0 0.0
        %1316 = vmatprep.subr.mxu0 0.0
        %1317 = vmatpush1.msra.mxu0 0.0
        %1318 = vmatprep.subr.mxu0 0.0
        %1319 = vmatpush1.msra.mxu0 0.0
        %1320 = vmatprep.subr.mxu0 0.0
        %1321 = vmatpush1.msra.mxu0 0.0
        %1322 = vmatprep.subr.mxu0 0.0
        %1323 = vmatpush1.msra.mxu0 0.0
        %1324 = vmatprep.subr.mxu0 0.0
        %1325 = vmatpush1.msra.mxu0 0.0
        %1326 = vmatprep.subr.mxu0 0.0
        %1327 = vmatpush1.msra.mxu0 0.0
        %1328 = vmatprep.subr.mxu0 0.0
        %1329 = vmatpush1.msra.mxu0 0.0
        %1330 = vmatprep.subr.mxu0 0.0
        %1331 = vmatpush1.msra.mxu0 0.0
        %1332 = vmatprep.subr.mxu0 0.0
        %1333 = vmatpush1.msra.mxu0 0.0
        %1334 = vmatprep.subr.mxu0 0.0
        %1335 = vmatpush1.msra.mxu0 0.0
        %1336 = vmatprep.subr.mxu0 0.0
        %1337 = vmatpush1.msra.mxu0 0.0
        %1338 = vmatprep.subr.mxu0 0.0
        %1339 = vmatpush1.msra.mxu0 0.0
        %1340 = vmatprep.subr.mxu0 0.0
        %1341 = vmatpush1.msra.mxu0 0.0
        %1342 = vmatprep.subr.mxu0 0.0
        %1343 = vmatpush1.msra.mxu0 0.0
        %1344 = vmatprep.subr.mxu0 0.0
        %1345 = vmatpush1.msra.mxu0 0.0
        %1346 = vmatprep.subr.mxu0 0.0
        %1347 = vmatpush1.msra.mxu0 0.0
        %1348 = vmatprep.subr.mxu0 0.0
        %1349 = vmatpush1.msra.mxu0 0.0
        %1350 = vmatprep.subr.mxu0 0.0
        %1351 = vmatpush1.msra.mxu0 0.0
        %1352 = vmatprep.subr.mxu0 0.0
        %1353 = vmatpush1.msra.mxu0 0.0
        %1354 = vmatprep.subr.mxu0 0.0
        %1355 = vmatpush1.msra.mxu0 0.0
        %1356 = vmatprep.subr.mxu0 0.0
        %1357 = vmatpush1.msra.mxu0 0.0
        %1358 = vmatprep.mubr.f32.mxu0 0.0
        %1359 = vmatmul.mubr.f32.gmra.mrb[0].mxu0 %v1271
        %v1360 = vpop.f32.mrb[0].mxu0
        %v1361 = vadd.f32 0.0, %v1360
        %v1362 = vpop.f32.mrb[0].mxu0
        %1363 = vmatprep.mubr.f32.mxu0 0.0
        %1364 = vmatmul.mubr.f32.gmra.mrb[0].mxu0 %v1274
        %v1365 = vpop.f32.mrb[0].mxu0
        %v1366 = vadd.f32 0.0, %v1365
        %v1367 = vpop.f32.mrb[0].mxu0
        %1368 = vmatprep.mubr.f32.mxu0 0.0
        %1369 = vmatmul.mubr.f32.gmra.mrb[0].mxu0 %v1277
        %v1370 = vpop.f32.mrb[0].mxu0
        %v1371 = vadd.f32 0.0, %v1370
        %v1372 = vpop.f32.mrb[0].mxu0
        %1373 = vmatprep.mubr.f32.mxu0 0.0
        %1374 = vmatmul.mubr.f32.gmra.mrb[0].mxu0 %v1280
        %v1375 = vpop.f32.mrb[0].mxu0
        %v1376 = vadd.f32 0.0, %v1375
        %v1377 = vpop.f32.mrb[0].mxu0
        %1378 = vmatprep.mubr.f32.mxu0 0.0
        %1379 = vmatmul.mubr.f32.gmra.mrb[0].mxu0 %v1283
        %v1380 = vpop.f32.mrb[0].mxu0
        %v1381 = vadd.f32 0.0, %v1380
        %v1382 = vpop.f32.mrb[0].mxu0
        %1383 = vmatprep.mubr.f32.mxu0 0.0
        %1384 = vmatmul.mubr.f32.gmra.mrb[0].mxu0 %v1286
        %v1385 = vpop.f32.mrb[0].mxu0
        %v1386 = vadd.f32 0.0, %v1385
        %v1387 = vpop.f32.mrb[0].mxu0
        %1388 = vmatprep.mubr.f32.mxu0 0.0
        %1389 = vmatmul.mubr.f32.gmra.mrb[0].mxu0 %v1289
        %v1390 = vpop.f32.mrb[0].mxu0
        %v1391 = vadd.f32 0.0, %v1390
        %v1392 = vpop.f32.mrb[0].mxu0
        %1393 = vmatprep.mubr.f32.mxu0 0.0
        %1394 = vmatmul.mubr.f32.gmra.mrb[0].mxu0 %v1292
        %v1395 = vpop.f32.mrb[0].mxu0
        %v1396 = vadd.f32 0.0, %v1395
        %v1397 = vpop.f32.mrb[0].mxu0
        %1398 = vdwg.mxu0
        %v1399 = vadd.f32 %v1249, %v1361
        %v1400 = vadd.f32 %v1250, %v1366
        %v1401 = vadd.f32 %v1251, %v1371
        %v1402 = vadd.f32 %v1252, %v1376
        %v1403 = vadd.f32 %v1253, %v1381
        %v1404 = vadd.f32 %v1254, %v1386
        %v1405 = vadd.f32 %v1255, %v1391
        %v1406 = vadd.f32 %v1256, %v1396
        %v1407 = vld [vmem:[%s2] sm:$0x1]
        %v1409 = vlaneseq
        %v1410 = vshrl.u32 %v1409, 7
        %v1411 = vsub.s32 0, %v1410
        %v1412 = vrot.slane %v1407, %v1411
        %v1414 = vadd.f32 %v1399, %v1412
        %v1415 = vadd.f32 %v1400, %v1412
        %v1416 = vadd.f32 %v1401, %v1412
        %v1417 = vadd.f32 %v1402, %v1412
        %v1418 = vadd.f32 %v1403, %v1412
        %v1419 = vadd.f32 %v1404, %v1412
        %v1420 = vadd.f32 %v1405, %v1412
        %v1421 = vadd.f32 %v1406, %v1412
        %v1422 = vsub.f32 0.0, %v1414
        %v1423 = vsub.f32 0.0, %v1415
        %v1424 = vsub.f32 0.0, %v1416
        %v1425 = vsub.f32 0.0, %v1417
        %v1426 = vsub.f32 0.0, %v1418
        %v1427 = vsub.f32 0.0, %v1419
        %v1428 = vsub.f32 0.0, %v1420
        %v1429 = vsub.f32 0.0, %v1421
        %v1430 = vmul.f32 %v1422, 1.442695
        %v1431 = vpow.pop %v1430
        %v1432 = vmul.f32 %v1423, 1.442695
        %v1433 = vpow.pop %v1432
        %v1434 = vmul.f32 %v1424, 1.442695
        %v1435 = vpow.pop %v1434
        %v1436 = vmul.f32 %v1425, 1.442695
        %v1437 = vpow.pop %v1436
        %v1438 = vmul.f32 %v1426, 1.442695
        %v1439 = vpow.pop %v1438
        %v1440 = vmul.f32 %v1427, 1.442695
        %v1441 = vpow.pop %v1440
        %v1442 = vmul.f32 %v1428, 1.442695
        %v1443 = vpow.pop %v1442
        %v1444 = vmul.f32 %v1429, 1.442695
        %v1445 = vpow.pop %v1444
        %v1446 = vadd.f32 %v1431, 1.0
        %v1447 = vadd.f32 %v1433, 1.0
        %v1448 = vadd.f32 %v1435, 1.0
        %v1449 = vadd.f32 %v1437, 1.0
        %v1450 = vadd.f32 %v1439, 1.0
        %v1451 = vadd.f32 %v1441, 1.0
        %v1452 = vadd.f32 %v1443, 1.0
        %v1453 = vadd.f32 %v1445, 1.0
        %v1454 = vrcp.pop %v1446
        %v1455 = vmul.f32 1.0, %v1454
        %v1456 = vrcp.pop %v1447
        %v1457 = vmul.f32 1.0, %v1456
        %v1458 = vrcp.pop %v1448
        %v1459 = vmul.f32 1.0, %v1458
        %v1460 = vrcp.pop %v1449
        %v1461 = vmul.f32 1.0, %v1460
        %v1462 = vrcp.pop %v1450
        %v1463 = vmul.f32 1.0, %v1462
        %v1464 = vrcp.pop %v1451
        %v1465 = vmul.f32 1.0, %v1464
        %v1466 = vrcp.pop %v1452
        %v1467 = vmul.f32 1.0, %v1466
        %v1468 = vrcp.pop %v1453
        %v1469 = vmul.f32 1.0, %v1468
        %s1470 = scalar_lea.vmem %s159, 64 [#allocation2]
        %1471 = vst.msk [vmem:[%s1470] sm:$0xff] %vm814, %v1455
        %1472 = vst.msk [vmem:[%s1470 + $0x8] sm:$0xff] %vm814, %v1457
        %1473 = vst.msk [vmem:[%s1470 + $0x10] sm:$0xff] %vm814, %v1459
        %1474 = vst.msk [vmem:[%s1470 + $0x18] sm:$0xff] %vm814, %v1461
        %1475 = vst.msk [vmem:[%s1470 + $0x20] sm:$0xff] %vm814, %v1463
        %1476 = vst.msk [vmem:[%s1470 + $0x28] sm:$0xff] %vm814, %v1465
        %1477 = vst.msk [vmem:[%s1470 + $0x30] sm:$0xff] %vm814, %v1467
        %1478 = vst.msk [vmem:[%s1470 + $0x38] sm:$0xff] %vm814, %v1469
        %v1479 = vld [vmem:[%s450] sm:$0xff]
        %v1480 = vld [vmem:[%s450 + $0x10] sm:$0xff]
        %v1481 = vld [vmem:[%s450 + $0x20] sm:$0xff]
        %v1482 = vld [vmem:[%s450 + $0x30] sm:$0xff]
        %v1483 = vld [vmem:[%s450 + $0x40] sm:$0xff]
        %v1484 = vld [vmem:[%s450 + $0x50] sm:$0xff]
        %v1485 = vld [vmem:[%s450 + $0x60] sm:$0xff]
        %v1486 = vld [vmem:[%s450 + $0x70] sm:$0xff]
        %s1487 = scalar_lea.vmem %s1, 256
        %v1488 = vld [vmem:[%s1487] sm:$0xff]
        %v1489 = vld [vmem:[%s1487 + $0x8] sm:$0xff]
        %v1490 = vld [vmem:[%s1487 + $0x10] sm:$0xff]
        %v1491 = vld [vmem:[%s1487 + $0x18] sm:$0xff]
        %v1492 = vld [vmem:[%s450 + $0x1] sm:$0xff]
        %v1493 = vld [vmem:[%s450 + $0x11] sm:$0xff]
        %v1494 = vld [vmem:[%s450 + $0x21] sm:$0xff]
        %v1495 = vld [vmem:[%s450 + $0x31] sm:$0xff]
        %v1496 = vld [vmem:[%s450 + $0x41] sm:$0xff]
        %v1497 = vld [vmem:[%s450 + $0x51] sm:$0xff]
        %v1498 = vld [vmem:[%s450 + $0x61] sm:$0xff]
        %v1499 = vld [vmem:[%s450 + $0x71] sm:$0xff]
        %s1500 = scalar_lea.vmem %s1, 288
        %v1501 = vld [vmem:[%s1500] sm:$0xff]
        %v1502 = vld [vmem:[%s1500 + $0x8] sm:$0xff]
        %v1503 = vld [vmem:[%s1500 + $0x10] sm:$0xff]
        %v1504 = vld [vmem:[%s1500 + $0x18] sm:$0xff]
        %v1506 = vsel %vm191, %v1492, 0
        %v1509 = vsel %vm191, %v1493, 0
        %v1512 = vsel %vm191, %v1494, 0
        %v1515 = vsel %vm191, %v1495, 0
        %v1518 = vsel %vm191, %v1496, 0
        %v1521 = vsel %vm191, %v1497, 0
        %v1524 = vsel %vm191, %v1498, 0
        %v1527 = vsel %vm191, %v1499, 0
        %1529 = vmatprep.subr.mxu0 0.0
        %1530 = vmatpush1.msra.mxu0 %v1501
        %1531 = vmatprep.subr.mxu0 0.0
        %1532 = vmatpush1.msra.mxu0 %v1502
        %1533 = vmatprep.subr.mxu0 0.0
        %1534 = vmatpush1.msra.mxu0 %v1503
        %1535 = vmatprep.subr.mxu0 0.0
        %1536 = vmatpush1.msra.mxu0 %v1504
        %1537 = vmatprep.subr.mxu0 0.0
        %1538 = vmatpush1.msra.mxu0 0.0
        %1539 = vmatprep.subr.mxu0 0.0
        %1540 = vmatpush1.msra.mxu0 0.0
        %1541 = vmatprep.subr.mxu0 0.0
        %1542 = vmatpush1.msra.mxu0 0.0
        %1543 = vmatprep.subr.mxu0 0.0
        %1544 = vmatpush1.msra.mxu0 0.0
        %1545 = vmatprep.subr.mxu0 0.0
        %1546 = vmatpush1.msra.mxu0 0.0
        %1547 = vmatprep.subr.mxu0 0.0
        %1548 = vmatpush1.msra.mxu0 0.0
        %1549 = vmatprep.subr.mxu0 0.0
        %1550 = vmatpush1.msra.mxu0 0.0
        %1551 = vmatprep.subr.mxu0 0.0
        %1552 = vmatpush1.msra.mxu0 0.0
        %1553 = vmatprep.subr.mxu0 0.0
        %1554 = vmatpush1.msra.mxu0 0.0
        %1555 = vmatprep.subr.mxu0 0.0
        %1556 = vmatpush1.msra.mxu0 0.0
        %1557 = vmatprep.subr.mxu0 0.0
        %1558 = vmatpush1.msra.mxu0 0.0
        %1559 = vmatprep.subr.mxu0 0.0
        %1560 = vmatpush1.msra.mxu0 0.0
        %1561 = vmatprep.subr.mxu0 0.0
        %1562 = vmatpush1.msra.mxu0 0.0
        %1563 = vmatprep.subr.mxu0 0.0
        %1564 = vmatpush1.msra.mxu0 0.0
        %1565 = vmatprep.subr.mxu0 0.0
        %1566 = vmatpush1.msra.mxu0 0.0
        %1567 = vmatprep.subr.mxu0 0.0
        %1568 = vmatpush1.msra.mxu0 0.0
        %1569 = vmatprep.subr.mxu0 0.0
        %1570 = vmatpush1.msra.mxu0 0.0
        %1571 = vmatprep.subr.mxu0 0.0
        %1572 = vmatpush1.msra.mxu0 0.0
        %1573 = vmatprep.subr.mxu0 0.0
        %1574 = vmatpush1.msra.mxu0 0.0
        %1575 = vmatprep.subr.mxu0 0.0
        %1576 = vmatpush1.msra.mxu0 0.0
        %1577 = vmatprep.subr.mxu0 0.0
        %1578 = vmatpush1.msra.mxu0 0.0
        %1579 = vmatprep.subr.mxu0 0.0
        %1580 = vmatpush1.msra.mxu0 0.0
        %1581 = vmatprep.subr.mxu0 0.0
        %1582 = vmatpush1.msra.mxu0 0.0
        %1583 = vmatprep.subr.mxu0 0.0
        %1584 = vmatpush1.msra.mxu0 0.0
        %1585 = vmatprep.subr.mxu0 0.0
        %1586 = vmatpush1.msra.mxu0 0.0
        %1587 = vmatprep.subr.mxu0 0.0
        %1588 = vmatpush1.msra.mxu0 0.0
        %1589 = vmatprep.subr.mxu0 0.0
        %1590 = vmatpush1.msra.mxu0 0.0
        %1591 = vmatprep.subr.mxu0 0.0
        %1592 = vmatpush1.msra.mxu0 0.0
        %1593 = vmatprep.mubr.f32.mxu0 0.0
        %1594 = vmatmul.mubr.f32.gmra.mrb[0].mxu0 %v1506
        %v1595 = vpop.f32.mrb[0].mxu0
        %v1596 = vadd.f32 0.0, %v1595
        %v1597 = vpop.f32.mrb[0].mxu0
        %1598 = vmatprep.mubr.f32.mxu0 0.0
        %1599 = vmatmul.mubr.f32.gmra.mrb[0].mxu0 %v1509
        %v1600 = vpop.f32.mrb[0].mxu0
        %v1601 = vadd.f32 0.0, %v1600
        %v1602 = vpop.f32.mrb[0].mxu0
        %1603 = vmatprep.mubr.f32.mxu0 0.0
        %1604 = vmatmul.mubr.f32.gmra.mrb[0].mxu0 %v1512
        %v1605 = vpop.f32.mrb[0].mxu0
        %v1606 = vadd.f32 0.0, %v1605
        %v1607 = vpop.f32.mrb[0].mxu0
        %1608 = vmatprep.mubr.f32.mxu0 0.0
        %1609 = vmatmul.mubr.f32.gmra.mrb[0].mxu0 %v1515
        %v1610 = vpop.f32.mrb[0].mxu0
        %v1611 = vadd.f32 0.0, %v1610
        %v1612 = vpop.f32.mrb[0].mxu0
        %1613 = vmatprep.mubr.f32.mxu0 0.0
        %1614 = vmatmul.mubr.f32.gmra.mrb[0].mxu0 %v1518
        %v1615 = vpop.f32.mrb[0].mxu0
        %v1616 = vadd.f32 0.0, %v1615
        %v1617 = vpop.f32.mrb[0].mxu0
        %1618 = vmatprep.mubr.f32.mxu0 0.0
        %1619 = vmatmul.mubr.f32.gmra.mrb[0].mxu0 %v1521
        %v1620 = vpop.f32.mrb[0].mxu0
        %v1621 = vadd.f32 0.0, %v1620
        %v1622 = vpop.f32.mrb[0].mxu0
        %1623 = vmatprep.mubr.f32.mxu0 0.0
        %1624 = vmatmul.mubr.f32.gmra.mrb[0].mxu0 %v1524
        %v1625 = vpop.f32.mrb[0].mxu0
        %v1626 = vadd.f32 0.0, %v1625
        %v1627 = vpop.f32.mrb[0].mxu0
        %1628 = vmatprep.mubr.f32.mxu0 0.0
        %1629 = vmatmul.mubr.f32.gmra.mrb[0].mxu0 %v1527
        %v1630 = vpop.f32.mrb[0].mxu0
        %v1631 = vadd.f32 0.0, %v1630
        %v1632 = vpop.f32.mrb[0].mxu0
        %1633 = vdwg.mxu0
        %v1635 = vsel %vm191, %v1479, 0
        %v1638 = vsel %vm191, %v1480, 0
        %v1641 = vsel %vm191, %v1481, 0
        %v1644 = vsel %vm191, %v1482, 0
        %v1647 = vsel %vm191, %v1483, 0
        %v1650 = vsel %vm191, %v1484, 0
        %v1653 = vsel %vm191, %v1485, 0
        %v1656 = vsel %vm191, %v1486, 0
        %1658 = vmatprep.subr.mxu0 0.0
        %1659 = vmatpush1.msra.mxu0 %v1488
        %1660 = vmatprep.subr.mxu0 0.0
        %1661 = vmatpush1.msra.mxu0 %v1489
        %1662 = vmatprep.subr.mxu0 0.0
        %1663 = vmatpush1.msra.mxu0 %v1490
        %1664 = vmatprep.subr.mxu0 0.0
        %1665 = vmatpush1.msra.mxu0 %v1491
        %1666 = vmatprep.subr.mxu0 0.0
        %1667 = vmatpush1.msra.mxu0 0.0
        %1668 = vmatprep.subr.mxu0 0.0
        %1669 = vmatpush1.msra.mxu0 0.0
        %1670 = vmatprep.subr.mxu0 0.0
        %1671 = vmatpush1.msra.mxu0 0.0
        %1672 = vmatprep.subr.mxu0 0.0
        %1673 = vmatpush1.msra.mxu0 0.0
        %1674 = vmatprep.subr.mxu0 0.0
        %1675 = vmatpush1.msra.mxu0 0.0
        %1676 = vmatprep.subr.mxu0 0.0
        %1677 = vmatpush1.msra.mxu0 0.0
        %1678 = vmatprep.subr.mxu0 0.0
        %1679 = vmatpush1.msra.mxu0 0.0
        %1680 = vmatprep.subr.mxu0 0.0
        %1681 = vmatpush1.msra.mxu0 0.0
        %1682 = vmatprep.subr.mxu0 0.0
        %1683 = vmatpush1.msra.mxu0 0.0
        %1684 = vmatprep.subr.mxu0 0.0
        %1685 = vmatpush1.msra.mxu0 0.0
        %1686 = vmatprep.subr.mxu0 0.0
        %1687 = vmatpush1.msra.mxu0 0.0
        %1688 = vmatprep.subr.mxu0 0.0
        %1689 = vmatpush1.msra.mxu0 0.0
        %1690 = vmatprep.subr.mxu0 0.0
        %1691 = vmatpush1.msra.mxu0 0.0
        %1692 = vmatprep.subr.mxu0 0.0
        %1693 = vmatpush1.msra.mxu0 0.0
        %1694 = vmatprep.subr.mxu0 0.0
        %1695 = vmatpush1.msra.mxu0 0.0
        %1696 = vmatprep.subr.mxu0 0.0
        %1697 = vmatpush1.msra.mxu0 0.0
        %1698 = vmatprep.subr.mxu0 0.0
        %1699 = vmatpush1.msra.mxu0 0.0
        %1700 = vmatprep.subr.mxu0 0.0
        %1701 = vmatpush1.msra.mxu0 0.0
        %1702 = vmatprep.subr.mxu0 0.0
        %1703 = vmatpush1.msra.mxu0 0.0
        %1704 = vmatprep.subr.mxu0 0.0
        %1705 = vmatpush1.msra.mxu0 0.0
        %1706 = vmatprep.subr.mxu0 0.0
        %1707 = vmatpush1.msra.mxu0 0.0
        %1708 = vmatprep.subr.mxu0 0.0
        %1709 = vmatpush1.msra.mxu0 0.0
        %1710 = vmatprep.subr.mxu0 0.0
        %1711 = vmatpush1.msra.mxu0 0.0
        %1712 = vmatprep.subr.mxu0 0.0
        %1713 = vmatpush1.msra.mxu0 0.0
        %1714 = vmatprep.subr.mxu0 0.0
        %1715 = vmatpush1.msra.mxu0 0.0
        %1716 = vmatprep.subr.mxu0 0.0
        %1717 = vmatpush1.msra.mxu0 0.0
        %1718 = vmatprep.subr.mxu0 0.0
        %1719 = vmatpush1.msra.mxu0 0.0
        %1720 = vmatprep.subr.mxu0 0.0
        %1721 = vmatpush1.msra.mxu0 0.0
        %1722 = vmatprep.mubr.f32.mxu0 0.0
        %1723 = vmatmul.mubr.f32.gmra.mrb[0].mxu0 %v1635
        %v1724 = vpop.f32.mrb[0].mxu0
        %v1725 = vadd.f32 %v1596, %v1724
        %v1726 = vpop.f32.mrb[0].mxu0
        %1727 = vmatprep.mubr.f32.mxu0 0.0
        %1728 = vmatmul.mubr.f32.gmra.mrb[0].mxu0 %v1638
        %v1729 = vpop.f32.mrb[0].mxu0
        %v1730 = vadd.f32 %v1601, %v1729
        %v1731 = vpop.f32.mrb[0].mxu0
        %1732 = vmatprep.mubr.f32.mxu0 0.0
        %1733 = vmatmul.mubr.f32.gmra.mrb[0].mxu0 %v1641
        %v1734 = vpop.f32.mrb[0].mxu0
        %v1735 = vadd.f32 %v1606, %v1734
        %v1736 = vpop.f32.mrb[0].mxu0
        %1737 = vmatprep.mubr.f32.mxu0 0.0
        %1738 = vmatmul.mubr.f32.gmra.mrb[0].mxu0 %v1644
        %v1739 = vpop.f32.mrb[0].mxu0
        %v1740 = vadd.f32 %v1611, %v1739
        %v1741 = vpop.f32.mrb[0].mxu0
        %1742 = vmatprep.mubr.f32.mxu0 0.0
        %1743 = vmatmul.mubr.f32.gmra.mrb[0].mxu0 %v1647
        %v1744 = vpop.f32.mrb[0].mxu0
        %v1745 = vadd.f32 %v1616, %v1744
        %v1746 = vpop.f32.mrb[0].mxu0
        %1747 = vmatprep.mubr.f32.mxu0 0.0
        %1748 = vmatmul.mubr.f32.gmra.mrb[0].mxu0 %v1650
        %v1749 = vpop.f32.mrb[0].mxu0
        %v1750 = vadd.f32 %v1621, %v1749
        %v1751 = vpop.f32.mrb[0].mxu0
        %1752 = vmatprep.mubr.f32.mxu0 0.0
        %1753 = vmatmul.mubr.f32.gmra.mrb[0].mxu0 %v1653
        %v1754 = vpop.f32.mrb[0].mxu0
        %v1755 = vadd.f32 %v1626, %v1754
        %v1756 = vpop.f32.mrb[0].mxu0
        %1757 = vmatprep.mubr.f32.mxu0 0.0
        %1758 = vmatmul.mubr.f32.gmra.mrb[0].mxu0 %v1656
        %v1759 = vpop.f32.mrb[0].mxu0
        %v1760 = vadd.f32 %v1631, %v1759
        %v1761 = vpop.f32.mrb[0].mxu0
        %1762 = vdwg.mxu0
        %s1763 = scalar_lea.vmem %s164, 32
        %v1764 = vld [vmem:[%s1763] sm:$0xff]
        %v1765 = vld [vmem:[%s1763 + $0x10] sm:$0xff]
        %v1766 = vld [vmem:[%s1763 + $0x20] sm:$0xff]
        %v1767 = vld [vmem:[%s1763 + $0x30] sm:$0xff]
        %v1768 = vld [vmem:[%s1763 + $0x40] sm:$0xff]
        %v1769 = vld [vmem:[%s1763 + $0x50] sm:$0xff]
        %v1770 = vld [vmem:[%s1763 + $0x60] sm:$0xff]
        %v1771 = vld [vmem:[%s1763 + $0x70] sm:$0xff]
        %s1772 = scalar_lea.vmem %s1, 320
        %v1773 = vld [vmem:[%s1772] sm:$0xff]
        %v1774 = vld [vmem:[%s1772 + $0x8] sm:$0xff]
        %v1775 = vld [vmem:[%s1772 + $0x10] sm:$0xff]
        %v1776 = vld [vmem:[%s1772 + $0x18] sm:$0xff]
        %v1778 = vsel %vm191, %v1764, 0
        %v1781 = vsel %vm191, %v1765, 0
        %v1784 = vsel %vm191, %v1766, 0
        %v1787 = vsel %vm191, %v1767, 0
        %v1790 = vsel %vm191, %v1768, 0
        %v1793 = vsel %vm191, %v1769, 0
        %v1796 = vsel %vm191, %v1770, 0
        %v1799 = vsel %vm191, %v1771, 0
        %1801 = vmatprep.subr.mxu0 0.0
        %1802 = vmatpush1.msra.mxu0 %v1773
        %1803 = vmatprep.subr.mxu0 0.0
        %1804 = vmatpush1.msra.mxu0 %v1774
        %1805 = vmatprep.subr.mxu0 0.0
        %1806 = vmatpush1.msra.mxu0 %v1775
        %1807 = vmatprep.subr.mxu0 0.0
        %1808 = vmatpush1.msra.mxu0 %v1776
        %1809 = vmatprep.subr.mxu0 0.0
        %1810 = vmatpush1.msra.mxu0 0.0
        %1811 = vmatprep.subr.mxu0 0.0
        %1812 = vmatpush1.msra.mxu0 0.0
        %1813 = vmatprep.subr.mxu0 0.0
        %1814 = vmatpush1.msra.mxu0 0.0
        %1815 = vmatprep.subr.mxu0 0.0
        %1816 = vmatpush1.msra.mxu0 0.0
        %1817 = vmatprep.subr.mxu0 0.0
        %1818 = vmatpush1.msra.mxu0 0.0
        %1819 = vmatprep.subr.mxu0 0.0
        %1820 = vmatpush1.msra.mxu0 0.0
        %1821 = vmatprep.subr.mxu0 0.0
        %1822 = vmatpush1.msra.mxu0 0.0
        %1823 = vmatprep.subr.mxu0 0.0
        %1824 = vmatpush1.msra.mxu0 0.0
        %1825 = vmatprep.subr.mxu0 0.0
        %1826 = vmatpush1.msra.mxu0 0.0
        %1827 = vmatprep.subr.mxu0 0.0
        %1828 = vmatpush1.msra.mxu0 0.0
        %1829 = vmatprep.subr.mxu0 0.0
        %1830 = vmatpush1.msra.mxu0 0.0
        %1831 = vmatprep.subr.mxu0 0.0
        %1832 = vmatpush1.msra.mxu0 0.0
        %1833 = vmatprep.subr.mxu0 0.0
        %1834 = vmatpush1.msra.mxu0 0.0
        %1835 = vmatprep.subr.mxu0 0.0
        %1836 = vmatpush1.msra.mxu0 0.0
        %1837 = vmatprep.subr.mxu0 0.0
        %1838 = vmatpush1.msra.mxu0 0.0
        %1839 = vmatprep.subr.mxu0 0.0
        %1840 = vmatpush1.msra.mxu0 0.0
        %1841 = vmatprep.subr.mxu0 0.0
        %1842 = vmatpush1.msra.mxu0 0.0
        %1843 = vmatprep.subr.mxu0 0.0
        %1844 = vmatpush1.msra.mxu0 0.0
        %1845 = vmatprep.subr.mxu0 0.0
        %1846 = vmatpush1.msra.mxu0 0.0
        %1847 = vmatprep.subr.mxu0 0.0
        %1848 = vmatpush1.msra.mxu0 0.0
        %1849 = vmatprep.subr.mxu0 0.0
        %1850 = vmatpush1.msra.mxu0 0.0
        %1851 = vmatprep.subr.mxu0 0.0
        %1852 = vmatpush1.msra.mxu0 0.0
        %1853 = vmatprep.subr.mxu0 0.0
        %1854 = vmatpush1.msra.mxu0 0.0
        %1855 = vmatprep.subr.mxu0 0.0
        %1856 = vmatpush1.msra.mxu0 0.0
        %1857 = vmatprep.subr.mxu0 0.0
        %1858 = vmatpush1.msra.mxu0 0.0
        %1859 = vmatprep.subr.mxu0 0.0
        %1860 = vmatpush1.msra.mxu0 0.0
        %1861 = vmatprep.subr.mxu0 0.0
        %1862 = vmatpush1.msra.mxu0 0.0
        %1863 = vmatprep.subr.mxu0 0.0
        %1864 = vmatpush1.msra.mxu0 0.0
        %1865 = vmatprep.mubr.f32.mxu0 0.0
        %1866 = vmatmul.mubr.f32.gmra.mrb[0].mxu0 %v1778
        %v1867 = vpop.f32.mrb[0].mxu0
        %v1868 = vadd.f32 0.0, %v1867
        %v1869 = vpop.f32.mrb[0].mxu0
        %1870 = vmatprep.mubr.f32.mxu0 0.0
        %1871 = vmatmul.mubr.f32.gmra.mrb[0].mxu0 %v1781
        %v1872 = vpop.f32.mrb[0].mxu0
        %v1873 = vadd.f32 0.0, %v1872
        %v1874 = vpop.f32.mrb[0].mxu0
        %1875 = vmatprep.mubr.f32.mxu0 0.0
        %1876 = vmatmul.mubr.f32.gmra.mrb[0].mxu0 %v1784
        %v1877 = vpop.f32.mrb[0].mxu0
        %v1878 = vadd.f32 0.0, %v1877
        %v1879 = vpop.f32.mrb[0].mxu0
        %1880 = vmatprep.mubr.f32.mxu0 0.0
        %1881 = vmatmul.mubr.f32.gmra.mrb[0].mxu0 %v1787
        %v1882 = vpop.f32.mrb[0].mxu0
        %v1883 = vadd.f32 0.0, %v1882
        %v1884 = vpop.f32.mrb[0].mxu0
        %1885 = vmatprep.mubr.f32.mxu0 0.0
        %1886 = vmatmul.mubr.f32.gmra.mrb[0].mxu0 %v1790
        %v1887 = vpop.f32.mrb[0].mxu0
        %v1888 = vadd.f32 0.0, %v1887
        %v1889 = vpop.f32.mrb[0].mxu0
        %1890 = vmatprep.mubr.f32.mxu0 0.0
        %1891 = vmatmul.mubr.f32.gmra.mrb[0].mxu0 %v1793
        %v1892 = vpop.f32.mrb[0].mxu0
        %v1893 = vadd.f32 0.0, %v1892
        %v1894 = vpop.f32.mrb[0].mxu0
        %1895 = vmatprep.mubr.f32.mxu0 0.0
        %1896 = vmatmul.mubr.f32.gmra.mrb[0].mxu0 %v1796
        %v1897 = vpop.f32.mrb[0].mxu0
        %v1898 = vadd.f32 0.0, %v1897
        %v1899 = vpop.f32.mrb[0].mxu0
        %1900 = vmatprep.mubr.f32.mxu0 0.0
        %1901 = vmatmul.mubr.f32.gmra.mrb[0].mxu0 %v1799
        %v1902 = vpop.f32.mrb[0].mxu0
        %v1903 = vadd.f32 0.0, %v1902
        %v1904 = vpop.f32.mrb[0].mxu0
        %1905 = vdwg.mxu0
        %v1906 = vadd.f32 %v1725, %v1868
        %v1907 = vadd.f32 %v1730, %v1873
        %v1908 = vadd.f32 %v1735, %v1878
        %v1909 = vadd.f32 %v1740, %v1883
        %v1910 = vadd.f32 %v1745, %v1888
        %v1911 = vadd.f32 %v1750, %v1893
        %v1912 = vadd.f32 %v1755, %v1898
        %v1913 = vadd.f32 %v1760, %v1903
        %v1914 = vld [vmem:[%s1763 + $0x1] sm:$0xff]
        %v1915 = vld [vmem:[%s1763 + $0x11] sm:$0xff]
        %v1916 = vld [vmem:[%s1763 + $0x21] sm:$0xff]
        %v1917 = vld [vmem:[%s1763 + $0x31] sm:$0xff]
        %v1918 = vld [vmem:[%s1763 + $0x41] sm:$0xff]
        %v1919 = vld [vmem:[%s1763 + $0x51] sm:$0xff]
        %v1920 = vld [vmem:[%s1763 + $0x61] sm:$0xff]
        %v1921 = vld [vmem:[%s1763 + $0x71] sm:$0xff]
        %s1922 = scalar_lea.vmem %s1, 352
        %v1923 = vld [vmem:[%s1922] sm:$0xff]
        %v1924 = vld [vmem:[%s1922 + $0x8] sm:$0xff]
        %v1925 = vld [vmem:[%s1922 + $0x10] sm:$0xff]
        %v1926 = vld [vmem:[%s1922 + $0x18] sm:$0xff]
        %v1928 = vsel %vm191, %v1914, 0
        %v1931 = vsel %vm191, %v1915, 0
        %v1934 = vsel %vm191, %v1916, 0
        %v1937 = vsel %vm191, %v1917, 0
        %v1940 = vsel %vm191, %v1918, 0
        %v1943 = vsel %vm191, %v1919, 0
        %v1946 = vsel %vm191, %v1920, 0
        %v1949 = vsel %vm191, %v1921, 0
        %1951 = vmatprep.subr.mxu0 0.0
        %1952 = vmatpush1.msra.mxu0 %v1923
        %1953 = vmatprep.subr.mxu0 0.0
        %1954 = vmatpush1.msra.mxu0 %v1924
        %1955 = vmatprep.subr.mxu0 0.0
        %1956 = vmatpush1.msra.mxu0 %v1925
        %1957 = vmatprep.subr.mxu0 0.0
        %1958 = vmatpush1.msra.mxu0 %v1926
        %1959 = vmatprep.subr.mxu0 0.0
        %1960 = vmatpush1.msra.mxu0 0.0
        %1961 = vmatprep.subr.mxu0 0.0
        %1962 = vmatpush1.msra.mxu0 0.0
        %1963 = vmatprep.subr.mxu0 0.0
        %1964 = vmatpush1.msra.mxu0 0.0
        %1965 = vmatprep.subr.mxu0 0.0
        %1966 = vmatpush1.msra.mxu0 0.0
        %1967 = vmatprep.subr.mxu0 0.0
        %1968 = vmatpush1.msra.mxu0 0.0
        %1969 = vmatprep.subr.mxu0 0.0
        %1970 = vmatpush1.msra.mxu0 0.0
        %1971 = vmatprep.subr.mxu0 0.0
        %1972 = vmatpush1.msra.mxu0 0.0
        %1973 = vmatprep.subr.mxu0 0.0
        %1974 = vmatpush1.msra.mxu0 0.0
        %1975 = vmatprep.subr.mxu0 0.0
        %1976 = vmatpush1.msra.mxu0 0.0
        %1977 = vmatprep.subr.mxu0 0.0
        %1978 = vmatpush1.msra.mxu0 0.0
        %1979 = vmatprep.subr.mxu0 0.0
        %1980 = vmatpush1.msra.mxu0 0.0
        %1981 = vmatprep.subr.mxu0 0.0
        %1982 = vmatpush1.msra.mxu0 0.0
        %1983 = vmatprep.subr.mxu0 0.0
        %1984 = vmatpush1.msra.mxu0 0.0
        %1985 = vmatprep.subr.mxu0 0.0
        %1986 = vmatpush1.msra.mxu0 0.0
        %1987 = vmatprep.subr.mxu0 0.0
        %1988 = vmatpush1.msra.mxu0 0.0
        %1989 = vmatprep.subr.mxu0 0.0
        %1990 = vmatpush1.msra.mxu0 0.0
        %1991 = vmatprep.subr.mxu0 0.0
        %1992 = vmatpush1.msra.mxu0 0.0
        %1993 = vmatprep.subr.mxu0 0.0
        %1994 = vmatpush1.msra.mxu0 0.0
        %1995 = vmatprep.subr.mxu0 0.0
        %1996 = vmatpush1.msra.mxu0 0.0
        %1997 = vmatprep.subr.mxu0 0.0
        %1998 = vmatpush1.msra.mxu0 0.0
        %1999 = vmatprep.subr.mxu0 0.0
        %2000 = vmatpush1.msra.mxu0 0.0
        %2001 = vmatprep.subr.mxu0 0.0
        %2002 = vmatpush1.msra.mxu0 0.0
        %2003 = vmatprep.subr.mxu0 0.0
        %2004 = vmatpush1.msra.mxu0 0.0
        %2005 = vmatprep.subr.mxu0 0.0
        %2006 = vmatpush1.msra.mxu0 0.0
        %2007 = vmatprep.subr.mxu0 0.0
        %2008 = vmatpush1.msra.mxu0 0.0
        %2009 = vmatprep.subr.mxu0 0.0
        %2010 = vmatpush1.msra.mxu0 0.0
        %2011 = vmatprep.subr.mxu0 0.0
        %2012 = vmatpush1.msra.mxu0 0.0
        %2013 = vmatprep.subr.mxu0 0.0
        %2014 = vmatpush1.msra.mxu0 0.0
        %2015 = vmatprep.mubr.f32.mxu0 0.0
        %2016 = vmatmul.mubr.f32.gmra.mrb[0].mxu0 %v1928
        %v2017 = vpop.f32.mrb[0].mxu0
        %v2018 = vadd.f32 0.0, %v2017
        %v2019 = vpop.f32.mrb[0].mxu0
        %2020 = vmatprep.mubr.f32.mxu0 0.0
        %2021 = vmatmul.mubr.f32.gmra.mrb[0].mxu0 %v1931
        %v2022 = vpop.f32.mrb[0].mxu0
        %v2023 = vadd.f32 0.0, %v2022
        %v2024 = vpop.f32.mrb[0].mxu0
        %2025 = vmatprep.mubr.f32.mxu0 0.0
        %2026 = vmatmul.mubr.f32.gmra.mrb[0].mxu0 %v1934
        %v2027 = vpop.f32.mrb[0].mxu0
        %v2028 = vadd.f32 0.0, %v2027
        %v2029 = vpop.f32.mrb[0].mxu0
        %2030 = vmatprep.mubr.f32.mxu0 0.0
        %2031 = vmatmul.mubr.f32.gmra.mrb[0].mxu0 %v1937
        %v2032 = vpop.f32.mrb[0].mxu0
        %v2033 = vadd.f32 0.0, %v2032
        %v2034 = vpop.f32.mrb[0].mxu0
        %2035 = vmatprep.mubr.f32.mxu0 0.0
        %2036 = vmatmul.mubr.f32.gmra.mrb[0].mxu0 %v1940
        %v2037 = vpop.f32.mrb[0].mxu0
        %v2038 = vadd.f32 0.0, %v2037
        %v2039 = vpop.f32.mrb[0].mxu0
        %2040 = vmatprep.mubr.f32.mxu0 0.0
        %2041 = vmatmul.mubr.f32.gmra.mrb[0].mxu0 %v1943
        %v2042 = vpop.f32.mrb[0].mxu0
        %v2043 = vadd.f32 0.0, %v2042
        %v2044 = vpop.f32.mrb[0].mxu0
        %2045 = vmatprep.mubr.f32.mxu0 0.0
        %2046 = vmatmul.mubr.f32.gmra.mrb[0].mxu0 %v1946
        %v2047 = vpop.f32.mrb[0].mxu0
        %v2048 = vadd.f32 0.0, %v2047
        %v2049 = vpop.f32.mrb[0].mxu0
        %2050 = vmatprep.mubr.f32.mxu0 0.0
        %2051 = vmatmul.mubr.f32.gmra.mrb[0].mxu0 %v1949
        %v2052 = vpop.f32.mrb[0].mxu0
        %v2053 = vadd.f32 0.0, %v2052
        %v2054 = vpop.f32.mrb[0].mxu0
        %2055 = vdwg.mxu0
        %v2056 = vadd.f32 %v1906, %v2018
        %v2057 = vadd.f32 %v1907, %v2023
        %v2058 = vadd.f32 %v1908, %v2028
        %v2059 = vadd.f32 %v1909, %v2033
        %v2060 = vadd.f32 %v1910, %v2038
        %v2061 = vadd.f32 %v1911, %v2043
        %v2062 = vadd.f32 %v1912, %v2048
        %v2063 = vadd.f32 %v1913, %v2053
        %v2064 = vld [vmem:[%s2] sm:$0x1]
        %v2066 = vlaneseq
        %v2067 = vshrl.u32 %v2066, 7
        %v2068 = vsub.s32 0, %v2067
        %v2069 = vrot.slane %v2064, %v2068
        %v2071 = vadd.f32 %v2056, %v2069
        %v2072 = vadd.f32 %v2057, %v2069
        %v2073 = vadd.f32 %v2058, %v2069
        %v2074 = vadd.f32 %v2059, %v2069
        %v2075 = vadd.f32 %v2060, %v2069
        %v2076 = vadd.f32 %v2061, %v2069
        %v2077 = vadd.f32 %v2062, %v2069
        %v2078 = vadd.f32 %v2063, %v2069
        %v2079 = vsub.f32 0.0, %v2071
        %v2080 = vsub.f32 0.0, %v2072
        %v2081 = vsub.f32 0.0, %v2073
        %v2082 = vsub.f32 0.0, %v2074
        %v2083 = vsub.f32 0.0, %v2075
        %v2084 = vsub.f32 0.0, %v2076
        %v2085 = vsub.f32 0.0, %v2077
        %v2086 = vsub.f32 0.0, %v2078
        %v2087 = vmul.f32 %v2079, 1.442695
        %v2088 = vpow.pop %v2087
        %v2089 = vmul.f32 %v2080, 1.442695
        %v2090 = vpow.pop %v2089
        %v2091 = vmul.f32 %v2081, 1.442695
        %v2092 = vpow.pop %v2091
        %v2093 = vmul.f32 %v2082, 1.442695
        %v2094 = vpow.pop %v2093
        %v2095 = vmul.f32 %v2083, 1.442695
        %v2096 = vpow.pop %v2095
        %v2097 = vmul.f32 %v2084, 1.442695
        %v2098 = vpow.pop %v2097
        %v2099 = vmul.f32 %v2085, 1.442695
        %v2100 = vpow.pop %v2099
        %v2101 = vmul.f32 %v2086, 1.442695
        %v2102 = vpow.pop %v2101
        %v2103 = vadd.f32 %v2088, 1.0
        %v2104 = vadd.f32 %v2090, 1.0
        %v2105 = vadd.f32 %v2092, 1.0
        %v2106 = vadd.f32 %v2094, 1.0
        %v2107 = vadd.f32 %v2096, 1.0
        %v2108 = vadd.f32 %v2098, 1.0
        %v2109 = vadd.f32 %v2100, 1.0
        %v2110 = vadd.f32 %v2102, 1.0
        %v2111 = vrcp.pop %v2103
        %v2112 = vmul.f32 1.0, %v2111
        %v2113 = vrcp.pop %v2104
        %v2114 = vmul.f32 1.0, %v2113
        %v2115 = vrcp.pop %v2105
        %v2116 = vmul.f32 1.0, %v2115
        %v2117 = vrcp.pop %v2106
        %v2118 = vmul.f32 1.0, %v2117
        %v2119 = vrcp.pop %v2107
        %v2120 = vmul.f32 1.0, %v2119
        %v2121 = vrcp.pop %v2108
        %v2122 = vmul.f32 1.0, %v2121
        %v2123 = vrcp.pop %v2109
        %v2124 = vmul.f32 1.0, %v2123
        %v2125 = vrcp.pop %v2110
        %v2126 = vmul.f32 1.0, %v2125
        %s2127 = scalar_lea.vmem %s159, 128 [#allocation2]
        %2128 = vst.msk [vmem:[%s2127] sm:$0xff] %vm814, %v2112
        %2129 = vst.msk [vmem:[%s2127 + $0x8] sm:$0xff] %vm814, %v2114
        %2130 = vst.msk [vmem:[%s2127 + $0x10] sm:$0xff] %vm814, %v2116
        %2131 = vst.msk [vmem:[%s2127 + $0x18] sm:$0xff] %vm814, %v2118
        %2132 = vst.msk [vmem:[%s2127 + $0x20] sm:$0xff] %vm814, %v2120
        %2133 = vst.msk [vmem:[%s2127 + $0x28] sm:$0xff] %vm814, %v2122
        %2134 = vst.msk [vmem:[%s2127 + $0x30] sm:$0xff] %vm814, %v2124
        %2135 = vst.msk [vmem:[%s2127 + $0x38] sm:$0xff] %vm814, %v2126
        %v2136 = vld [vmem:[%s450 + $0x1] sm:$0xff]
        %v2137 = vld [vmem:[%s450 + $0x11] sm:$0xff]
        %v2138 = vld [vmem:[%s450 + $0x21] sm:$0xff]
        %v2139 = vld [vmem:[%s450 + $0x31] sm:$0xff]
        %v2140 = vld [vmem:[%s450 + $0x41] sm:$0xff]
        %v2141 = vld [vmem:[%s450 + $0x51] sm:$0xff]
        %v2142 = vld [vmem:[%s450 + $0x61] sm:$0xff]
        %v2143 = vld [vmem:[%s450 + $0x71] sm:$0xff]
        %s2144 = scalar_lea.vmem %s1, 384
        %v2145 = vld [vmem:[%s2144] sm:$0xff]
        %v2146 = vld [vmem:[%s2144 + $0x8] sm:$0xff]
        %v2147 = vld [vmem:[%s2144 + $0x10] sm:$0xff]
        %v2148 = vld [vmem:[%s2144 + $0x18] sm:$0xff]
        %v2149 = vld [vmem:[%s450 + $0x2] sm:$0xff]
        %v2150 = vld [vmem:[%s450 + $0x12] sm:$0xff]
        %v2151 = vld [vmem:[%s450 + $0x22] sm:$0xff]
        %v2152 = vld [vmem:[%s450 + $0x32] sm:$0xff]
        %v2153 = vld [vmem:[%s450 + $0x42] sm:$0xff]
        %v2154 = vld [vmem:[%s450 + $0x52] sm:$0xff]
        %v2155 = vld [vmem:[%s450 + $0x62] sm:$0xff]
        %v2156 = vld [vmem:[%s450 + $0x72] sm:$0xff]
        %s2157 = scalar_lea.vmem %s1, 416
        %v2158 = vld [vmem:[%s2157] sm:$0xff]
        %v2159 = vld [vmem:[%s2157 + $0x8] sm:$0xff]
        %v2160 = vld [vmem:[%s2157 + $0x10] sm:$0xff]
        %v2161 = vld [vmem:[%s2157 + $0x18] sm:$0xff]
        %v2163 = vsel %vm191, %v2149, 0
        %v2166 = vsel %vm191, %v2150, 0
        %v2169 = vsel %vm191, %v2151, 0
        %v2172 = vsel %vm191, %v2152, 0
        %v2175 = vsel %vm191, %v2153, 0
        %v2178 = vsel %vm191, %v2154, 0
        %v2181 = vsel %vm191, %v2155, 0
        %v2184 = vsel %vm191, %v2156, 0
        %2186 = vmatprep.subr.mxu0 0.0
        %2187 = vmatpush1.msra.mxu0 %v2158
        %2188 = vmatprep.subr.mxu0 0.0
        %2189 = vmatpush1.msra.mxu0 %v2159
        %2190 = vmatprep.subr.mxu0 0.0
        %2191 = vmatpush1.msra.mxu0 %v2160
        %2192 = vmatprep.subr.mxu0 0.0
        %2193 = vmatpush1.msra.mxu0 %v2161
        %2194 = vmatprep.subr.mxu0 0.0
        %2195 = vmatpush1.msra.mxu0 0.0
        %2196 = vmatprep.subr.mxu0 0.0
        %2197 = vmatpush1.msra.mxu0 0.0
        %2198 = vmatprep.subr.mxu0 0.0
        %2199 = vmatpush1.msra.mxu0 0.0
        %2200 = vmatprep.subr.mxu0 0.0
        %2201 = vmatpush1.msra.mxu0 0.0
        %2202 = vmatprep.subr.mxu0 0.0
        %2203 = vmatpush1.msra.mxu0 0.0
        %2204 = vmatprep.subr.mxu0 0.0
        %2205 = vmatpush1.msra.mxu0 0.0
        %2206 = vmatprep.subr.mxu0 0.0
        %2207 = vmatpush1.msra.mxu0 0.0
        %2208 = vmatprep.subr.mxu0 0.0
        %2209 = vmatpush1.msra.mxu0 0.0
        %2210 = vmatprep.subr.mxu0 0.0
        %2211 = vmatpush1.msra.mxu0 0.0
        %2212 = vmatprep.subr.mxu0 0.0
        %2213 = vmatpush1.msra.mxu0 0.0
        %2214 = vmatprep.subr.mxu0 0.0
        %2215 = vmatpush1.msra.mxu0 0.0
        %2216 = vmatprep.subr.mxu0 0.0
        %2217 = vmatpush1.msra.mxu0 0.0
        %2218 = vmatprep.subr.mxu0 0.0
        %2219 = vmatpush1.msra.mxu0 0.0
        %2220 = vmatprep.subr.mxu0 0.0
        %2221 = vmatpush1.msra.mxu0 0.0
        %2222 = vmatprep.subr.mxu0 0.0
        %2223 = vmatpush1.msra.mxu0 0.0
        %2224 = vmatprep.subr.mxu0 0.0
        %2225 = vmatpush1.msra.mxu0 0.0
        %2226 = vmatprep.subr.mxu0 0.0
        %2227 = vmatpush1.msra.mxu0 0.0
        %2228 = vmatprep.subr.mxu0 0.0
        %2229 = vmatpush1.msra.mxu0 0.0
        %2230 = vmatprep.subr.mxu0 0.0
        %2231 = vmatpush1.msra.mxu0 0.0
        %2232 = vmatprep.subr.mxu0 0.0
        %2233 = vmatpush1.msra.mxu0 0.0
        %2234 = vmatprep.subr.mxu0 0.0
        %2235 = vmatpush1.msra.mxu0 0.0
        %2236 = vmatprep.subr.mxu0 0.0
        %2237 = vmatpush1.msra.mxu0 0.0
        %2238 = vmatprep.subr.mxu0 0.0
        %2239 = vmatpush1.msra.mxu0 0.0
        %2240 = vmatprep.subr.mxu0 0.0
        %2241 = vmatpush1.msra.mxu0 0.0
        %2242 = vmatprep.subr.mxu0 0.0
        %2243 = vmatpush1.msra.mxu0 0.0
        %2244 = vmatprep.subr.mxu0 0.0
        %2245 = vmatpush1.msra.mxu0 0.0
        %2246 = vmatprep.subr.mxu0 0.0
        %2247 = vmatpush1.msra.mxu0 0.0
        %2248 = vmatprep.subr.mxu0 0.0
        %2249 = vmatpush1.msra.mxu0 0.0
        %2250 = vmatprep.mubr.f32.mxu0 0.0
        %2251 = vmatmul.mubr.f32.gmra.mrb[0].mxu0 %v2163
        %v2252 = vpop.f32.mrb[0].mxu0
        %v2253 = vadd.f32 0.0, %v2252
        %v2254 = vpop.f32.mrb[0].mxu0
        %2255 = vmatprep.mubr.f32.mxu0 0.0
        %2256 = vmatmul.mubr.f32.gmra.mrb[0].mxu0 %v2166
        %v2257 = vpop.f32.mrb[0].mxu0
        %v2258 = vadd.f32 0.0, %v2257
        %v2259 = vpop.f32.mrb[0].mxu0
        %2260 = vmatprep.mubr.f32.mxu0 0.0
        %2261 = vmatmul.mubr.f32.gmra.mrb[0].mxu0 %v2169
        %v2262 = vpop.f32.mrb[0].mxu0
        %v2263 = vadd.f32 0.0, %v2262
        %v2264 = vpop.f32.mrb[0].mxu0
        %2265 = vmatprep.mubr.f32.mxu0 0.0
        %2266 = vmatmul.mubr.f32.gmra.mrb[0].mxu0 %v2172
        %v2267 = vpop.f32.mrb[0].mxu0
        %v2268 = vadd.f32 0.0, %v2267
        %v2269 = vpop.f32.mrb[0].mxu0
        %2270 = vmatprep.mubr.f32.mxu0 0.0
        %2271 = vmatmul.mubr.f32.gmra.mrb[0].mxu0 %v2175
        %v2272 = vpop.f32.mrb[0].mxu0
        %v2273 = vadd.f32 0.0, %v2272
        %v2274 = vpop.f32.mrb[0].mxu0
        %2275 = vmatprep.mubr.f32.mxu0 0.0
        %2276 = vmatmul.mubr.f32.gmra.mrb[0].mxu0 %v2178
        %v2277 = vpop.f32.mrb[0].mxu0
        %v2278 = vadd.f32 0.0, %v2277
        %v2279 = vpop.f32.mrb[0].mxu0
        %2280 = vmatprep.mubr.f32.mxu0 0.0
        %2281 = vmatmul.mubr.f32.gmra.mrb[0].mxu0 %v2181
        %v2282 = vpop.f32.mrb[0].mxu0
        %v2283 = vadd.f32 0.0, %v2282
        %v2284 = vpop.f32.mrb[0].mxu0
        %2285 = vmatprep.mubr.f32.mxu0 0.0
        %2286 = vmatmul.mubr.f32.gmra.mrb[0].mxu0 %v2184
        %v2287 = vpop.f32.mrb[0].mxu0
        %v2288 = vadd.f32 0.0, %v2287
        %v2289 = vpop.f32.mrb[0].mxu0
        %2290 = vdwg.mxu0
        %v2292 = vsel %vm191, %v2136, 0
        %v2295 = vsel %vm191, %v2137, 0
        %v2298 = vsel %vm191, %v2138, 0
        %v2301 = vsel %vm191, %v2139, 0
        %v2304 = vsel %vm191, %v2140, 0
        %v2307 = vsel %vm191, %v2141, 0
        %v2310 = vsel %vm191, %v2142, 0
        %v2313 = vsel %vm191, %v2143, 0
        %2315 = vmatprep.subr.mxu0 0.0
        %2316 = vmatpush1.msra.mxu0 %v2145
        %2317 = vmatprep.subr.mxu0 0.0
        %2318 = vmatpush1.msra.mxu0 %v2146
        %2319 = vmatprep.subr.mxu0 0.0
        %2320 = vmatpush1.msra.mxu0 %v2147
        %2321 = vmatprep.subr.mxu0 0.0
        %2322 = vmatpush1.msra.mxu0 %v2148
        %2323 = vmatprep.subr.mxu0 0.0
        %2324 = vmatpush1.msra.mxu0 0.0
        %2325 = vmatprep.subr.mxu0 0.0
        %2326 = vmatpush1.msra.mxu0 0.0
        %2327 = vmatprep.subr.mxu0 0.0
        %2328 = vmatpush1.msra.mxu0 0.0
        %2329 = vmatprep.subr.mxu0 0.0
        %2330 = vmatpush1.msra.mxu0 0.0
        %2331 = vmatprep.subr.mxu0 0.0
        %2332 = vmatpush1.msra.mxu0 0.0
        %2333 = vmatprep.subr.mxu0 0.0
        %2334 = vmatpush1.msra.mxu0 0.0
        %2335 = vmatprep.subr.mxu0 0.0
        %2336 = vmatpush1.msra.mxu0 0.0
        %2337 = vmatprep.subr.mxu0 0.0
        %2338 = vmatpush1.msra.mxu0 0.0
        %2339 = vmatprep.subr.mxu0 0.0
        %2340 = vmatpush1.msra.mxu0 0.0
        %2341 = vmatprep.subr.mxu0 0.0
        %2342 = vmatpush1.msra.mxu0 0.0
        %2343 = vmatprep.subr.mxu0 0.0
        %2344 = vmatpush1.msra.mxu0 0.0
        %2345 = vmatprep.subr.mxu0 0.0
        %2346 = vmatpush1.msra.mxu0 0.0
        %2347 = vmatprep.subr.mxu0 0.0
        %2348 = vmatpush1.msra.mxu0 0.0
        %2349 = vmatprep.subr.mxu0 0.0
        %2350 = vmatpush1.msra.mxu0 0.0
        %2351 = vmatprep.subr.mxu0 0.0
        %2352 = vmatpush1.msra.mxu0 0.0
        %2353 = vmatprep.subr.mxu0 0.0
        %2354 = vmatpush1.msra.mxu0 0.0
        %2355 = vmatprep.subr.mxu0 0.0
        %2356 = vmatpush1.msra.mxu0 0.0
        %2357 = vmatprep.subr.mxu0 0.0
        %2358 = vmatpush1.msra.mxu0 0.0
        %2359 = vmatprep.subr.mxu0 0.0
        %2360 = vmatpush1.msra.mxu0 0.0
        %2361 = vmatprep.subr.mxu0 0.0
        %2362 = vmatpush1.msra.mxu0 0.0
        %2363 = vmatprep.subr.mxu0 0.0
        %2364 = vmatpush1.msra.mxu0 0.0
        %2365 = vmatprep.subr.mxu0 0.0
        %2366 = vmatpush1.msra.mxu0 0.0
        %2367 = vmatprep.subr.mxu0 0.0
        %2368 = vmatpush1.msra.mxu0 0.0
        %2369 = vmatprep.subr.mxu0 0.0
        %2370 = vmatpush1.msra.mxu0 0.0
        %2371 = vmatprep.subr.mxu0 0.0
        %2372 = vmatpush1.msra.mxu0 0.0
        %2373 = vmatprep.subr.mxu0 0.0
        %2374 = vmatpush1.msra.mxu0 0.0
        %2375 = vmatprep.subr.mxu0 0.0
        %2376 = vmatpush1.msra.mxu0 0.0
        %2377 = vmatprep.subr.mxu0 0.0
        %2378 = vmatpush1.msra.mxu0 0.0
        %2379 = vmatprep.mubr.f32.mxu0 0.0
        %2380 = vmatmul.mubr.f32.gmra.mrb[0].mxu0 %v2292
        %v2381 = vpop.f32.mrb[0].mxu0
        %v2382 = vadd.f32 %v2253, %v2381
        %v2383 = vpop.f32.mrb[0].mxu0
        %2384 = vmatprep.mubr.f32.mxu0 0.0
        %2385 = vmatmul.mubr.f32.gmra.mrb[0].mxu0 %v2295
        %v2386 = vpop.f32.mrb[0].mxu0
        %v2387 = vadd.f32 %v2258, %v2386
        %v2388 = vpop.f32.mrb[0].mxu0
        %2389 = vmatprep.mubr.f32.mxu0 0.0
        %2390 = vmatmul.mubr.f32.gmra.mrb[0].mxu0 %v2298
        %v2391 = vpop.f32.mrb[0].mxu0
        %v2392 = vadd.f32 %v2263, %v2391
        %v2393 = vpop.f32.mrb[0].mxu0
        %2394 = vmatprep.mubr.f32.mxu0 0.0
        %2395 = vmatmul.mubr.f32.gmra.mrb[0].mxu0 %v2301
        %v2396 = vpop.f32.mrb[0].mxu0
        %v2397 = vadd.f32 %v2268, %v2396
        %v2398 = vpop.f32.mrb[0].mxu0
        %2399 = vmatprep.mubr.f32.mxu0 0.0
        %2400 = vmatmul.mubr.f32.gmra.mrb[0].mxu0 %v2304
        %v2401 = vpop.f32.mrb[0].mxu0
        %v2402 = vadd.f32 %v2273, %v2401
        %v2403 = vpop.f32.mrb[0].mxu0
        %2404 = vmatprep.mubr.f32.mxu0 0.0
        %2405 = vmatmul.mubr.f32.gmra.mrb[0].mxu0 %v2307
        %v2406 = vpop.f32.mrb[0].mxu0
        %v2407 = vadd.f32 %v2278, %v2406
        %v2408 = vpop.f32.mrb[0].mxu0
        %2409 = vmatprep.mubr.f32.mxu0 0.0
        %2410 = vmatmul.mubr.f32.gmra.mrb[0].mxu0 %v2310
        %v2411 = vpop.f32.mrb[0].mxu0
        %v2412 = vadd.f32 %v2283, %v2411
        %v2413 = vpop.f32.mrb[0].mxu0
        %2414 = vmatprep.mubr.f32.mxu0 0.0
        %2415 = vmatmul.mubr.f32.gmra.mrb[0].mxu0 %v2313
        %v2416 = vpop.f32.mrb[0].mxu0
        %v2417 = vadd.f32 %v2288, %v2416
        %v2418 = vpop.f32.mrb[0].mxu0
        %2419 = vdwg.mxu0
        %v2420 = vld [vmem:[%s1763 + $0x1] sm:$0xff]
        %v2421 = vld [vmem:[%s1763 + $0x11] sm:$0xff]
        %v2422 = vld [vmem:[%s1763 + $0x21] sm:$0xff]
        %v2423 = vld [vmem:[%s1763 + $0x31] sm:$0xff]
        %v2424 = vld [vmem:[%s1763 + $0x41] sm:$0xff]
        %v2425 = vld [vmem:[%s1763 + $0x51] sm:$0xff]
        %v2426 = vld [vmem:[%s1763 + $0x61] sm:$0xff]
        %v2427 = vld [vmem:[%s1763 + $0x71] sm:$0xff]
        %s2428 = scalar_lea.vmem %s1, 448
        %v2429 = vld [vmem:[%s2428] sm:$0xff]
        %v2430 = vld [vmem:[%s2428 + $0x8] sm:$0xff]
        %v2431 = vld [vmem:[%s2428 + $0x10] sm:$0xff]
        %v2432 = vld [vmem:[%s2428 + $0x18] sm:$0xff]
        %v2434 = vsel %vm191, %v2420, 0
        %v2437 = vsel %vm191, %v2421, 0
        %v2440 = vsel %vm191, %v2422, 0
        %v2443 = vsel %vm191, %v2423, 0
        %v2446 = vsel %vm191, %v2424, 0
        %v2449 = vsel %vm191, %v2425, 0
        %v2452 = vsel %vm191, %v2426, 0
        %v2455 = vsel %vm191, %v2427, 0
        %2457 = vmatprep.subr.mxu0 0.0
        %2458 = vmatpush1.msra.mxu0 %v2429
        %2459 = vmatprep.subr.mxu0 0.0
        %2460 = vmatpush1.msra.mxu0 %v2430
        %2461 = vmatprep.subr.mxu0 0.0
        %2462 = vmatpush1.msra.mxu0 %v2431
        %2463 = vmatprep.subr.mxu0 0.0
        %2464 = vmatpush1.msra.mxu0 %v2432
        %2465 = vmatprep.subr.mxu0 0.0
        %2466 = vmatpush1.msra.mxu0 0.0
        %2467 = vmatprep.subr.mxu0 0.0
        %2468 = vmatpush1.msra.mxu0 0.0
        %2469 = vmatprep.subr.mxu0 0.0
        %2470 = vmatpush1.msra.mxu0 0.0
        %2471 = vmatprep.subr.mxu0 0.0
        %2472 = vmatpush1.msra.mxu0 0.0
        %2473 = vmatprep.subr.mxu0 0.0
        %2474 = vmatpush1.msra.mxu0 0.0
        %2475 = vmatprep.subr.mxu0 0.0
        %2476 = vmatpush1.msra.mxu0 0.0
        %2477 = vmatprep.subr.mxu0 0.0
        %2478 = vmatpush1.msra.mxu0 0.0
        %2479 = vmatprep.subr.mxu0 0.0
        %2480 = vmatpush1.msra.mxu0 0.0
        %2481 = vmatprep.subr.mxu0 0.0
        %2482 = vmatpush1.msra.mxu0 0.0
        %2483 = vmatprep.subr.mxu0 0.0
        %2484 = vmatpush1.msra.mxu0 0.0
        %2485 = vmatprep.subr.mxu0 0.0
        %2486 = vmatpush1.msra.mxu0 0.0
        %2487 = vmatprep.subr.mxu0 0.0
        %2488 = vmatpush1.msra.mxu0 0.0
        %2489 = vmatprep.subr.mxu0 0.0
        %2490 = vmatpush1.msra.mxu0 0.0
        %2491 = vmatprep.subr.mxu0 0.0
        %2492 = vmatpush1.msra.mxu0 0.0
        %2493 = vmatprep.subr.mxu0 0.0
        %2494 = vmatpush1.msra.mxu0 0.0
        %2495 = vmatprep.subr.mxu0 0.0
        %2496 = vmatpush1.msra.mxu0 0.0
        %2497 = vmatprep.subr.mxu0 0.0
        %2498 = vmatpush1.msra.mxu0 0.0
        %2499 = vmatprep.subr.mxu0 0.0
        %2500 = vmatpush1.msra.mxu0 0.0
        %2501 = vmatprep.subr.mxu0 0.0
        %2502 = vmatpush1.msra.mxu0 0.0
        %2503 = vmatprep.subr.mxu0 0.0
        %2504 = vmatpush1.msra.mxu0 0.0
        %2505 = vmatprep.subr.mxu0 0.0
        %2506 = vmatpush1.msra.mxu0 0.0
        %2507 = vmatprep.subr.mxu0 0.0
        %2508 = vmatpush1.msra.mxu0 0.0
        %2509 = vmatprep.subr.mxu0 0.0
        %2510 = vmatpush1.msra.mxu0 0.0
        %2511 = vmatprep.subr.mxu0 0.0
        %2512 = vmatpush1.msra.mxu0 0.0
        %2513 = vmatprep.subr.mxu0 0.0
        %2514 = vmatpush1.msra.mxu0 0.0
        %2515 = vmatprep.subr.mxu0 0.0
        %2516 = vmatpush1.msra.mxu0 0.0
        %2517 = vmatprep.subr.mxu0 0.0
        %2518 = vmatpush1.msra.mxu0 0.0
        %2519 = vmatprep.subr.mxu0 0.0
        %2520 = vmatpush1.msra.mxu0 0.0
        %2521 = vmatprep.mubr.f32.mxu0 0.0
        %2522 = vmatmul.mubr.f32.gmra.mrb[0].mxu0 %v2434
        %v2523 = vpop.f32.mrb[0].mxu0
        %v2524 = vadd.f32 0.0, %v2523
        %v2525 = vpop.f32.mrb[0].mxu0
        %2526 = vmatprep.mubr.f32.mxu0 0.0
        %2527 = vmatmul.mubr.f32.gmra.mrb[0].mxu0 %v2437
        %v2528 = vpop.f32.mrb[0].mxu0
        %v2529 = vadd.f32 0.0, %v2528
        %v2530 = vpop.f32.mrb[0].mxu0
        %2531 = vmatprep.mubr.f32.mxu0 0.0
        %2532 = vmatmul.mubr.f32.gmra.mrb[0].mxu0 %v2440
        %v2533 = vpop.f32.mrb[0].mxu0
        %v2534 = vadd.f32 0.0, %v2533
        %v2535 = vpop.f32.mrb[0].mxu0
        %2536 = vmatprep.mubr.f32.mxu0 0.0
        %2537 = vmatmul.mubr.f32.gmra.mrb[0].mxu0 %v2443
        %v2538 = vpop.f32.mrb[0].mxu0
        %v2539 = vadd.f32 0.0, %v2538
        %v2540 = vpop.f32.mrb[0].mxu0
        %2541 = vmatprep.mubr.f32.mxu0 0.0
        %2542 = vmatmul.mubr.f32.gmra.mrb[0].mxu0 %v2446
        %v2543 = vpop.f32.mrb[0].mxu0
        %v2544 = vadd.f32 0.0, %v2543
        %v2545 = vpop.f32.mrb[0].mxu0
        %2546 = vmatprep.mubr.f32.mxu0 0.0
        %2547 = vmatmul.mubr.f32.gmra.mrb[0].mxu0 %v2449
        %v2548 = vpop.f32.mrb[0].mxu0
        %v2549 = vadd.f32 0.0, %v2548
        %v2550 = vpop.f32.mrb[0].mxu0
        %2551 = vmatprep.mubr.f32.mxu0 0.0
        %2552 = vmatmul.mubr.f32.gmra.mrb[0].mxu0 %v2452
        %v2553 = vpop.f32.mrb[0].mxu0
        %v2554 = vadd.f32 0.0, %v2553
        %v2555 = vpop.f32.mrb[0].mxu0
        %2556 = vmatprep.mubr.f32.mxu0 0.0
        %2557 = vmatmul.mubr.f32.gmra.mrb[0].mxu0 %v2455
        %v2558 = vpop.f32.mrb[0].mxu0
        %v2559 = vadd.f32 0.0, %v2558
        %v2560 = vpop.f32.mrb[0].mxu0
        %2561 = vdwg.mxu0
        %v2562 = vadd.f32 %v2382, %v2524
        %v2563 = vadd.f32 %v2387, %v2529
        %v2564 = vadd.f32 %v2392, %v2534
        %v2565 = vadd.f32 %v2397, %v2539
        %v2566 = vadd.f32 %v2402, %v2544
        %v2567 = vadd.f32 %v2407, %v2549
        %v2568 = vadd.f32 %v2412, %v2554
        %v2569 = vadd.f32 %v2417, %v2559
        %v2570 = vld [vmem:[%s1763 + $0x2] sm:$0xff]
        %v2571 = vld [vmem:[%s1763 + $0x12] sm:$0xff]
        %v2572 = vld [vmem:[%s1763 + $0x22] sm:$0xff]
        %v2573 = vld [vmem:[%s1763 + $0x32] sm:$0xff]
        %v2574 = vld [vmem:[%s1763 + $0x42] sm:$0xff]
        %v2575 = vld [vmem:[%s1763 + $0x52] sm:$0xff]
        %v2576 = vld [vmem:[%s1763 + $0x62] sm:$0xff]
        %v2577 = vld [vmem:[%s1763 + $0x72] sm:$0xff]
        %s2578 = scalar_lea.vmem %s1, 480
        %v2579 = vld [vmem:[%s2578] sm:$0xff]
        %v2580 = vld [vmem:[%s2578 + $0x8] sm:$0xff]
        %v2581 = vld [vmem:[%s2578 + $0x10] sm:$0xff]
        %v2582 = vld [vmem:[%s2578 + $0x18] sm:$0xff]
        %v2584 = vsel %vm191, %v2570, 0
        %v2587 = vsel %vm191, %v2571, 0
        %v2590 = vsel %vm191, %v2572, 0
        %v2593 = vsel %vm191, %v2573, 0
        %v2596 = vsel %vm191, %v2574, 0
        %v2599 = vsel %vm191, %v2575, 0
        %v2602 = vsel %vm191, %v2576, 0
        %v2605 = vsel %vm191, %v2577, 0
        %2607 = vmatprep.subr.mxu0 0.0
        %2608 = vmatpush1.msra.mxu0 %v2579
        %2609 = vmatprep.subr.mxu0 0.0
        %2610 = vmatpush1.msra.mxu0 %v2580
        %2611 = vmatprep.subr.mxu0 0.0
        %2612 = vmatpush1.msra.mxu0 %v2581
        %2613 = vmatprep.subr.mxu0 0.0
        %2614 = vmatpush1.msra.mxu0 %v2582
        %2615 = vmatprep.subr.mxu0 0.0
        %2616 = vmatpush1.msra.mxu0 0.0
        %2617 = vmatprep.subr.mxu0 0.0
        %2618 = vmatpush1.msra.mxu0 0.0
        %2619 = vmatprep.subr.mxu0 0.0
        %2620 = vmatpush1.msra.mxu0 0.0
        %2621 = vmatprep.subr.mxu0 0.0
        %2622 = vmatpush1.msra.mxu0 0.0
        %2623 = vmatprep.subr.mxu0 0.0
        %2624 = vmatpush1.msra.mxu0 0.0
        %2625 = vmatprep.subr.mxu0 0.0
        %2626 = vmatpush1.msra.mxu0 0.0
        %2627 = vmatprep.subr.mxu0 0.0
        %2628 = vmatpush1.msra.mxu0 0.0
        %2629 = vmatprep.subr.mxu0 0.0
        %2630 = vmatpush1.msra.mxu0 0.0
        %2631 = vmatprep.subr.mxu0 0.0
        %2632 = vmatpush1.msra.mxu0 0.0
        %2633 = vmatprep.subr.mxu0 0.0
        %2634 = vmatpush1.msra.mxu0 0.0
        %2635 = vmatprep.subr.mxu0 0.0
        %2636 = vmatpush1.msra.mxu0 0.0
        %2637 = vmatprep.subr.mxu0 0.0
        %2638 = vmatpush1.msra.mxu0 0.0
        %2639 = vmatprep.subr.mxu0 0.0
        %2640 = vmatpush1.msra.mxu0 0.0
        %2641 = vmatprep.subr.mxu0 0.0
        %2642 = vmatpush1.msra.mxu0 0.0
        %2643 = vmatprep.subr.mxu0 0.0
        %2644 = vmatpush1.msra.mxu0 0.0
        %2645 = vmatprep.subr.mxu0 0.0
        %2646 = vmatpush1.msra.mxu0 0.0
        %2647 = vmatprep.subr.mxu0 0.0
        %2648 = vmatpush1.msra.mxu0 0.0
        %2649 = vmatprep.subr.mxu0 0.0
        %2650 = vmatpush1.msra.mxu0 0.0
        %2651 = vmatprep.subr.mxu0 0.0
        %2652 = vmatpush1.msra.mxu0 0.0
        %2653 = vmatprep.subr.mxu0 0.0
        %2654 = vmatpush1.msra.mxu0 0.0
        %2655 = vmatprep.subr.mxu0 0.0
        %2656 = vmatpush1.msra.mxu0 0.0
        %2657 = vmatprep.subr.mxu0 0.0
        %2658 = vmatpush1.msra.mxu0 0.0
        %2659 = vmatprep.subr.mxu0 0.0
        %2660 = vmatpush1.msra.mxu0 0.0
        %2661 = vmatprep.subr.mxu0 0.0
        %2662 = vmatpush1.msra.mxu0 0.0
        %2663 = vmatprep.subr.mxu0 0.0
        %2664 = vmatpush1.msra.mxu0 0.0
        %2665 = vmatprep.subr.mxu0 0.0
        %2666 = vmatpush1.msra.mxu0 0.0
        %2667 = vmatprep.subr.mxu0 0.0
        %2668 = vmatpush1.msra.mxu0 0.0
        %2669 = vmatprep.subr.mxu0 0.0
        %2670 = vmatpush1.msra.mxu0 0.0
        %2671 = vmatprep.mubr.f32.mxu0 0.0
        %2672 = vmatmul.mubr.f32.gmra.mrb[0].mxu0 %v2584
        %v2673 = vpop.f32.mrb[0].mxu0
        %v2674 = vadd.f32 0.0, %v2673
        %v2675 = vpop.f32.mrb[0].mxu0
        %2676 = vmatprep.mubr.f32.mxu0 0.0
        %2677 = vmatmul.mubr.f32.gmra.mrb[0].mxu0 %v2587
        %v2678 = vpop.f32.mrb[0].mxu0
        %v2679 = vadd.f32 0.0, %v2678
        %v2680 = vpop.f32.mrb[0].mxu0
        %2681 = vmatprep.mubr.f32.mxu0 0.0
        %2682 = vmatmul.mubr.f32.gmra.mrb[0].mxu0 %v2590
        %v2683 = vpop.f32.mrb[0].mxu0
        %v2684 = vadd.f32 0.0, %v2683
        %v2685 = vpop.f32.mrb[0].mxu0
        %2686 = vmatprep.mubr.f32.mxu0 0.0
        %2687 = vmatmul.mubr.f32.gmra.mrb[0].mxu0 %v2593
        %v2688 = vpop.f32.mrb[0].mxu0
        %v2689 = vadd.f32 0.0, %v2688
        %v2690 = vpop.f32.mrb[0].mxu0
        %2691 = vmatprep.mubr.f32.mxu0 0.0
        %2692 = vmatmul.mubr.f32.gmra.mrb[0].mxu0 %v2596
        %v2693 = vpop.f32.mrb[0].mxu0
        %v2694 = vadd.f32 0.0, %v2693
        %v2695 = vpop.f32.mrb[0].mxu0
        %2696 = vmatprep.mubr.f32.mxu0 0.0
        %2697 = vmatmul.mubr.f32.gmra.mrb[0].mxu0 %v2599
        %v2698 = vpop.f32.mrb[0].mxu0
        %v2699 = vadd.f32 0.0, %v2698
        %v2700 = vpop.f32.mrb[0].mxu0
        %2701 = vmatprep.mubr.f32.mxu0 0.0
        %2702 = vmatmul.mubr.f32.gmra.mrb[0].mxu0 %v2602
        %v2703 = vpop.f32.mrb[0].mxu0
        %v2704 = vadd.f32 0.0, %v2703
        %v2705 = vpop.f32.mrb[0].mxu0
        %2706 = vmatprep.mubr.f32.mxu0 0.0
        %2707 = vmatmul.mubr.f32.gmra.mrb[0].mxu0 %v2605
        %v2708 = vpop.f32.mrb[0].mxu0
        %v2709 = vadd.f32 0.0, %v2708
        %v2710 = vpop.f32.mrb[0].mxu0
        %2711 = vdwg.mxu0
        %v2712 = vadd.f32 %v2562, %v2674
        %v2713 = vadd.f32 %v2563, %v2679
        %v2714 = vadd.f32 %v2564, %v2684
        %v2715 = vadd.f32 %v2565, %v2689
        %v2716 = vadd.f32 %v2566, %v2694
        %v2717 = vadd.f32 %v2567, %v2699
        %v2718 = vadd.f32 %v2568, %v2704
        %v2719 = vadd.f32 %v2569, %v2709
        %v2720 = vld [vmem:[%s2] sm:$0x1]
        %v2722 = vlaneseq
        %v2723 = vshrl.u32 %v2722, 7
        %v2724 = vsub.s32 0, %v2723
        %v2725 = vrot.slane %v2720, %v2724
        %v2727 = vadd.f32 %v2712, %v2725
        %v2728 = vadd.f32 %v2713, %v2725
        %v2729 = vadd.f32 %v2714, %v2725
        %v2730 = vadd.f32 %v2715, %v2725
        %v2731 = vadd.f32 %v2716, %v2725
        %v2732 = vadd.f32 %v2717, %v2725
        %v2733 = vadd.f32 %v2718, %v2725
        %v2734 = vadd.f32 %v2719, %v2725
        %v2735 = vsub.f32 0.0, %v2727
        %v2736 = vsub.f32 0.0, %v2728
        %v2737 = vsub.f32 0.0, %v2729
        %v2738 = vsub.f32 0.0, %v2730
        %v2739 = vsub.f32 0.0, %v2731
        %v2740 = vsub.f32 0.0, %v2732
        %v2741 = vsub.f32 0.0, %v2733
        %v2742 = vsub.f32 0.0, %v2734
        %v2743 = vmul.f32 %v2735, 1.442695
        %v2744 = vpow.pop %v2743
        %v2745 = vmul.f32 %v2736, 1.442695
        %v2746 = vpow.pop %v2745
        %v2747 = vmul.f32 %v2737, 1.442695
        %v2748 = vpow.pop %v2747
        %v2749 = vmul.f32 %v2738, 1.442695
        %v2750 = vpow.pop %v2749
        %v2751 = vmul.f32 %v2739, 1.442695
        %v2752 = vpow.pop %v2751
        %v2753 = vmul.f32 %v2740, 1.442695
        %v2754 = vpow.pop %v2753
        %v2755 = vmul.f32 %v2741, 1.442695
        %v2756 = vpow.pop %v2755
        %v2757 = vmul.f32 %v2742, 1.442695
        %v2758 = vpow.pop %v2757
        %v2759 = vadd.f32 %v2744, 1.0
        %v2760 = vadd.f32 %v2746, 1.0
        %v2761 = vadd.f32 %v2748, 1.0
        %v2762 = vadd.f32 %v2750, 1.0
        %v2763 = vadd.f32 %v2752, 1.0
        %v2764 = vadd.f32 %v2754, 1.0
        %v2765 = vadd.f32 %v2756, 1.0
        %v2766 = vadd.f32 %v2758, 1.0
        %v2767 = vrcp.pop %v2759
        %v2768 = vmul.f32 1.0, %v2767
        %v2769 = vrcp.pop %v2760
        %v2770 = vmul.f32 1.0, %v2769
        %v2771 = vrcp.pop %v2761
        %v2772 = vmul.f32 1.0, %v2771
        %v2773 = vrcp.pop %v2762
        %v2774 = vmul.f32 1.0, %v2773
        %v2775 = vrcp.pop %v2763
        %v2776 = vmul.f32 1.0, %v2775
        %v2777 = vrcp.pop %v2764
        %v2778 = vmul.f32 1.0, %v2777
        %v2779 = vrcp.pop %v2765
        %v2780 = vmul.f32 1.0, %v2779
        %v2781 = vrcp.pop %v2766
        %v2782 = vmul.f32 1.0, %v2781
        %s2783 = scalar_lea.vmem %s159, 192 [#allocation2]
        %2784 = vst.msk [vmem:[%s2783] sm:$0xff] %vm814, %v2768
        %2785 = vst.msk [vmem:[%s2783 + $0x8] sm:$0xff] %vm814, %v2770
        %2786 = vst.msk [vmem:[%s2783 + $0x10] sm:$0xff] %vm814, %v2772
        %2787 = vst.msk [vmem:[%s2783 + $0x18] sm:$0xff] %vm814, %v2774
        %2788 = vst.msk [vmem:[%s2783 + $0x20] sm:$0xff] %vm814, %v2776
        %2789 = vst.msk [vmem:[%s2783 + $0x28] sm:$0xff] %vm814, %v2778
        %2790 = vst.msk [vmem:[%s2783 + $0x30] sm:$0xff] %vm814, %v2780
        %2791 = vst.msk [vmem:[%s2783 + $0x38] sm:$0xff] %vm814, %v2782
        %s2792 = sand.u32 %s90, 1
        %s2793 = sand.u32 %s90, 1
        %s2794 = smul.addr %s2793, 256
        %s2795 = scalar_lea.vmem [#allocation2], %s2794
        // Predicated region
        $region33: #{autoencoder_forward.11} parent=31 // pred_check
          %p2796 = pneg %p100
        $region34: #{autoencoder_forward.11} parent=31 // pred_check_branch
          %2798 = sbr.rel (%p2796) target = $region36
        $region35: #{autoencoder_forward.11} parent=31 // pred_region
          %s2799 = smul.u32 8, %s14
          %s2800 = smul.addr %s2799, 8
          %s2801 = scalar_lea.vmem %s3, %s2800
          // Predicated region
          $region37: #{autoencoder_forward.11} parent=35 // pred_check
            _
          $region38: #{autoencoder_forward.11} parent=35 // pred_check_branch
            %2803 = sbr.rel (0) target = $region40
          $region39: #{autoencoder_forward.11} parent=35 // pred_region
            // Predicated region
            $region41: #{autoencoder_forward.11} parent=39 // pred_check
              _
            $region42: #{autoencoder_forward.11} parent=39 // pred_check_branch
              %2805 = sbr.rel (0) target = $region44
            $region43: #{autoencoder_forward.11} parent=39 // pred_region
              // Predicated region
              $region56: #{autoencoder_forward.11} parent=43 // pred_check
                _
              $region57: #{autoencoder_forward.11} parent=43 // pred_check_branch
                %2882 = sbr.rel (0) target = $region59
              $region58: #{autoencoder_forward.11} parent=43 // pred_region
                loop: start=0, step=1, limit=1
                $region60: #{autoencoder_forward.11} parent=58 // loop_pre_header
                  _
                $region61: #{autoencoder_forward.11} parent=58 // loop_header
                  %s2884 = sphi 0, %s2888
                  %p2885 = scmp.ge.s32.totalorder %s2884, 1
                  %s2889 = sphi %s2795, %s2795
                  %s2890 = sphi %s2801, %s2801
                $region62: #{autoencoder_forward.11} parent=58 // loop_header_branch
                  %2887 = sbr.rel (%p2885) target = $region66
                $region63: #{autoencoder_forward.11} parent=58 // loop_body
                  %v2891 = vld [vmem:[%s2889] sm:$0xff]
                  %2892 = vst [vmem:[%s2890] sm:$0xff] %v2891
                  %v2893 = vld [vmem:[%s2889 + $0x8] sm:$0xff]
                  %2894 = vst [vmem:[%s2890 + $0x8] sm:$0xff] %v2893
                  %v2895 = vld [vmem:[%s2889 + $0x10] sm:$0xff]
                  %2896 = vst [vmem:[%s2890 + $0x10] sm:$0xff] %v2895
                  %v2897 = vld [vmem:[%s2889 + $0x18] sm:$0xff]
                  %2898 = vst [vmem:[%s2890 + $0x18] sm:$0xff] %v2897
                  %v2899 = vld [vmem:[%s2889 + $0x20] sm:$0xff]
                  %2900 = vst [vmem:[%s2890 + $0x20] sm:$0xff] %v2899
                  %v2901 = vld [vmem:[%s2889 + $0x28] sm:$0xff]
                  %2902 = vst [vmem:[%s2890 + $0x28] sm:$0xff] %v2901
                  %v2903 = vld [vmem:[%s2889 + $0x30] sm:$0xff]
                  %2904 = vst [vmem:[%s2890 + $0x30] sm:$0xff] %v2903
                  %v2905 = vld [vmem:[%s2889 + $0x38] sm:$0xff]
                  %2906 = vst [vmem:[%s2890 + $0x38] sm:$0xff] %v2905
                  %v2907 = vld [vmem:[%s2889 + $0x40] sm:$0xff]
                  %2908 = vst [vmem:[%s2890 + $0x80] sm:$0xff] %v2907
                  %v2909 = vld [vmem:[%s2889 + $0x48] sm:$0xff]
                  %2910 = vst [vmem:[%s2890 + $0x88] sm:$0xff] %v2909
                  %v2911 = vld [vmem:[%s2889 + $0x50] sm:$0xff]
                  %2912 = vst [vmem:[%s2890 + $0x90] sm:$0xff] %v2911
                  %v2913 = vld [vmem:[%s2889 + $0x58] sm:$0xff]
                  %2914 = vst [vmem:[%s2890 + $0x98] sm:$0xff] %v2913
                  %v2915 = vld [vmem:[%s2889 + $0x60] sm:$0xff]
                  %2916 = vst [vmem:[%s2890 + $0xa0] sm:$0xff] %v2915
                  %v2917 = vld [vmem:[%s2889 + $0x68] sm:$0xff]
                  %2918 = vst [vmem:[%s2890 + $0xa8] sm:$0xff] %v2917
                  %v2919 = vld [vmem:[%s2889 + $0x70] sm:$0xff]
                  %2920 = vst [vmem:[%s2890 + $0xb0] sm:$0xff] %v2919
                  %v2921 = vld [vmem:[%s2889 + $0x78] sm:$0xff]
                  %2922 = vst [vmem:[%s2890 + $0xb8] sm:$0xff] %v2921
                  %v2923 = vld [vmem:[%s2889 + $0x80] sm:$0xff]
                  %2924 = vst [vmem:[%s2890 + $0x100] sm:$0xff] %v2923
                  %v2925 = vld [vmem:[%s2889 + $0x88] sm:$0xff]
                  %2926 = vst [vmem:[%s2890 + $0x108] sm:$0xff] %v2925
                  %v2927 = vld [vmem:[%s2889 + $0x90] sm:$0xff]
                  %2928 = vst [vmem:[%s2890 + $0x110] sm:$0xff] %v2927
                  %v2929 = vld [vmem:[%s2889 + $0x98] sm:$0xff]
                  %2930 = vst [vmem:[%s2890 + $0x118] sm:$0xff] %v2929
                  %v2931 = vld [vmem:[%s2889 + $0xa0] sm:$0xff]
                  %2932 = vst [vmem:[%s2890 + $0x120] sm:$0xff] %v2931
                  %v2933 = vld [vmem:[%s2889 + $0xa8] sm:$0xff]
                  %2934 = vst [vmem:[%s2890 + $0x128] sm:$0xff] %v2933
                  %v2935 = vld [vmem:[%s2889 + $0xb0] sm:$0xff]
                  %2936 = vst [vmem:[%s2890 + $0x130] sm:$0xff] %v2935
                  %v2937 = vld [vmem:[%s2889 + $0xb8] sm:$0xff]
                  %2938 = vst [vmem:[%s2890 + $0x138] sm:$0xff] %v2937
                  %v2939 = vld [vmem:[%s2889 + $0xc0] sm:$0xff]
                  %2940 = vst [vmem:[%s2890 + $0x180] sm:$0xff] %v2939
                  %v2941 = vld [vmem:[%s2889 + $0xc8] sm:$0xff]
                  %2942 = vst [vmem:[%s2890 + $0x188] sm:$0xff] %v2941
                  %v2943 = vld [vmem:[%s2889 + $0xd0] sm:$0xff]
                  %2944 = vst [vmem:[%s2890 + $0x190] sm:$0xff] %v2943
                  %v2945 = vld [vmem:[%s2889 + $0xd8] sm:$0xff]
                  %2946 = vst [vmem:[%s2890 + $0x198] sm:$0xff] %v2945
                  %v2947 = vld [vmem:[%s2889 + $0xe0] sm:$0xff]
                  %2948 = vst [vmem:[%s2890 + $0x1a0] sm:$0xff] %v2947
                  %v2949 = vld [vmem:[%s2889 + $0xe8] sm:$0xff]
                  %2950 = vst [vmem:[%s2890 + $0x1a8] sm:$0xff] %v2949
                  %v2951 = vld [vmem:[%s2889 + $0xf0] sm:$0xff]
                  %2952 = vst [vmem:[%s2890 + $0x1b0] sm:$0xff] %v2951
                  %v2953 = vld [vmem:[%s2889 + $0xf8] sm:$0xff]
                  %2954 = vst [vmem:[%s2890 + $0x1b8] sm:$0xff] %v2953
                $region64: #{autoencoder_forward.11} parent=58 // loop_footer
                  %s2888 = sadd.s32 1, %s2884
                $region65: #{autoencoder_forward.11} parent=58 // loop_footer_branch
                  %2883 = sbr.rel target = $region61
                $region66: #{autoencoder_forward.11} parent=58 // loop_exit
                  _
              $region59: #{autoencoder_forward.11} parent=43 // pred_fallthru
                _
              // Predicated region
              $region67: #{autoencoder_forward.11} parent=43 // pred_check
                _
              $region68: #{autoencoder_forward.11} parent=43 // pred_check_branch
                %2956 = sbr.rel target = $region70
              $region69: #{autoencoder_forward.11} parent=43 // pred_region
                _
              $region70: #{autoencoder_forward.11} parent=43 // pred_fallthru
                _
            $region44: #{autoencoder_forward.11} parent=39 // pred_fallthru
              _
            // Predicated region
            $region45: #{autoencoder_forward.11} parent=39 // pred_check
              _
            $region46: #{autoencoder_forward.11} parent=39 // pred_check_branch
              %2807 = sbr.rel target = $region48
            $region47: #{autoencoder_forward.11} parent=39 // pred_region
              loop: start=0, step=1, limit=1
              $region49: #{autoencoder_forward.11} parent=47 // loop_pre_header
                _
              $region50: #{autoencoder_forward.11} parent=47 // loop_header
                %s2810 = sphi 0, %s2814
                %p2811 = scmp.ge.s32.totalorder %s2810, 1
                %s2815 = sphi %s2795, %s2795
                %s2816 = sphi %s2801, %s2801
              $region51: #{autoencoder_forward.11} parent=47 // loop_header_branch
                %2813 = sbr.rel (%p2811) target = $region55
              $region52: #{autoencoder_forward.11} parent=47 // loop_body
                %v2817 = vld [vmem:[%s2815] sm:$0xff]
                %2818 = vst [vmem:[%s2816] sm:$0xff] %v2817
                %v2819 = vld [vmem:[%s2815 + $0x8] sm:$0xff]
                %2820 = vst [vmem:[%s2816 + $0x8] sm:$0xff] %v2819
                %v2821 = vld [vmem:[%s2815 + $0x10] sm:$0xff]
                %2822 = vst [vmem:[%s2816 + $0x10] sm:$0xff] %v2821
                %v2823 = vld [vmem:[%s2815 + $0x18] sm:$0xff]
                %2824 = vst [vmem:[%s2816 + $0x18] sm:$0xff] %v2823
                %v2825 = vld [vmem:[%s2815 + $0x20] sm:$0xff]
                %2826 = vst [vmem:[%s2816 + $0x20] sm:$0xff] %v2825
                %v2827 = vld [vmem:[%s2815 + $0x28] sm:$0xff]
                %2828 = vst [vmem:[%s2816 + $0x28] sm:$0xff] %v2827
                %v2829 = vld [vmem:[%s2815 + $0x30] sm:$0xff]
                %2830 = vst [vmem:[%s2816 + $0x30] sm:$0xff] %v2829
                %v2831 = vld [vmem:[%s2815 + $0x38] sm:$0xff]
                %2832 = vst [vmem:[%s2816 + $0x38] sm:$0xff] %v2831
                %v2833 = vld [vmem:[%s2815 + $0x40] sm:$0xff]
                %2834 = vst [vmem:[%s2816 + $0x80] sm:$0xff] %v2833
                %v2835 = vld [vmem:[%s2815 + $0x48] sm:$0xff]
                %2836 = vst [vmem:[%s2816 + $0x88] sm:$0xff] %v2835
                %v2837 = vld [vmem:[%s2815 + $0x50] sm:$0xff]
                %2838 = vst [vmem:[%s2816 + $0x90] sm:$0xff] %v2837
                %v2839 = vld [vmem:[%s2815 + $0x58] sm:$0xff]
                %2840 = vst [vmem:[%s2816 + $0x98] sm:$0xff] %v2839
                %v2841 = vld [vmem:[%s2815 + $0x60] sm:$0xff]
                %2842 = vst [vmem:[%s2816 + $0xa0] sm:$0xff] %v2841
                %v2843 = vld [vmem:[%s2815 + $0x68] sm:$0xff]
                %2844 = vst [vmem:[%s2816 + $0xa8] sm:$0xff] %v2843
                %v2845 = vld [vmem:[%s2815 + $0x70] sm:$0xff]
                %2846 = vst [vmem:[%s2816 + $0xb0] sm:$0xff] %v2845
                %v2847 = vld [vmem:[%s2815 + $0x78] sm:$0xff]
                %2848 = vst [vmem:[%s2816 + $0xb8] sm:$0xff] %v2847
                %v2849 = vld [vmem:[%s2815 + $0x80] sm:$0xff]
                %2850 = vst [vmem:[%s2816 + $0x100] sm:$0xff] %v2849
                %v2851 = vld [vmem:[%s2815 + $0x88] sm:$0xff]
                %2852 = vst [vmem:[%s2816 + $0x108] sm:$0xff] %v2851
                %v2853 = vld [vmem:[%s2815 + $0x90] sm:$0xff]
                %2854 = vst [vmem:[%s2816 + $0x110] sm:$0xff] %v2853
                %v2855 = vld [vmem:[%s2815 + $0x98] sm:$0xff]
                %2856 = vst [vmem:[%s2816 + $0x118] sm:$0xff] %v2855
                %v2857 = vld [vmem:[%s2815 + $0xa0] sm:$0xff]
                %2858 = vst [vmem:[%s2816 + $0x120] sm:$0xff] %v2857
                %v2859 = vld [vmem:[%s2815 + $0xa8] sm:$0xff]
                %2860 = vst [vmem:[%s2816 + $0x128] sm:$0xff] %v2859
                %v2861 = vld [vmem:[%s2815 + $0xb0] sm:$0xff]
                %2862 = vst [vmem:[%s2816 + $0x130] sm:$0xff] %v2861
                %v2863 = vld [vmem:[%s2815 + $0xb8] sm:$0xff]
                %2864 = vst [vmem:[%s2816 + $0x138] sm:$0xff] %v2863
                %v2865 = vld [vmem:[%s2815 + $0xc0] sm:$0xff]
                %2866 = vst [vmem:[%s2816 + $0x180] sm:$0xff] %v2865
                %v2867 = vld [vmem:[%s2815 + $0xc8] sm:$0xff]
                %2868 = vst [vmem:[%s2816 + $0x188] sm:$0xff] %v2867
                %v2869 = vld [vmem:[%s2815 + $0xd0] sm:$0xff]
                %2870 = vst [vmem:[%s2816 + $0x190] sm:$0xff] %v2869
                %v2871 = vld [vmem:[%s2815 + $0xd8] sm:$0xff]
                %2872 = vst [vmem:[%s2816 + $0x198] sm:$0xff] %v2871
                %v2873 = vld [vmem:[%s2815 + $0xe0] sm:$0xff]
                %2874 = vst [vmem:[%s2816 + $0x1a0] sm:$0xff] %v2873
                %v2875 = vld [vmem:[%s2815 + $0xe8] sm:$0xff]
                %2876 = vst [vmem:[%s2816 + $0x1a8] sm:$0xff] %v2875
                %v2877 = vld [vmem:[%s2815 + $0xf0] sm:$0xff]
                %2878 = vst [vmem:[%s2816 + $0x1b0] sm:$0xff] %v2877
                %v2879 = vld [vmem:[%s2815 + $0xf8] sm:$0xff]
                %2880 = vst [vmem:[%s2816 + $0x1b8] sm:$0xff] %v2879
              $region53: #{autoencoder_forward.11} parent=47 // loop_footer
                %s2814 = sadd.s32 1, %s2810
              $region54: #{autoencoder_forward.11} parent=47 // loop_footer_branch
                %2809 = sbr.rel target = $region50
              $region55: #{autoencoder_forward.11} parent=47 // loop_exit
                _
            $region48: #{autoencoder_forward.11} parent=39 // pred_fallthru
              _
          $region40: #{autoencoder_forward.11} parent=35 // pred_fallthru
            _
          %2957 = vnop
        $region36: #{autoencoder_forward.11} parent=31 // pred_fallthru
          _
      $region32: #{autoencoder_forward.11} parent=5 // pred_fallthru
        _
      %p2958 = scmp.le.s32.totalorder 2, %s9
      // Predicated region
      $region71: #{autoencoder_forward.11} parent=5 // pred_check
        %p2959 = pneg %p2958
      $region72: #{autoencoder_forward.11} parent=5 // pred_check_branch
        %2961 = sbr.rel (%p2959) target = $region74
      $region73: #{autoencoder_forward.11} parent=5 // pred_region
        %s2962 = ssub.s32 %s9, 2
        // Predicated region
        $region75: #{autoencoder_forward.11} parent=73 // pred_check
          %p2963 = pneg %p106
        $region76: #{autoencoder_forward.11} parent=73 // pred_check_branch
          %2965 = sbr.rel (%p2963) target = $region78
        $region77: #{autoencoder_forward.11} parent=73 // pred_region
          %s2966 = sand.u32 %s91, 1
          %s2967 = sand.u32 %s91, 1
          %s2968 = smul.addr %s2967, 256
          %s2969 = scalar_lea.vmem [#allocation2], %s2968
        $region78: #{autoencoder_forward.11} parent=73 // pred_fallthru
          _
      $region74: #{autoencoder_forward.11} parent=5 // pred_fallthru
        _
    $region6: #{autoencoder_forward.11} parent=1 // loop_footer
      %s13 = sadd.s32 1, %s9
    $region7: #{autoencoder_forward.11} parent=1 // loop_footer_branch
      %8 = sbr.rel target = $region3
    $region8: #{autoencoder_forward.11} parent=1 // loop_exit
      _

</llo_original>
